<compile_context>
chip_gen: v5e
topology: v5e:2x2
jax: 0.10.0
libtpu: 0.0.40
codegen_flags: <defaults>
</compile_context>

<pallas_src>
import functools

import jax
import jax.numpy as jnp
from jax.experimental import pallas as pl
from jax.experimental.pallas import tpu as pltpu

C = 128  # trunk channel width == TPU lane width


def _round_up(x, m):
    return (x + m - 1) // m * m


# ---------------------------------------------------------------------------
# Fused kernel: the entire generator forward for one image per grid step.
# ---------------------------------------------------------------------------
def _acgan_fused_kernel(gt_ref, u1e_ref, r1_ref, b1_ref, w1_ref, a2_ref,
                        u2_ref, w2_ref, a3_ref, w3_ref, b3_ref, m3_ref,
                        out_ref, *, ha, wpa, hb, wb, wpb):
    f32, bf16 = jnp.float32, jnp.bfloat16

    def conv3x3(x, w_ref, h, wp):
        # x: ((h+2)*wp, C) zero-padded input (bf16).  9 slab matmuls; slab
        # starts dy*wp are multiples of 8 -> no relayout feeding the MXU.
        # The 3 dx taps are combined with two shifted adds on the reduced
        # (h*wp, C) output.  Valid rows are r = y*wp + x with x < real width.
        rows = h * wp
        z = jnp.zeros((rows, C), f32)
        for dx in range(3):
            acc = jnp.zeros((rows, C), f32)
            for dy in range(3):
                acc = acc + jnp.dot(
                    x[dy * wp:dy * wp + rows, :], w_ref[dy * 3 + dx],
                    preferred_element_type=f32)
            if dx:  # shift rows up by dx (tail rows are padding-only garbage)
                acc = jnp.concatenate(
                    [acc[dx:, :], jnp.zeros((dx, C), f32)], axis=0)
            z = z + acc
        return z

    def affine_leaky(z, a_ref):
        # folded conv-bias + inference BatchNorm, then LeakyReLU(0.2), in f32
        y = z * a_ref[0:1, :] + a_ref[1:2, :]
        return jnp.where(y >= 0, y, 0.2 * y)

    # -- Stage 0: (emb*noise) -> Linear -> BN1 -> NCHW->NHWC -> 2x up -> pad,
    #    all as one matmul: u1e routes each padded/upsampled pixel to its
    #    source pixel, r1 is the reordered + BN1-folded l1 weight.
    t = (u1e_ref[...] * gt_ref[0]).astype(bf16)                     # (n1, P*z)
    xp1 = jnp.dot(t, r1_ref[...], preferred_element_type=f32) + b1_ref[...]

    # -- Stage 1: Conv3x3(128->128) + BN2 + LeakyReLU.
    y1 = affine_leaky(conv3x3(xp1.astype(bf16), w1_ref, ha, wpa), a2_ref)

    # -- Stage 2: 2x upsample + pad (router matmul), Conv3x3(128->64, padded
    #    to 128 lanes) + BN3 + LeakyReLU.
    xp2 = jnp.dot(u2_ref[...], y1.astype(bf16), preferred_element_type=f32)
    y2 = affine_leaky(conv3x3(xp2.astype(bf16), w2_ref, hb, wpb), a3_ref)

    # -- Stage 3: zero-pad (row shift + border-column mask),
    #    Conv3x3(64->nc, padded to 128 lanes) + bias + Tanh.
    top = jnp.zeros((wpb + 1, C), f32)
    bot = jnp.zeros((wpb - 1, C), f32)
    xp3 = jnp.concatenate([top, y2, bot], axis=0) * m3_ref[...]
    img = jnp.tanh(conv3x3(xp3.astype(bf16), w3_ref, hb, wpb) + b3_ref[...])

    # -- Lane-dense output: rows y*wb + x, full 128 lanes (padded channels).
    for y in range(hb):
        out_ref[0, y * wb:(y + 1) * wb, :] = img[y * wpb:y * wpb + wb, :]


# ---------------------------------------------------------------------------
# Host-side constant preparation (done once, outside the hot path)
# ---------------------------------------------------------------------------
def _router(h_src, w_src, src_stride, scale, wp_dst):
    """0/1 matrix routing a (h_src x w_src) source grid (source rows at
    i*src_stride + j) onto the flattened 1-pixel-zero-padded, `scale`x
    nearest-upsampled destination buffer whose row pitch is wp_dst."""
    h_dst, w_dst = h_src * scale, w_src * scale
    n_dst = (h_dst + 2) * wp_dst
    n_src = h_src * src_stride
    q = jnp.arange(n_dst)
    y, x = q // wp_dst, q % wp_dst
    valid = (y >= 1) & (y <= h_dst) & (x >= 1) & (x <= w_dst)
    si = jnp.clip((y - 1) // scale, 0, h_src - 1)
    sj = jnp.clip((x - 1) // scale, 0, w_src - 1)
    src = si * src_stride + sj
    one_hot = (jnp.arange(n_src)[None, :] == src[:, None]) & valid[:, None]
    return one_hot.astype(jnp.float32)


def prepare_generator(params, *, init_size, img_size, nc, z_dim):
    p1 = init_size * init_size
    ha = wa = 2 * init_size
    hb = wb = img_size
    wpa = _round_up(wa + 2, 8)      # padded width, multiple of 8 sublanes
    wpb = _round_up(wb + 2, 8)
    eps1, eps23 = 1e-5, 0.8
    f32, bf16 = jnp.float32, jnp.bfloat16

    # l1 + BN1 fold, reordered NCHW-feature -> pixel-major NHWC, then
    # pre-routed through the upsample+pad matrix U1.
    s1 = params["bn1_g"] / jnp.sqrt(1.0 + eps1)
    s1_f = jnp.repeat(s1, p1)
    w1f = params["l1_w"] * s1_f[None, :]
    b1f = params["l1_b"] * s1_f + jnp.repeat(params["bn1_b"], p1)
    r1 = (w1f.reshape(z_dim, C, init_size, init_size)
             .transpose(2, 3, 0, 1).reshape(p1 * z_dim, C))
    b1_img = (b1f.reshape(C, init_size, init_size)
                 .transpose(1, 2, 0).reshape(p1, C))
    u1 = _router(init_size, init_size, init_size, 2, wpa)       # (n1, p1)
    u1e = jnp.repeat(u1, z_dim, axis=1)                         # (n1, p1*z)
    b1r = u1 @ b1_img                                           # (n1, C)

    # Upsample+pad router for stage 2 (source rows have pitch wpa).
    u2 = _router(ha, wa, wpa, 2, wpb)                           # (n2, ha*wpa)

    # Conv weights (kh*kw, Cin, Cout), channel dims zero-padded to 128 lanes.
    # TODO(synk): PyTorch checkpoints store (Cout, Cin, kh, kw); transpose
    #             to (kh*kw, Cin, Cout) when porting real weights.
    w1 = params["conv1_w"]
    w2 = jnp.zeros((9, C, C), f32).at[:, :, :64].set(params["conv2_w"])
    w3 = jnp.zeros((9, C, C), f32).at[:, :64, :nc].set(params["conv3_w"])

    # Folded conv-bias + inference-BN affines; zero on padded channels.
    s2 = params["bn2_g"] / jnp.sqrt(1.0 + eps23)
    a2 = jnp.stack([s2, params["conv1_b"] * s2 + params["bn2_b"]])
    s3 = params["bn3_g"] / jnp.sqrt(1.0 + eps23)
    a3 = jnp.stack([
        jnp.zeros((C,), f32).at[:64].set(s3),
        jnp.zeros((C,), f32).at[:64].set(
            params["conv2_b"] * s3 + params["bn3_b"]),
    ])
    b3 = jnp.zeros((1, C), f32).at[0, :nc].set(params["conv3_b"])

    # Stage-3 border mask: zero the w == 0 and w == wb+1 pad columns.
    q = jnp.arange((hb + 2) * wpb)
    m3 = (((q % wpb) != 0) & ((q % wpb) != wb + 1)).astype(f32)[:, None]

    cfg = dict(p1=p1, z_dim=z_dim, nc=nc,
               ha=ha, wpa=wpa, hb=hb, wb=wb, wpb=wpb)
    prep = dict(emb=params["emb"].astype(f32),
                u1e=u1e.astype(bf16), r1=r1.astype(bf16), b1=b1r.astype(f32),
                w1=w1.astype(bf16), a2=a2.astype(f32),
                u2=u2.astype(bf16), w2=w2.astype(bf16), a3=a3.astype(f32),
                w3=w3.astype(bf16), b3=b3.astype(f32), m3=m3)
    return cfg, prep


# ---------------------------------------------------------------------------
# Forward pass (== ACGAN_Generator.forward)
# ---------------------------------------------------------------------------
def make_acgan_forward(cfg):
    p1, z_dim, nc = cfg["p1"], cfg["z_dim"], cfg["nc"]
    ha, wpa = cfg["ha"], cfg["wpa"]
    hb, wb, wpb = cfg["hb"], cfg["wb"], cfg["wpb"]
    n1 = (ha + 2) * wpa
    n2 = (hb + 2) * wpb
    k1 = p1 * z_dim
    rows1 = ha * wpa
    rows_out = hb * wb

    kern = functools.partial(_acgan_fused_kernel,
                             ha=ha, wpa=wpa, hb=hb, wb=wb, wpb=wpb)

    def const(shape):  # weight-like input: full block, constant index map
        return pl.BlockSpec(shape, lambda b: (0,) * len(shape))

    @jax.jit
    def forward(prep, noise, labels):
        B = noise.shape[0]
        gen_input = prep["emb"][labels] * noise                # (B, z)
        gt = jnp.tile(gen_input, (1, p1))[:, None, :]          # (B, 1, p1*z)

        out = pl.pallas_call(
            kern,
            out_shape=jax.ShapeDtypeStruct((B, rows_out, C), jnp.float32),
            grid=(B,),
            in_specs=[
                pl.BlockSpec((1, 1, k1), lambda b: (b, 0, 0)),  # tiled gen_input
                const((n1, k1)),        # u1e: upsample+pad router (stage 0/1)
                const((k1, C)),         # r1 : BN1-folded, reordered l1 weight
                const((n1, C)),         # b1 : routed l1/BN1 bias
                const((9, C, C)),       # conv1 weights
                const((2, C)),          # BN2 affine (scale, shift)
                const((n2, rows1)),     # u2 : upsample+pad router (stage 2)
                const((9, C, C)),       # conv2 weights (Cout padded to 128)
                const((2, C)),          # BN3 affine
                const((9, C, C)),       # conv3 weights (Cin/Cout padded)
                const((1, C)),          # conv3 bias (padded)
                const((n2, 1)),         # stage-3 border mask
            ],
            out_specs=pl.BlockSpec((1, rows_out, C), lambda b: (b, 0, 0)),
            compiler_params=pltpu.CompilerParams(
                dimension_semantics=("parallel",),   # >=2 steps -> both v7x TCs
                vmem_limit_bytes=48 * 1024 * 1024),
        )(gt, prep["u1e"], prep["r1"], prep["b1"], prep["w1"], prep["a2"],
          prep["u2"], prep["w2"], prep["a3"], prep["w3"], prep["b3"],
          prep["m3"])

        img = out.reshape(B, hb, wb, C)[..., :nc]
        return jnp.transpose(img, (0, 3, 1, 2))                # NCHW, like torch

    return forward


# ---------------------------------------------------------------------------
# Parameters (deterministic, in-script) and pure-JAX reference
# ---------------------------------------------------------------------------
def init_params(key, num_classes, z_dim, init_size, nc):
    F = 128 * init_size * init_size
    ks = jax.random.split(key, 14)
    p = {}
    p["emb"] = jax.random.normal(ks[0], (num_classes, z_dim), jnp.float32)
    p["l1_w"] = jax.random.normal(ks[1], (z_dim, F), jnp.float32) * 0.05
    p["l1_b"] = jax.random.normal(ks[2], (F,), jnp.float32) * 0.05
    p["bn1_g"] = 1.0 + 0.1 * jax.random.normal(ks[3], (128,), jnp.float32)
    p["bn1_b"] = 0.1 * jax.random.normal(ks[4], (128,), jnp.float32)
    p["conv1_w"] = jax.random.normal(ks[5], (9, 128, 128), jnp.float32) * 0.02
    p["conv1_b"] = 0.02 * jax.random.normal(ks[6], (128,), jnp.float32)
    p["bn2_g"] = 1.0 + 0.1 * jax.random.normal(ks[7], (128,), jnp.float32)
    p["bn2_b"] = 0.1 * jax.random.normal(ks[8], (128,), jnp.float32)
    p["conv2_w"] = jax.random.normal(ks[9], (9, 128, 64), jnp.float32) * 0.02
    p["conv2_b"] = 0.02 * jax.random.normal(ks[10], (64,), jnp.float32)
    p["bn3_g"] = 1.0 + 0.1 * jax.random.normal(ks[11], (64,), jnp.float32)
    p["bn3_b"] = 0.1 * jax.random.normal(ks[12], (64,), jnp.float32)
    p["conv3_w"] = jax.random.normal(ks[13], (9, 64, nc), jnp.float32) * 0.05
    p["conv3_b"] = jnp.zeros((nc,), jnp.float32)
    return p


def acgan_reference(params, noise, labels, *, init_size, nc):
    """Pure-JAX (f32, NCHW) reference with inference-mode BatchNorm."""
    B = noise.shape[0]
    hp = jax.lax.Precision.HIGHEST

    def bn(x, g, b, eps):
        return (g[None, :, None, None] * x / jnp.sqrt(1.0 + eps)
                + b[None, :, None, None])

    def up2(x):
        return jnp.repeat(jnp.repeat(x, 2, axis=2), 2, axis=3)

    def conv(x, w9, b):
        ci, co = w9.shape[1], w9.shape[2]
        w = w9.reshape(3, 3, ci, co).transpose(3, 2, 0, 1)     # OIHW
        y = jax.lax.conv_general_dilated(
            x, w, (1, 1), ((1, 1), (1, 1)),
            dimension_numbers=("NCHW", "OIHW", "NCHW"), precision=hp)
        return y + b[None, :, None, None]

    def leaky(x):
        return jnp.where(x >= 0, x, 0.2 * x)

    g = params["emb"][labels] * noise
    x = jnp.dot(g, params["l1_w"], precision=hp) + params["l1_b"]
    x = x.reshape(B, 128, init_size, init_size)
    x = bn(x, params["bn1_g"], params["bn1_b"], 1e-5)
    x = up2(x)
    x = leaky(bn(conv(x, params["conv1_w"], params["conv1_b"]),
                 params["bn2_g"], params["bn2_b"], 0.8))
    x = up2(x)
    x = leaky(bn(conv(x, params["conv2_w"], params["conv2_b"]),
                 params["bn3_g"], params["bn3_b"], 0.8))
    return jnp.tanh(conv(x, params["conv3_w"], params["conv3_b"]))


# ---------------------------------------------------------------------------
if __name__ == "__main__":
    # small config consistent with the module: img_size=16 -> init_size=4
    num_classes, z_dim, img_size, nc, B = 10, 32, 16, 3, 2
    init_size = img_size // 4

    key = jax.random.PRNGKey(0)
    kp, kn, kl = jax.random.split(key, 3)
    params = init_params(kp, num_classes, z_dim, init_size, nc)
    noise = jax.random.normal(kn, (B, z_dim), jnp.float32)
    labels = jax.random.randint(kl, (B,), 0, num_classes)

    cfg, prep = prepare_generator(params, init_size=init_size,
                                  img_size=img_size, nc=nc, z_dim=z_dim)
    forward = make_acgan_forward(cfg)
    img = jax.block_until_ready(forward(prep, noise, labels))

    assert img.shape == (B, nc, img_size, img_size), img.shape
    assert bool(jnp.all(jnp.isfinite(img)))

    ref = acgan_reference(params, noise, labels, init_size=init_size, nc=nc)
    err = float(jnp.max(jnp.abs(img - ref.astype(jnp.float32))))
    assert err < 3e-2, f"mismatch vs reference: max abs err {err}"

    print("KERNEL_OK")
</pallas_src>

<mosaic_0001>
module attributes {stable_mosaic.version = 11 : i64} {
  func.func @_acgan_fused_kernel(%arg0: i32, %arg1: memref<1x1x512xf32, #tpu.memory_space<vmem>>, %arg2: memref<160x512xbf16, #tpu.memory_space<vmem>>, %arg3: memref<512x128xbf16, #tpu.memory_space<vmem>>, %arg4: memref<160x128xf32, #tpu.memory_space<vmem>>, %arg5: memref<9x128x128xbf16, #tpu.memory_space<vmem>>, %arg6: memref<2x128xf32, #tpu.memory_space<vmem>>, %arg7: memref<432x128xbf16, #tpu.memory_space<vmem>>, %arg8: memref<9x128x128xbf16, #tpu.memory_space<vmem>>, %arg9: memref<2x128xf32, #tpu.memory_space<vmem>>, %arg10: memref<9x128x128xbf16, #tpu.memory_space<vmem>>, %arg11: memref<1x128xf32, #tpu.memory_space<vmem>>, %arg12: memref<432x1xf32, #tpu.memory_space<vmem>>, %arg13: memref<1x256x128xf32, #tpu.memory_space<vmem>>) attributes {dimension_semantics = [#tpu.dimension_semantics<parallel>], iteration_bounds = array<i64: 2>, scalar_prefetch = 0 : i64, scratch_operands = 0 : i64, tpu.core_type = #tpu.core_type<tc>, window_params = [{transform_indices = @transform_0, window_bounds = array<i64: 1, 1, 512>}, {pipeline_mode = #tpu.pipeline_mode<synchronous>, transform_indices = @transform_1, window_bounds = array<i64: 160, 512>}, {pipeline_mode = #tpu.pipeline_mode<synchronous>, transform_indices = @transform_2, window_bounds = array<i64: 512, 128>}, {pipeline_mode = #tpu.pipeline_mode<synchronous>, transform_indices = @transform_3, window_bounds = array<i64: 160, 128>}, {pipeline_mode = #tpu.pipeline_mode<synchronous>, transform_indices = @transform_4, window_bounds = array<i64: 9, 128, 128>}, {pipeline_mode = #tpu.pipeline_mode<synchronous>, transform_indices = @transform_5, window_bounds = array<i64: 2, 128>}, {pipeline_mode = #tpu.pipeline_mode<synchronous>, transform_indices = @transform_6, window_bounds = array<i64: 432, 128>}, {pipeline_mode = #tpu.pipeline_mode<synchronous>, transform_indices = @transform_7, window_bounds = array<i64: 9, 128, 128>}, {pipeline_mode = #tpu.pipeline_mode<synchronous>, transform_indices = @transform_8, window_bounds = array<i64: 2, 128>}, {pipeline_mode = #tpu.pipeline_mode<synchronous>, transform_indices = @transform_9, window_bounds = array<i64: 9, 128, 128>}, {pipeline_mode = #tpu.pipeline_mode<synchronous>, transform_indices = @transform_10, window_bounds = array<i64: 1, 128>}, {pipeline_mode = #tpu.pipeline_mode<synchronous>, transform_indices = @transform_11, window_bounds = array<i64: 432, 1>}, {transform_indices = @transform_12, window_bounds = array<i64: 1, 256, 128>}]} {
    %c0 = arith.constant 0 : index
    %c0_0 = arith.constant 0 : index
    %0 = vector.load %arg2[%c0, %c0_0] : memref<160x512xbf16, #tpu.memory_space<vmem>>, vector<160x512xbf16>
    %c0_1 = arith.constant 0 : index
    %c0_2 = arith.constant 0 : index
    %c0_3 = arith.constant 0 : index
    %1 = vector.load %arg1[%c0_1, %c0_2, %c0_3] : memref<1x1x512xf32, #tpu.memory_space<vmem>>, vector<1x1x512xf32>
    %2 = vector.shape_cast %1 : vector<1x1x512xf32> to vector<1x512xf32>
    %3 = arith.extf %0 : vector<160x512xbf16> to vector<160x512xf32>
    %4 = vector.broadcast %2 : vector<1x512xf32> to vector<160x512xf32>
    %5 = arith.mulf %3, %4 : vector<160x512xf32>
    %6 = arith.truncf %5 : vector<160x512xf32> to vector<160x512xbf16>
    %c0_4 = arith.constant 0 : index
    %c0_5 = arith.constant 0 : index
    %7 = vector.load %arg3[%c0_4, %c0_5] : memref<512x128xbf16, #tpu.memory_space<vmem>>, vector<512x128xbf16>
    %cst = arith.constant dense<0.000000e+00> : vector<160x128xf32>
    %8 = tpu.matmul %6, %7, %cst {dimension_numbers = #tpu.dot_dimension_numbers<[1], [0], [0], [1], [0, 0, 1, 1], [], []>} : vector<160x512xbf16>, vector<512x128xbf16>, vector<160x128xf32> -> vector<160x128xf32>
    %c0_6 = arith.constant 0 : index
    %c0_7 = arith.constant 0 : index
    %9 = vector.load %arg4[%c0_6, %c0_7] : memref<160x128xf32, #tpu.memory_space<vmem>>, vector<160x128xf32>
    %10 = arith.addf %8, %9 : vector<160x128xf32>
    %11 = arith.truncf %10 : vector<160x128xf32> to vector<160x128xbf16>
    %cst_8 = arith.constant 0.000000e+00 : f32
    %12 = vector.broadcast %cst_8 : f32 to vector<128x128xf32>
    %cst_9 = arith.constant 0.000000e+00 : f32
    %13 = vector.broadcast %cst_9 : f32 to vector<128x128xf32>
    %14 = vector.extract_strided_slice %11 {offsets = [0, 0], sizes = [128, 128], strides = [1, 1]} : vector<160x128xbf16> to vector<128x128xbf16>
    %c0_10 = arith.constant 0 : index
    %c0_11 = arith.constant 0 : index
    %c0_12 = arith.constant 0 : index
    %15 = vector.load %arg5[%c0_10, %c0_11, %c0_12] : memref<9x128x128xbf16, #tpu.memory_space<vmem>>, vector<1x128x128xbf16>
    %16 = vector.shape_cast %15 : vector<1x128x128xbf16> to vector<128x128xbf16>
    %cst_13 = arith.constant dense<0.000000e+00> : vector<128x128xf32>
    %17 = tpu.matmul %14, %16, %cst_13 {dimension_numbers = #tpu.dot_dimension_numbers<[1], [0], [0], [1], [0, 0, 1, 1], [], []>} : vector<128x128xbf16>, vector<128x128xbf16>, vector<128x128xf32> -> vector<128x128xf32>
    %18 = arith.addf %13, %17 : vector<128x128xf32>
    %19 = vector.extract_strided_slice %11 {offsets = [16, 0], sizes = [128, 128], strides = [1, 1]} : vector<160x128xbf16> to vector<128x128xbf16>
    %c3 = arith.constant 3 : index
    %c0_14 = arith.constant 0 : index
    %c0_15 = arith.constant 0 : index
    %20 = vector.load %arg5[%c3, %c0_14, %c0_15] : memref<9x128x128xbf16, #tpu.memory_space<vmem>>, vector<1x128x128xbf16>
    %21 = vector.shape_cast %20 : vector<1x128x128xbf16> to vector<128x128xbf16>
    %cst_16 = arith.constant dense<0.000000e+00> : vector<128x128xf32>
    %22 = tpu.matmul %19, %21, %cst_16 {dimension_numbers = #tpu.dot_dimension_numbers<[1], [0], [0], [1], [0, 0, 1, 1], [], []>} : vector<128x128xbf16>, vector<128x128xbf16>, vector<128x128xf32> -> vector<128x128xf32>
    %23 = arith.addf %18, %22 : vector<128x128xf32>
    %24 = vector.extract_strided_slice %11 {offsets = [32, 0], sizes = [128, 128], strides = [1, 1]} : vector<160x128xbf16> to vector<128x128xbf16>
    %c6 = arith.constant 6 : index
    %c0_17 = arith.constant 0 : index
    %c0_18 = arith.constant 0 : index
    %25 = vector.load %arg5[%c6, %c0_17, %c0_18] : memref<9x128x128xbf16, #tpu.memory_space<vmem>>, vector<1x128x128xbf16>
    %26 = vector.shape_cast %25 : vector<1x128x128xbf16> to vector<128x128xbf16>
    %cst_19 = arith.constant dense<0.000000e+00> : vector<128x128xf32>
    %27 = tpu.matmul %24, %26, %cst_19 {dimension_numbers = #tpu.dot_dimension_numbers<[1], [0], [0], [1], [0, 0, 1, 1], [], []>} : vector<128x128xbf16>, vector<128x128xbf16>, vector<128x128xf32> -> vector<128x128xf32>
    %28 = arith.addf %23, %27 : vector<128x128xf32>
    %29 = arith.addf %12, %28 : vector<128x128xf32>
    %cst_20 = arith.constant 0.000000e+00 : f32
    %30 = vector.broadcast %cst_20 : f32 to vector<128x128xf32>
    %31 = vector.extract_strided_slice %11 {offsets = [0, 0], sizes = [128, 128], strides = [1, 1]} : vector<160x128xbf16> to vector<128x128xbf16>
    %c1 = arith.constant 1 : index
    %c0_21 = arith.constant 0 : index
    %c0_22 = arith.constant 0 : index
    %32 = vector.load %arg5[%c1, %c0_21, %c0_22] : memref<9x128x128xbf16, #tpu.memory_space<vmem>>, vector<1x128x128xbf16>
    %33 = vector.shape_cast %32 : vector<1x128x128xbf16> to vector<128x128xbf16>
    %cst_23 = arith.constant dense<0.000000e+00> : vector<128x128xf32>
    %34 = tpu.matmul %31, %33, %cst_23 {dimension_numbers = #tpu.dot_dimension_numbers<[1], [0], [0], [1], [0, 0, 1, 1], [], []>} : vector<128x128xbf16>, vector<128x128xbf16>, vector<128x128xf32> -> vector<128x128xf32>
    %35 = arith.addf %30, %34 : vector<128x128xf32>
    %36 = vector.extract_strided_slice %11 {offsets = [16, 0], sizes = [128, 128], strides = [1, 1]} : vector<160x128xbf16> to vector<128x128xbf16>
    %c4 = arith.constant 4 : index
    %c0_24 = arith.constant 0 : index
    %c0_25 = arith.constant 0 : index
    %37 = vector.load %arg5[%c4, %c0_24, %c0_25] : memref<9x128x128xbf16, #tpu.memory_space<vmem>>, vector<1x128x128xbf16>
    %38 = vector.shape_cast %37 : vector<1x128x128xbf16> to vector<128x128xbf16>
    %cst_26 = arith.constant dense<0.000000e+00> : vector<128x128xf32>
    %39 = tpu.matmul %36, %38, %cst_26 {dimension_numbers = #tpu.dot_dimension_numbers<[1], [0], [0], [1], [0, 0, 1, 1], [], []>} : vector<128x128xbf16>, vector<128x128xbf16>, vector<128x128xf32> -> vector<128x128xf32>
    %40 = arith.addf %35, %39 : vector<128x128xf32>
    %41 = vector.extract_strided_slice %11 {offsets = [32, 0], sizes = [128, 128], strides = [1, 1]} : vector<160x128xbf16> to vector<128x128xbf16>
    %c7 = arith.constant 7 : index
    %c0_27 = arith.constant 0 : index
    %c0_28 = arith.constant 0 : index
    %42 = vector.load %arg5[%c7, %c0_27, %c0_28] : memref<9x128x128xbf16, #tpu.memory_space<vmem>>, vector<1x128x128xbf16>
    %43 = vector.shape_cast %42 : vector<1x128x128xbf16> to vector<128x128xbf16>
    %cst_29 = arith.constant dense<0.000000e+00> : vector<128x128xf32>
    %44 = tpu.matmul %41, %43, %cst_29 {dimension_numbers = #tpu.dot_dimension_numbers<[1], [0], [0], [1], [0, 0, 1, 1], [], []>} : vector<128x128xbf16>, vector<128x128xbf16>, vector<128x128xf32> -> vector<128x128xf32>
    %45 = arith.addf %40, %44 : vector<128x128xf32>
    %46 = vector.extract_strided_slice %45 {offsets = [1, 0], sizes = [127, 128], strides = [1, 1]} : vector<128x128xf32> to vector<127x128xf32>
    %cst_30 = arith.constant 0.000000e+00 : f32
    %47 = vector.broadcast %cst_30 : f32 to vector<1x128xf32>
    %48 = tpu.concatenate %46, %47 in 0 : vector<127x128xf32>, vector<1x128xf32> -> vector<128x128xf32>
    %49 = arith.addf %29, %48 : vector<128x128xf32>
    %cst_31 = arith.constant 0.000000e+00 : f32
    %50 = vector.broadcast %cst_31 : f32 to vector<128x128xf32>
    %51 = vector.extract_strided_slice %11 {offsets = [0, 0], sizes = [128, 128], strides = [1, 1]} : vector<160x128xbf16> to vector<128x128xbf16>
    %c2 = arith.constant 2 : index
    %c0_32 = arith.constant 0 : index
    %c0_33 = arith.constant 0 : index
    %52 = vector.load %arg5[%c2, %c0_32, %c0_33] : memref<9x128x128xbf16, #tpu.memory_space<vmem>>, vector<1x128x128xbf16>
    %53 = vector.shape_cast %52 : vector<1x128x128xbf16> to vector<128x128xbf16>
    %cst_34 = arith.constant dense<0.000000e+00> : vector<128x128xf32>
    %54 = tpu.matmul %51, %53, %cst_34 {dimension_numbers = #tpu.dot_dimension_numbers<[1], [0], [0], [1], [0, 0, 1, 1], [], []>} : vector<128x128xbf16>, vector<128x128xbf16>, vector<128x128xf32> -> vector<128x128xf32>
    %55 = arith.addf %50, %54 : vector<128x128xf32>
    %56 = vector.extract_strided_slice %11 {offsets = [16, 0], sizes = [128, 128], strides = [1, 1]} : vector<160x128xbf16> to vector<128x128xbf16>
    %c5 = arith.constant 5 : index
    %c0_35 = arith.constant 0 : index
    %c0_36 = arith.constant 0 : index
    %57 = vector.load %arg5[%c5, %c0_35, %c0_36] : memref<9x128x128xbf16, #tpu.memory_space<vmem>>, vector<1x128x128xbf16>
    %58 = vector.shape_cast %57 : vector<1x128x128xbf16> to vector<128x128xbf16>
    %cst_37 = arith.constant dense<0.000000e+00> : vector<128x128xf32>
    %59 = tpu.matmul %56, %58, %cst_37 {dimension_numbers = #tpu.dot_dimension_numbers<[1], [0], [0], [1], [0, 0, 1, 1], [], []>} : vector<128x128xbf16>, vector<128x128xbf16>, vector<128x128xf32> -> vector<128x128xf32>
    %60 = arith.addf %55, %59 : vector<128x128xf32>
    %61 = vector.extract_strided_slice %11 {offsets = [32, 0], sizes = [128, 128], strides = [1, 1]} : vector<160x128xbf16> to vector<128x128xbf16>
    %c8 = arith.constant 8 : index
    %c0_38 = arith.constant 0 : index
    %c0_39 = arith.constant 0 : index
    %62 = vector.load %arg5[%c8, %c0_38, %c0_39] : memref<9x128x128xbf16, #tpu.memory_space<vmem>>, vector<1x128x128xbf16>
    %63 = vector.shape_cast %62 : vector<1x128x128xbf16> to vector<128x128xbf16>
    %cst_40 = arith.constant dense<0.000000e+00> : vector<128x128xf32>
    %64 = tpu.matmul %61, %63, %cst_40 {dimension_numbers = #tpu.dot_dimension_numbers<[1], [0], [0], [1], [0, 0, 1, 1], [], []>} : vector<128x128xbf16>, vector<128x128xbf16>, vector<128x128xf32> -> vector<128x128xf32>
    %65 = arith.addf %60, %64 : vector<128x128xf32>
    %66 = vector.extract_strided_slice %65 {offsets = [2, 0], sizes = [126, 128], strides = [1, 1]} : vector<128x128xf32> to vector<126x128xf32>
    %cst_41 = arith.constant 0.000000e+00 : f32
    %67 = vector.broadcast %cst_41 : f32 to vector<2x128xf32>
    %68 = tpu.concatenate %66, %67 in 0 : vector<126x128xf32>, vector<2x128xf32> -> vector<128x128xf32>
    %69 = arith.addf %49, %68 : vector<128x128xf32>
    %c0_42 = arith.constant 0 : index
    %c0_43 = arith.constant 0 : index
    %70 = vector.load %arg6[%c0_42, %c0_43] : memref<2x128xf32, #tpu.memory_space<vmem>>, vector<1x128xf32>
    %71 = vector.broadcast %70 : vector<1x128xf32> to vector<128x128xf32>
    %72 = arith.mulf %69, %71 : vector<128x128xf32>
    %c1_44 = arith.constant 1 : index
    %c0_45 = arith.constant 0 : index
    %73 = vector.load %arg6[%c1_44, %c0_45] : memref<2x128xf32, #tpu.memory_space<vmem>>, vector<1x128xf32>
    %74 = vector.broadcast %73 : vector<1x128xf32> to vector<128x128xf32>
    %75 = arith.addf %72, %74 : vector<128x128xf32>
    %cst_46 = arith.constant 0.000000e+00 : f32
    %76 = vector.broadcast %cst_46 : f32 to vector<128x128xf32>
    %77 = arith.cmpf oge, %75, %76 : vector<128x128xf32>
    %cst_47 = arith.constant 2.000000e-01 : f32
    %78 = vector.broadcast %cst_47 : f32 to vector<128x128xf32>
    %79 = arith.mulf %78, %75 : vector<128x128xf32>
    %80 = arith.select %77, %75, %79 : vector<128x128xi1>, vector<128x128xf32>
    %c0_48 = arith.constant 0 : index
    %c0_49 = arith.constant 0 : index
    %81 = vector.load %arg7[%c0_48, %c0_49] : memref<432x128xbf16, #tpu.memory_space<vmem>>, vector<432x128xbf16>
    %82 = arith.truncf %80 : vector<128x128xf32> to vector<128x128xbf16>
    %cst_50 = arith.constant dense<0.000000e+00> : vector<432x128xf32>
    %83 = tpu.matmul %81, %82, %cst_50 {dimension_numbers = #tpu.dot_dimension_numbers<[1], [0], [0], [1], [0, 0, 1, 1], [], []>} : vector<432x128xbf16>, vector<128x128xbf16>, vector<432x128xf32> -> vector<432x128xf32>
    %84 = arith.truncf %83 : vector<432x128xf32> to vector<432x128xbf16>
    %cst_51 = arith.constant 0.000000e+00 : f32
    %85 = vector.broadcast %cst_51 : f32 to vector<384x128xf32>
    %cst_52 = arith.constant 0.000000e+00 : f32
    %86 = vector.broadcast %cst_52 : f32 to vector<384x128xf32>
    %87 = vector.extract_strided_slice %84 {offsets = [0, 0], sizes = [384, 128], strides = [1, 1]} : vector<432x128xbf16> to vector<384x128xbf16>
    %c0_53 = arith.constant 0 : index
    %c0_54 = arith.constant 0 : index
    %c0_55 = arith.constant 0 : index
    %88 = vector.load %arg8[%c0_53, %c0_54, %c0_55] : memref<9x128x128xbf16, #tpu.memory_space<vmem>>, vector<1x128x128xbf16>
    %89 = vector.shape_cast %88 : vector<1x128x128xbf16> to vector<128x128xbf16>
    %cst_56 = arith.constant dense<0.000000e+00> : vector<384x128xf32>
    %90 = tpu.matmul %87, %89, %cst_56 {dimension_numbers = #tpu.dot_dimension_numbers<[1], [0], [0], [1], [0, 0, 1, 1], [], []>} : vector<384x128xbf16>, vector<128x128xbf16>, vector<384x128xf32> -> vector<384x128xf32>
    %91 = arith.addf %86, %90 : vector<384x128xf32>
    %92 = vector.extract_strided_slice %84 {offsets = [24, 0], sizes = [384, 128], strides = [1, 1]} : vector<432x128xbf16> to vector<384x128xbf16>
    %c3_57 = arith.constant 3 : index
    %c0_58 = arith.constant 0 : index
    %c0_59 = arith.constant 0 : index
    %93 = vector.load %arg8[%c3_57, %c0_58, %c0_59] : memref<9x128x128xbf16, #tpu.memory_space<vmem>>, vector<1x128x128xbf16>
    %94 = vector.shape_cast %93 : vector<1x128x128xbf16> to vector<128x128xbf16>
    %cst_60 = arith.constant dense<0.000000e+00> : vector<384x128xf32>
    %95 = tpu.matmul %92, %94, %cst_60 {dimension_numbers = #tpu.dot_dimension_numbers<[1], [0], [0], [1], [0, 0, 1, 1], [], []>} : vector<384x128xbf16>, vector<128x128xbf16>, vector<384x128xf32> -> vector<384x128xf32>
    %96 = arith.addf %91, %95 : vector<384x128xf32>
    %97 = vector.extract_strided_slice %84 {offsets = [48, 0], sizes = [384, 128], strides = [1, 1]} : vector<432x128xbf16> to vector<384x128xbf16>
    %c6_61 = arith.constant 6 : index
    %c0_62 = arith.constant 0 : index
    %c0_63 = arith.constant 0 : index
    %98 = vector.load %arg8[%c6_61, %c0_62, %c0_63] : memref<9x128x128xbf16, #tpu.memory_space<vmem>>, vector<1x128x128xbf16>
    %99 = vector.shape_cast %98 : vector<1x128x128xbf16> to vector<128x128xbf16>
    %cst_64 = arith.constant dense<0.000000e+00> : vector<384x128xf32>
    %100 = tpu.matmul %97, %99, %cst_64 {dimension_numbers = #tpu.dot_dimension_numbers<[1], [0], [0], [1], [0, 0, 1, 1], [], []>} : vector<384x128xbf16>, vector<128x128xbf16>, vector<384x128xf32> -> vector<384x128xf32>
    %101 = arith.addf %96, %100 : vector<384x128xf32>
    %102 = arith.addf %85, %101 : vector<384x128xf32>
    %cst_65 = arith.constant 0.000000e+00 : f32
    %103 = vector.broadcast %cst_65 : f32 to vector<384x128xf32>
    %104 = vector.extract_strided_slice %84 {offsets = [0, 0], sizes = [384, 128], strides = [1, 1]} : vector<432x128xbf16> to vector<384x128xbf16>
    %c1_66 = arith.constant 1 : index
    %c0_67 = arith.constant 0 : index
    %c0_68 = arith.constant 0 : index
    %105 = vector.load %arg8[%c1_66, %c0_67, %c0_68] : memref<9x128x128xbf16, #tpu.memory_space<vmem>>, vector<1x128x128xbf16>
    %106 = vector.shape_cast %105 : vector<1x128x128xbf16> to vector<128x128xbf16>
    %cst_69 = arith.constant dense<0.000000e+00> : vector<384x128xf32>
    %107 = tpu.matmul %104, %106, %cst_69 {dimension_numbers = #tpu.dot_dimension_numbers<[1], [0], [0], [1], [0, 0, 1, 1], [], []>} : vector<384x128xbf16>, vector<128x128xbf16>, vector<384x128xf32> -> vector<384x128xf32>
    %108 = arith.addf %103, %107 : vector<384x128xf32>
    %109 = vector.extract_strided_slice %84 {offsets = [24, 0], sizes = [384, 128], strides = [1, 1]} : vector<432x128xbf16> to vector<384x128xbf16>
    %c4_70 = arith.constant 4 : index
    %c0_71 = arith.constant 0 : index
    %c0_72 = arith.constant 0 : index
    %110 = vector.load %arg8[%c4_70, %c0_71, %c0_72] : memref<9x128x128xbf16, #tpu.memory_space<vmem>>, vector<1x128x128xbf16>
    %111 = vector.shape_cast %110 : vector<1x128x128xbf16> to vector<128x128xbf16>
    %cst_73 = arith.constant dense<0.000000e+00> : vector<384x128xf32>
    %112 = tpu.matmul %109, %111, %cst_73 {dimension_numbers = #tpu.dot_dimension_numbers<[1], [0], [0], [1], [0, 0, 1, 1], [], []>} : vector<384x128xbf16>, vector<128x128xbf16>, vector<384x128xf32> -> vector<384x128xf32>
    %113 = arith.addf %108, %112 : vector<384x128xf32>
    %114 = vector.extract_strided_slice %84 {offsets = [48, 0], sizes = [384, 128], strides = [1, 1]} : vector<432x128xbf16> to vector<384x128xbf16>
    %c7_74 = arith.constant 7 : index
    %c0_75 = arith.constant 0 : index
    %c0_76 = arith.constant 0 : index
    %115 = vector.load %arg8[%c7_74, %c0_75, %c0_76] : memref<9x128x128xbf16, #tpu.memory_space<vmem>>, vector<1x128x128xbf16>
    %116 = vector.shape_cast %115 : vector<1x128x128xbf16> to vector<128x128xbf16>
    %cst_77 = arith.constant dense<0.000000e+00> : vector<384x128xf32>
    %117 = tpu.matmul %114, %116, %cst_77 {dimension_numbers = #tpu.dot_dimension_numbers<[1], [0], [0], [1], [0, 0, 1, 1], [], []>} : vector<384x128xbf16>, vector<128x128xbf16>, vector<384x128xf32> -> vector<384x128xf32>
    %118 = arith.addf %113, %117 : vector<384x128xf32>
    %119 = vector.extract_strided_slice %118 {offsets = [1, 0], sizes = [383, 128], strides = [1, 1]} : vector<384x128xf32> to vector<383x128xf32>
    %cst_78 = arith.constant 0.000000e+00 : f32
    %120 = vector.broadcast %cst_78 : f32 to vector<1x128xf32>
    %121 = tpu.concatenate %119, %120 in 0 : vector<383x128xf32>, vector<1x128xf32> -> vector<384x128xf32>
    %122 = arith.addf %102, %121 : vector<384x128xf32>
    %cst_79 = arith.constant 0.000000e+00 : f32
    %123 = vector.broadcast %cst_79 : f32 to vector<384x128xf32>
    %124 = vector.extract_strided_slice %84 {offsets = [0, 0], sizes = [384, 128], strides = [1, 1]} : vector<432x128xbf16> to vector<384x128xbf16>
    %c2_80 = arith.constant 2 : index
    %c0_81 = arith.constant 0 : index
    %c0_82 = arith.constant 0 : index
    %125 = vector.load %arg8[%c2_80, %c0_81, %c0_82] : memref<9x128x128xbf16, #tpu.memory_space<vmem>>, vector<1x128x128xbf16>
    %126 = vector.shape_cast %125 : vector<1x128x128xbf16> to vector<128x128xbf16>
    %cst_83 = arith.constant dense<0.000000e+00> : vector<384x128xf32>
    %127 = tpu.matmul %124, %126, %cst_83 {dimension_numbers = #tpu.dot_dimension_numbers<[1], [0], [0], [1], [0, 0, 1, 1], [], []>} : vector<384x128xbf16>, vector<128x128xbf16>, vector<384x128xf32> -> vector<384x128xf32>
    %128 = arith.addf %123, %127 : vector<384x128xf32>
    %129 = vector.extract_strided_slice %84 {offsets = [24, 0], sizes = [384, 128], strides = [1, 1]} : vector<432x128xbf16> to vector<384x128xbf16>
    %c5_84 = arith.constant 5 : index
    %c0_85 = arith.constant 0 : index
    %c0_86 = arith.constant 0 : index
    %130 = vector.load %arg8[%c5_84, %c0_85, %c0_86] : memref<9x128x128xbf16, #tpu.memory_space<vmem>>, vector<1x128x128xbf16>
    %131 = vector.shape_cast %130 : vector<1x128x128xbf16> to vector<128x128xbf16>
    %cst_87 = arith.constant dense<0.000000e+00> : vector<384x128xf32>
    %132 = tpu.matmul %129, %131, %cst_87 {dimension_numbers = #tpu.dot_dimension_numbers<[1], [0], [0], [1], [0, 0, 1, 1], [], []>} : vector<384x128xbf16>, vector<128x128xbf16>, vector<384x128xf32> -> vector<384x128xf32>
    %133 = arith.addf %128, %132 : vector<384x128xf32>
    %134 = vector.extract_strided_slice %84 {offsets = [48, 0], sizes = [384, 128], strides = [1, 1]} : vector<432x128xbf16> to vector<384x128xbf16>
    %c8_88 = arith.constant 8 : index
    %c0_89 = arith.constant 0 : index
    %c0_90 = arith.constant 0 : index
    %135 = vector.load %arg8[%c8_88, %c0_89, %c0_90] : memref<9x128x128xbf16, #tpu.memory_space<vmem>>, vector<1x128x128xbf16>
    %136 = vector.shape_cast %135 : vector<1x128x128xbf16> to vector<128x128xbf16>
    %cst_91 = arith.constant dense<0.000000e+00> : vector<384x128xf32>
    %137 = tpu.matmul %134, %136, %cst_91 {dimension_numbers = #tpu.dot_dimension_numbers<[1], [0], [0], [1], [0, 0, 1, 1], [], []>} : vector<384x128xbf16>, vector<128x128xbf16>, vector<384x128xf32> -> vector<384x128xf32>
    %138 = arith.addf %133, %137 : vector<384x128xf32>
    %139 = vector.extract_strided_slice %138 {offsets = [2, 0], sizes = [382, 128], strides = [1, 1]} : vector<384x128xf32> to vector<382x128xf32>
    %cst_92 = arith.constant 0.000000e+00 : f32
    %140 = vector.broadcast %cst_92 : f32 to vector<2x128xf32>
    %141 = tpu.concatenate %139, %140 in 0 : vector<382x128xf32>, vector<2x128xf32> -> vector<384x128xf32>
    %142 = arith.addf %122, %141 : vector<384x128xf32>
    %c0_93 = arith.constant 0 : index
    %c0_94 = arith.constant 0 : index
    %143 = vector.load %arg9[%c0_93, %c0_94] : memref<2x128xf32, #tpu.memory_space<vmem>>, vector<1x128xf32>
    %144 = vector.broadcast %143 : vector<1x128xf32> to vector<384x128xf32>
    %145 = arith.mulf %142, %144 : vector<384x128xf32>
    %c1_95 = arith.constant 1 : index
    %c0_96 = arith.constant 0 : index
    %146 = vector.load %arg9[%c1_95, %c0_96] : memref<2x128xf32, #tpu.memory_space<vmem>>, vector<1x128xf32>
    %147 = vector.broadcast %146 : vector<1x128xf32> to vector<384x128xf32>
    %148 = arith.addf %145, %147 : vector<384x128xf32>
    %cst_97 = arith.constant 0.000000e+00 : f32
    %149 = vector.broadcast %cst_97 : f32 to vector<384x128xf32>
    %150 = arith.cmpf oge, %148, %149 : vector<384x128xf32>
    %cst_98 = arith.constant 2.000000e-01 : f32
    %151 = vector.broadcast %cst_98 : f32 to vector<384x128xf32>
    %152 = arith.mulf %151, %148 : vector<384x128xf32>
    %153 = arith.select %150, %148, %152 : vector<384x128xi1>, vector<384x128xf32>
    %cst_99 = arith.constant 0.000000e+00 : f32
    %154 = vector.broadcast %cst_99 : f32 to vector<25x128xf32>
    %cst_100 = arith.constant 0.000000e+00 : f32
    %155 = vector.broadcast %cst_100 : f32 to vector<23x128xf32>
    %156 = tpu.concatenate %154, %153, %155 in 0 : vector<25x128xf32>, vector<384x128xf32>, vector<23x128xf32> -> vector<432x128xf32>
    %c0_101 = arith.constant 0 : index
    %c0_102 = arith.constant 0 : index
    %157 = vector.load %arg12[%c0_101, %c0_102] : memref<432x1xf32, #tpu.memory_space<vmem>>, vector<432x1xf32>
    %158 = vector.broadcast %157 : vector<432x1xf32> to vector<432x128xf32>
    %159 = arith.mulf %156, %158 : vector<432x128xf32>
    %160 = arith.truncf %159 : vector<432x128xf32> to vector<432x128xbf16>
    %cst_103 = arith.constant 0.000000e+00 : f32
    %161 = vector.broadcast %cst_103 : f32 to vector<384x128xf32>
    %cst_104 = arith.constant 0.000000e+00 : f32
    %162 = vector.broadcast %cst_104 : f32 to vector<384x128xf32>
    %163 = vector.extract_strided_slice %160 {offsets = [0, 0], sizes = [384, 128], strides = [1, 1]} : vector<432x128xbf16> to vector<384x128xbf16>
    %c0_105 = arith.constant 0 : index
    %c0_106 = arith.constant 0 : index
    %c0_107 = arith.constant 0 : index
    %164 = vector.load %arg10[%c0_105, %c0_106, %c0_107] : memref<9x128x128xbf16, #tpu.memory_space<vmem>>, vector<1x128x128xbf16>
    %165 = vector.shape_cast %164 : vector<1x128x128xbf16> to vector<128x128xbf16>
    %cst_108 = arith.constant dense<0.000000e+00> : vector<384x128xf32>
    %166 = tpu.matmul %163, %165, %cst_108 {dimension_numbers = #tpu.dot_dimension_numbers<[1], [0], [0], [1], [0, 0, 1, 1], [], []>} : vector<384x128xbf16>, vector<128x128xbf16>, vector<384x128xf32> -> vector<384x128xf32>
    %167 = arith.addf %162, %166 : vector<384x128xf32>
    %168 = vector.extract_strided_slice %160 {offsets = [24, 0], sizes = [384, 128], strides = [1, 1]} : vector<432x128xbf16> to vector<384x128xbf16>
    %c3_109 = arith.constant 3 : index
    %c0_110 = arith.constant 0 : index
    %c0_111 = arith.constant 0 : index
    %169 = vector.load %arg10[%c3_109, %c0_110, %c0_111] : memref<9x128x128xbf16, #tpu.memory_space<vmem>>, vector<1x128x128xbf16>
    %170 = vector.shape_cast %169 : vector<1x128x128xbf16> to vector<128x128xbf16>
    %cst_112 = arith.constant dense<0.000000e+00> : vector<384x128xf32>
    %171 = tpu.matmul %168, %170, %cst_112 {dimension_numbers = #tpu.dot_dimension_numbers<[1], [0], [0], [1], [0, 0, 1, 1], [], []>} : vector<384x128xbf16>, vector<128x128xbf16>, vector<384x128xf32> -> vector<384x128xf32>
    %172 = arith.addf %167, %171 : vector<384x128xf32>
    %173 = vector.extract_strided_slice %160 {offsets = [48, 0], sizes = [384, 128], strides = [1, 1]} : vector<432x128xbf16> to vector<384x128xbf16>
    %c6_113 = arith.constant 6 : index
    %c0_114 = arith.constant 0 : index
    %c0_115 = arith.constant 0 : index
    %174 = vector.load %arg10[%c6_113, %c0_114, %c0_115] : memref<9x128x128xbf16, #tpu.memory_space<vmem>>, vector<1x128x128xbf16>
    %175 = vector.shape_cast %174 : vector<1x128x128xbf16> to vector<128x128xbf16>
    %cst_116 = arith.constant dense<0.000000e+00> : vector<384x128xf32>
    %176 = tpu.matmul %173, %175, %cst_116 {dimension_numbers = #tpu.dot_dimension_numbers<[1], [0], [0], [1], [0, 0, 1, 1], [], []>} : vector<384x128xbf16>, vector<128x128xbf16>, vector<384x128xf32> -> vector<384x128xf32>
    %177 = arith.addf %172, %176 : vector<384x128xf32>
    %178 = arith.addf %161, %177 : vector<384x128xf32>
    %cst_117 = arith.constant 0.000000e+00 : f32
    %179 = vector.broadcast %cst_117 : f32 to vector<384x128xf32>
    %180 = vector.extract_strided_slice %160 {offsets = [0, 0], sizes = [384, 128], strides = [1, 1]} : vector<432x128xbf16> to vector<384x128xbf16>
    %c1_118 = arith.constant 1 : index
    %c0_119 = arith.constant 0 : index
    %c0_120 = arith.constant 0 : index
    %181 = vector.load %arg10[%c1_118, %c0_119, %c0_120] : memref<9x128x128xbf16, #tpu.memory_space<vmem>>, vector<1x128x128xbf16>
    %182 = vector.shape_cast %181 : vector<1x128x128xbf16> to vector<128x128xbf16>
    %cst_121 = arith.constant dense<0.000000e+00> : vector<384x128xf32>
    %183 = tpu.matmul %180, %182, %cst_121 {dimension_numbers = #tpu.dot_dimension_numbers<[1], [0], [0], [1], [0, 0, 1, 1], [], []>} : vector<384x128xbf16>, vector<128x128xbf16>, vector<384x128xf32> -> vector<384x128xf32>
    %184 = arith.addf %179, %183 : vector<384x128xf32>
    %185 = vector.extract_strided_slice %160 {offsets = [24, 0], sizes = [384, 128], strides = [1, 1]} : vector<432x128xbf16> to vector<384x128xbf16>
    %c4_122 = arith.constant 4 : index
    %c0_123 = arith.constant 0 : index
    %c0_124 = arith.constant 0 : index
    %186 = vector.load %arg10[%c4_122, %c0_123, %c0_124] : memref<9x128x128xbf16, #tpu.memory_space<vmem>>, vector<1x128x128xbf16>
    %187 = vector.shape_cast %186 : vector<1x128x128xbf16> to vector<128x128xbf16>
    %cst_125 = arith.constant dense<0.000000e+00> : vector<384x128xf32>
    %188 = tpu.matmul %185, %187, %cst_125 {dimension_numbers = #tpu.dot_dimension_numbers<[1], [0], [0], [1], [0, 0, 1, 1], [], []>} : vector<384x128xbf16>, vector<128x128xbf16>, vector<384x128xf32> -> vector<384x128xf32>
    %189 = arith.addf %184, %188 : vector<384x128xf32>
    %190 = vector.extract_strided_slice %160 {offsets = [48, 0], sizes = [384, 128], strides = [1, 1]} : vector<432x128xbf16> to vector<384x128xbf16>
    %c7_126 = arith.constant 7 : index
    %c0_127 = arith.constant 0 : index
    %c0_128 = arith.constant 0 : index
    %191 = vector.load %arg10[%c7_126, %c0_127, %c0_128] : memref<9x128x128xbf16, #tpu.memory_space<vmem>>, vector<1x128x128xbf16>
    %192 = vector.shape_cast %191 : vector<1x128x128xbf16> to vector<128x128xbf16>
    %cst_129 = arith.constant dense<0.000000e+00> : vector<384x128xf32>
    %193 = tpu.matmul %190, %192, %cst_129 {dimension_numbers = #tpu.dot_dimension_numbers<[1], [0], [0], [1], [0, 0, 1, 1], [], []>} : vector<384x128xbf16>, vector<128x128xbf16>, vector<384x128xf32> -> vector<384x128xf32>
    %194 = arith.addf %189, %193 : vector<384x128xf32>
    %195 = vector.extract_strided_slice %194 {offsets = [1, 0], sizes = [383, 128], strides = [1, 1]} : vector<384x128xf32> to vector<383x128xf32>
    %cst_130 = arith.constant 0.000000e+00 : f32
    %196 = vector.broadcast %cst_130 : f32 to vector<1x128xf32>
    %197 = tpu.concatenate %195, %196 in 0 : vector<383x128xf32>, vector<1x128xf32> -> vector<384x128xf32>
    %198 = arith.addf %178, %197 : vector<384x128xf32>
    %cst_131 = arith.constant 0.000000e+00 : f32
    %199 = vector.broadcast %cst_131 : f32 to vector<384x128xf32>
    %200 = vector.extract_strided_slice %160 {offsets = [0, 0], sizes = [384, 128], strides = [1, 1]} : vector<432x128xbf16> to vector<384x128xbf16>
    %c2_132 = arith.constant 2 : index
    %c0_133 = arith.constant 0 : index
    %c0_134 = arith.constant 0 : index
    %201 = vector.load %arg10[%c2_132, %c0_133, %c0_134] : memref<9x128x128xbf16, #tpu.memory_space<vmem>>, vector<1x128x128xbf16>
    %202 = vector.shape_cast %201 : vector<1x128x128xbf16> to vector<128x128xbf16>
    %cst_135 = arith.constant dense<0.000000e+00> : vector<384x128xf32>
    %203 = tpu.matmul %200, %202, %cst_135 {dimension_numbers = #tpu.dot_dimension_numbers<[1], [0], [0], [1], [0, 0, 1, 1], [], []>} : vector<384x128xbf16>, vector<128x128xbf16>, vector<384x128xf32> -> vector<384x128xf32>
    %204 = arith.addf %199, %203 : vector<384x128xf32>
    %205 = vector.extract_strided_slice %160 {offsets = [24, 0], sizes = [384, 128], strides = [1, 1]} : vector<432x128xbf16> to vector<384x128xbf16>
    %c5_136 = arith.constant 5 : index
    %c0_137 = arith.constant 0 : index
    %c0_138 = arith.constant 0 : index
    %206 = vector.load %arg10[%c5_136, %c0_137, %c0_138] : memref<9x128x128xbf16, #tpu.memory_space<vmem>>, vector<1x128x128xbf16>
    %207 = vector.shape_cast %206 : vector<1x128x128xbf16> to vector<128x128xbf16>
    %cst_139 = arith.constant dense<0.000000e+00> : vector<384x128xf32>
    %208 = tpu.matmul %205, %207, %cst_139 {dimension_numbers = #tpu.dot_dimension_numbers<[1], [0], [0], [1], [0, 0, 1, 1], [], []>} : vector<384x128xbf16>, vector<128x128xbf16>, vector<384x128xf32> -> vector<384x128xf32>
    %209 = arith.addf %204, %208 : vector<384x128xf32>
    %210 = vector.extract_strided_slice %160 {offsets = [48, 0], sizes = [384, 128], strides = [1, 1]} : vector<432x128xbf16> to vector<384x128xbf16>
    %c8_140 = arith.constant 8 : index
    %c0_141 = arith.constant 0 : index
    %c0_142 = arith.constant 0 : index
    %211 = vector.load %arg10[%c8_140, %c0_141, %c0_142] : memref<9x128x128xbf16, #tpu.memory_space<vmem>>, vector<1x128x128xbf16>
    %212 = vector.shape_cast %211 : vector<1x128x128xbf16> to vector<128x128xbf16>
    %cst_143 = arith.constant dense<0.000000e+00> : vector<384x128xf32>
    %213 = tpu.matmul %210, %212, %cst_143 {dimension_numbers = #tpu.dot_dimension_numbers<[1], [0], [0], [1], [0, 0, 1, 1], [], []>} : vector<384x128xbf16>, vector<128x128xbf16>, vector<384x128xf32> -> vector<384x128xf32>
    %214 = arith.addf %209, %213 : vector<384x128xf32>
    %215 = vector.extract_strided_slice %214 {offsets = [2, 0], sizes = [382, 128], strides = [1, 1]} : vector<384x128xf32> to vector<382x128xf32>
    %cst_144 = arith.constant 0.000000e+00 : f32
    %216 = vector.broadcast %cst_144 : f32 to vector<2x128xf32>
    %217 = tpu.concatenate %215, %216 in 0 : vector<382x128xf32>, vector<2x128xf32> -> vector<384x128xf32>
    %218 = arith.addf %198, %217 : vector<384x128xf32>
    %c0_145 = arith.constant 0 : index
    %c0_146 = arith.constant 0 : index
    %219 = vector.load %arg11[%c0_145, %c0_146] : memref<1x128xf32, #tpu.memory_space<vmem>>, vector<1x128xf32>
    %220 = vector.broadcast %219 : vector<1x128xf32> to vector<384x128xf32>
    %221 = arith.addf %218, %220 : vector<384x128xf32>
    %222 = math.tanh %221 : vector<384x128xf32>
    %223 = vector.extract_strided_slice %222 {offsets = [0, 0], sizes = [16, 128], strides = [1, 1]} : vector<384x128xf32> to vector<16x128xf32>
    %c0_147 = arith.constant 0 : index
    %c0_148 = arith.constant 0 : index
    %c0_149 = arith.constant 0 : index
    %224 = vector.load %arg13[%c0_147, %c0_148, %c0_149] : memref<1x256x128xf32, #tpu.memory_space<vmem>>, vector<1x16x128xf32>
    %225 = vector.shape_cast %224 : vector<1x16x128xf32> to vector<16x128xf32>
    %226 = vector.shape_cast %223 : vector<16x128xf32> to vector<1x16x128xf32>
    tpu.vector_store %arg13[%c0_147, %c0_148, %c0_149], %226 {strides = array<i32>} : memref<1x256x128xf32, #tpu.memory_space<vmem>>, vector<1x16x128xf32>,
    %227 = vector.extract_strided_slice %222 {offsets = [24, 0], sizes = [16, 128], strides = [1, 1]} : vector<384x128xf32> to vector<16x128xf32>
    %c0_150 = arith.constant 0 : index
    %c16 = arith.constant 16 : index
    %c0_151 = arith.constant 0 : index
    %228 = vector.load %arg13[%c0_150, %c16, %c0_151] : memref<1x256x128xf32, #tpu.memory_space<vmem>>, vector<1x16x128xf32>
    %229 = vector.shape_cast %228 : vector<1x16x128xf32> to vector<16x128xf32>
    %230 = vector.shape_cast %227 : vector<16x128xf32> to vector<1x16x128xf32>
    tpu.vector_store %arg13[%c0_150, %c16, %c0_151], %230 {strides = array<i32>} : memref<1x256x128xf32, #tpu.memory_space<vmem>>, vector<1x16x128xf32>,
    %231 = vector.extract_strided_slice %222 {offsets = [48, 0], sizes = [16, 128], strides = [1, 1]} : vector<384x128xf32> to vector<16x128xf32>
    %c0_152 = arith.constant 0 : index
    %c32 = arith.constant 32 : index
    %c0_153 = arith.constant 0 : index
    %232 = vector.load %arg13[%c0_152, %c32, %c0_153] : memref<1x256x128xf32, #tpu.memory_space<vmem>>, vector<1x16x128xf32>
    %233 = vector.shape_cast %232 : vector<1x16x128xf32> to vector<16x128xf32>
    %234 = vector.shape_cast %231 : vector<16x128xf32> to vector<1x16x128xf32>
    tpu.vector_store %arg13[%c0_152, %c32, %c0_153], %234 {strides = array<i32>} : memref<1x256x128xf32, #tpu.memory_space<vmem>>, vector<1x16x128xf32>,
    %235 = vector.extract_strided_slice %222 {offsets = [72, 0], sizes = [16, 128], strides = [1, 1]} : vector<384x128xf32> to vector<16x128xf32>
    %c0_154 = arith.constant 0 : index
    %c48 = arith.constant 48 : index
    %c0_155 = arith.constant 0 : index
    %236 = vector.load %arg13[%c0_154, %c48, %c0_155] : memref<1x256x128xf32, #tpu.memory_space<vmem>>, vector<1x16x128xf32>
    %237 = vector.shape_cast %236 : vector<1x16x128xf32> to vector<16x128xf32>
    %238 = vector.shape_cast %235 : vector<16x128xf32> to vector<1x16x128xf32>
    tpu.vector_store %arg13[%c0_154, %c48, %c0_155], %238 {strides = array<i32>} : memref<1x256x128xf32, #tpu.memory_space<vmem>>, vector<1x16x128xf32>,
    %239 = vector.extract_strided_slice %222 {offsets = [96, 0], sizes = [16, 128], strides = [1, 1]} : vector<384x128xf32> to vector<16x128xf32>
    %c0_156 = arith.constant 0 : index
    %c64 = arith.constant 64 : index
    %c0_157 = arith.constant 0 : index
    %240 = vector.load %arg13[%c0_156, %c64, %c0_157] : memref<1x256x128xf32, #tpu.memory_space<vmem>>, vector<1x16x128xf32>
    %241 = vector.shape_cast %240 : vector<1x16x128xf32> to vector<16x128xf32>
    %242 = vector.shape_cast %239 : vector<16x128xf32> to vector<1x16x128xf32>
    tpu.vector_store %arg13[%c0_156, %c64, %c0_157], %242 {strides = array<i32>} : memref<1x256x128xf32, #tpu.memory_space<vmem>>, vector<1x16x128xf32>,
    %243 = vector.extract_strided_slice %222 {offsets = [120, 0], sizes = [16, 128], strides = [1, 1]} : vector<384x128xf32> to vector<16x128xf32>
    %c0_158 = arith.constant 0 : index
    %c80 = arith.constant 80 : index
    %c0_159 = arith.constant 0 : index
    %244 = vector.load %arg13[%c0_158, %c80, %c0_159] : memref<1x256x128xf32, #tpu.memory_space<vmem>>, vector<1x16x128xf32>
    %245 = vector.shape_cast %244 : vector<1x16x128xf32> to vector<16x128xf32>
    %246 = vector.shape_cast %243 : vector<16x128xf32> to vector<1x16x128xf32>
    tpu.vector_store %arg13[%c0_158, %c80, %c0_159], %246 {strides = array<i32>} : memref<1x256x128xf32, #tpu.memory_space<vmem>>, vector<1x16x128xf32>,
    %247 = vector.extract_strided_slice %222 {offsets = [144, 0], sizes = [16, 128], strides = [1, 1]} : vector<384x128xf32> to vector<16x128xf32>
    %c0_160 = arith.constant 0 : index
    %c96 = arith.constant 96 : index
    %c0_161 = arith.constant 0 : index
    %248 = vector.load %arg13[%c0_160, %c96, %c0_161] : memref<1x256x128xf32, #tpu.memory_space<vmem>>, vector<1x16x128xf32>
    %249 = vector.shape_cast %248 : vector<1x16x128xf32> to vector<16x128xf32>
    %250 = vector.shape_cast %247 : vector<16x128xf32> to vector<1x16x128xf32>
    tpu.vector_store %arg13[%c0_160, %c96, %c0_161], %250 {strides = array<i32>} : memref<1x256x128xf32, #tpu.memory_space<vmem>>, vector<1x16x128xf32>,
    %251 = vector.extract_strided_slice %222 {offsets = [168, 0], sizes = [16, 128], strides = [1, 1]} : vector<384x128xf32> to vector<16x128xf32>
    %c0_162 = arith.constant 0 : index
    %c112 = arith.constant 112 : index
    %c0_163 = arith.constant 0 : index
    %252 = vector.load %arg13[%c0_162, %c112, %c0_163] : memref<1x256x128xf32, #tpu.memory_space<vmem>>, vector<1x16x128xf32>
    %253 = vector.shape_cast %252 : vector<1x16x128xf32> to vector<16x128xf32>
    %254 = vector.shape_cast %251 : vector<16x128xf32> to vector<1x16x128xf32>
    tpu.vector_store %arg13[%c0_162, %c112, %c0_163], %254 {strides = array<i32>} : memref<1x256x128xf32, #tpu.memory_space<vmem>>, vector<1x16x128xf32>,
    %255 = vector.extract_strided_slice %222 {offsets = [192, 0], sizes = [16, 128], strides = [1, 1]} : vector<384x128xf32> to vector<16x128xf32>
    %c0_164 = arith.constant 0 : index
    %c128 = arith.constant 128 : index
    %c0_165 = arith.constant 0 : index
    %256 = vector.load %arg13[%c0_164, %c128, %c0_165] : memref<1x256x128xf32, #tpu.memory_space<vmem>>, vector<1x16x128xf32>
    %257 = vector.shape_cast %256 : vector<1x16x128xf32> to vector<16x128xf32>
    %258 = vector.shape_cast %255 : vector<16x128xf32> to vector<1x16x128xf32>
    tpu.vector_store %arg13[%c0_164, %c128, %c0_165], %258 {strides = array<i32>} : memref<1x256x128xf32, #tpu.memory_space<vmem>>, vector<1x16x128xf32>,
    %259 = vector.extract_strided_slice %222 {offsets = [216, 0], sizes = [16, 128], strides = [1, 1]} : vector<384x128xf32> to vector<16x128xf32>
    %c0_166 = arith.constant 0 : index
    %c144 = arith.constant 144 : index
    %c0_167 = arith.constant 0 : index
    %260 = vector.load %arg13[%c0_166, %c144, %c0_167] : memref<1x256x128xf32, #tpu.memory_space<vmem>>, vector<1x16x128xf32>
    %261 = vector.shape_cast %260 : vector<1x16x128xf32> to vector<16x128xf32>
    %262 = vector.shape_cast %259 : vector<16x128xf32> to vector<1x16x128xf32>
    tpu.vector_store %arg13[%c0_166, %c144, %c0_167], %262 {strides = array<i32>} : memref<1x256x128xf32, #tpu.memory_space<vmem>>, vector<1x16x128xf32>,
    %263 = vector.extract_strided_slice %222 {offsets = [240, 0], sizes = [16, 128], strides = [1, 1]} : vector<384x128xf32> to vector<16x128xf32>
    %c0_168 = arith.constant 0 : index
    %c160 = arith.constant 160 : index
    %c0_169 = arith.constant 0 : index
    %264 = vector.load %arg13[%c0_168, %c160, %c0_169] : memref<1x256x128xf32, #tpu.memory_space<vmem>>, vector<1x16x128xf32>
    %265 = vector.shape_cast %264 : vector<1x16x128xf32> to vector<16x128xf32>
    %266 = vector.shape_cast %263 : vector<16x128xf32> to vector<1x16x128xf32>
    tpu.vector_store %arg13[%c0_168, %c160, %c0_169], %266 {strides = array<i32>} : memref<1x256x128xf32, #tpu.memory_space<vmem>>, vector<1x16x128xf32>,
    %267 = vector.extract_strided_slice %222 {offsets = [264, 0], sizes = [16, 128], strides = [1, 1]} : vector<384x128xf32> to vector<16x128xf32>
    %c0_170 = arith.constant 0 : index
    %c176 = arith.constant 176 : index
    %c0_171 = arith.constant 0 : index
    %268 = vector.load %arg13[%c0_170, %c176, %c0_171] : memref<1x256x128xf32, #tpu.memory_space<vmem>>, vector<1x16x128xf32>
    %269 = vector.shape_cast %268 : vector<1x16x128xf32> to vector<16x128xf32>
    %270 = vector.shape_cast %267 : vector<16x128xf32> to vector<1x16x128xf32>
    tpu.vector_store %arg13[%c0_170, %c176, %c0_171], %270 {strides = array<i32>} : memref<1x256x128xf32, #tpu.memory_space<vmem>>, vector<1x16x128xf32>,
    %271 = vector.extract_strided_slice %222 {offsets = [288, 0], sizes = [16, 128], strides = [1, 1]} : vector<384x128xf32> to vector<16x128xf32>
    %c0_172 = arith.constant 0 : index
    %c192 = arith.constant 192 : index
    %c0_173 = arith.constant 0 : index
    %272 = vector.load %arg13[%c0_172, %c192, %c0_173] : memref<1x256x128xf32, #tpu.memory_space<vmem>>, vector<1x16x128xf32>
    %273 = vector.shape_cast %272 : vector<1x16x128xf32> to vector<16x128xf32>
    %274 = vector.shape_cast %271 : vector<16x128xf32> to vector<1x16x128xf32>
    tpu.vector_store %arg13[%c0_172, %c192, %c0_173], %274 {strides = array<i32>} : memref<1x256x128xf32, #tpu.memory_space<vmem>>, vector<1x16x128xf32>,
    %275 = vector.extract_strided_slice %222 {offsets = [312, 0], sizes = [16, 128], strides = [1, 1]} : vector<384x128xf32> to vector<16x128xf32>
    %c0_174 = arith.constant 0 : index
    %c208 = arith.constant 208 : index
    %c0_175 = arith.constant 0 : index
    %276 = vector.load %arg13[%c0_174, %c208, %c0_175] : memref<1x256x128xf32, #tpu.memory_space<vmem>>, vector<1x16x128xf32>
    %277 = vector.shape_cast %276 : vector<1x16x128xf32> to vector<16x128xf32>
    %278 = vector.shape_cast %275 : vector<16x128xf32> to vector<1x16x128xf32>
    tpu.vector_store %arg13[%c0_174, %c208, %c0_175], %278 {strides = array<i32>} : memref<1x256x128xf32, #tpu.memory_space<vmem>>, vector<1x16x128xf32>,
    %279 = vector.extract_strided_slice %222 {offsets = [336, 0], sizes = [16, 128], strides = [1, 1]} : vector<384x128xf32> to vector<16x128xf32>
    %c0_176 = arith.constant 0 : index
    %c224 = arith.constant 224 : index
    %c0_177 = arith.constant 0 : index
    %280 = vector.load %arg13[%c0_176, %c224, %c0_177] : memref<1x256x128xf32, #tpu.memory_space<vmem>>, vector<1x16x128xf32>
    %281 = vector.shape_cast %280 : vector<1x16x128xf32> to vector<16x128xf32>
    %282 = vector.shape_cast %279 : vector<16x128xf32> to vector<1x16x128xf32>
    tpu.vector_store %arg13[%c0_176, %c224, %c0_177], %282 {strides = array<i32>} : memref<1x256x128xf32, #tpu.memory_space<vmem>>, vector<1x16x128xf32>,
    %283 = vector.extract_strided_slice %222 {offsets = [360, 0], sizes = [16, 128], strides = [1, 1]} : vector<384x128xf32> to vector<16x128xf32>
    %c0_178 = arith.constant 0 : index
    %c240 = arith.constant 240 : index
    %c0_179 = arith.constant 0 : index
    %284 = vector.load %arg13[%c0_178, %c240, %c0_179] : memref<1x256x128xf32, #tpu.memory_space<vmem>>, vector<1x16x128xf32>
    %285 = vector.shape_cast %284 : vector<1x16x128xf32> to vector<16x128xf32>
    %286 = vector.shape_cast %283 : vector<16x128xf32> to vector<1x16x128xf32>
    tpu.vector_store %arg13[%c0_178, %c240, %c0_179], %286 {strides = array<i32>} : memref<1x256x128xf32, #tpu.memory_space<vmem>>, vector<1x16x128xf32>,
    return
  }
  func.func @transform_0(%arg0: i32) -> (i32, i32, i32) {
    %c0_i32 = arith.constant 0 : i32
    %c0_i32_0 = arith.constant 0 : i32
    %c0_i32_1 = arith.constant 0 : i32
    return %arg0, %c0_i32, %c0_i32_0 : i32, i32, i32
  }
  func.func @transform_1(%arg0: i32) -> (i32, i32) {
    %c0_i32 = arith.constant 0 : i32
    %c0_i32_0 = arith.constant 0 : i32
    %c0_i32_1 = arith.constant 0 : i32
    return %c0_i32, %c0_i32_0 : i32, i32
  }
  func.func @transform_2(%arg0: i32) -> (i32, i32) {
    %c0_i32 = arith.constant 0 : i32
    %c0_i32_0 = arith.constant 0 : i32
    %c0_i32_1 = arith.constant 0 : i32
    return %c0_i32, %c0_i32_0 : i32, i32
  }
  func.func @transform_3(%arg0: i32) -> (i32, i32) {
    %c0_i32 = arith.constant 0 : i32
    %c0_i32_0 = arith.constant 0 : i32
    %c0_i32_1 = arith.constant 0 : i32
    return %c0_i32, %c0_i32_0 : i32, i32
  }
  func.func @transform_4(%arg0: i32) -> (i32, i32, i32) {
    %c0_i32 = arith.constant 0 : i32
    %c0_i32_0 = arith.constant 0 : i32
    %c0_i32_1 = arith.constant 0 : i32
    %c0_i32_2 = arith.constant 0 : i32
    return %c0_i32, %c0_i32_0, %c0_i32_1 : i32, i32, i32
  }
  func.func @transform_5(%arg0: i32) -> (i32, i32) {
    %c0_i32 = arith.constant 0 : i32
    %c0_i32_0 = arith.constant 0 : i32
    %c0_i32_1 = arith.constant 0 : i32
    return %c0_i32, %c0_i32_0 : i32, i32
  }
  func.func @transform_6(%arg0: i32) -> (i32, i32) {
    %c0_i32 = arith.constant 0 : i32
    %c0_i32_0 = arith.constant 0 : i32
    %c0_i32_1 = arith.constant 0 : i32
    return %c0_i32, %c0_i32_0 : i32, i32
  }
  func.func @transform_7(%arg0: i32) -> (i32, i32, i32) {
    %c0_i32 = arith.constant 0 : i32
    %c0_i32_0 = arith.constant 0 : i32
    %c0_i32_1 = arith.constant 0 : i32
    %c0_i32_2 = arith.constant 0 : i32
    return %c0_i32, %c0_i32_0, %c0_i32_1 : i32, i32, i32
  }
  func.func @transform_8(%arg0: i32) -> (i32, i32) {
    %c0_i32 = arith.constant 0 : i32
    %c0_i32_0 = arith.constant 0 : i32
    %c0_i32_1 = arith.constant 0 : i32
    return %c0_i32, %c0_i32_0 : i32, i32
  }
  func.func @transform_9(%arg0: i32) -> (i32, i32, i32) {
    %c0_i32 = arith.constant 0 : i32
    %c0_i32_0 = arith.constant 0 : i32
    %c0_i32_1 = arith.constant 0 : i32
    %c0_i32_2 = arith.constant 0 : i32
    return %c0_i32, %c0_i32_0, %c0_i32_1 : i32, i32, i32
  }
  func.func @transform_10(%arg0: i32) -> (i32, i32) {
    %c0_i32 = arith.constant 0 : i32
    %c0_i32_0 = arith.constant 0 : i32
    %c0_i32_1 = arith.constant 0 : i32
    return %c0_i32, %c0_i32_0 : i32, i32
  }
  func.func @transform_11(%arg0: i32) -> (i32, i32) {
    %c0_i32 = arith.constant 0 : i32
    %c0_i32_0 = arith.constant 0 : i32
    %c0_i32_1 = arith.constant 0 : i32
    return %c0_i32, %c0_i32_0 : i32, i32
  }
  func.func @transform_12(%arg0: i32) -> (i32, i32, i32) {
    %c0_i32 = arith.constant 0 : i32
    %c0_i32_0 = arith.constant 0 : i32
    %c0_i32_1 = arith.constant 0 : i32
    return %arg0, %c0_i32, %c0_i32_0 : i32, i32, i32
  }
}

</mosaic_0001>

<llo_original>
// kernel: mul.1
$region0: #{mul.1}
  #allocation0 [shape = 's32[1]{0}', space=sflag, size = 0x4, scoped, tag = 'scoped memory for mul.1']
  %s0 = inlined_call_operand.vmem [shape: f32[2,32], index: 0, kind: input, shape index: {}]
  %s1 = inlined_call_operand.vmem [shape: f32[2,32], index: 1, kind: input, shape index: {}]
  %s2 = inlined_call_operand.vmem [shape: f32[2,32], index: 2, kind: output, shape index: {}]
  %v3 = vld [vmem:[%s0] sm:$0x3]
  %v4 = vld [vmem:[%s1] sm:$0x3]
  %5 = xla_tuple %v3, %v4
  %6 = xla_tuple %5
  %v7 = vmul.f32 %v3, %v4
  %8 = xla_tuple %v7
  %9 = vst [vmem:[%s2] sm:$0x3] %v7

// kernel: forward.1
$region0: #{forward.1}
  #allocation0 [shape = 'u32[]', space=smem, size = 0x4, offset = 0x4, fixed_abs, tag = 'smem constant byte address 0x4 - core index']
  #allocation1 [shape = 'u32[72,128]{1,0:T(1,128)}', space=vmem, size = 0x9000, scoped, tag = 'internal scratch']
  %s0 = inlined_call_operand.vmem [shape: f32[2,1,512], index: 0, kind: input, shape index: {}]
  %s1 = inlined_call_operand.vmem [shape: bf16[160,512], index: 1, kind: input, shape index: {}]
  %s2 = inlined_call_operand.hbm [shape: bf16[512,128], index: 2, kind: input, shape index: {}]
  %s3 = inlined_call_operand.hbm [shape: f32[160,128], index: 3, kind: input, shape index: {}]
  %s4 = inlined_call_operand.hbm [shape: bf16[9,128,128], index: 4, kind: input, shape index: {}]
  %s5 = inlined_call_operand.vmem [shape: f32[2,128], index: 5, kind: input, shape index: {}]
  %s6 = inlined_call_operand.hbm [shape: bf16[432,128], index: 6, kind: input, shape index: {}]
  %s7 = inlined_call_operand.hbm [shape: bf16[9,128,128], index: 7, kind: input, shape index: {}]
  %s8 = inlined_call_operand.vmem [shape: f32[2,128], index: 8, kind: input, shape index: {}]
  %s9 = inlined_call_operand.hbm [shape: bf16[9,128,128], index: 9, kind: input, shape index: {}]
  %s10 = inlined_call_operand.vmem [shape: f32[1,128], index: 10, kind: input, shape index: {}]
  %s11 = inlined_call_operand.vmem [shape: f32[432,1], index: 11, kind: input, shape index: {}]
  %s12 = inlined_call_operand.vmem [shape: f32[2,256,128], index: 12, kind: output, shape index: {}]
  %s13 = sld [smem:[#allocation0]]
  $region105: #{forward.1} parent=0
    _
  %s15 = ssub.s32 1, %s13
  %s16 = scalar_select 0, %s15, %s13
  $region1: #{forward.1} parent=0
    #allocation2 [shape = 'u8[131072]{0}', space=vmem, size = 0x20000, scoped, tag = 'input window, operand 2, single buffered']
    #allocation3 [shape = 's32[2]{0}', space=sflag, size = 0x8, scoped, tag = 'scoped memory for forward.1']
    #allocation4 [shape = 'u8[81920]{0}', space=vmem, size = 0x14000, scoped, tag = 'input window, operand 3, single buffered']
    #allocation5 [shape = 's32[1]{0}', space=sflag, size = 0x4, scoped, tag = 'scoped memory for forward.1']
    #allocation6 [shape = 'u8[294912]{0}', space=vmem, size = 0x48000, scoped, tag = 'input window, operand 4, single buffered']
    #allocation7 [shape = 'u8[110592]{0}', space=vmem, size = 0x1b000, scoped, tag = 'input window, operand 6, single buffered']
    #allocation8 [shape = 's32[1]{0}', space=sflag, size = 0x4, scoped, tag = 'scoped memory for forward.1']
    #allocation9 [shape = 'u8[294912]{0}', space=vmem, size = 0x48000, scoped, tag = 'input window, operand 7, single buffered']
    #allocation10 [shape = 'u8[294912]{0}', space=vmem, size = 0x48000, scoped, tag = 'input window, operand 9, single buffered']
    #allocation11 [shape = 's32[1]{0}', space=sflag, size = 0x4, scoped, tag = 'scoped memory for forward.1']
    %17 = vsyncpa [#allocation3], 0
    %18 = vsyncpa [#allocation5], 0
    %19 = vsyncpa [#allocation8], 0
    %20 = vsyncpa [#allocation11], 0
    loop: start=0, step=1, limit=4
    $region2: #{forward.1} parent=1 // loop_pre_header
      _
    $region3: #{forward.1} parent=1 // loop_header
      %s22 = sphi 0, %s26
      %p23 = scmp.ge.s32.totalorder %s22, 4
      %s32 = sphi 0, %s34
      %s35 = sphi 0, %s32
      %s36 = sphi 0, %s35
      %s52 = sphi 0, %s36
      %s56 = sphi 0, %s56
      %s58 = sphi 0, %s56
      %s59 = sphi 0, %s58
      %s73 = sphi 0, %s59
      %s77 = sphi 0, %s77
      %s79 = sphi 0, %s77
      %s80 = sphi 0, %s79
      %s94 = sphi 0, %s80
      %s98 = sphi 0, %s98
      %s100 = sphi 0, %s98
      %s101 = sphi 0, %s100
      %s115 = sphi 0, %s101
      %s119 = sphi 0, %s119
      %s121 = sphi 0, %s119
      %s122 = sphi 0, %s121
      %s136 = sphi 0, %s122
      %s140 = sphi 0, %s140
      %s142 = sphi 0, %s140
      %s143 = sphi 0, %s142
      %s157 = sphi 0, %s143
      %s161 = sphi 0, %s161
      %s163 = sphi 0, %s161
      %s164 = sphi 0, %s163
      %s178 = sphi 0, %s164
      %s182 = sphi 0, %s182
      %s184 = sphi 0, %s182
      %s185 = sphi 0, %s184
      %s199 = sphi 0, %s185
      %s203 = sphi 0, %s203
      %s205 = sphi 0, %s203
      %s206 = sphi 0, %s205
      %s220 = sphi 0, %s206
      %s224 = sphi 0, %s224
      %s226 = sphi 0, %s224
      %s227 = sphi 0, %s226
      %s241 = sphi 0, %s227
      %s245 = sphi 0, %s245
      %s247 = sphi 0, %s245
      %s248 = sphi 0, %s247
      %s262 = sphi 0, %s248
      %s266 = sphi 0, %s266
      %s268 = sphi 0, %s266
      %s269 = sphi 0, %s268
      %s283 = sphi 0, %s269
      %s289 = sphi 0, %s291
      %s292 = sphi 0, %s289
      %s293 = sphi 0, %s292
      %s309 = sphi 0, %s293
    $region4: #{forward.1} parent=1 // loop_header_branch
      %25 = sbr.rel (%p23) target = $region8
    $region5: #{forward.1} parent=1 // loop_body
      %s27 = ssub.s32 %s22, 1
      %s28 = ssub.s32 %s22, 2
      %s29 = sadd.s32 %s22, 1
      %s30 = ssub.s32 %s22, %s29
      %p31 = scmp.eq.s32.totalorder %s30, 0
      %s33 = sadd.s32 %s32, 1
      %s34 = scalar_select %p31, %s32, %s33
      %p37 = pneg %p31
      %p38 = scmp.eq.s32.totalorder %s22, 1
      %p39 = por %p37, %p38
      %p40 = scmp.ne.s32.totalorder %s32, %s35
      %p41 = scmp.eq.s32.totalorder %s22, 0
      %p42 = por %p40, %p41
      %p43 = scmp.ne.s32.totalorder %s32, %s35
      %p44 = scmp.eq.s32.totalorder %s27, 1
      %p45 = por %p43, %p44
      %p46 = scmp.ne.s32.totalorder %s35, %s36
      %p47 = scmp.eq.s32.totalorder %s27, 0
      %p48 = por %p46, %p47
      %p49 = scmp.ne.s32.totalorder %s35, %s36
      %p50 = scmp.eq.s32.totalorder %s28, 1
      %p51 = por %p49, %p50
      %p53 = scmp.ne.s32.totalorder %s36, %s52
      %p54 = scmp.eq.s32.totalorder %s28, 0
      %p55 = por %p53, %p54
      %s57 = sadd.s32 %s56, 1
      %p60 = scmp.eq.s32.totalorder %s22, 1
      %p61 = scmp.ne.s32.totalorder %s56, %s58
      %p62 = scmp.eq.s32.totalorder %s22, 0
      %p63 = por %p61, %p62
      %p64 = scmp.ne.s32.totalorder %s56, %s58
      %p65 = scmp.eq.s32.totalorder %s27, 1
      %p66 = por %p64, %p65
      %p67 = scmp.ne.s32.totalorder %s58, %s59
      %p68 = scmp.eq.s32.totalorder %s27, 0
      %p69 = por %p67, %p68
      %p70 = scmp.ne.s32.totalorder %s58, %s59
      %p71 = scmp.eq.s32.totalorder %s28, 1
      %p72 = por %p70, %p71
      %p74 = scmp.ne.s32.totalorder %s59, %s73
      %p75 = scmp.eq.s32.totalorder %s28, 0
      %p76 = por %p74, %p75
      %s78 = sadd.s32 %s77, 1
      %p81 = scmp.eq.s32.totalorder %s22, 1
      %p82 = scmp.ne.s32.totalorder %s77, %s79
      %p83 = scmp.eq.s32.totalorder %s22, 0
      %p84 = por %p82, %p83
      %p85 = scmp.ne.s32.totalorder %s77, %s79
      %p86 = scmp.eq.s32.totalorder %s27, 1
      %p87 = por %p85, %p86
      %p88 = scmp.ne.s32.totalorder %s79, %s80
      %p89 = scmp.eq.s32.totalorder %s27, 0
      %p90 = por %p88, %p89
      %p91 = scmp.ne.s32.totalorder %s79, %s80
      %p92 = scmp.eq.s32.totalorder %s28, 1
      %p93 = por %p91, %p92
      %p95 = scmp.ne.s32.totalorder %s80, %s94
      %p96 = scmp.eq.s32.totalorder %s28, 0
      %p97 = por %p95, %p96
      %s99 = sadd.s32 %s98, 1
      %p102 = scmp.eq.s32.totalorder %s22, 1
      %p103 = scmp.ne.s32.totalorder %s98, %s100
      %p104 = scmp.eq.s32.totalorder %s22, 0
      %p105 = por %p103, %p104
      %p106 = scmp.ne.s32.totalorder %s98, %s100
      %p107 = scmp.eq.s32.totalorder %s27, 1
      %p108 = por %p106, %p107
      %p109 = scmp.ne.s32.totalorder %s100, %s101
      %p110 = scmp.eq.s32.totalorder %s27, 0
      %p111 = por %p109, %p110
      %p112 = scmp.ne.s32.totalorder %s100, %s101
      %p113 = scmp.eq.s32.totalorder %s28, 1
      %p114 = por %p112, %p113
      %p116 = scmp.ne.s32.totalorder %s101, %s115
      %p117 = scmp.eq.s32.totalorder %s28, 0
      %p118 = por %p116, %p117
      %s120 = sadd.s32 %s119, 1
      %p123 = scmp.eq.s32.totalorder %s22, 1
      %p124 = scmp.ne.s32.totalorder %s119, %s121
      %p125 = scmp.eq.s32.totalorder %s22, 0
      %p126 = por %p124, %p125
      %p127 = scmp.ne.s32.totalorder %s119, %s121
      %p128 = scmp.eq.s32.totalorder %s27, 1
      %p129 = por %p127, %p128
      %p130 = scmp.ne.s32.totalorder %s121, %s122
      %p131 = scmp.eq.s32.totalorder %s27, 0
      %p132 = por %p130, %p131
      %p133 = scmp.ne.s32.totalorder %s121, %s122
      %p134 = scmp.eq.s32.totalorder %s28, 1
      %p135 = por %p133, %p134
      %p137 = scmp.ne.s32.totalorder %s122, %s136
      %p138 = scmp.eq.s32.totalorder %s28, 0
      %p139 = por %p137, %p138
      %s141 = sadd.s32 %s140, 1
      %p144 = scmp.eq.s32.totalorder %s22, 1
      %p145 = scmp.ne.s32.totalorder %s140, %s142
      %p146 = scmp.eq.s32.totalorder %s22, 0
      %p147 = por %p145, %p146
      %p148 = scmp.ne.s32.totalorder %s140, %s142
      %p149 = scmp.eq.s32.totalorder %s27, 1
      %p150 = por %p148, %p149
      %p151 = scmp.ne.s32.totalorder %s142, %s143
      %p152 = scmp.eq.s32.totalorder %s27, 0
      %p153 = por %p151, %p152
      %p154 = scmp.ne.s32.totalorder %s142, %s143
      %p155 = scmp.eq.s32.totalorder %s28, 1
      %p156 = por %p154, %p155
      %p158 = scmp.ne.s32.totalorder %s143, %s157
      %p159 = scmp.eq.s32.totalorder %s28, 0
      %p160 = por %p158, %p159
      %s162 = sadd.s32 %s161, 1
      %p165 = scmp.eq.s32.totalorder %s22, 1
      %p166 = scmp.ne.s32.totalorder %s161, %s163
      %p167 = scmp.eq.s32.totalorder %s22, 0
      %p168 = por %p166, %p167
      %p169 = scmp.ne.s32.totalorder %s161, %s163
      %p170 = scmp.eq.s32.totalorder %s27, 1
      %p171 = por %p169, %p170
      %p172 = scmp.ne.s32.totalorder %s163, %s164
      %p173 = scmp.eq.s32.totalorder %s27, 0
      %p174 = por %p172, %p173
      %p175 = scmp.ne.s32.totalorder %s163, %s164
      %p176 = scmp.eq.s32.totalorder %s28, 1
      %p177 = por %p175, %p176
      %p179 = scmp.ne.s32.totalorder %s164, %s178
      %p180 = scmp.eq.s32.totalorder %s28, 0
      %p181 = por %p179, %p180
      %s183 = sadd.s32 %s182, 1
      %p186 = scmp.eq.s32.totalorder %s22, 1
      %p187 = scmp.ne.s32.totalorder %s182, %s184
      %p188 = scmp.eq.s32.totalorder %s22, 0
      %p189 = por %p187, %p188
      %p190 = scmp.ne.s32.totalorder %s182, %s184
      %p191 = scmp.eq.s32.totalorder %s27, 1
      %p192 = por %p190, %p191
      %p193 = scmp.ne.s32.totalorder %s184, %s185
      %p194 = scmp.eq.s32.totalorder %s27, 0
      %p195 = por %p193, %p194
      %p196 = scmp.ne.s32.totalorder %s184, %s185
      %p197 = scmp.eq.s32.totalorder %s28, 1
      %p198 = por %p196, %p197
      %p200 = scmp.ne.s32.totalorder %s185, %s199
      %p201 = scmp.eq.s32.totalorder %s28, 0
      %p202 = por %p200, %p201
      %s204 = sadd.s32 %s203, 1
      %p207 = scmp.eq.s32.totalorder %s22, 1
      %p208 = scmp.ne.s32.totalorder %s203, %s205
      %p209 = scmp.eq.s32.totalorder %s22, 0
      %p210 = por %p208, %p209
      %p211 = scmp.ne.s32.totalorder %s203, %s205
      %p212 = scmp.eq.s32.totalorder %s27, 1
      %p213 = por %p211, %p212
      %p214 = scmp.ne.s32.totalorder %s205, %s206
      %p215 = scmp.eq.s32.totalorder %s27, 0
      %p216 = por %p214, %p215
      %p217 = scmp.ne.s32.totalorder %s205, %s206
      %p218 = scmp.eq.s32.totalorder %s28, 1
      %p219 = por %p217, %p218
      %p221 = scmp.ne.s32.totalorder %s206, %s220
      %p222 = scmp.eq.s32.totalorder %s28, 0
      %p223 = por %p221, %p222
      %s225 = sadd.s32 %s224, 1
      %p228 = scmp.eq.s32.totalorder %s22, 1
      %p229 = scmp.ne.s32.totalorder %s224, %s226
      %p230 = scmp.eq.s32.totalorder %s22, 0
      %p231 = por %p229, %p230
      %p232 = scmp.ne.s32.totalorder %s224, %s226
      %p233 = scmp.eq.s32.totalorder %s27, 1
      %p234 = por %p232, %p233
      %p235 = scmp.ne.s32.totalorder %s226, %s227
      %p236 = scmp.eq.s32.totalorder %s27, 0
      %p237 = por %p235, %p236
      %p238 = scmp.ne.s32.totalorder %s226, %s227
      %p239 = scmp.eq.s32.totalorder %s28, 1
      %p240 = por %p238, %p239
      %p242 = scmp.ne.s32.totalorder %s227, %s241
      %p243 = scmp.eq.s32.totalorder %s28, 0
      %p244 = por %p242, %p243
      %s246 = sadd.s32 %s245, 1
      %p249 = scmp.eq.s32.totalorder %s22, 1
      %p250 = scmp.ne.s32.totalorder %s245, %s247
      %p251 = scmp.eq.s32.totalorder %s22, 0
      %p252 = por %p250, %p251
      %p253 = scmp.ne.s32.totalorder %s245, %s247
      %p254 = scmp.eq.s32.totalorder %s27, 1
      %p255 = por %p253, %p254
      %p256 = scmp.ne.s32.totalorder %s247, %s248
      %p257 = scmp.eq.s32.totalorder %s27, 0
      %p258 = por %p256, %p257
      %p259 = scmp.ne.s32.totalorder %s247, %s248
      %p260 = scmp.eq.s32.totalorder %s28, 1
      %p261 = por %p259, %p260
      %p263 = scmp.ne.s32.totalorder %s248, %s262
      %p264 = scmp.eq.s32.totalorder %s28, 0
      %p265 = por %p263, %p264
      %s267 = sadd.s32 %s266, 1
      %p270 = scmp.eq.s32.totalorder %s22, 1
      %p271 = scmp.ne.s32.totalorder %s266, %s268
      %p272 = scmp.eq.s32.totalorder %s22, 0
      %p273 = por %p271, %p272
      %p274 = scmp.ne.s32.totalorder %s266, %s268
      %p275 = scmp.eq.s32.totalorder %s27, 1
      %p276 = por %p274, %p275
      %p277 = scmp.ne.s32.totalorder %s268, %s269
      %p278 = scmp.eq.s32.totalorder %s27, 0
      %p279 = por %p277, %p278
      %p280 = scmp.ne.s32.totalorder %s268, %s269
      %p281 = scmp.eq.s32.totalorder %s28, 1
      %p282 = por %p280, %p281
      %p284 = scmp.ne.s32.totalorder %s269, %s283
      %p285 = scmp.eq.s32.totalorder %s28, 0
      %p286 = por %p284, %p285
      %s287 = ssub.s32 %s22, %s29
      %p288 = scmp.eq.s32.totalorder %s287, 0
      %s290 = sadd.s32 %s289, 1
      %s291 = scalar_select %p288, %s289, %s290
      %p294 = pneg %p288
      %p295 = scmp.eq.s32.totalorder %s22, 1
      %p296 = por %p294, %p295
      %p297 = scmp.ne.s32.totalorder %s289, %s292
      %p298 = scmp.eq.s32.totalorder %s22, 0
      %p299 = por %p297, %p298
      %p300 = scmp.ne.s32.totalorder %s289, %s292
      %p301 = scmp.eq.s32.totalorder %s27, 1
      %p302 = por %p300, %p301
      %p303 = scmp.ne.s32.totalorder %s292, %s293
      %p304 = scmp.eq.s32.totalorder %s27, 0
      %p305 = por %p303, %p304
      %p306 = scmp.ne.s32.totalorder %s292, %s293
      %p307 = scmp.eq.s32.totalorder %s28, 1
      %p308 = por %p306, %p307
      %p310 = scmp.ne.s32.totalorder %s293, %s309
      %p311 = scmp.eq.s32.totalorder %s28, 0
      %p312 = por %p310, %p311
      %p313 = scmp.le.s32.totalorder 1, %s22
      %p314 = scmp.lt.s32.totalorder %s22, 3
      %p315 = pnand %p313, %p314
      %p316 = pneg %p315
      // Predicated region
      $region9: #{forward.1} parent=5 // pred_check
        _
      $region10: #{forward.1} parent=5 // pred_check_branch
        %318 = sbr.rel (%p315) target = $region12
      $region11: #{forward.1} parent=5 // pred_region
        %s319 = ssub.s32 %s22, 1
        // Predicated region
        $region13: #{forward.1} parent=11 // pred_check
          %p320 = pneg %p69
        $region14: #{forward.1} parent=11 // pred_check_branch
          %322 = sbr.rel (%p320) target = $region16
        $region15: #{forward.1} parent=11 // pred_region
          _
        $region16: #{forward.1} parent=11 // pred_fallthru
          _
        // Predicated region
        $region17: #{forward.1} parent=11 // pred_check
          %p323 = pneg %p90
        $region18: #{forward.1} parent=11 // pred_check_branch
          %325 = sbr.rel (%p323) target = $region20
        $region19: #{forward.1} parent=11 // pred_region
          %327 = vsyncadd [#allocation3], 0
          %s328 = sshll.u32 %s2, 4
          %s329 = int_to_ptr.hbm [resolvable:$true] %s328
          %s330 = sshll.u32 [#allocation2], 4
          %s331 = int_to_ptr.vmem [resolvable:$true] %s330
          %336 = dma.hbm_to_vmem [thread:$0]  %s329, 4096, %s331, [#allocation3], 64, 64, 4
        $region20: #{forward.1} parent=11 // pred_fallthru
          _
        // Predicated region
        $region21: #{forward.1} parent=11 // pred_check
          %p337 = pneg %p111
        $region22: #{forward.1} parent=11 // pred_check_branch
          %339 = sbr.rel (%p337) target = $region24
        $region23: #{forward.1} parent=11 // pred_region
          %341 = vsyncadd [#allocation5], 0
          %s342 = sshll.u32 %s3, 4
          %s343 = int_to_ptr.hbm [resolvable:$true] %s342
          %s344 = sshll.u32 [#allocation4], 4
          %s345 = int_to_ptr.vmem [resolvable:$true] %s344
          %350 = dma.hbm_to_vmem [thread:$0]  %s343, 2560, %s345, [#allocation5], 128, 128, 8
        $region24: #{forward.1} parent=11 // pred_fallthru
          _
        // Predicated region
        $region25: #{forward.1} parent=11 // pred_check
          %p351 = pneg %p132
        $region26: #{forward.1} parent=11 // pred_check_branch
          %353 = sbr.rel (%p351) target = $region28
        $region27: #{forward.1} parent=11 // pred_region
          %355 = vsyncadd [#allocation5], 0
          %s356 = sshll.u32 %s4, 4
          %s357 = int_to_ptr.hbm [resolvable:$true] %s356
          %s358 = sshll.u32 [#allocation6], 4
          %s359 = int_to_ptr.vmem [resolvable:$true] %s358
          %364 = dma.hbm_to_vmem [thread:$0]  %s357, 9216, %s359, [#allocation5], 64, 64, 4
        $region28: #{forward.1} parent=11 // pred_fallthru
          _
        // Predicated region
        $region29: #{forward.1} parent=11 // pred_check
          %p365 = pneg %p153
        $region30: #{forward.1} parent=11 // pred_check_branch
          %367 = sbr.rel (%p365) target = $region32
        $region31: #{forward.1} parent=11 // pred_region
          _
        $region32: #{forward.1} parent=11 // pred_fallthru
          _
        // Predicated region
        $region33: #{forward.1} parent=11 // pred_check
          %p368 = pneg %p174
        $region34: #{forward.1} parent=11 // pred_check_branch
          %370 = sbr.rel (%p368) target = $region36
        $region35: #{forward.1} parent=11 // pred_region
          %372 = vsyncadd [#allocation8], 0
          %s373 = sshll.u32 %s6, 4
          %s374 = int_to_ptr.hbm [resolvable:$true] %s373
          %s375 = sshll.u32 [#allocation7], 4
          %s376 = int_to_ptr.vmem [resolvable:$true] %s375
          %381 = dma.hbm_to_vmem [thread:$0]  %s374, 3456, %s376, [#allocation8], 64, 64, 4
        $region36: #{forward.1} parent=11 // pred_fallthru
          _
        // Predicated region
        $region37: #{forward.1} parent=11 // pred_check
          %p382 = pneg %p195
        $region38: #{forward.1} parent=11 // pred_check_branch
          %384 = sbr.rel (%p382) target = $region40
        $region39: #{forward.1} parent=11 // pred_region
          %386 = vsyncadd [#allocation8], 0
          %s387 = sshll.u32 %s7, 4
          %s388 = int_to_ptr.hbm [resolvable:$true] %s387
          %s389 = sshll.u32 [#allocation9], 4
          %s390 = int_to_ptr.vmem [resolvable:$true] %s389
          %395 = dma.hbm_to_vmem [thread:$0]  %s388, 9216, %s390, [#allocation8], 64, 64, 4
        $region40: #{forward.1} parent=11 // pred_fallthru
          _
        // Predicated region
        $region41: #{forward.1} parent=11 // pred_check
          %p396 = pneg %p216
        $region42: #{forward.1} parent=11 // pred_check_branch
          %398 = sbr.rel (%p396) target = $region44
        $region43: #{forward.1} parent=11 // pred_region
          _
        $region44: #{forward.1} parent=11 // pred_fallthru
          _
        // Predicated region
        $region45: #{forward.1} parent=11 // pred_check
          %p399 = pneg %p237
        $region46: #{forward.1} parent=11 // pred_check_branch
          %401 = sbr.rel (%p399) target = $region48
        $region47: #{forward.1} parent=11 // pred_region
          %403 = vsyncadd [#allocation11], 0
          %s404 = sshll.u32 %s9, 4
          %s405 = int_to_ptr.hbm [resolvable:$true] %s404
          %s406 = sshll.u32 [#allocation10], 4
          %s407 = int_to_ptr.vmem [resolvable:$true] %s406
          %412 = dma.hbm_to_vmem [thread:$0]  %s405, 9216, %s407, [#allocation11], 64, 64, 4
        $region48: #{forward.1} parent=11 // pred_fallthru
          _
        // Predicated region
        $region49: #{forward.1} parent=11 // pred_check
          %p413 = pneg %p258
        $region50: #{forward.1} parent=11 // pred_check_branch
          %415 = sbr.rel (%p413) target = $region52
        $region51: #{forward.1} parent=11 // pred_region
          _
        $region52: #{forward.1} parent=11 // pred_fallthru
          _
        // Predicated region
        $region53: #{forward.1} parent=11 // pred_check
          %p416 = pneg %p279
        $region54: #{forward.1} parent=11 // pred_check_branch
          %418 = sbr.rel (%p416) target = $region56
        $region55: #{forward.1} parent=11 // pred_region
          _
        $region56: #{forward.1} parent=11 // pred_fallthru
          _
      $region12: #{forward.1} parent=5 // pred_fallthru
        _
      %p419 = scmp.lt.s32.totalorder %s22, 2
      // Predicated region
      $region57: #{forward.1} parent=5 // pred_check
        %p420 = pneg %p419
      $region58: #{forward.1} parent=5 // pred_check_branch
        %422 = sbr.rel (%p420) target = $region60
      $region59: #{forward.1} parent=5 // pred_region
        // Predicated region
        $region61: #{forward.1} parent=59 // pred_check
          %p423 = pneg %p42
        $region62: #{forward.1} parent=59 // pred_check_branch
          %425 = sbr.rel (%p423) target = $region64
        $region63: #{forward.1} parent=59 // pred_region
          %p426 = scmp.lt.s32.totalorder %s22, 1
          %s427 = scalar_select %p426, %s22, 1
          %s428 = smul.addr %s427, 4
          %s429 = scalar_lea.vmem %s0, %s428
        $region64: #{forward.1} parent=59 // pred_fallthru
          _
      $region60: #{forward.1} parent=5 // pred_fallthru
        _
      %p430 = scmp.le.s32.totalorder 1, %s22
      %p431 = scmp.lt.s32.totalorder %s22, 3
      %p432 = pnand %p430, %p431
      %p433 = pneg %p432
      // Predicated region
      $region65: #{forward.1} parent=5 // pred_check
        _
      $region66: #{forward.1} parent=5 // pred_check_branch
        %435 = sbr.rel (%p432) target = $region68
      $region67: #{forward.1} parent=5 // pred_region
        %s436 = ssub.s32 %s22, 1
        // Predicated region
        $region69: #{forward.1} parent=67 // pred_check
          %p437 = pneg %p90
        $region70: #{forward.1} parent=67 // pred_check_branch
          %439 = sbr.rel (%p437) target = $region72
        $region71: #{forward.1} parent=67 // pred_region
          %441 = dma.done [#allocation3], 4096
        $region72: #{forward.1} parent=67 // pred_fallthru
          _
        // Predicated region
        $region73: #{forward.1} parent=67 // pred_check
          %p442 = pneg %p111
        $region74: #{forward.1} parent=67 // pred_check_branch
          %444 = sbr.rel (%p442) target = $region76
        $region75: #{forward.1} parent=67 // pred_region
          %446 = dma.done [#allocation5], 2560
        $region76: #{forward.1} parent=67 // pred_fallthru
          _
        // Predicated region
        $region77: #{forward.1} parent=67 // pred_check
          %p447 = pneg %p132
        $region78: #{forward.1} parent=67 // pred_check_branch
          %449 = sbr.rel (%p447) target = $region80
        $region79: #{forward.1} parent=67 // pred_region
          %451 = dma.done [#allocation5], 9216
        $region80: #{forward.1} parent=67 // pred_fallthru
          _
        // Predicated region
        $region81: #{forward.1} parent=67 // pred_check
          %p452 = pneg %p174
        $region82: #{forward.1} parent=67 // pred_check_branch
          %454 = sbr.rel (%p452) target = $region84
        $region83: #{forward.1} parent=67 // pred_region
          %456 = dma.done [#allocation8], 3456
        $region84: #{forward.1} parent=67 // pred_fallthru
          _
        // Predicated region
        $region85: #{forward.1} parent=67 // pred_check
          %p457 = pneg %p195
        $region86: #{forward.1} parent=67 // pred_check_branch
          %459 = sbr.rel (%p457) target = $region88
        $region87: #{forward.1} parent=67 // pred_region
          %461 = dma.done [#allocation8], 9216
        $region88: #{forward.1} parent=67 // pred_fallthru
          _
        // Predicated region
        $region89: #{forward.1} parent=67 // pred_check
          %p462 = pneg %p237
        $region90: #{forward.1} parent=67 // pred_check_branch
          %464 = sbr.rel (%p462) target = $region92
        $region91: #{forward.1} parent=67 // pred_region
          %466 = dma.done [#allocation11], 9216
        $region92: #{forward.1} parent=67 // pred_fallthru
          _
        %p467 = scmp.lt.s32.totalorder %s27, 1
        %s468 = scalar_select %p467, %s27, 1
        %s469 = smul.addr %s468, 4
        %s470 = scalar_lea.vmem %s0, %s469
        %p471 = pneg %p48
        %p472 = pneg %p45
        %p473 = pneg %p69
        %p474 = pneg %p66
        %p475 = pneg %p90
        %p476 = pneg %p87
        %p477 = pneg %p111
        %p478 = pneg %p108
        %p479 = pneg %p132
        %p480 = pneg %p129
        %p481 = pneg %p153
        %p482 = pneg %p150
        %p483 = pneg %p174
        %p484 = pneg %p171
        %p485 = pneg %p195
        %p486 = pneg %p192
        %p487 = pneg %p216
        %p488 = pneg %p213
        %p489 = pneg %p237
        %p490 = pneg %p234
        %p491 = pneg %p258
        %p492 = pneg %p255
        %p493 = pneg %p279
        %p494 = pneg %p276
        %p495 = pneg %p305
        %p496 = pneg %p302
        %p497 = scmp.lt.s32.totalorder %s27, 1
        %s498 = scalar_select %p497, %s27, 1
        %s499 = smul.addr %s498, 32
        %s500 = smul.addr %s499, 8
        %s501 = scalar_lea.vmem %s12, %s500
        %p502 = scmp.lt.s32.totalorder %s27, 1
        %s503 = scalar_select %p502, %s27, 1
        %s504 = smul.addr %s503, 4
        %s505 = scalar_lea.vmem %s0, %s504
        %p506 = scmp.lt.s32.totalorder %s27, 1
        %s507 = scalar_select %p506, %s27, 1
        %s508 = smul.addr %s507, 32
        %s509 = smul.addr %s508, 8
        %s510 = scalar_lea.vmem %s12, %s509
        %v511 = vld [vmem:[%s1] sm:$0xff]
        %v512 = vld [vmem:[%s1 + $0x8] sm:$0xff]
        %v513 = vld [vmem:[%s1 + $0x10] sm:$0xff]
        %v514 = vld [vmem:[%s1 + $0x18] sm:$0xff]
        %v515 = vld [vmem:[%s1 + $0x20] sm:$0xff]
        %v516 = vld [vmem:[%s1 + $0x28] sm:$0xff]
        %v517 = vld [vmem:[%s1 + $0x30] sm:$0xff]
        %v518 = vld [vmem:[%s1 + $0x38] sm:$0xff]
        %v519 = vld [vmem:[%s1 + $0x40] sm:$0xff]
        %v520 = vld [vmem:[%s1 + $0x48] sm:$0xff]
        %v521 = vld [vmem:[%s1 + $0x50] sm:$0xff]
        %v522 = vld [vmem:[%s1 + $0x58] sm:$0xff]
        %v523 = vld [vmem:[%s1 + $0x60] sm:$0xff]
        %v524 = vld [vmem:[%s1 + $0x68] sm:$0xff]
        %v525 = vld [vmem:[%s1 + $0x70] sm:$0xff]
        %v526 = vld [vmem:[%s1 + $0x78] sm:$0xff]
        %v527 = vld [vmem:[%s1 + $0x80] sm:$0xff]
        %v528 = vld [vmem:[%s1 + $0x88] sm:$0xff]
        %v529 = vld [vmem:[%s1 + $0x90] sm:$0xff]
        %v530 = vld [vmem:[%s1 + $0x98] sm:$0xff]
        %v531 = vld [vmem:[%s1 + $0xa0] sm:$0xff]
        %v532 = vld [vmem:[%s1 + $0xa8] sm:$0xff]
        %v533 = vld [vmem:[%s1 + $0xb0] sm:$0xff]
        %v534 = vld [vmem:[%s1 + $0xb8] sm:$0xff]
        %v535 = vld [vmem:[%s1 + $0xc0] sm:$0xff]
        %v536 = vld [vmem:[%s1 + $0xc8] sm:$0xff]
        %v537 = vld [vmem:[%s1 + $0xd0] sm:$0xff]
        %v538 = vld [vmem:[%s1 + $0xd8] sm:$0xff]
        %v539 = vld [vmem:[%s1 + $0xe0] sm:$0xff]
        %v540 = vld [vmem:[%s1 + $0xe8] sm:$0xff]
        %v541 = vld [vmem:[%s1 + $0xf0] sm:$0xff]
        %v542 = vld [vmem:[%s1 + $0xf8] sm:$0xff]
        %v543 = vld [vmem:[%s1 + $0x100] sm:$0xff]
        %v544 = vld [vmem:[%s1 + $0x108] sm:$0xff]
        %v545 = vld [vmem:[%s1 + $0x110] sm:$0xff]
        %v546 = vld [vmem:[%s1 + $0x118] sm:$0xff]
        %v547 = vld [vmem:[%s1 + $0x120] sm:$0xff]
        %v548 = vld [vmem:[%s1 + $0x128] sm:$0xff]
        %v549 = vld [vmem:[%s1 + $0x130] sm:$0xff]
        %v550 = vld [vmem:[%s1 + $0x138] sm:$0xff]
        %v551 = vld [vmem:[%s505] sm:$0xf]
        %v552 = vunpack.c.l.bf16 %v511
        %v553 = vunpack.c.h.bf16 %v511
        %v554 = vunpack.c.l.bf16 %v512
        %v555 = vunpack.c.h.bf16 %v512
        %v556 = vunpack.c.l.bf16 %v513
        %v557 = vunpack.c.h.bf16 %v513
        %v558 = vunpack.c.l.bf16 %v514
        %v559 = vunpack.c.h.bf16 %v514
        %v560 = vunpack.c.l.bf16 %v515
        %v561 = vunpack.c.h.bf16 %v515
        %v562 = vunpack.c.l.bf16 %v516
        %v563 = vunpack.c.h.bf16 %v516
        %v564 = vunpack.c.l.bf16 %v517
        %v565 = vunpack.c.h.bf16 %v517
        %v566 = vunpack.c.l.bf16 %v518
        %v567 = vunpack.c.h.bf16 %v518
        %v568 = vunpack.c.l.bf16 %v519
        %v569 = vunpack.c.h.bf16 %v519
        %v570 = vunpack.c.l.bf16 %v520
        %v571 = vunpack.c.h.bf16 %v520
        %v572 = vunpack.c.l.bf16 %v521
        %v573 = vunpack.c.h.bf16 %v521
        %v574 = vunpack.c.l.bf16 %v522
        %v575 = vunpack.c.h.bf16 %v522
        %v576 = vunpack.c.l.bf16 %v523
        %v577 = vunpack.c.h.bf16 %v523
        %v578 = vunpack.c.l.bf16 %v524
        %v579 = vunpack.c.h.bf16 %v524
        %v580 = vunpack.c.l.bf16 %v525
        %v581 = vunpack.c.h.bf16 %v525
        %v582 = vunpack.c.l.bf16 %v526
        %v583 = vunpack.c.h.bf16 %v526
        %v584 = vunpack.c.l.bf16 %v527
        %v585 = vunpack.c.h.bf16 %v527
        %v586 = vunpack.c.l.bf16 %v528
        %v587 = vunpack.c.h.bf16 %v528
        %v588 = vunpack.c.l.bf16 %v529
        %v589 = vunpack.c.h.bf16 %v529
        %v590 = vunpack.c.l.bf16 %v530
        %v591 = vunpack.c.h.bf16 %v530
        %v592 = vunpack.c.l.bf16 %v531
        %v593 = vunpack.c.h.bf16 %v531
        %v594 = vunpack.c.l.bf16 %v532
        %v595 = vunpack.c.h.bf16 %v532
        %v596 = vunpack.c.l.bf16 %v533
        %v597 = vunpack.c.h.bf16 %v533
        %v598 = vunpack.c.l.bf16 %v534
        %v599 = vunpack.c.h.bf16 %v534
        %v600 = vunpack.c.l.bf16 %v535
        %v601 = vunpack.c.h.bf16 %v535
        %v602 = vunpack.c.l.bf16 %v536
        %v603 = vunpack.c.h.bf16 %v536
        %v604 = vunpack.c.l.bf16 %v537
        %v605 = vunpack.c.h.bf16 %v537
        %v606 = vunpack.c.l.bf16 %v538
        %v607 = vunpack.c.h.bf16 %v538
        %v608 = vunpack.c.l.bf16 %v539
        %v609 = vunpack.c.h.bf16 %v539
        %v610 = vunpack.c.l.bf16 %v540
        %v611 = vunpack.c.h.bf16 %v540
        %v612 = vunpack.c.l.bf16 %v541
        %v613 = vunpack.c.h.bf16 %v541
        %v614 = vunpack.c.l.bf16 %v542
        %v615 = vunpack.c.h.bf16 %v542
        %v616 = vunpack.c.l.bf16 %v543
        %v617 = vunpack.c.h.bf16 %v543
        %v618 = vunpack.c.l.bf16 %v544
        %v619 = vunpack.c.h.bf16 %v544
        %v620 = vunpack.c.l.bf16 %v545
        %v621 = vunpack.c.h.bf16 %v545
        %v622 = vunpack.c.l.bf16 %v546
        %v623 = vunpack.c.h.bf16 %v546
        %v624 = vunpack.c.l.bf16 %v547
        %v625 = vunpack.c.h.bf16 %v547
        %v626 = vunpack.c.l.bf16 %v548
        %v627 = vunpack.c.h.bf16 %v548
        %v628 = vunpack.c.l.bf16 %v549
        %v629 = vunpack.c.h.bf16 %v549
        %v630 = vunpack.c.l.bf16 %v550
        %v631 = vunpack.c.h.bf16 %v550
        %v633 = vperm.slane %v551, 0
        %v634 = vperm.slane %v551, 1
        %v635 = vperm.slane %v551, 2
        %v636 = vperm.slane %v551, 3
        %v641 = vmul.f32 %v552, %v633
        %v642 = vmul.f32 %v553, %v634
        %v643 = vmul.f32 %v554, %v635
        %v644 = vmul.f32 %v555, %v636
        %v645 = vmul.f32 %v556, %v633
        %v646 = vmul.f32 %v557, %v634
        %v647 = vmul.f32 %v558, %v635
        %v648 = vmul.f32 %v559, %v636
        %v649 = vmul.f32 %v560, %v633
        %v650 = vmul.f32 %v561, %v634
        %v651 = vmul.f32 %v562, %v635
        %v652 = vmul.f32 %v563, %v636
        %v653 = vmul.f32 %v564, %v633
        %v654 = vmul.f32 %v565, %v634
        %v655 = vmul.f32 %v566, %v635
        %v656 = vmul.f32 %v567, %v636
        %v657 = vmul.f32 %v568, %v633
        %v658 = vmul.f32 %v569, %v634
        %v659 = vmul.f32 %v570, %v635
        %v660 = vmul.f32 %v571, %v636
        %v661 = vmul.f32 %v572, %v633
        %v662 = vmul.f32 %v573, %v634
        %v663 = vmul.f32 %v574, %v635
        %v664 = vmul.f32 %v575, %v636
        %v665 = vmul.f32 %v576, %v633
        %v666 = vmul.f32 %v577, %v634
        %v667 = vmul.f32 %v578, %v635
        %v668 = vmul.f32 %v579, %v636
        %v669 = vmul.f32 %v580, %v633
        %v670 = vmul.f32 %v581, %v634
        %v671 = vmul.f32 %v582, %v635
        %v672 = vmul.f32 %v583, %v636
        %v673 = vmul.f32 %v584, %v633
        %v674 = vmul.f32 %v585, %v634
        %v675 = vmul.f32 %v586, %v635
        %v676 = vmul.f32 %v587, %v636
        %v677 = vmul.f32 %v588, %v633
        %v678 = vmul.f32 %v589, %v634
        %v679 = vmul.f32 %v590, %v635
        %v680 = vmul.f32 %v591, %v636
        %v681 = vmul.f32 %v592, %v633
        %v682 = vmul.f32 %v593, %v634
        %v683 = vmul.f32 %v594, %v635
        %v684 = vmul.f32 %v595, %v636
        %v685 = vmul.f32 %v596, %v633
        %v686 = vmul.f32 %v597, %v634
        %v687 = vmul.f32 %v598, %v635
        %v688 = vmul.f32 %v599, %v636
        %v689 = vmul.f32 %v600, %v633
        %v690 = vmul.f32 %v601, %v634
        %v691 = vmul.f32 %v602, %v635
        %v692 = vmul.f32 %v603, %v636
        %v693 = vmul.f32 %v604, %v633
        %v694 = vmul.f32 %v605, %v634
        %v695 = vmul.f32 %v606, %v635
        %v696 = vmul.f32 %v607, %v636
        %v697 = vmul.f32 %v608, %v633
        %v698 = vmul.f32 %v609, %v634
        %v699 = vmul.f32 %v610, %v635
        %v700 = vmul.f32 %v611, %v636
        %v701 = vmul.f32 %v612, %v633
        %v702 = vmul.f32 %v613, %v634
        %v703 = vmul.f32 %v614, %v635
        %v704 = vmul.f32 %v615, %v636
        %v705 = vmul.f32 %v616, %v633
        %v706 = vmul.f32 %v617, %v634
        %v707 = vmul.f32 %v618, %v635
        %v708 = vmul.f32 %v619, %v636
        %v709 = vmul.f32 %v620, %v633
        %v710 = vmul.f32 %v621, %v634
        %v711 = vmul.f32 %v622, %v635
        %v712 = vmul.f32 %v623, %v636
        %v713 = vmul.f32 %v624, %v633
        %v714 = vmul.f32 %v625, %v634
        %v715 = vmul.f32 %v626, %v635
        %v716 = vmul.f32 %v627, %v636
        %v717 = vmul.f32 %v628, %v633
        %v718 = vmul.f32 %v629, %v634
        %v719 = vmul.f32 %v630, %v635
        %v720 = vmul.f32 %v631, %v636
        %v721 = vpack.c.bf16 %v645, %v641
        %v722 = vpack.c.bf16 %v646, %v642
        %v723 = vpack.c.bf16 %v647, %v643
        %v724 = vpack.c.bf16 %v648, %v644
        %v725 = vpack.c.bf16 %v653, %v649
        %v726 = vpack.c.bf16 %v654, %v650
        %v727 = vpack.c.bf16 %v655, %v651
        %v728 = vpack.c.bf16 %v656, %v652
        %v729 = vpack.c.bf16 %v661, %v657
        %v730 = vpack.c.bf16 %v662, %v658
        %v731 = vpack.c.bf16 %v663, %v659
        %v732 = vpack.c.bf16 %v664, %v660
        %v733 = vpack.c.bf16 %v669, %v665
        %v734 = vpack.c.bf16 %v670, %v666
        %v735 = vpack.c.bf16 %v671, %v667
        %v736 = vpack.c.bf16 %v672, %v668
        %v737 = vpack.c.bf16 %v677, %v673
        %v738 = vpack.c.bf16 %v678, %v674
        %v739 = vpack.c.bf16 %v679, %v675
        %v740 = vpack.c.bf16 %v680, %v676
        %v741 = vpack.c.bf16 %v685, %v681
        %v742 = vpack.c.bf16 %v686, %v682
        %v743 = vpack.c.bf16 %v687, %v683
        %v744 = vpack.c.bf16 %v688, %v684
        %v745 = vpack.c.bf16 %v693, %v689
        %v746 = vpack.c.bf16 %v694, %v690
        %v747 = vpack.c.bf16 %v695, %v691
        %v748 = vpack.c.bf16 %v696, %v692
        %v749 = vpack.c.bf16 %v701, %v697
        %v750 = vpack.c.bf16 %v702, %v698
        %v751 = vpack.c.bf16 %v703, %v699
        %v752 = vpack.c.bf16 %v704, %v700
        %v753 = vpack.c.bf16 %v709, %v705
        %v754 = vpack.c.bf16 %v710, %v706
        %v755 = vpack.c.bf16 %v711, %v707
        %v756 = vpack.c.bf16 %v712, %v708
        %v757 = vpack.c.bf16 %v717, %v713
        %v758 = vpack.c.bf16 %v718, %v714
        %v759 = vpack.c.bf16 %v719, %v715
        %v760 = vpack.c.bf16 %v720, %v716
        %v761 = vld [vmem:[#allocation2] sm:$0xf]
        %v762 = vld [vmem:[#allocation2 + $0x4] sm:$0xf]
        %v763 = vld [vmem:[#allocation2 + $0x8] sm:$0xf]
        %v764 = vld [vmem:[#allocation2 + $0xc] sm:$0xf]
        %v765 = vld [vmem:[#allocation2 + $0x10] sm:$0xf]
        %v766 = vld [vmem:[#allocation2 + $0x14] sm:$0xf]
        %v767 = vld [vmem:[#allocation2 + $0x18] sm:$0xf]
        %v768 = vld [vmem:[#allocation2 + $0x1c] sm:$0xf]
        %v769 = vld [vmem:[#allocation2 + $0x20] sm:$0xf]
        %v770 = vld [vmem:[#allocation2 + $0x24] sm:$0xf]
        %v771 = vld [vmem:[#allocation2 + $0x28] sm:$0xf]
        %v772 = vld [vmem:[#allocation2 + $0x2c] sm:$0xf]
        %v773 = vld [vmem:[#allocation2 + $0x30] sm:$0xf]
        %v774 = vld [vmem:[#allocation2 + $0x34] sm:$0xf]
        %v775 = vld [vmem:[#allocation2 + $0x38] sm:$0xf]
        %v776 = vld [vmem:[#allocation2 + $0x3c] sm:$0xf]
        %v777 = vld [vmem:[#allocation2 + $0x40] sm:$0xf]
        %v778 = vld [vmem:[#allocation2 + $0x44] sm:$0xf]
        %v779 = vld [vmem:[#allocation2 + $0x48] sm:$0xf]
        %v780 = vld [vmem:[#allocation2 + $0x4c] sm:$0xf]
        %v781 = vld [vmem:[#allocation2 + $0x50] sm:$0xf]
        %v782 = vld [vmem:[#allocation2 + $0x54] sm:$0xf]
        %v783 = vld [vmem:[#allocation2 + $0x58] sm:$0xf]
        %v784 = vld [vmem:[#allocation2 + $0x5c] sm:$0xf]
        %v785 = vld [vmem:[#allocation2 + $0x60] sm:$0xf]
        %v786 = vld [vmem:[#allocation2 + $0x64] sm:$0xf]
        %v787 = vld [vmem:[#allocation2 + $0x68] sm:$0xf]
        %v788 = vld [vmem:[#allocation2 + $0x6c] sm:$0xf]
        %v789 = vld [vmem:[#allocation2 + $0x70] sm:$0xf]
        %v790 = vld [vmem:[#allocation2 + $0x74] sm:$0xf]
        %v791 = vld [vmem:[#allocation2 + $0x78] sm:$0xf]
        %v792 = vld [vmem:[#allocation2 + $0x7c] sm:$0xf]
        %v793 = vld [vmem:[#allocation2 + $0x80] sm:$0xf]
        %v794 = vld [vmem:[#allocation2 + $0x84] sm:$0xf]
        %v795 = vld [vmem:[#allocation2 + $0x88] sm:$0xf]
        %v796 = vld [vmem:[#allocation2 + $0x8c] sm:$0xf]
        %v797 = vld [vmem:[#allocation2 + $0x90] sm:$0xf]
        %v798 = vld [vmem:[#allocation2 + $0x94] sm:$0xf]
        %v799 = vld [vmem:[#allocation2 + $0x98] sm:$0xf]
        %v800 = vld [vmem:[#allocation2 + $0x9c] sm:$0xf]
        %v801 = vld [vmem:[#allocation2 + $0xa0] sm:$0xf]
        %v802 = vld [vmem:[#allocation2 + $0xa4] sm:$0xf]
        %v803 = vld [vmem:[#allocation2 + $0xa8] sm:$0xf]
        %v804 = vld [vmem:[#allocation2 + $0xac] sm:$0xf]
        %v805 = vld [vmem:[#allocation2 + $0xb0] sm:$0xf]
        %v806 = vld [vmem:[#allocation2 + $0xb4] sm:$0xf]
        %v807 = vld [vmem:[#allocation2 + $0xb8] sm:$0xf]
        %v808 = vld [vmem:[#allocation2 + $0xbc] sm:$0xf]
        %v809 = vld [vmem:[#allocation2 + $0xc0] sm:$0xf]
        %v810 = vld [vmem:[#allocation2 + $0xc4] sm:$0xf]
        %v811 = vld [vmem:[#allocation2 + $0xc8] sm:$0xf]
        %v812 = vld [vmem:[#allocation2 + $0xcc] sm:$0xf]
        %v813 = vld [vmem:[#allocation2 + $0xd0] sm:$0xf]
        %v814 = vld [vmem:[#allocation2 + $0xd4] sm:$0xf]
        %v815 = vld [vmem:[#allocation2 + $0xd8] sm:$0xf]
        %v816 = vld [vmem:[#allocation2 + $0xdc] sm:$0xf]
        %v817 = vld [vmem:[#allocation2 + $0xe0] sm:$0xf]
        %v818 = vld [vmem:[#allocation2 + $0xe4] sm:$0xf]
        %v819 = vld [vmem:[#allocation2 + $0xe8] sm:$0xf]
        %v820 = vld [vmem:[#allocation2 + $0xec] sm:$0xf]
        %v821 = vld [vmem:[#allocation2 + $0xf0] sm:$0xf]
        %v822 = vld [vmem:[#allocation2 + $0xf4] sm:$0xf]
        %v823 = vld [vmem:[#allocation2 + $0xf8] sm:$0xf]
        %v824 = vld [vmem:[#allocation2 + $0xfc] sm:$0xf]
        %v825 = vld [vmem:[#allocation4] sm:$0xff]
        %v826 = vld [vmem:[#allocation4 + $0x8] sm:$0xff]
        %v827 = vld [vmem:[#allocation4 + $0x10] sm:$0xff]
        %v828 = vld [vmem:[#allocation4 + $0x18] sm:$0xff]
        %v829 = vld [vmem:[#allocation4 + $0x20] sm:$0xff]
        %v830 = vld [vmem:[#allocation4 + $0x28] sm:$0xff]
        %v831 = vld [vmem:[#allocation4 + $0x30] sm:$0xff]
        %v832 = vld [vmem:[#allocation4 + $0x38] sm:$0xff]
        %v833 = vld [vmem:[#allocation4 + $0x40] sm:$0xff]
        %v834 = vld [vmem:[#allocation4 + $0x48] sm:$0xff]
        %v835 = vld [vmem:[#allocation4 + $0x50] sm:$0xff]
        %v836 = vld [vmem:[#allocation4 + $0x58] sm:$0xff]
        %v837 = vld [vmem:[#allocation4 + $0x60] sm:$0xff]
        %v838 = vld [vmem:[#allocation4 + $0x68] sm:$0xff]
        %v839 = vld [vmem:[#allocation4 + $0x70] sm:$0xff]
        %v840 = vld [vmem:[#allocation4 + $0x78] sm:$0xff]
        %v841 = vld [vmem:[#allocation4 + $0x80] sm:$0xff]
        %v842 = vld [vmem:[#allocation4 + $0x88] sm:$0xff]
        %v843 = vld [vmem:[#allocation4 + $0x90] sm:$0xff]
        %v844 = vld [vmem:[#allocation4 + $0x98] sm:$0xff]
        %v909 = vunpack.c.l.b16 %v761
        %v910 = vunpack.c.l.b16 %v762
        %v911 = vunpack.c.l.b16 %v763
        %v912 = vunpack.c.l.b16 %v764
        %v913 = vunpack.c.l.b16 %v765
        %v914 = vunpack.c.l.b16 %v766
        %v915 = vunpack.c.l.b16 %v767
        %v916 = vunpack.c.l.b16 %v768
        %v917 = vunpack.c.l.b16 %v769
        %v918 = vunpack.c.l.b16 %v770
        %v919 = vunpack.c.l.b16 %v771
        %v920 = vunpack.c.l.b16 %v772
        %v921 = vunpack.c.l.b16 %v773
        %v922 = vunpack.c.l.b16 %v774
        %v923 = vunpack.c.l.b16 %v775
        %v924 = vunpack.c.l.b16 %v776
        %v925 = vunpack.c.l.b16 %v777
        %v926 = vunpack.c.l.b16 %v778
        %v927 = vunpack.c.l.b16 %v779
        %v928 = vunpack.c.l.b16 %v780
        %v929 = vunpack.c.l.b16 %v781
        %v930 = vunpack.c.l.b16 %v782
        %v931 = vunpack.c.l.b16 %v783
        %v932 = vunpack.c.l.b16 %v784
        %v933 = vunpack.c.l.b16 %v785
        %v934 = vunpack.c.l.b16 %v786
        %v935 = vunpack.c.l.b16 %v787
        %v936 = vunpack.c.l.b16 %v788
        %v937 = vunpack.c.l.b16 %v789
        %v938 = vunpack.c.l.b16 %v790
        %v939 = vunpack.c.l.b16 %v791
        %v940 = vunpack.c.l.b16 %v792
        %v941 = vunpack.c.l.b16 %v793
        %v942 = vunpack.c.l.b16 %v794
        %v943 = vunpack.c.l.b16 %v795
        %v944 = vunpack.c.l.b16 %v796
        %v945 = vunpack.c.l.b16 %v797
        %v946 = vunpack.c.l.b16 %v798
        %v947 = vunpack.c.l.b16 %v799
        %v948 = vunpack.c.l.b16 %v800
        %v949 = vunpack.c.l.b16 %v801
        %v950 = vunpack.c.l.b16 %v802
        %v951 = vunpack.c.l.b16 %v803
        %v952 = vunpack.c.l.b16 %v804
        %v953 = vunpack.c.l.b16 %v805
        %v954 = vunpack.c.l.b16 %v806
        %v955 = vunpack.c.l.b16 %v807
        %v956 = vunpack.c.l.b16 %v808
        %v957 = vunpack.c.l.b16 %v809
        %v958 = vunpack.c.l.b16 %v810
        %v959 = vunpack.c.l.b16 %v811
        %v960 = vunpack.c.l.b16 %v812
        %v961 = vunpack.c.l.b16 %v813
        %v962 = vunpack.c.l.b16 %v814
        %v963 = vunpack.c.l.b16 %v815
        %v964 = vunpack.c.l.b16 %v816
        %v965 = vunpack.c.l.b16 %v817
        %v966 = vunpack.c.l.b16 %v818
        %v967 = vunpack.c.l.b16 %v819
        %v968 = vunpack.c.l.b16 %v820
        %v969 = vunpack.c.l.b16 %v821
        %v970 = vunpack.c.l.b16 %v822
        %v971 = vunpack.c.l.b16 %v823
        %v972 = vunpack.c.l.b16 %v824
        %v973 = vpack.c.b16 %v910, %v909
        %v974 = vpack.c.b16 %v912, %v911
        %v975 = vpack.c.b16 %v914, %v913
        %v976 = vpack.c.b16 %v916, %v915
        %v977 = vpack.c.b16 %v918, %v917
        %v978 = vpack.c.b16 %v920, %v919
        %v979 = vpack.c.b16 %v922, %v921
        %v980 = vpack.c.b16 %v924, %v923
        %v981 = vpack.c.b16 %v926, %v925
        %v982 = vpack.c.b16 %v928, %v927
        %v983 = vpack.c.b16 %v930, %v929
        %v984 = vpack.c.b16 %v932, %v931
        %v985 = vpack.c.b16 %v934, %v933
        %v986 = vpack.c.b16 %v936, %v935
        %v987 = vpack.c.b16 %v938, %v937
        %v988 = vpack.c.b16 %v940, %v939
        %v989 = vpack.c.b16 %v942, %v941
        %v990 = vpack.c.b16 %v944, %v943
        %v991 = vpack.c.b16 %v946, %v945
        %v992 = vpack.c.b16 %v948, %v947
        %v993 = vpack.c.b16 %v950, %v949
        %v994 = vpack.c.b16 %v952, %v951
        %v995 = vpack.c.b16 %v954, %v953
        %v996 = vpack.c.b16 %v956, %v955
        %v997 = vpack.c.b16 %v958, %v957
        %v998 = vpack.c.b16 %v960, %v959
        %v999 = vpack.c.b16 %v962, %v961
        %v1000 = vpack.c.b16 %v964, %v963
        %v1001 = vpack.c.b16 %v966, %v965
        %v1002 = vpack.c.b16 %v968, %v967
        %v1003 = vpack.c.b16 %v970, %v969
        %v1004 = vpack.c.b16 %v972, %v971
        %1037 = vmatpush.bf16.msra.mxu0 %v980
        %1038 = vmatpush.bf16.msra.mxu0 %v979
        %1039 = vmatpush.bf16.msra.mxu0 %v978
        %1040 = vmatpush.bf16.msra.mxu0 %v977
        %1041 = vmatpush.bf16.msra.mxu0 %v976
        %1042 = vmatpush.bf16.msra.mxu0 %v975
        %1043 = vmatpush.bf16.msra.mxu0 %v974
        %1044 = vmatpush.bf16.msra.mxu0 %v973
        %1045 = vmatmul.bf16.gmra.mxu0 %v721
        %v1046 = vpop.f32.mrf.mxu0
        %v1047 = vadd.f32 %v825, %v1046
        %v1048 = vpop.f32.mrf.mxu0
        %v1049 = vadd.f32 %v826, %v1048
        %1050 = vmatmul.bf16.gmra.mxu0 %v725
        %v1051 = vpop.f32.mrf.mxu0
        %v1052 = vadd.f32 %v827, %v1051
        %v1053 = vpop.f32.mrf.mxu0
        %v1054 = vadd.f32 %v828, %v1053
        %1055 = vmatmul.bf16.gmra.mxu0 %v729
        %v1056 = vpop.f32.mrf.mxu0
        %v1057 = vadd.f32 %v829, %v1056
        %v1058 = vpop.f32.mrf.mxu0
        %v1059 = vadd.f32 %v830, %v1058
        %1060 = vmatmul.bf16.gmra.mxu0 %v733
        %v1061 = vpop.f32.mrf.mxu0
        %v1062 = vadd.f32 %v831, %v1061
        %v1063 = vpop.f32.mrf.mxu0
        %v1064 = vadd.f32 %v832, %v1063
        %1065 = vmatmul.bf16.gmra.mxu0 %v737
        %v1066 = vpop.f32.mrf.mxu0
        %v1067 = vadd.f32 %v833, %v1066
        %v1068 = vpop.f32.mrf.mxu0
        %v1069 = vadd.f32 %v834, %v1068
        %1070 = vmatmul.bf16.gmra.mxu0 %v741
        %v1071 = vpop.f32.mrf.mxu0
        %v1072 = vadd.f32 %v835, %v1071
        %v1073 = vpop.f32.mrf.mxu0
        %v1074 = vadd.f32 %v836, %v1073
        %1075 = vmatmul.bf16.gmra.mxu0 %v745
        %v1076 = vpop.f32.mrf.mxu0
        %v1077 = vadd.f32 %v837, %v1076
        %v1078 = vpop.f32.mrf.mxu0
        %v1079 = vadd.f32 %v838, %v1078
        %1080 = vmatmul.bf16.gmra.mxu0 %v749
        %v1081 = vpop.f32.mrf.mxu0
        %v1082 = vadd.f32 %v839, %v1081
        %v1083 = vpop.f32.mrf.mxu0
        %v1084 = vadd.f32 %v840, %v1083
        %1085 = vmatmul.bf16.gmra.mxu0 %v753
        %v1086 = vpop.f32.mrf.mxu0
        %v1087 = vadd.f32 %v841, %v1086
        %v1088 = vpop.f32.mrf.mxu0
        %v1089 = vadd.f32 %v842, %v1088
        %1090 = vmatmul.bf16.gmra.mxu0 %v757
        %v1091 = vpop.f32.mrf.mxu0
        %v1092 = vadd.f32 %v843, %v1091
        %v1093 = vpop.f32.mrf.mxu0
        %v1094 = vadd.f32 %v844, %v1093
        %1095 = vdwg.mxu0
        %1096 = vmatpush.bf16.msra.mxu0 %v988
        %1097 = vmatpush.bf16.msra.mxu0 %v987
        %1098 = vmatpush.bf16.msra.mxu0 %v986
        %1099 = vmatpush.bf16.msra.mxu0 %v985
        %1100 = vmatpush.bf16.msra.mxu0 %v984
        %1101 = vmatpush.bf16.msra.mxu0 %v983
        %1102 = vmatpush.bf16.msra.mxu0 %v982
        %1103 = vmatpush.bf16.msra.mxu0 %v981
        %1104 = vmatmul.bf16.gmra.mxu0 %v722
        %v1105 = vpop.f32.mrf.mxu0
        %v1106 = vadd.f32 %v1047, %v1105
        %v1107 = vpop.f32.mrf.mxu0
        %v1108 = vadd.f32 %v1049, %v1107
        %1109 = vmatmul.bf16.gmra.mxu0 %v726
        %v1110 = vpop.f32.mrf.mxu0
        %v1111 = vadd.f32 %v1052, %v1110
        %v1112 = vpop.f32.mrf.mxu0
        %v1113 = vadd.f32 %v1054, %v1112
        %1114 = vmatmul.bf16.gmra.mxu0 %v730
        %v1115 = vpop.f32.mrf.mxu0
        %v1116 = vadd.f32 %v1057, %v1115
        %v1117 = vpop.f32.mrf.mxu0
        %v1118 = vadd.f32 %v1059, %v1117
        %1119 = vmatmul.bf16.gmra.mxu0 %v734
        %v1120 = vpop.f32.mrf.mxu0
        %v1121 = vadd.f32 %v1062, %v1120
        %v1122 = vpop.f32.mrf.mxu0
        %v1123 = vadd.f32 %v1064, %v1122
        %1124 = vmatmul.bf16.gmra.mxu0 %v738
        %v1125 = vpop.f32.mrf.mxu0
        %v1126 = vadd.f32 %v1067, %v1125
        %v1127 = vpop.f32.mrf.mxu0
        %v1128 = vadd.f32 %v1069, %v1127
        %1129 = vmatmul.bf16.gmra.mxu0 %v742
        %v1130 = vpop.f32.mrf.mxu0
        %v1131 = vadd.f32 %v1072, %v1130
        %v1132 = vpop.f32.mrf.mxu0
        %v1133 = vadd.f32 %v1074, %v1132
        %1134 = vmatmul.bf16.gmra.mxu0 %v746
        %v1135 = vpop.f32.mrf.mxu0
        %v1136 = vadd.f32 %v1077, %v1135
        %v1137 = vpop.f32.mrf.mxu0
        %v1138 = vadd.f32 %v1079, %v1137
        %1139 = vmatmul.bf16.gmra.mxu0 %v750
        %v1140 = vpop.f32.mrf.mxu0
        %v1141 = vadd.f32 %v1082, %v1140
        %v1142 = vpop.f32.mrf.mxu0
        %v1143 = vadd.f32 %v1084, %v1142
        %1144 = vmatmul.bf16.gmra.mxu0 %v754
        %v1145 = vpop.f32.mrf.mxu0
        %v1146 = vadd.f32 %v1087, %v1145
        %v1147 = vpop.f32.mrf.mxu0
        %v1148 = vadd.f32 %v1089, %v1147
        %1149 = vmatmul.bf16.gmra.mxu0 %v758
        %v1150 = vpop.f32.mrf.mxu0
        %v1151 = vadd.f32 %v1092, %v1150
        %v1152 = vpop.f32.mrf.mxu0
        %v1153 = vadd.f32 %v1094, %v1152
        %1154 = vdwg.mxu0
        %1155 = vmatpush.bf16.msra.mxu0 %v996
        %1156 = vmatpush.bf16.msra.mxu0 %v995
        %1157 = vmatpush.bf16.msra.mxu0 %v994
        %1158 = vmatpush.bf16.msra.mxu0 %v993
        %1159 = vmatpush.bf16.msra.mxu0 %v992
        %1160 = vmatpush.bf16.msra.mxu0 %v991
        %1161 = vmatpush.bf16.msra.mxu0 %v990
        %1162 = vmatpush.bf16.msra.mxu0 %v989
        %1163 = vmatmul.bf16.gmra.mxu0 %v723
        %v1164 = vpop.f32.mrf.mxu0
        %v1165 = vadd.f32 %v1106, %v1164
        %v1166 = vpop.f32.mrf.mxu0
        %v1167 = vadd.f32 %v1108, %v1166
        %1168 = vmatmul.bf16.gmra.mxu0 %v727
        %v1169 = vpop.f32.mrf.mxu0
        %v1170 = vadd.f32 %v1111, %v1169
        %v1171 = vpop.f32.mrf.mxu0
        %v1172 = vadd.f32 %v1113, %v1171
        %1173 = vmatmul.bf16.gmra.mxu0 %v731
        %v1174 = vpop.f32.mrf.mxu0
        %v1175 = vadd.f32 %v1116, %v1174
        %v1176 = vpop.f32.mrf.mxu0
        %v1177 = vadd.f32 %v1118, %v1176
        %1178 = vmatmul.bf16.gmra.mxu0 %v735
        %v1179 = vpop.f32.mrf.mxu0
        %v1180 = vadd.f32 %v1121, %v1179
        %v1181 = vpop.f32.mrf.mxu0
        %v1182 = vadd.f32 %v1123, %v1181
        %1183 = vmatmul.bf16.gmra.mxu0 %v739
        %v1184 = vpop.f32.mrf.mxu0
        %v1185 = vadd.f32 %v1126, %v1184
        %v1186 = vpop.f32.mrf.mxu0
        %v1187 = vadd.f32 %v1128, %v1186
        %1188 = vmatmul.bf16.gmra.mxu0 %v743
        %v1189 = vpop.f32.mrf.mxu0
        %v1190 = vadd.f32 %v1131, %v1189
        %v1191 = vpop.f32.mrf.mxu0
        %v1192 = vadd.f32 %v1133, %v1191
        %1193 = vmatmul.bf16.gmra.mxu0 %v747
        %v1194 = vpop.f32.mrf.mxu0
        %v1195 = vadd.f32 %v1136, %v1194
        %v1196 = vpop.f32.mrf.mxu0
        %v1197 = vadd.f32 %v1138, %v1196
        %1198 = vmatmul.bf16.gmra.mxu0 %v751
        %v1199 = vpop.f32.mrf.mxu0
        %v1200 = vadd.f32 %v1141, %v1199
        %v1201 = vpop.f32.mrf.mxu0
        %v1202 = vadd.f32 %v1143, %v1201
        %1203 = vmatmul.bf16.gmra.mxu0 %v755
        %v1204 = vpop.f32.mrf.mxu0
        %v1205 = vadd.f32 %v1146, %v1204
        %v1206 = vpop.f32.mrf.mxu0
        %v1207 = vadd.f32 %v1148, %v1206
        %1208 = vmatmul.bf16.gmra.mxu0 %v759
        %v1209 = vpop.f32.mrf.mxu0
        %v1210 = vadd.f32 %v1151, %v1209
        %v1211 = vpop.f32.mrf.mxu0
        %v1212 = vadd.f32 %v1153, %v1211
        %1213 = vdwg.mxu0
        %1214 = vmatpush.bf16.msra.mxu0 %v1004
        %1215 = vmatpush.bf16.msra.mxu0 %v1003
        %1216 = vmatpush.bf16.msra.mxu0 %v1002
        %1217 = vmatpush.bf16.msra.mxu0 %v1001
        %1218 = vmatpush.bf16.msra.mxu0 %v1000
        %1219 = vmatpush.bf16.msra.mxu0 %v999
        %1220 = vmatpush.bf16.msra.mxu0 %v998
        %1221 = vmatpush.bf16.msra.mxu0 %v997
        %1222 = vmatmul.bf16.gmra.mxu0 %v724
        %v1223 = vpop.f32.mrf.mxu0
        %v1224 = vadd.f32 %v1165, %v1223
        %v1225 = vpop.f32.mrf.mxu0
        %v1226 = vadd.f32 %v1167, %v1225
        %1227 = vmatmul.bf16.gmra.mxu0 %v728
        %v1228 = vpop.f32.mrf.mxu0
        %v1229 = vadd.f32 %v1170, %v1228
        %v1230 = vpop.f32.mrf.mxu0
        %v1231 = vadd.f32 %v1172, %v1230
        %1232 = vmatmul.bf16.gmra.mxu0 %v732
        %v1233 = vpop.f32.mrf.mxu0
        %v1234 = vadd.f32 %v1175, %v1233
        %v1235 = vpop.f32.mrf.mxu0
        %v1236 = vadd.f32 %v1177, %v1235
        %1237 = vmatmul.bf16.gmra.mxu0 %v736
        %v1238 = vpop.f32.mrf.mxu0
        %v1239 = vadd.f32 %v1180, %v1238
        %v1240 = vpop.f32.mrf.mxu0
        %v1241 = vadd.f32 %v1182, %v1240
        %1242 = vmatmul.bf16.gmra.mxu0 %v740
        %v1243 = vpop.f32.mrf.mxu0
        %v1244 = vadd.f32 %v1185, %v1243
        %v1245 = vpop.f32.mrf.mxu0
        %v1246 = vadd.f32 %v1187, %v1245
        %1247 = vmatmul.bf16.gmra.mxu0 %v744
        %v1248 = vpop.f32.mrf.mxu0
        %v1249 = vadd.f32 %v1190, %v1248
        %v1250 = vpop.f32.mrf.mxu0
        %v1251 = vadd.f32 %v1192, %v1250
        %1252 = vmatmul.bf16.gmra.mxu0 %v748
        %v1253 = vpop.f32.mrf.mxu0
        %v1254 = vadd.f32 %v1195, %v1253
        %v1255 = vpop.f32.mrf.mxu0
        %v1256 = vadd.f32 %v1197, %v1255
        %1257 = vmatmul.bf16.gmra.mxu0 %v752
        %v1258 = vpop.f32.mrf.mxu0
        %v1259 = vadd.f32 %v1200, %v1258
        %v1260 = vpop.f32.mrf.mxu0
        %v1261 = vadd.f32 %v1202, %v1260
        %1262 = vmatmul.bf16.gmra.mxu0 %v756
        %v1263 = vpop.f32.mrf.mxu0
        %v1264 = vadd.f32 %v1205, %v1263
        %v1265 = vpop.f32.mrf.mxu0
        %v1266 = vadd.f32 %v1207, %v1265
        %1267 = vmatmul.bf16.gmra.mxu0 %v760
        %v1268 = vpop.f32.mrf.mxu0
        %v1269 = vadd.f32 %v1210, %v1268
        %v1270 = vpop.f32.mrf.mxu0
        %v1271 = vadd.f32 %v1212, %v1270
        %1272 = vdwg.mxu0
        %v1273 = vpack.c.bf16 %v1224, %v1224
        %v1274 = vpack.c.bf16 %v1226, %v1226
        %v1275 = vpack.c.bf16 %v1229, %v1229
        %v1276 = vpack.c.bf16 %v1231, %v1231
        %v1277 = vpack.c.bf16 %v1234, %v1234
        %v1278 = vpack.c.bf16 %v1236, %v1236
        %v1279 = vpack.c.bf16 %v1239, %v1239
        %v1280 = vpack.c.bf16 %v1241, %v1241
        %v1281 = vpack.c.bf16 %v1244, %v1244
        %v1282 = vpack.c.bf16 %v1246, %v1246
        %v1283 = vpack.c.bf16 %v1249, %v1249
        %v1284 = vpack.c.bf16 %v1251, %v1251
        %v1285 = vpack.c.bf16 %v1254, %v1254
        %v1286 = vpack.c.bf16 %v1256, %v1256
        %v1287 = vpack.c.bf16 %v1259, %v1259
        %v1288 = vpack.c.bf16 %v1261, %v1261
        %v1289 = vpack.c.bf16 %v1264, %v1264
        %v1290 = vpack.c.bf16 %v1266, %v1266
        %v1291 = vpack.c.bf16 %v1269, %v1269
        %v1292 = vpack.c.bf16 %v1271, %v1271
        %v1293 = vld [vmem:[#allocation6] sm:$0xf]
        %v1294 = vld [vmem:[#allocation6 + $0x4] sm:$0xf]
        %v1295 = vld [vmem:[#allocation6 + $0x8] sm:$0xf]
        %v1296 = vld [vmem:[#allocation6 + $0xc] sm:$0xf]
        %v1297 = vld [vmem:[#allocation6 + $0x10] sm:$0xf]
        %v1298 = vld [vmem:[#allocation6 + $0x14] sm:$0xf]
        %v1299 = vld [vmem:[#allocation6 + $0x18] sm:$0xf]
        %v1300 = vld [vmem:[#allocation6 + $0x1c] sm:$0xf]
        %v1301 = vld [vmem:[#allocation6 + $0x20] sm:$0xf]
        %v1302 = vld [vmem:[#allocation6 + $0x24] sm:$0xf]
        %v1303 = vld [vmem:[#allocation6 + $0x28] sm:$0xf]
        %v1304 = vld [vmem:[#allocation6 + $0x2c] sm:$0xf]
        %v1305 = vld [vmem:[#allocation6 + $0x30] sm:$0xf]
        %v1306 = vld [vmem:[#allocation6 + $0x34] sm:$0xf]
        %v1307 = vld [vmem:[#allocation6 + $0x38] sm:$0xf]
        %v1308 = vld [vmem:[#allocation6 + $0x3c] sm:$0xf]
        %s1309 = scalar_lea.vmem [#allocation6], 192
        %v1310 = vld [vmem:[%s1309] sm:$0xf]
        %v1311 = vld [vmem:[%s1309 + $0x4] sm:$0xf]
        %v1312 = vld [vmem:[%s1309 + $0x8] sm:$0xf]
        %v1313 = vld [vmem:[%s1309 + $0xc] sm:$0xf]
        %v1314 = vld [vmem:[%s1309 + $0x10] sm:$0xf]
        %v1315 = vld [vmem:[%s1309 + $0x14] sm:$0xf]
        %v1316 = vld [vmem:[%s1309 + $0x18] sm:$0xf]
        %v1317 = vld [vmem:[%s1309 + $0x1c] sm:$0xf]
        %v1318 = vld [vmem:[%s1309 + $0x20] sm:$0xf]
        %v1319 = vld [vmem:[%s1309 + $0x24] sm:$0xf]
        %v1320 = vld [vmem:[%s1309 + $0x28] sm:$0xf]
        %v1321 = vld [vmem:[%s1309 + $0x2c] sm:$0xf]
        %v1322 = vld [vmem:[%s1309 + $0x30] sm:$0xf]
        %v1323 = vld [vmem:[%s1309 + $0x34] sm:$0xf]
        %v1324 = vld [vmem:[%s1309 + $0x38] sm:$0xf]
        %v1325 = vld [vmem:[%s1309 + $0x3c] sm:$0xf]
        %v1342 = vunpack.c.l.b16 %v1275
        %v1343 = vunpack.c.l.b16 %v1276
        %v1344 = vunpack.c.l.b16 %v1277
        %v1345 = vunpack.c.l.b16 %v1278
        %v1346 = vunpack.c.l.b16 %v1279
        %v1347 = vunpack.c.l.b16 %v1280
        %v1348 = vunpack.c.l.b16 %v1281
        %v1349 = vunpack.c.l.b16 %v1282
        %v1350 = vunpack.c.l.b16 %v1283
        %v1351 = vunpack.c.l.b16 %v1284
        %v1352 = vunpack.c.l.b16 %v1285
        %v1353 = vunpack.c.l.b16 %v1286
        %v1354 = vunpack.c.l.b16 %v1287
        %v1355 = vunpack.c.l.b16 %v1288
        %v1356 = vunpack.c.l.b16 %v1289
        %v1357 = vunpack.c.l.b16 %v1290
        %v1358 = vpack.c.b16 %v1343, %v1342
        %v1359 = vpack.c.b16 %v1345, %v1344
        %v1360 = vpack.c.b16 %v1347, %v1346
        %v1361 = vpack.c.b16 %v1349, %v1348
        %v1362 = vpack.c.b16 %v1351, %v1350
        %v1363 = vpack.c.b16 %v1353, %v1352
        %v1364 = vpack.c.b16 %v1355, %v1354
        %v1365 = vpack.c.b16 %v1357, %v1356
        %v1390 = vunpack.c.l.b16 %v1310
        %v1391 = vunpack.c.l.b16 %v1311
        %v1392 = vunpack.c.l.b16 %v1312
        %v1393 = vunpack.c.l.b16 %v1313
        %v1394 = vunpack.c.l.b16 %v1314
        %v1395 = vunpack.c.l.b16 %v1315
        %v1396 = vunpack.c.l.b16 %v1316
        %v1397 = vunpack.c.l.b16 %v1317
        %v1398 = vunpack.c.l.b16 %v1318
        %v1399 = vunpack.c.l.b16 %v1319
        %v1400 = vunpack.c.l.b16 %v1320
        %v1401 = vunpack.c.l.b16 %v1321
        %v1402 = vunpack.c.l.b16 %v1322
        %v1403 = vunpack.c.l.b16 %v1323
        %v1404 = vunpack.c.l.b16 %v1324
        %v1405 = vunpack.c.l.b16 %v1325
        %v1406 = vpack.c.b16 %v1391, %v1390
        %v1407 = vpack.c.b16 %v1393, %v1392
        %v1408 = vpack.c.b16 %v1395, %v1394
        %v1409 = vpack.c.b16 %v1397, %v1396
        %v1410 = vpack.c.b16 %v1399, %v1398
        %v1411 = vpack.c.b16 %v1401, %v1400
        %v1412 = vpack.c.b16 %v1403, %v1402
        %v1413 = vpack.c.b16 %v1405, %v1404
        %1422 = vmatpush.bf16.msra.mxu0 %v1413
        %1423 = vmatpush.bf16.msra.mxu0 %v1412
        %1424 = vmatpush.bf16.msra.mxu0 %v1411
        %1425 = vmatpush.bf16.msra.mxu0 %v1410
        %1426 = vmatpush.bf16.msra.mxu0 %v1409
        %1427 = vmatpush.bf16.msra.mxu0 %v1408
        %1428 = vmatpush.bf16.msra.mxu0 %v1407
        %1429 = vmatpush.bf16.msra.mxu0 %v1406
        %1430 = vmatmul.bf16.gmra.mxu0 %v1358
        %v1431 = vpop.f32.mrf.mxu0
        %v1432 = vadd.f32 0.0, %v1431
        %v1433 = vpop.f32.mrf.mxu0
        %v1434 = vadd.f32 0.0, %v1433
        %1435 = vmatmul.bf16.gmra.mxu0 %v1359
        %v1436 = vpop.f32.mrf.mxu0
        %v1437 = vadd.f32 0.0, %v1436
        %v1438 = vpop.f32.mrf.mxu0
        %v1439 = vadd.f32 0.0, %v1438
        %1440 = vmatmul.bf16.gmra.mxu0 %v1360
        %v1441 = vpop.f32.mrf.mxu0
        %v1442 = vadd.f32 0.0, %v1441
        %v1443 = vpop.f32.mrf.mxu0
        %v1444 = vadd.f32 0.0, %v1443
        %1445 = vmatmul.bf16.gmra.mxu0 %v1361
        %v1446 = vpop.f32.mrf.mxu0
        %v1447 = vadd.f32 0.0, %v1446
        %v1448 = vpop.f32.mrf.mxu0
        %v1449 = vadd.f32 0.0, %v1448
        %1450 = vmatmul.bf16.gmra.mxu0 %v1362
        %v1451 = vpop.f32.mrf.mxu0
        %v1452 = vadd.f32 0.0, %v1451
        %v1453 = vpop.f32.mrf.mxu0
        %v1454 = vadd.f32 0.0, %v1453
        %1455 = vmatmul.bf16.gmra.mxu0 %v1363
        %v1456 = vpop.f32.mrf.mxu0
        %v1457 = vadd.f32 0.0, %v1456
        %v1458 = vpop.f32.mrf.mxu0
        %v1459 = vadd.f32 0.0, %v1458
        %1460 = vmatmul.bf16.gmra.mxu0 %v1364
        %v1461 = vpop.f32.mrf.mxu0
        %v1462 = vadd.f32 0.0, %v1461
        %v1463 = vpop.f32.mrf.mxu0
        %v1464 = vadd.f32 0.0, %v1463
        %1465 = vmatmul.bf16.gmra.mxu0 %v1365
        %v1466 = vpop.f32.mrf.mxu0
        %v1467 = vadd.f32 0.0, %v1466
        %v1468 = vpop.f32.mrf.mxu0
        %v1469 = vadd.f32 0.0, %v1468
        %1470 = vdwg.mxu0
        %v1473 = vunpack.c.l.b16 %v1273
        %v1474 = vunpack.c.l.b16 %v1274
        %v1475 = vpack.c.b16 %v1474, %v1473
        %v1493 = vunpack.c.l.b16 %v1293
        %v1494 = vunpack.c.l.b16 %v1294
        %v1495 = vunpack.c.l.b16 %v1295
        %v1496 = vunpack.c.l.b16 %v1296
        %v1497 = vunpack.c.l.b16 %v1297
        %v1498 = vunpack.c.l.b16 %v1298
        %v1499 = vunpack.c.l.b16 %v1299
        %v1500 = vunpack.c.l.b16 %v1300
        %v1501 = vunpack.c.l.b16 %v1301
        %v1502 = vunpack.c.l.b16 %v1302
        %v1503 = vunpack.c.l.b16 %v1303
        %v1504 = vunpack.c.l.b16 %v1304
        %v1505 = vunpack.c.l.b16 %v1305
        %v1506 = vunpack.c.l.b16 %v1306
        %v1507 = vunpack.c.l.b16 %v1307
        %v1508 = vunpack.c.l.b16 %v1308
        %v1509 = vpack.c.b16 %v1494, %v1493
        %v1510 = vpack.c.b16 %v1496, %v1495
        %v1511 = vpack.c.b16 %v1498, %v1497
        %v1512 = vpack.c.b16 %v1500, %v1499
        %v1513 = vpack.c.b16 %v1502, %v1501
        %v1514 = vpack.c.b16 %v1504, %v1503
        %v1515 = vpack.c.b16 %v1506, %v1505
        %v1516 = vpack.c.b16 %v1508, %v1507
        %1525 = vmatpush.bf16.msra.mxu0 %v1516
        %1526 = vmatpush.bf16.msra.mxu0 %v1515
        %1527 = vmatpush.bf16.msra.mxu0 %v1514
        %1528 = vmatpush.bf16.msra.mxu0 %v1513
        %1529 = vmatpush.bf16.msra.mxu0 %v1512
        %1530 = vmatpush.bf16.msra.mxu0 %v1511
        %1531 = vmatpush.bf16.msra.mxu0 %v1510
        %1532 = vmatpush.bf16.msra.mxu0 %v1509
        %1533 = vmatmul.bf16.gmra.mxu0 %v1475
        %v1534 = vpop.f32.mrf.mxu0
        %v1535 = vadd.f32 %v1432, %v1534
        %v1536 = vpop.f32.mrf.mxu0
        %v1537 = vadd.f32 %v1434, %v1536
        %1538 = vmatmul.bf16.gmra.mxu0 %v1358
        %v1539 = vpop.f32.mrf.mxu0
        %v1540 = vadd.f32 %v1437, %v1539
        %v1541 = vpop.f32.mrf.mxu0
        %v1542 = vadd.f32 %v1439, %v1541
        %1543 = vmatmul.bf16.gmra.mxu0 %v1359
        %v1544 = vpop.f32.mrf.mxu0
        %v1545 = vadd.f32 %v1442, %v1544
        %v1546 = vpop.f32.mrf.mxu0
        %v1547 = vadd.f32 %v1444, %v1546
        %1548 = vmatmul.bf16.gmra.mxu0 %v1360
        %v1549 = vpop.f32.mrf.mxu0
        %v1550 = vadd.f32 %v1447, %v1549
        %v1551 = vpop.f32.mrf.mxu0
        %v1552 = vadd.f32 %v1449, %v1551
        %1553 = vmatmul.bf16.gmra.mxu0 %v1361
        %v1554 = vpop.f32.mrf.mxu0
        %v1555 = vadd.f32 %v1452, %v1554
        %v1556 = vpop.f32.mrf.mxu0
        %v1557 = vadd.f32 %v1454, %v1556
        %1558 = vmatmul.bf16.gmra.mxu0 %v1362
        %v1559 = vpop.f32.mrf.mxu0
        %v1560 = vadd.f32 %v1457, %v1559
        %v1561 = vpop.f32.mrf.mxu0
        %v1562 = vadd.f32 %v1459, %v1561
        %1563 = vmatmul.bf16.gmra.mxu0 %v1363
        %v1564 = vpop.f32.mrf.mxu0
        %v1565 = vadd.f32 %v1462, %v1564
        %v1566 = vpop.f32.mrf.mxu0
        %v1567 = vadd.f32 %v1464, %v1566
        %1568 = vmatmul.bf16.gmra.mxu0 %v1364
        %v1569 = vpop.f32.mrf.mxu0
        %v1570 = vadd.f32 %v1467, %v1569
        %v1571 = vpop.f32.mrf.mxu0
        %v1572 = vadd.f32 %v1469, %v1571
        %1573 = vdwg.mxu0
        %s1574 = scalar_lea.vmem [#allocation6], 384
        %v1575 = vld [vmem:[%s1574] sm:$0xf]
        %v1576 = vld [vmem:[%s1574 + $0x4] sm:$0xf]
        %v1577 = vld [vmem:[%s1574 + $0x8] sm:$0xf]
        %v1578 = vld [vmem:[%s1574 + $0xc] sm:$0xf]
        %v1579 = vld [vmem:[%s1574 + $0x10] sm:$0xf]
        %v1580 = vld [vmem:[%s1574 + $0x14] sm:$0xf]
        %v1581 = vld [vmem:[%s1574 + $0x18] sm:$0xf]
        %v1582 = vld [vmem:[%s1574 + $0x1c] sm:$0xf]
        %v1583 = vld [vmem:[%s1574 + $0x20] sm:$0xf]
        %v1584 = vld [vmem:[%s1574 + $0x24] sm:$0xf]
        %v1585 = vld [vmem:[%s1574 + $0x28] sm:$0xf]
        %v1586 = vld [vmem:[%s1574 + $0x2c] sm:$0xf]
        %v1587 = vld [vmem:[%s1574 + $0x30] sm:$0xf]
        %v1588 = vld [vmem:[%s1574 + $0x34] sm:$0xf]
        %v1589 = vld [vmem:[%s1574 + $0x38] sm:$0xf]
        %v1590 = vld [vmem:[%s1574 + $0x3c] sm:$0xf]
        %v1593 = vunpack.c.l.b16 %v1291
        %v1594 = vunpack.c.l.b16 %v1292
        %v1595 = vpack.c.b16 %v1594, %v1593
        %v1613 = vunpack.c.l.b16 %v1575
        %v1614 = vunpack.c.l.b16 %v1576
        %v1615 = vunpack.c.l.b16 %v1577
        %v1616 = vunpack.c.l.b16 %v1578
        %v1617 = vunpack.c.l.b16 %v1579
        %v1618 = vunpack.c.l.b16 %v1580
        %v1619 = vunpack.c.l.b16 %v1581
        %v1620 = vunpack.c.l.b16 %v1582
        %v1621 = vunpack.c.l.b16 %v1583
        %v1622 = vunpack.c.l.b16 %v1584
        %v1623 = vunpack.c.l.b16 %v1585
        %v1624 = vunpack.c.l.b16 %v1586
        %v1625 = vunpack.c.l.b16 %v1587
        %v1626 = vunpack.c.l.b16 %v1588
        %v1627 = vunpack.c.l.b16 %v1589
        %v1628 = vunpack.c.l.b16 %v1590
        %v1629 = vpack.c.b16 %v1614, %v1613
        %v1630 = vpack.c.b16 %v1616, %v1615
        %v1631 = vpack.c.b16 %v1618, %v1617
        %v1632 = vpack.c.b16 %v1620, %v1619
        %v1633 = vpack.c.b16 %v1622, %v1621
        %v1634 = vpack.c.b16 %v1624, %v1623
        %v1635 = vpack.c.b16 %v1626, %v1625
        %v1636 = vpack.c.b16 %v1628, %v1627
        %1645 = vmatpush.bf16.msra.mxu0 %v1636
        %1646 = vmatpush.bf16.msra.mxu0 %v1635
        %1647 = vmatpush.bf16.msra.mxu0 %v1634
        %1648 = vmatpush.bf16.msra.mxu0 %v1633
        %1649 = vmatpush.bf16.msra.mxu0 %v1632
        %1650 = vmatpush.bf16.msra.mxu0 %v1631
        %1651 = vmatpush.bf16.msra.mxu0 %v1630
        %1652 = vmatpush.bf16.msra.mxu0 %v1629
        %1653 = vmatmul.bf16.gmra.mxu0 %v1359
        %v1654 = vpop.f32.mrf.mxu0
        %v1655 = vadd.f32 0.0, %v1654
        %v1656 = vpop.f32.mrf.mxu0
        %v1657 = vadd.f32 0.0, %v1656
        %1658 = vmatmul.bf16.gmra.mxu0 %v1360
        %v1659 = vpop.f32.mrf.mxu0
        %v1660 = vadd.f32 0.0, %v1659
        %v1661 = vpop.f32.mrf.mxu0
        %v1662 = vadd.f32 0.0, %v1661
        %1663 = vmatmul.bf16.gmra.mxu0 %v1361
        %v1664 = vpop.f32.mrf.mxu0
        %v1665 = vadd.f32 0.0, %v1664
        %v1666 = vpop.f32.mrf.mxu0
        %v1667 = vadd.f32 0.0, %v1666
        %1668 = vmatmul.bf16.gmra.mxu0 %v1362
        %v1669 = vpop.f32.mrf.mxu0
        %v1670 = vadd.f32 0.0, %v1669
        %v1671 = vpop.f32.mrf.mxu0
        %v1672 = vadd.f32 0.0, %v1671
        %1673 = vmatmul.bf16.gmra.mxu0 %v1363
        %v1674 = vpop.f32.mrf.mxu0
        %v1675 = vadd.f32 0.0, %v1674
        %v1676 = vpop.f32.mrf.mxu0
        %v1677 = vadd.f32 0.0, %v1676
        %1678 = vmatmul.bf16.gmra.mxu0 %v1364
        %v1679 = vpop.f32.mrf.mxu0
        %v1680 = vadd.f32 0.0, %v1679
        %v1681 = vpop.f32.mrf.mxu0
        %v1682 = vadd.f32 0.0, %v1681
        %1683 = vmatmul.bf16.gmra.mxu0 %v1365
        %v1684 = vpop.f32.mrf.mxu0
        %v1685 = vadd.f32 0.0, %v1684
        %v1686 = vpop.f32.mrf.mxu0
        %v1687 = vadd.f32 0.0, %v1686
        %1688 = vmatmul.bf16.gmra.mxu0 %v1595
        %v1689 = vpop.f32.mrf.mxu0
        %v1690 = vadd.f32 0.0, %v1689
        %v1691 = vpop.f32.mrf.mxu0
        %v1692 = vadd.f32 0.0, %v1691
        %1693 = vdwg.mxu0
        %v1694 = vadd.f32 %v1535, %v1655
        %v1695 = vadd.f32 %v1537, %v1657
        %v1696 = vadd.f32 %v1540, %v1660
        %v1697 = vadd.f32 %v1542, %v1662
        %v1698 = vadd.f32 %v1545, %v1665
        %v1699 = vadd.f32 %v1547, %v1667
        %v1700 = vadd.f32 %v1550, %v1670
        %v1701 = vadd.f32 %v1552, %v1672
        %v1702 = vadd.f32 %v1555, %v1675
        %v1703 = vadd.f32 %v1557, %v1677
        %v1704 = vadd.f32 %v1560, %v1680
        %v1705 = vadd.f32 %v1562, %v1682
        %v1706 = vadd.f32 %v1565, %v1685
        %v1707 = vadd.f32 %v1567, %v1687
        %v1708 = vadd.f32 %v1570, %v1690
        %v1709 = vadd.f32 %v1572, %v1692
        %v1710 = vadd.f32 %v1694, 0.0
        %v1711 = vadd.f32 %v1695, 0.0
        %v1712 = vadd.f32 %v1696, 0.0
        %v1713 = vadd.f32 %v1697, 0.0
        %v1714 = vadd.f32 %v1698, 0.0
        %v1715 = vadd.f32 %v1699, 0.0
        %v1716 = vadd.f32 %v1700, 0.0
        %v1717 = vadd.f32 %v1701, 0.0
        %v1718 = vadd.f32 %v1702, 0.0
        %v1719 = vadd.f32 %v1703, 0.0
        %v1720 = vadd.f32 %v1704, 0.0
        %v1721 = vadd.f32 %v1705, 0.0
        %v1722 = vadd.f32 %v1706, 0.0
        %v1723 = vadd.f32 %v1707, 0.0
        %v1724 = vadd.f32 %v1708, 0.0
        %v1725 = vadd.f32 %v1709, 0.0
        %s1726 = scalar_lea.vmem [#allocation6], 64
        %v1727 = vld [vmem:[%s1726] sm:$0xf]
        %v1728 = vld [vmem:[%s1726 + $0x4] sm:$0xf]
        %v1729 = vld [vmem:[%s1726 + $0x8] sm:$0xf]
        %v1730 = vld [vmem:[%s1726 + $0xc] sm:$0xf]
        %v1731 = vld [vmem:[%s1726 + $0x10] sm:$0xf]
        %v1732 = vld [vmem:[%s1726 + $0x14] sm:$0xf]
        %v1733 = vld [vmem:[%s1726 + $0x18] sm:$0xf]
        %v1734 = vld [vmem:[%s1726 + $0x1c] sm:$0xf]
        %v1735 = vld [vmem:[%s1726 + $0x20] sm:$0xf]
        %v1736 = vld [vmem:[%s1726 + $0x24] sm:$0xf]
        %v1737 = vld [vmem:[%s1726 + $0x28] sm:$0xf]
        %v1738 = vld [vmem:[%s1726 + $0x2c] sm:$0xf]
        %v1739 = vld [vmem:[%s1726 + $0x30] sm:$0xf]
        %v1740 = vld [vmem:[%s1726 + $0x34] sm:$0xf]
        %v1741 = vld [vmem:[%s1726 + $0x38] sm:$0xf]
        %v1742 = vld [vmem:[%s1726 + $0x3c] sm:$0xf]
        %s1743 = scalar_lea.vmem [#allocation6], 256
        %v1744 = vld [vmem:[%s1743] sm:$0xf]
        %v1745 = vld [vmem:[%s1743 + $0x4] sm:$0xf]
        %v1746 = vld [vmem:[%s1743 + $0x8] sm:$0xf]
        %v1747 = vld [vmem:[%s1743 + $0xc] sm:$0xf]
        %v1748 = vld [vmem:[%s1743 + $0x10] sm:$0xf]
        %v1749 = vld [vmem:[%s1743 + $0x14] sm:$0xf]
        %v1750 = vld [vmem:[%s1743 + $0x18] sm:$0xf]
        %v1751 = vld [vmem:[%s1743 + $0x1c] sm:$0xf]
        %v1752 = vld [vmem:[%s1743 + $0x20] sm:$0xf]
        %v1753 = vld [vmem:[%s1743 + $0x24] sm:$0xf]
        %v1754 = vld [vmem:[%s1743 + $0x28] sm:$0xf]
        %v1755 = vld [vmem:[%s1743 + $0x2c] sm:$0xf]
        %v1756 = vld [vmem:[%s1743 + $0x30] sm:$0xf]
        %v1757 = vld [vmem:[%s1743 + $0x34] sm:$0xf]
        %v1758 = vld [vmem:[%s1743 + $0x38] sm:$0xf]
        %v1759 = vld [vmem:[%s1743 + $0x3c] sm:$0xf]
        %v1776 = vunpack.c.l.b16 %v1744
        %v1777 = vunpack.c.l.b16 %v1745
        %v1778 = vunpack.c.l.b16 %v1746
        %v1779 = vunpack.c.l.b16 %v1747
        %v1780 = vunpack.c.l.b16 %v1748
        %v1781 = vunpack.c.l.b16 %v1749
        %v1782 = vunpack.c.l.b16 %v1750
        %v1783 = vunpack.c.l.b16 %v1751
        %v1784 = vunpack.c.l.b16 %v1752
        %v1785 = vunpack.c.l.b16 %v1753
        %v1786 = vunpack.c.l.b16 %v1754
        %v1787 = vunpack.c.l.b16 %v1755
        %v1788 = vunpack.c.l.b16 %v1756
        %v1789 = vunpack.c.l.b16 %v1757
        %v1790 = vunpack.c.l.b16 %v1758
        %v1791 = vunpack.c.l.b16 %v1759
        %v1792 = vpack.c.b16 %v1777, %v1776
        %v1793 = vpack.c.b16 %v1779, %v1778
        %v1794 = vpack.c.b16 %v1781, %v1780
        %v1795 = vpack.c.b16 %v1783, %v1782
        %v1796 = vpack.c.b16 %v1785, %v1784
        %v1797 = vpack.c.b16 %v1787, %v1786
        %v1798 = vpack.c.b16 %v1789, %v1788
        %v1799 = vpack.c.b16 %v1791, %v1790
        %1808 = vmatpush.bf16.msra.mxu0 %v1799
        %1809 = vmatpush.bf16.msra.mxu0 %v1798
        %1810 = vmatpush.bf16.msra.mxu0 %v1797
        %1811 = vmatpush.bf16.msra.mxu0 %v1796
        %1812 = vmatpush.bf16.msra.mxu0 %v1795
        %1813 = vmatpush.bf16.msra.mxu0 %v1794
        %1814 = vmatpush.bf16.msra.mxu0 %v1793
        %1815 = vmatpush.bf16.msra.mxu0 %v1792
        %1816 = vmatmul.bf16.gmra.mxu0 %v1358
        %v1817 = vpop.f32.mrf.mxu0
        %v1818 = vadd.f32 0.0, %v1817
        %v1819 = vpop.f32.mrf.mxu0
        %v1820 = vadd.f32 0.0, %v1819
        %1821 = vmatmul.bf16.gmra.mxu0 %v1359
        %v1822 = vpop.f32.mrf.mxu0
        %v1823 = vadd.f32 0.0, %v1822
        %v1824 = vpop.f32.mrf.mxu0
        %v1825 = vadd.f32 0.0, %v1824
        %1826 = vmatmul.bf16.gmra.mxu0 %v1360
        %v1827 = vpop.f32.mrf.mxu0
        %v1828 = vadd.f32 0.0, %v1827
        %v1829 = vpop.f32.mrf.mxu0
        %v1830 = vadd.f32 0.0, %v1829
        %1831 = vmatmul.bf16.gmra.mxu0 %v1361
        %v1832 = vpop.f32.mrf.mxu0
        %v1833 = vadd.f32 0.0, %v1832
        %v1834 = vpop.f32.mrf.mxu0
        %v1835 = vadd.f32 0.0, %v1834
        %1836 = vmatmul.bf16.gmra.mxu0 %v1362
        %v1837 = vpop.f32.mrf.mxu0
        %v1838 = vadd.f32 0.0, %v1837
        %v1839 = vpop.f32.mrf.mxu0
        %v1840 = vadd.f32 0.0, %v1839
        %1841 = vmatmul.bf16.gmra.mxu0 %v1363
        %v1842 = vpop.f32.mrf.mxu0
        %v1843 = vadd.f32 0.0, %v1842
        %v1844 = vpop.f32.mrf.mxu0
        %v1845 = vadd.f32 0.0, %v1844
        %1846 = vmatmul.bf16.gmra.mxu0 %v1364
        %v1847 = vpop.f32.mrf.mxu0
        %v1848 = vadd.f32 0.0, %v1847
        %v1849 = vpop.f32.mrf.mxu0
        %v1850 = vadd.f32 0.0, %v1849
        %1851 = vmatmul.bf16.gmra.mxu0 %v1365
        %v1852 = vpop.f32.mrf.mxu0
        %v1853 = vadd.f32 0.0, %v1852
        %v1854 = vpop.f32.mrf.mxu0
        %v1855 = vadd.f32 0.0, %v1854
        %1856 = vdwg.mxu0
        %v1873 = vunpack.c.l.b16 %v1727
        %v1874 = vunpack.c.l.b16 %v1728
        %v1875 = vunpack.c.l.b16 %v1729
        %v1876 = vunpack.c.l.b16 %v1730
        %v1877 = vunpack.c.l.b16 %v1731
        %v1878 = vunpack.c.l.b16 %v1732
        %v1879 = vunpack.c.l.b16 %v1733
        %v1880 = vunpack.c.l.b16 %v1734
        %v1881 = vunpack.c.l.b16 %v1735
        %v1882 = vunpack.c.l.b16 %v1736
        %v1883 = vunpack.c.l.b16 %v1737
        %v1884 = vunpack.c.l.b16 %v1738
        %v1885 = vunpack.c.l.b16 %v1739
        %v1886 = vunpack.c.l.b16 %v1740
        %v1887 = vunpack.c.l.b16 %v1741
        %v1888 = vunpack.c.l.b16 %v1742
        %v1889 = vpack.c.b16 %v1874, %v1873
        %v1890 = vpack.c.b16 %v1876, %v1875
        %v1891 = vpack.c.b16 %v1878, %v1877
        %v1892 = vpack.c.b16 %v1880, %v1879
        %v1893 = vpack.c.b16 %v1882, %v1881
        %v1894 = vpack.c.b16 %v1884, %v1883
        %v1895 = vpack.c.b16 %v1886, %v1885
        %v1896 = vpack.c.b16 %v1888, %v1887
        %1905 = vmatpush.bf16.msra.mxu0 %v1896
        %1906 = vmatpush.bf16.msra.mxu0 %v1895
        %1907 = vmatpush.bf16.msra.mxu0 %v1894
        %1908 = vmatpush.bf16.msra.mxu0 %v1893
        %1909 = vmatpush.bf16.msra.mxu0 %v1892
        %1910 = vmatpush.bf16.msra.mxu0 %v1891
        %1911 = vmatpush.bf16.msra.mxu0 %v1890
        %1912 = vmatpush.bf16.msra.mxu0 %v1889
        %1913 = vmatmul.bf16.gmra.mxu0 %v1475
        %v1914 = vpop.f32.mrf.mxu0
        %v1915 = vadd.f32 %v1818, %v1914
        %v1916 = vpop.f32.mrf.mxu0
        %v1917 = vadd.f32 %v1820, %v1916
        %1918 = vmatmul.bf16.gmra.mxu0 %v1358
        %v1919 = vpop.f32.mrf.mxu0
        %v1920 = vadd.f32 %v1823, %v1919
        %v1921 = vpop.f32.mrf.mxu0
        %v1922 = vadd.f32 %v1825, %v1921
        %1923 = vmatmul.bf16.gmra.mxu0 %v1359
        %v1924 = vpop.f32.mrf.mxu0
        %v1925 = vadd.f32 %v1828, %v1924
        %v1926 = vpop.f32.mrf.mxu0
        %v1927 = vadd.f32 %v1830, %v1926
        %1928 = vmatmul.bf16.gmra.mxu0 %v1360
        %v1929 = vpop.f32.mrf.mxu0
        %v1930 = vadd.f32 %v1833, %v1929
        %v1931 = vpop.f32.mrf.mxu0
        %v1932 = vadd.f32 %v1835, %v1931
        %1933 = vmatmul.bf16.gmra.mxu0 %v1361
        %v1934 = vpop.f32.mrf.mxu0
        %v1935 = vadd.f32 %v1838, %v1934
        %v1936 = vpop.f32.mrf.mxu0
        %v1937 = vadd.f32 %v1840, %v1936
        %1938 = vmatmul.bf16.gmra.mxu0 %v1362
        %v1939 = vpop.f32.mrf.mxu0
        %v1940 = vadd.f32 %v1843, %v1939
        %v1941 = vpop.f32.mrf.mxu0
        %v1942 = vadd.f32 %v1845, %v1941
        %1943 = vmatmul.bf16.gmra.mxu0 %v1363
        %v1944 = vpop.f32.mrf.mxu0
        %v1945 = vadd.f32 %v1848, %v1944
        %v1946 = vpop.f32.mrf.mxu0
        %v1947 = vadd.f32 %v1850, %v1946
        %1948 = vmatmul.bf16.gmra.mxu0 %v1364
        %v1949 = vpop.f32.mrf.mxu0
        %v1950 = vadd.f32 %v1853, %v1949
        %v1951 = vpop.f32.mrf.mxu0
        %v1952 = vadd.f32 %v1855, %v1951
        %1953 = vdwg.mxu0
        %s1954 = scalar_lea.vmem [#allocation6], 448
        %v1955 = vld [vmem:[%s1954] sm:$0xf]
        %v1956 = vld [vmem:[%s1954 + $0x4] sm:$0xf]
        %v1957 = vld [vmem:[%s1954 + $0x8] sm:$0xf]
        %v1958 = vld [vmem:[%s1954 + $0xc] sm:$0xf]
        %v1959 = vld [vmem:[%s1954 + $0x10] sm:$0xf]
        %v1960 = vld [vmem:[%s1954 + $0x14] sm:$0xf]
        %v1961 = vld [vmem:[%s1954 + $0x18] sm:$0xf]
        %v1962 = vld [vmem:[%s1954 + $0x1c] sm:$0xf]
        %v1963 = vld [vmem:[%s1954 + $0x20] sm:$0xf]
        %v1964 = vld [vmem:[%s1954 + $0x24] sm:$0xf]
        %v1965 = vld [vmem:[%s1954 + $0x28] sm:$0xf]
        %v1966 = vld [vmem:[%s1954 + $0x2c] sm:$0xf]
        %v1967 = vld [vmem:[%s1954 + $0x30] sm:$0xf]
        %v1968 = vld [vmem:[%s1954 + $0x34] sm:$0xf]
        %v1969 = vld [vmem:[%s1954 + $0x38] sm:$0xf]
        %v1970 = vld [vmem:[%s1954 + $0x3c] sm:$0xf]
        %v1987 = vunpack.c.l.b16 %v1955
        %v1988 = vunpack.c.l.b16 %v1956
        %v1989 = vunpack.c.l.b16 %v1957
        %v1990 = vunpack.c.l.b16 %v1958
        %v1991 = vunpack.c.l.b16 %v1959
        %v1992 = vunpack.c.l.b16 %v1960
        %v1993 = vunpack.c.l.b16 %v1961
        %v1994 = vunpack.c.l.b16 %v1962
        %v1995 = vunpack.c.l.b16 %v1963
        %v1996 = vunpack.c.l.b16 %v1964
        %v1997 = vunpack.c.l.b16 %v1965
        %v1998 = vunpack.c.l.b16 %v1966
        %v1999 = vunpack.c.l.b16 %v1967
        %v2000 = vunpack.c.l.b16 %v1968
        %v2001 = vunpack.c.l.b16 %v1969
        %v2002 = vunpack.c.l.b16 %v1970
        %v2003 = vpack.c.b16 %v1988, %v1987
        %v2004 = vpack.c.b16 %v1990, %v1989
        %v2005 = vpack.c.b16 %v1992, %v1991
        %v2006 = vpack.c.b16 %v1994, %v1993
        %v2007 = vpack.c.b16 %v1996, %v1995
        %v2008 = vpack.c.b16 %v1998, %v1997
        %v2009 = vpack.c.b16 %v2000, %v1999
        %v2010 = vpack.c.b16 %v2002, %v2001
        %2019 = vmatpush.bf16.msra.mxu0 %v2010
        %2020 = vmatpush.bf16.msra.mxu0 %v2009
        %2021 = vmatpush.bf16.msra.mxu0 %v2008
        %2022 = vmatpush.bf16.msra.mxu0 %v2007
        %2023 = vmatpush.bf16.msra.mxu0 %v2006
        %2024 = vmatpush.bf16.msra.mxu0 %v2005
        %2025 = vmatpush.bf16.msra.mxu0 %v2004
        %2026 = vmatpush.bf16.msra.mxu0 %v2003
        %2027 = vmatmul.bf16.gmra.mxu0 %v1359
        %v2028 = vpop.f32.mrf.mxu0
        %v2029 = vadd.f32 0.0, %v2028
        %v2030 = vpop.f32.mrf.mxu0
        %v2031 = vadd.f32 0.0, %v2030
        %2032 = vmatmul.bf16.gmra.mxu0 %v1360
        %v2033 = vpop.f32.mrf.mxu0
        %v2034 = vadd.f32 0.0, %v2033
        %v2035 = vpop.f32.mrf.mxu0
        %v2036 = vadd.f32 0.0, %v2035
        %2037 = vmatmul.bf16.gmra.mxu0 %v1361
        %v2038 = vpop.f32.mrf.mxu0
        %v2039 = vadd.f32 0.0, %v2038
        %v2040 = vpop.f32.mrf.mxu0
        %v2041 = vadd.f32 0.0, %v2040
        %2042 = vmatmul.bf16.gmra.mxu0 %v1362
        %v2043 = vpop.f32.mrf.mxu0
        %v2044 = vadd.f32 0.0, %v2043
        %v2045 = vpop.f32.mrf.mxu0
        %v2046 = vadd.f32 0.0, %v2045
        %2047 = vmatmul.bf16.gmra.mxu0 %v1363
        %v2048 = vpop.f32.mrf.mxu0
        %v2049 = vadd.f32 0.0, %v2048
        %v2050 = vpop.f32.mrf.mxu0
        %v2051 = vadd.f32 0.0, %v2050
        %2052 = vmatmul.bf16.gmra.mxu0 %v1364
        %v2053 = vpop.f32.mrf.mxu0
        %v2054 = vadd.f32 0.0, %v2053
        %v2055 = vpop.f32.mrf.mxu0
        %v2056 = vadd.f32 0.0, %v2055
        %2057 = vmatmul.bf16.gmra.mxu0 %v1365
        %v2058 = vpop.f32.mrf.mxu0
        %v2059 = vadd.f32 0.0, %v2058
        %v2060 = vpop.f32.mrf.mxu0
        %v2061 = vadd.f32 0.0, %v2060
        %2062 = vmatmul.bf16.gmra.mxu0 %v1595
        %v2063 = vpop.f32.mrf.mxu0
        %v2064 = vadd.f32 0.0, %v2063
        %v2065 = vpop.f32.mrf.mxu0
        %v2066 = vadd.f32 0.0, %v2065
        %2067 = vdwg.mxu0
        %v2068 = vadd.f32 %v1915, %v2029
        %v2069 = vadd.f32 %v1917, %v2031
        %v2070 = vadd.f32 %v1920, %v2034
        %v2071 = vadd.f32 %v1922, %v2036
        %v2072 = vadd.f32 %v1925, %v2039
        %v2073 = vadd.f32 %v1927, %v2041
        %v2074 = vadd.f32 %v1930, %v2044
        %v2075 = vadd.f32 %v1932, %v2046
        %v2076 = vadd.f32 %v1935, %v2049
        %v2077 = vadd.f32 %v1937, %v2051
        %v2078 = vadd.f32 %v1940, %v2054
        %v2079 = vadd.f32 %v1942, %v2056
        %v2080 = vadd.f32 %v1945, %v2059
        %v2081 = vadd.f32 %v1947, %v2061
        %v2082 = vadd.f32 %v1950, %v2064
        %v2083 = vadd.f32 %v1952, %v2066
        %vm2100 = vcmask 1046528
        %v2101 = vrot.slane %v2068, 1
        %v2102 = vrot.slane %v2069, 1
        %v2103 = vsel %vm2100, %v2101, %v2102
        %v2104 = vrot.slane %v2070, 1
        %v2105 = vsel %vm2100, %v2102, %v2104
        %v2106 = vrot.slane %v2071, 1
        %v2107 = vsel %vm2100, %v2104, %v2106
        %v2108 = vrot.slane %v2072, 1
        %v2109 = vsel %vm2100, %v2106, %v2108
        %v2110 = vrot.slane %v2073, 1
        %v2111 = vsel %vm2100, %v2108, %v2110
        %v2112 = vrot.slane %v2074, 1
        %v2113 = vsel %vm2100, %v2110, %v2112
        %v2114 = vrot.slane %v2075, 1
        %v2115 = vsel %vm2100, %v2112, %v2114
        %v2116 = vrot.slane %v2076, 1
        %v2117 = vsel %vm2100, %v2114, %v2116
        %v2118 = vrot.slane %v2077, 1
        %v2119 = vsel %vm2100, %v2116, %v2118
        %v2120 = vrot.slane %v2078, 1
        %v2121 = vsel %vm2100, %v2118, %v2120
        %v2122 = vrot.slane %v2079, 1
        %v2123 = vsel %vm2100, %v2120, %v2122
        %v2124 = vrot.slane %v2080, 1
        %v2125 = vsel %vm2100, %v2122, %v2124
        %v2126 = vrot.slane %v2081, 1
        %v2127 = vsel %vm2100, %v2124, %v2126
        %v2128 = vrot.slane %v2082, 1
        %v2129 = vsel %vm2100, %v2126, %v2128
        %v2130 = vrot.slane %v2083, 1
        %v2131 = vsel %vm2100, %v2128, %v2130
        %v2148 = vsel %vm2100, %v2130, 0.0
        %v2149 = vadd.f32 %v1710, %v2103
        %v2150 = vadd.f32 %v1711, %v2105
        %v2151 = vadd.f32 %v1712, %v2107
        %v2152 = vadd.f32 %v1713, %v2109
        %v2153 = vadd.f32 %v1714, %v2111
        %v2154 = vadd.f32 %v1715, %v2113
        %v2155 = vadd.f32 %v1716, %v2115
        %v2156 = vadd.f32 %v1717, %v2117
        %v2157 = vadd.f32 %v1718, %v2119
        %v2158 = vadd.f32 %v1719, %v2121
        %v2159 = vadd.f32 %v1720, %v2123
        %v2160 = vadd.f32 %v1721, %v2125
        %v2161 = vadd.f32 %v1722, %v2127
        %v2162 = vadd.f32 %v1723, %v2129
        %v2163 = vadd.f32 %v1724, %v2131
        %v2164 = vadd.f32 %v1725, %v2148
        %s2165 = scalar_lea.vmem [#allocation6], 128
        %v2166 = vld [vmem:[%s2165] sm:$0xf]
        %v2167 = vld [vmem:[%s2165 + $0x4] sm:$0xf]
        %v2168 = vld [vmem:[%s2165 + $0x8] sm:$0xf]
        %v2169 = vld [vmem:[%s2165 + $0xc] sm:$0xf]
        %v2170 = vld [vmem:[%s2165 + $0x10] sm:$0xf]
        %v2171 = vld [vmem:[%s2165 + $0x14] sm:$0xf]
        %v2172 = vld [vmem:[%s2165 + $0x18] sm:$0xf]
        %v2173 = vld [vmem:[%s2165 + $0x1c] sm:$0xf]
        %v2174 = vld [vmem:[%s2165 + $0x20] sm:$0xf]
        %v2175 = vld [vmem:[%s2165 + $0x24] sm:$0xf]
        %v2176 = vld [vmem:[%s2165 + $0x28] sm:$0xf]
        %v2177 = vld [vmem:[%s2165 + $0x2c] sm:$0xf]
        %v2178 = vld [vmem:[%s2165 + $0x30] sm:$0xf]
        %v2179 = vld [vmem:[%s2165 + $0x34] sm:$0xf]
        %v2180 = vld [vmem:[%s2165 + $0x38] sm:$0xf]
        %v2181 = vld [vmem:[%s2165 + $0x3c] sm:$0xf]
        %s2182 = scalar_lea.vmem [#allocation6], 320
        %v2183 = vld [vmem:[%s2182] sm:$0xf]
        %v2184 = vld [vmem:[%s2182 + $0x4] sm:$0xf]
        %v2185 = vld [vmem:[%s2182 + $0x8] sm:$0xf]
        %v2186 = vld [vmem:[%s2182 + $0xc] sm:$0xf]
        %v2187 = vld [vmem:[%s2182 + $0x10] sm:$0xf]
        %v2188 = vld [vmem:[%s2182 + $0x14] sm:$0xf]
        %v2189 = vld [vmem:[%s2182 + $0x18] sm:$0xf]
        %v2190 = vld [vmem:[%s2182 + $0x1c] sm:$0xf]
        %v2191 = vld [vmem:[%s2182 + $0x20] sm:$0xf]
        %v2192 = vld [vmem:[%s2182 + $0x24] sm:$0xf]
        %v2193 = vld [vmem:[%s2182 + $0x28] sm:$0xf]
        %v2194 = vld [vmem:[%s2182 + $0x2c] sm:$0xf]
        %v2195 = vld [vmem:[%s2182 + $0x30] sm:$0xf]
        %v2196 = vld [vmem:[%s2182 + $0x34] sm:$0xf]
        %v2197 = vld [vmem:[%s2182 + $0x38] sm:$0xf]
        %v2198 = vld [vmem:[%s2182 + $0x3c] sm:$0xf]
        %v2215 = vunpack.c.l.b16 %v2183
        %v2216 = vunpack.c.l.b16 %v2184
        %v2217 = vunpack.c.l.b16 %v2185
        %v2218 = vunpack.c.l.b16 %v2186
        %v2219 = vunpack.c.l.b16 %v2187
        %v2220 = vunpack.c.l.b16 %v2188
        %v2221 = vunpack.c.l.b16 %v2189
        %v2222 = vunpack.c.l.b16 %v2190
        %v2223 = vunpack.c.l.b16 %v2191
        %v2224 = vunpack.c.l.b16 %v2192
        %v2225 = vunpack.c.l.b16 %v2193
        %v2226 = vunpack.c.l.b16 %v2194
        %v2227 = vunpack.c.l.b16 %v2195
        %v2228 = vunpack.c.l.b16 %v2196
        %v2229 = vunpack.c.l.b16 %v2197
        %v2230 = vunpack.c.l.b16 %v2198
        %v2231 = vpack.c.b16 %v2216, %v2215
        %v2232 = vpack.c.b16 %v2218, %v2217
        %v2233 = vpack.c.b16 %v2220, %v2219
        %v2234 = vpack.c.b16 %v2222, %v2221
        %v2235 = vpack.c.b16 %v2224, %v2223
        %v2236 = vpack.c.b16 %v2226, %v2225
        %v2237 = vpack.c.b16 %v2228, %v2227
        %v2238 = vpack.c.b16 %v2230, %v2229
        %2247 = vmatpush.bf16.msra.mxu0 %v2238
        %2248 = vmatpush.bf16.msra.mxu0 %v2237
        %2249 = vmatpush.bf16.msra.mxu0 %v2236
        %2250 = vmatpush.bf16.msra.mxu0 %v2235
        %2251 = vmatpush.bf16.msra.mxu0 %v2234
        %2252 = vmatpush.bf16.msra.mxu0 %v2233
        %2253 = vmatpush.bf16.msra.mxu0 %v2232
        %2254 = vmatpush.bf16.msra.mxu0 %v2231
        %2255 = vmatmul.bf16.gmra.mxu0 %v1358
        %v2256 = vpop.f32.mrf.mxu0
        %v2257 = vadd.f32 0.0, %v2256
        %v2258 = vpop.f32.mrf.mxu0
        %v2259 = vadd.f32 0.0, %v2258
        %2260 = vmatmul.bf16.gmra.mxu0 %v1359
        %v2261 = vpop.f32.mrf.mxu0
        %v2262 = vadd.f32 0.0, %v2261
        %v2263 = vpop.f32.mrf.mxu0
        %v2264 = vadd.f32 0.0, %v2263
        %2265 = vmatmul.bf16.gmra.mxu0 %v1360
        %v2266 = vpop.f32.mrf.mxu0
        %v2267 = vadd.f32 0.0, %v2266
        %v2268 = vpop.f32.mrf.mxu0
        %v2269 = vadd.f32 0.0, %v2268
        %2270 = vmatmul.bf16.gmra.mxu0 %v1361
        %v2271 = vpop.f32.mrf.mxu0
        %v2272 = vadd.f32 0.0, %v2271
        %v2273 = vpop.f32.mrf.mxu0
        %v2274 = vadd.f32 0.0, %v2273
        %2275 = vmatmul.bf16.gmra.mxu0 %v1362
        %v2276 = vpop.f32.mrf.mxu0
        %v2277 = vadd.f32 0.0, %v2276
        %v2278 = vpop.f32.mrf.mxu0
        %v2279 = vadd.f32 0.0, %v2278
        %2280 = vmatmul.bf16.gmra.mxu0 %v1363
        %v2281 = vpop.f32.mrf.mxu0
        %v2282 = vadd.f32 0.0, %v2281
        %v2283 = vpop.f32.mrf.mxu0
        %v2284 = vadd.f32 0.0, %v2283
        %2285 = vmatmul.bf16.gmra.mxu0 %v1364
        %v2286 = vpop.f32.mrf.mxu0
        %v2287 = vadd.f32 0.0, %v2286
        %v2288 = vpop.f32.mrf.mxu0
        %v2289 = vadd.f32 0.0, %v2288
        %2290 = vmatmul.bf16.gmra.mxu0 %v1365
        %v2291 = vpop.f32.mrf.mxu0
        %v2292 = vadd.f32 0.0, %v2291
        %v2293 = vpop.f32.mrf.mxu0
        %v2294 = vadd.f32 0.0, %v2293
        %2295 = vdwg.mxu0
        %v2312 = vunpack.c.l.b16 %v2166
        %v2313 = vunpack.c.l.b16 %v2167
        %v2314 = vunpack.c.l.b16 %v2168
        %v2315 = vunpack.c.l.b16 %v2169
        %v2316 = vunpack.c.l.b16 %v2170
        %v2317 = vunpack.c.l.b16 %v2171
        %v2318 = vunpack.c.l.b16 %v2172
        %v2319 = vunpack.c.l.b16 %v2173
        %v2320 = vunpack.c.l.b16 %v2174
        %v2321 = vunpack.c.l.b16 %v2175
        %v2322 = vunpack.c.l.b16 %v2176
        %v2323 = vunpack.c.l.b16 %v2177
        %v2324 = vunpack.c.l.b16 %v2178
        %v2325 = vunpack.c.l.b16 %v2179
        %v2326 = vunpack.c.l.b16 %v2180
        %v2327 = vunpack.c.l.b16 %v2181
        %v2328 = vpack.c.b16 %v2313, %v2312
        %v2329 = vpack.c.b16 %v2315, %v2314
        %v2330 = vpack.c.b16 %v2317, %v2316
        %v2331 = vpack.c.b16 %v2319, %v2318
        %v2332 = vpack.c.b16 %v2321, %v2320
        %v2333 = vpack.c.b16 %v2323, %v2322
        %v2334 = vpack.c.b16 %v2325, %v2324
        %v2335 = vpack.c.b16 %v2327, %v2326
        %2344 = vmatpush.bf16.msra.mxu0 %v2335
        %2345 = vmatpush.bf16.msra.mxu0 %v2334
        %2346 = vmatpush.bf16.msra.mxu0 %v2333
        %2347 = vmatpush.bf16.msra.mxu0 %v2332
        %2348 = vmatpush.bf16.msra.mxu0 %v2331
        %2349 = vmatpush.bf16.msra.mxu0 %v2330
        %2350 = vmatpush.bf16.msra.mxu0 %v2329
        %2351 = vmatpush.bf16.msra.mxu0 %v2328
        %2352 = vmatmul.bf16.gmra.mxu0 %v1475
        %v2353 = vpop.f32.mrf.mxu0
        %v2354 = vadd.f32 %v2257, %v2353
        %v2355 = vpop.f32.mrf.mxu0
        %v2356 = vadd.f32 %v2259, %v2355
        %2357 = vmatmul.bf16.gmra.mxu0 %v1358
        %v2358 = vpop.f32.mrf.mxu0
        %v2359 = vadd.f32 %v2262, %v2358
        %v2360 = vpop.f32.mrf.mxu0
        %v2361 = vadd.f32 %v2264, %v2360
        %2362 = vmatmul.bf16.gmra.mxu0 %v1359
        %v2363 = vpop.f32.mrf.mxu0
        %v2364 = vadd.f32 %v2267, %v2363
        %v2365 = vpop.f32.mrf.mxu0
        %v2366 = vadd.f32 %v2269, %v2365
        %2367 = vmatmul.bf16.gmra.mxu0 %v1360
        %v2368 = vpop.f32.mrf.mxu0
        %v2369 = vadd.f32 %v2272, %v2368
        %v2370 = vpop.f32.mrf.mxu0
        %v2371 = vadd.f32 %v2274, %v2370
        %2372 = vmatmul.bf16.gmra.mxu0 %v1361
        %v2373 = vpop.f32.mrf.mxu0
        %v2374 = vadd.f32 %v2277, %v2373
        %v2375 = vpop.f32.mrf.mxu0
        %v2376 = vadd.f32 %v2279, %v2375
        %2377 = vmatmul.bf16.gmra.mxu0 %v1362
        %v2378 = vpop.f32.mrf.mxu0
        %v2379 = vadd.f32 %v2282, %v2378
        %v2380 = vpop.f32.mrf.mxu0
        %v2381 = vadd.f32 %v2284, %v2380
        %2382 = vmatmul.bf16.gmra.mxu0 %v1363
        %v2383 = vpop.f32.mrf.mxu0
        %v2384 = vadd.f32 %v2287, %v2383
        %v2385 = vpop.f32.mrf.mxu0
        %v2386 = vadd.f32 %v2289, %v2385
        %2387 = vmatmul.bf16.gmra.mxu0 %v1364
        %v2388 = vpop.f32.mrf.mxu0
        %v2389 = vadd.f32 %v2292, %v2388
        %v2390 = vpop.f32.mrf.mxu0
        %v2391 = vadd.f32 %v2294, %v2390
        %2392 = vdwg.mxu0
        %s2393 = scalar_lea.vmem [#allocation6], 512
        %v2394 = vld [vmem:[%s2393] sm:$0xf]
        %v2395 = vld [vmem:[%s2393 + $0x4] sm:$0xf]
        %v2396 = vld [vmem:[%s2393 + $0x8] sm:$0xf]
        %v2397 = vld [vmem:[%s2393 + $0xc] sm:$0xf]
        %v2398 = vld [vmem:[%s2393 + $0x10] sm:$0xf]
        %v2399 = vld [vmem:[%s2393 + $0x14] sm:$0xf]
        %v2400 = vld [vmem:[%s2393 + $0x18] sm:$0xf]
        %v2401 = vld [vmem:[%s2393 + $0x1c] sm:$0xf]
        %v2402 = vld [vmem:[%s2393 + $0x20] sm:$0xf]
        %v2403 = vld [vmem:[%s2393 + $0x24] sm:$0xf]
        %v2404 = vld [vmem:[%s2393 + $0x28] sm:$0xf]
        %v2405 = vld [vmem:[%s2393 + $0x2c] sm:$0xf]
        %v2406 = vld [vmem:[%s2393 + $0x30] sm:$0xf]
        %v2407 = vld [vmem:[%s2393 + $0x34] sm:$0xf]
        %v2408 = vld [vmem:[%s2393 + $0x38] sm:$0xf]
        %v2409 = vld [vmem:[%s2393 + $0x3c] sm:$0xf]
        %v2426 = vunpack.c.l.b16 %v2394
        %v2427 = vunpack.c.l.b16 %v2395
        %v2428 = vunpack.c.l.b16 %v2396
        %v2429 = vunpack.c.l.b16 %v2397
        %v2430 = vunpack.c.l.b16 %v2398
        %v2431 = vunpack.c.l.b16 %v2399
        %v2432 = vunpack.c.l.b16 %v2400
        %v2433 = vunpack.c.l.b16 %v2401
        %v2434 = vunpack.c.l.b16 %v2402
        %v2435 = vunpack.c.l.b16 %v2403
        %v2436 = vunpack.c.l.b16 %v2404
        %v2437 = vunpack.c.l.b16 %v2405
        %v2438 = vunpack.c.l.b16 %v2406
        %v2439 = vunpack.c.l.b16 %v2407
        %v2440 = vunpack.c.l.b16 %v2408
        %v2441 = vunpack.c.l.b16 %v2409
        %v2442 = vpack.c.b16 %v2427, %v2426
        %v2443 = vpack.c.b16 %v2429, %v2428
        %v2444 = vpack.c.b16 %v2431, %v2430
        %v2445 = vpack.c.b16 %v2433, %v2432
        %v2446 = vpack.c.b16 %v2435, %v2434
        %v2447 = vpack.c.b16 %v2437, %v2436
        %v2448 = vpack.c.b16 %v2439, %v2438
        %v2449 = vpack.c.b16 %v2441, %v2440
        %2458 = vmatpush.bf16.msra.mxu0 %v2449
        %2459 = vmatpush.bf16.msra.mxu0 %v2448
        %2460 = vmatpush.bf16.msra.mxu0 %v2447
        %2461 = vmatpush.bf16.msra.mxu0 %v2446
        %2462 = vmatpush.bf16.msra.mxu0 %v2445
        %2463 = vmatpush.bf16.msra.mxu0 %v2444
        %2464 = vmatpush.bf16.msra.mxu0 %v2443
        %2465 = vmatpush.bf16.msra.mxu0 %v2442
        %2466 = vmatmul.bf16.gmra.mxu0 %v1359
        %v2467 = vpop.f32.mrf.mxu0
        %v2468 = vadd.f32 0.0, %v2467
        %v2469 = vpop.f32.mrf.mxu0
        %v2470 = vadd.f32 0.0, %v2469
        %2471 = vmatmul.bf16.gmra.mxu0 %v1360
        %v2472 = vpop.f32.mrf.mxu0
        %v2473 = vadd.f32 0.0, %v2472
        %v2474 = vpop.f32.mrf.mxu0
        %v2475 = vadd.f32 0.0, %v2474
        %2476 = vmatmul.bf16.gmra.mxu0 %v1361
        %v2477 = vpop.f32.mrf.mxu0
        %v2478 = vadd.f32 0.0, %v2477
        %v2479 = vpop.f32.mrf.mxu0
        %v2480 = vadd.f32 0.0, %v2479
        %2481 = vmatmul.bf16.gmra.mxu0 %v1362
        %v2482 = vpop.f32.mrf.mxu0
        %v2483 = vadd.f32 0.0, %v2482
        %v2484 = vpop.f32.mrf.mxu0
        %v2485 = vadd.f32 0.0, %v2484
        %2486 = vmatmul.bf16.gmra.mxu0 %v1363
        %v2487 = vpop.f32.mrf.mxu0
        %v2488 = vadd.f32 0.0, %v2487
        %v2489 = vpop.f32.mrf.mxu0
        %v2490 = vadd.f32 0.0, %v2489
        %2491 = vmatmul.bf16.gmra.mxu0 %v1364
        %v2492 = vpop.f32.mrf.mxu0
        %v2493 = vadd.f32 0.0, %v2492
        %v2494 = vpop.f32.mrf.mxu0
        %v2495 = vadd.f32 0.0, %v2494
        %2496 = vmatmul.bf16.gmra.mxu0 %v1365
        %v2497 = vpop.f32.mrf.mxu0
        %v2498 = vadd.f32 0.0, %v2497
        %v2499 = vpop.f32.mrf.mxu0
        %v2500 = vadd.f32 0.0, %v2499
        %2501 = vmatmul.bf16.gmra.mxu0 %v1595
        %v2502 = vpop.f32.mrf.mxu0
        %v2503 = vadd.f32 0.0, %v2502
        %v2504 = vpop.f32.mrf.mxu0
        %v2505 = vadd.f32 0.0, %v2504
        %2506 = vdwg.mxu0
        %v2507 = vadd.f32 %v2354, %v2468
        %v2508 = vadd.f32 %v2356, %v2470
        %v2509 = vadd.f32 %v2359, %v2473
        %v2510 = vadd.f32 %v2361, %v2475
        %v2511 = vadd.f32 %v2364, %v2478
        %v2512 = vadd.f32 %v2366, %v2480
        %v2513 = vadd.f32 %v2369, %v2483
        %v2514 = vadd.f32 %v2371, %v2485
        %v2515 = vadd.f32 %v2374, %v2488
        %v2516 = vadd.f32 %v2376, %v2490
        %v2517 = vadd.f32 %v2379, %v2493
        %v2518 = vadd.f32 %v2381, %v2495
        %v2519 = vadd.f32 %v2384, %v2498
        %v2520 = vadd.f32 %v2386, %v2500
        %v2521 = vadd.f32 %v2389, %v2503
        %v2522 = vadd.f32 %v2391, %v2505
        %vm2539 = vcmask 1045504
        %v2540 = vrot.slane %v2507, 2
        %v2541 = vrot.slane %v2508, 2
        %v2542 = vsel %vm2539, %v2540, %v2541
        %v2543 = vrot.slane %v2509, 2
        %v2544 = vsel %vm2539, %v2541, %v2543
        %v2545 = vrot.slane %v2510, 2
        %v2546 = vsel %vm2539, %v2543, %v2545
        %v2547 = vrot.slane %v2511, 2
        %v2548 = vsel %vm2539, %v2545, %v2547
        %v2549 = vrot.slane %v2512, 2
        %v2550 = vsel %vm2539, %v2547, %v2549
        %v2551 = vrot.slane %v2513, 2
        %v2552 = vsel %vm2539, %v2549, %v2551
        %v2553 = vrot.slane %v2514, 2
        %v2554 = vsel %vm2539, %v2551, %v2553
        %v2555 = vrot.slane %v2515, 2
        %v2556 = vsel %vm2539, %v2553, %v2555
        %v2557 = vrot.slane %v2516, 2
        %v2558 = vsel %vm2539, %v2555, %v2557
        %v2559 = vrot.slane %v2517, 2
        %v2560 = vsel %vm2539, %v2557, %v2559
        %v2561 = vrot.slane %v2518, 2
        %v2562 = vsel %vm2539, %v2559, %v2561
        %v2563 = vrot.slane %v2519, 2
        %v2564 = vsel %vm2539, %v2561, %v2563
        %v2565 = vrot.slane %v2520, 2
        %v2566 = vsel %vm2539, %v2563, %v2565
        %v2567 = vrot.slane %v2521, 2
        %v2568 = vsel %vm2539, %v2565, %v2567
        %v2569 = vrot.slane %v2522, 2
        %v2570 = vsel %vm2539, %v2567, %v2569
        %v2587 = vsel %vm2539, %v2569, 0.0
        %v2588 = vadd.f32 %v2149, %v2542
        %v2589 = vadd.f32 %v2150, %v2544
        %v2590 = vadd.f32 %v2151, %v2546
        %v2591 = vadd.f32 %v2152, %v2548
        %v2592 = vadd.f32 %v2153, %v2550
        %v2593 = vadd.f32 %v2154, %v2552
        %v2594 = vadd.f32 %v2155, %v2554
        %v2595 = vadd.f32 %v2156, %v2556
        %v2596 = vadd.f32 %v2157, %v2558
        %v2597 = vadd.f32 %v2158, %v2560
        %v2598 = vadd.f32 %v2159, %v2562
        %v2599 = vadd.f32 %v2160, %v2564
        %v2600 = vadd.f32 %v2161, %v2566
        %v2601 = vadd.f32 %v2162, %v2568
        %v2602 = vadd.f32 %v2163, %v2570
        %v2603 = vadd.f32 %v2164, %v2587
        %v2604 = vld [vmem:[%s5] sm:$0x1]
        %v2605 = vperm.slane %v2604, 0
        %v2606 = vmul.f32 %v2588, %v2605
        %v2607 = vmul.f32 %v2589, %v2605
        %v2608 = vmul.f32 %v2590, %v2605
        %v2609 = vmul.f32 %v2591, %v2605
        %v2610 = vmul.f32 %v2592, %v2605
        %v2611 = vmul.f32 %v2593, %v2605
        %v2612 = vmul.f32 %v2594, %v2605
        %v2613 = vmul.f32 %v2595, %v2605
        %v2614 = vmul.f32 %v2596, %v2605
        %v2615 = vmul.f32 %v2597, %v2605
        %v2616 = vmul.f32 %v2598, %v2605
        %v2617 = vmul.f32 %v2599, %v2605
        %v2618 = vmul.f32 %v2600, %v2605
        %v2619 = vmul.f32 %v2601, %v2605
        %v2620 = vmul.f32 %v2602, %v2605
        %v2621 = vmul.f32 %v2603, %v2605
        %v2622 = vld [vmem:[%s5 + $0x1] sm:$0x1]
        %v2623 = vperm.slane %v2622, 0
        %v2624 = vadd.f32 %v2606, %v2623
        %v2625 = vadd.f32 %v2607, %v2623
        %v2626 = vadd.f32 %v2608, %v2623
        %v2627 = vadd.f32 %v2609, %v2623
        %v2628 = vadd.f32 %v2610, %v2623
        %v2629 = vadd.f32 %v2611, %v2623
        %v2630 = vadd.f32 %v2612, %v2623
        %v2631 = vadd.f32 %v2613, %v2623
        %v2632 = vadd.f32 %v2614, %v2623
        %v2633 = vadd.f32 %v2615, %v2623
        %v2634 = vadd.f32 %v2616, %v2623
        %v2635 = vadd.f32 %v2617, %v2623
        %v2636 = vadd.f32 %v2618, %v2623
        %v2637 = vadd.f32 %v2619, %v2623
        %v2638 = vadd.f32 %v2620, %v2623
        %v2639 = vadd.f32 %v2621, %v2623
        %vm2640 = vcmp.ge.f32.partialorder %v2624, 0.0
        %vm2641 = vcmp.ge.f32.partialorder %v2625, 0.0
        %vm2642 = vcmp.ge.f32.partialorder %v2626, 0.0
        %vm2643 = vcmp.ge.f32.partialorder %v2627, 0.0
        %vm2644 = vcmp.ge.f32.partialorder %v2628, 0.0
        %vm2645 = vcmp.ge.f32.partialorder %v2629, 0.0
        %vm2646 = vcmp.ge.f32.partialorder %v2630, 0.0
        %vm2647 = vcmp.ge.f32.partialorder %v2631, 0.0
        %vm2648 = vcmp.ge.f32.partialorder %v2632, 0.0
        %vm2649 = vcmp.ge.f32.partialorder %v2633, 0.0
        %vm2650 = vcmp.ge.f32.partialorder %v2634, 0.0
        %vm2651 = vcmp.ge.f32.partialorder %v2635, 0.0
        %vm2652 = vcmp.ge.f32.partialorder %v2636, 0.0
        %vm2653 = vcmp.ge.f32.partialorder %v2637, 0.0
        %vm2654 = vcmp.ge.f32.partialorder %v2638, 0.0
        %vm2655 = vcmp.ge.f32.partialorder %v2639, 0.0
        %v2656 = vmul.f32 %v2624, 0.2
        %v2657 = vmul.f32 %v2625, 0.2
        %v2658 = vmul.f32 %v2626, 0.2
        %v2659 = vmul.f32 %v2627, 0.2
        %v2660 = vmul.f32 %v2628, 0.2
        %v2661 = vmul.f32 %v2629, 0.2
        %v2662 = vmul.f32 %v2630, 0.2
        %v2663 = vmul.f32 %v2631, 0.2
        %v2664 = vmul.f32 %v2632, 0.2
        %v2665 = vmul.f32 %v2633, 0.2
        %v2666 = vmul.f32 %v2634, 0.2
        %v2667 = vmul.f32 %v2635, 0.2
        %v2668 = vmul.f32 %v2636, 0.2
        %v2669 = vmul.f32 %v2637, 0.2
        %v2670 = vmul.f32 %v2638, 0.2
        %v2671 = vmul.f32 %v2639, 0.2
        %v2672 = vsel %vm2640, %v2624, %v2656
        %v2673 = vsel %vm2641, %v2625, %v2657
        %v2674 = vsel %vm2642, %v2626, %v2658
        %v2675 = vsel %vm2643, %v2627, %v2659
        %v2676 = vsel %vm2644, %v2628, %v2660
        %v2677 = vsel %vm2645, %v2629, %v2661
        %v2678 = vsel %vm2646, %v2630, %v2662
        %v2679 = vsel %vm2647, %v2631, %v2663
        %v2680 = vsel %vm2648, %v2632, %v2664
        %v2681 = vsel %vm2649, %v2633, %v2665
        %v2682 = vsel %vm2650, %v2634, %v2666
        %v2683 = vsel %vm2651, %v2635, %v2667
        %v2684 = vsel %vm2652, %v2636, %v2668
        %v2685 = vsel %vm2653, %v2637, %v2669
        %v2686 = vsel %vm2654, %v2638, %v2670
        %v2687 = vsel %vm2655, %v2639, %v2671
        %v2688 = vld [vmem:[#allocation7] sm:$0xf]
        %v2689 = vld [vmem:[#allocation7 + $0x4] sm:$0xf]
        %v2690 = vld [vmem:[#allocation7 + $0x8] sm:$0xf]
        %v2691 = vld [vmem:[#allocation7 + $0xc] sm:$0xf]
        %v2692 = vld [vmem:[#allocation7 + $0x10] sm:$0xf]
        %v2693 = vld [vmem:[#allocation7 + $0x14] sm:$0xf]
        %v2694 = vld [vmem:[#allocation7 + $0x18] sm:$0xf]
        %v2695 = vld [vmem:[#allocation7 + $0x1c] sm:$0xf]
        %v2696 = vld [vmem:[#allocation7 + $0x20] sm:$0xf]
        %v2697 = vld [vmem:[#allocation7 + $0x24] sm:$0xf]
        %v2698 = vld [vmem:[#allocation7 + $0x28] sm:$0xf]
        %v2699 = vld [vmem:[#allocation7 + $0x2c] sm:$0xf]
        %v2700 = vld [vmem:[#allocation7 + $0x30] sm:$0xf]
        %v2701 = vld [vmem:[#allocation7 + $0x34] sm:$0xf]
        %v2702 = vld [vmem:[#allocation7 + $0x38] sm:$0xf]
        %v2703 = vld [vmem:[#allocation7 + $0x3c] sm:$0xf]
        %v2704 = vld [vmem:[#allocation7 + $0x40] sm:$0xf]
        %v2705 = vld [vmem:[#allocation7 + $0x44] sm:$0xf]
        %v2706 = vld [vmem:[#allocation7 + $0x48] sm:$0xf]
        %v2707 = vld [vmem:[#allocation7 + $0x4c] sm:$0xf]
        %v2708 = vld [vmem:[#allocation7 + $0x50] sm:$0xf]
        %v2709 = vld [vmem:[#allocation7 + $0x54] sm:$0xf]
        %v2710 = vld [vmem:[#allocation7 + $0x58] sm:$0xf]
        %v2711 = vld [vmem:[#allocation7 + $0x5c] sm:$0xf]
        %v2712 = vld [vmem:[#allocation7 + $0x60] sm:$0xf]
        %v2713 = vld [vmem:[#allocation7 + $0x64] sm:$0xf]
        %v2714 = vld [vmem:[#allocation7 + $0x68] sm:$0xf]
        %v2715 = vld [vmem:[#allocation7 + $0x6c] sm:$0xf]
        %v2716 = vld [vmem:[#allocation7 + $0x70] sm:$0xf]
        %v2717 = vld [vmem:[#allocation7 + $0x74] sm:$0xf]
        %v2718 = vld [vmem:[#allocation7 + $0x78] sm:$0xf]
        %v2719 = vld [vmem:[#allocation7 + $0x7c] sm:$0xf]
        %v2720 = vld [vmem:[#allocation7 + $0x80] sm:$0xf]
        %v2721 = vld [vmem:[#allocation7 + $0x84] sm:$0xf]
        %v2722 = vld [vmem:[#allocation7 + $0x88] sm:$0xf]
        %v2723 = vld [vmem:[#allocation7 + $0x8c] sm:$0xf]
        %v2724 = vld [vmem:[#allocation7 + $0x90] sm:$0xf]
        %v2725 = vld [vmem:[#allocation7 + $0x94] sm:$0xf]
        %v2726 = vld [vmem:[#allocation7 + $0x98] sm:$0xf]
        %v2727 = vld [vmem:[#allocation7 + $0x9c] sm:$0xf]
        %v2728 = vld [vmem:[#allocation7 + $0xa0] sm:$0xf]
        %v2729 = vld [vmem:[#allocation7 + $0xa4] sm:$0xf]
        %v2730 = vld [vmem:[#allocation7 + $0xa8] sm:$0xf]
        %v2731 = vld [vmem:[#allocation7 + $0xac] sm:$0xf]
        %v2732 = vld [vmem:[#allocation7 + $0xb0] sm:$0xf]
        %v2733 = vld [vmem:[#allocation7 + $0xb4] sm:$0xf]
        %v2734 = vld [vmem:[#allocation7 + $0xb8] sm:$0xf]
        %v2735 = vld [vmem:[#allocation7 + $0xbc] sm:$0xf]
        %v2736 = vld [vmem:[#allocation7 + $0xc0] sm:$0xf]
        %v2737 = vld [vmem:[#allocation7 + $0xc4] sm:$0xf]
        %v2738 = vld [vmem:[#allocation7 + $0xc8] sm:$0xf]
        %v2739 = vld [vmem:[#allocation7 + $0xcc] sm:$0xf]
        %v2740 = vld [vmem:[#allocation7 + $0xd0] sm:$0xf]
        %v2741 = vld [vmem:[#allocation7 + $0xd4] sm:$0xf]
        %v2742 = vpack.c.bf16 %v2673, %v2672
        %v2743 = vpack.c.bf16 %v2675, %v2674
        %v2744 = vpack.c.bf16 %v2677, %v2676
        %v2745 = vpack.c.bf16 %v2679, %v2678
        %v2746 = vpack.c.bf16 %v2681, %v2680
        %v2747 = vpack.c.bf16 %v2683, %v2682
        %v2748 = vpack.c.bf16 %v2685, %v2684
        %v2749 = vpack.c.bf16 %v2687, %v2686
        %v2804 = vunpack.c.l.b16 %v2688
        %v2805 = vunpack.c.l.b16 %v2689
        %v2806 = vunpack.c.l.b16 %v2690
        %v2807 = vunpack.c.l.b16 %v2691
        %v2808 = vunpack.c.l.b16 %v2692
        %v2809 = vunpack.c.l.b16 %v2693
        %v2810 = vunpack.c.l.b16 %v2694
        %v2811 = vunpack.c.l.b16 %v2695
        %v2812 = vunpack.c.l.b16 %v2696
        %v2813 = vunpack.c.l.b16 %v2697
        %v2814 = vunpack.c.l.b16 %v2698
        %v2815 = vunpack.c.l.b16 %v2699
        %v2816 = vunpack.c.l.b16 %v2700
        %v2817 = vunpack.c.l.b16 %v2701
        %v2818 = vunpack.c.l.b16 %v2702
        %v2819 = vunpack.c.l.b16 %v2703
        %v2820 = vunpack.c.l.b16 %v2704
        %v2821 = vunpack.c.l.b16 %v2705
        %v2822 = vunpack.c.l.b16 %v2706
        %v2823 = vunpack.c.l.b16 %v2707
        %v2824 = vunpack.c.l.b16 %v2708
        %v2825 = vunpack.c.l.b16 %v2709
        %v2826 = vunpack.c.l.b16 %v2710
        %v2827 = vunpack.c.l.b16 %v2711
        %v2828 = vunpack.c.l.b16 %v2712
        %v2829 = vunpack.c.l.b16 %v2713
        %v2830 = vunpack.c.l.b16 %v2714
        %v2831 = vunpack.c.l.b16 %v2715
        %v2832 = vunpack.c.l.b16 %v2716
        %v2833 = vunpack.c.l.b16 %v2717
        %v2834 = vunpack.c.l.b16 %v2718
        %v2835 = vunpack.c.l.b16 %v2719
        %v2836 = vunpack.c.l.b16 %v2720
        %v2837 = vunpack.c.l.b16 %v2721
        %v2838 = vunpack.c.l.b16 %v2722
        %v2839 = vunpack.c.l.b16 %v2723
        %v2840 = vunpack.c.l.b16 %v2724
        %v2841 = vunpack.c.l.b16 %v2725
        %v2842 = vunpack.c.l.b16 %v2726
        %v2843 = vunpack.c.l.b16 %v2727
        %v2844 = vunpack.c.l.b16 %v2728
        %v2845 = vunpack.c.l.b16 %v2729
        %v2846 = vunpack.c.l.b16 %v2730
        %v2847 = vunpack.c.l.b16 %v2731
        %v2848 = vunpack.c.l.b16 %v2732
        %v2849 = vunpack.c.l.b16 %v2733
        %v2850 = vunpack.c.l.b16 %v2734
        %v2851 = vunpack.c.l.b16 %v2735
        %v2852 = vunpack.c.l.b16 %v2736
        %v2853 = vunpack.c.l.b16 %v2737
        %v2854 = vunpack.c.l.b16 %v2738
        %v2855 = vunpack.c.l.b16 %v2739
        %v2856 = vunpack.c.l.b16 %v2740
        %v2857 = vunpack.c.l.b16 %v2741
        %v2858 = vpack.c.b16 %v2805, %v2804
        %v2859 = vpack.c.b16 %v2807, %v2806
        %v2860 = vpack.c.b16 %v2809, %v2808
        %v2861 = vpack.c.b16 %v2811, %v2810
        %v2862 = vpack.c.b16 %v2813, %v2812
        %v2863 = vpack.c.b16 %v2815, %v2814
        %v2864 = vpack.c.b16 %v2817, %v2816
        %v2865 = vpack.c.b16 %v2819, %v2818
        %v2866 = vpack.c.b16 %v2821, %v2820
        %v2867 = vpack.c.b16 %v2823, %v2822
        %v2868 = vpack.c.b16 %v2825, %v2824
        %v2869 = vpack.c.b16 %v2827, %v2826
        %v2870 = vpack.c.b16 %v2829, %v2828
        %v2871 = vpack.c.b16 %v2831, %v2830
        %v2872 = vpack.c.b16 %v2833, %v2832
        %v2873 = vpack.c.b16 %v2835, %v2834
        %v2874 = vpack.c.b16 %v2837, %v2836
        %v2875 = vpack.c.b16 %v2839, %v2838
        %v2876 = vpack.c.b16 %v2841, %v2840
        %v2877 = vpack.c.b16 %v2843, %v2842
        %v2878 = vpack.c.b16 %v2845, %v2844
        %v2879 = vpack.c.b16 %v2847, %v2846
        %v2880 = vpack.c.b16 %v2849, %v2848
        %v2881 = vpack.c.b16 %v2851, %v2850
        %v2882 = vpack.c.b16 %v2853, %v2852
        %v2883 = vpack.c.b16 %v2855, %v2854
        %v2884 = vpack.c.b16 %v2857, %v2856
        %2912 = vmatpush.bf16.msra.mxu0 %v2749
        %2913 = vmatpush.bf16.msra.mxu0 %v2748
        %2914 = vmatpush.bf16.msra.mxu0 %v2747
        %2915 = vmatpush.bf16.msra.mxu0 %v2746
        %2916 = vmatpush.bf16.msra.mxu0 %v2745
        %2917 = vmatpush.bf16.msra.mxu0 %v2744
        %2918 = vmatpush.bf16.msra.mxu0 %v2743
        %2919 = vmatpush.bf16.msra.mxu0 %v2742
        %2920 = vmatmul.bf16.gmra.mxu0 %v2858
        %v2921 = vpop.f32.mrf.mxu0
        %v2922 = vadd.f32 0.0, %v2921
        %v2923 = vpop.f32.mrf.mxu0
        %v2924 = vadd.f32 0.0, %v2923
        %2925 = vmatmul.bf16.gmra.mxu0 %v2859
        %v2926 = vpop.f32.mrf.mxu0
        %v2927 = vadd.f32 0.0, %v2926
        %v2928 = vpop.f32.mrf.mxu0
        %v2929 = vadd.f32 0.0, %v2928
        %2930 = vmatmul.bf16.gmra.mxu0 %v2860
        %v2931 = vpop.f32.mrf.mxu0
        %v2932 = vadd.f32 0.0, %v2931
        %v2933 = vpop.f32.mrf.mxu0
        %v2934 = vadd.f32 0.0, %v2933
        %2935 = vmatmul.bf16.gmra.mxu0 %v2861
        %v2936 = vpop.f32.mrf.mxu0
        %v2937 = vadd.f32 0.0, %v2936
        %v2938 = vpop.f32.mrf.mxu0
        %v2939 = vadd.f32 0.0, %v2938
        %2940 = vmatmul.bf16.gmra.mxu0 %v2862
        %v2941 = vpop.f32.mrf.mxu0
        %v2942 = vadd.f32 0.0, %v2941
        %v2943 = vpop.f32.mrf.mxu0
        %v2944 = vadd.f32 0.0, %v2943
        %2945 = vmatmul.bf16.gmra.mxu0 %v2863
        %v2946 = vpop.f32.mrf.mxu0
        %v2947 = vadd.f32 0.0, %v2946
        %v2948 = vpop.f32.mrf.mxu0
        %v2949 = vadd.f32 0.0, %v2948
        %2950 = vmatmul.bf16.gmra.mxu0 %v2864
        %v2951 = vpop.f32.mrf.mxu0
        %v2952 = vadd.f32 0.0, %v2951
        %v2953 = vpop.f32.mrf.mxu0
        %v2954 = vadd.f32 0.0, %v2953
        %2955 = vmatmul.bf16.gmra.mxu0 %v2865
        %v2956 = vpop.f32.mrf.mxu0
        %v2957 = vadd.f32 0.0, %v2956
        %v2958 = vpop.f32.mrf.mxu0
        %v2959 = vadd.f32 0.0, %v2958
        %2960 = vmatmul.bf16.gmra.mxu0 %v2866
        %v2961 = vpop.f32.mrf.mxu0
        %v2962 = vadd.f32 0.0, %v2961
        %v2963 = vpop.f32.mrf.mxu0
        %v2964 = vadd.f32 0.0, %v2963
        %2965 = vmatmul.bf16.gmra.mxu0 %v2867
        %v2966 = vpop.f32.mrf.mxu0
        %v2967 = vadd.f32 0.0, %v2966
        %v2968 = vpop.f32.mrf.mxu0
        %v2969 = vadd.f32 0.0, %v2968
        %2970 = vmatmul.bf16.gmra.mxu0 %v2868
        %v2971 = vpop.f32.mrf.mxu0
        %v2972 = vadd.f32 0.0, %v2971
        %v2973 = vpop.f32.mrf.mxu0
        %v2974 = vadd.f32 0.0, %v2973
        %2975 = vmatmul.bf16.gmra.mxu0 %v2869
        %v2976 = vpop.f32.mrf.mxu0
        %v2977 = vadd.f32 0.0, %v2976
        %v2978 = vpop.f32.mrf.mxu0
        %v2979 = vadd.f32 0.0, %v2978
        %2980 = vmatmul.bf16.gmra.mxu0 %v2870
        %v2981 = vpop.f32.mrf.mxu0
        %v2982 = vadd.f32 0.0, %v2981
        %v2983 = vpop.f32.mrf.mxu0
        %v2984 = vadd.f32 0.0, %v2983
        %2985 = vmatmul.bf16.gmra.mxu0 %v2871
        %v2986 = vpop.f32.mrf.mxu0
        %v2987 = vadd.f32 0.0, %v2986
        %v2988 = vpop.f32.mrf.mxu0
        %v2989 = vadd.f32 0.0, %v2988
        %2990 = vmatmul.bf16.gmra.mxu0 %v2872
        %v2991 = vpop.f32.mrf.mxu0
        %v2992 = vadd.f32 0.0, %v2991
        %v2993 = vpop.f32.mrf.mxu0
        %v2994 = vadd.f32 0.0, %v2993
        %2995 = vmatmul.bf16.gmra.mxu0 %v2873
        %v2996 = vpop.f32.mrf.mxu0
        %v2997 = vadd.f32 0.0, %v2996
        %v2998 = vpop.f32.mrf.mxu0
        %v2999 = vadd.f32 0.0, %v2998
        %3000 = vmatmul.bf16.gmra.mxu0 %v2874
        %v3001 = vpop.f32.mrf.mxu0
        %v3002 = vadd.f32 0.0, %v3001
        %v3003 = vpop.f32.mrf.mxu0
        %v3004 = vadd.f32 0.0, %v3003
        %3005 = vmatmul.bf16.gmra.mxu0 %v2875
        %v3006 = vpop.f32.mrf.mxu0
        %v3007 = vadd.f32 0.0, %v3006
        %v3008 = vpop.f32.mrf.mxu0
        %v3009 = vadd.f32 0.0, %v3008
        %3010 = vmatmul.bf16.gmra.mxu0 %v2876
        %v3011 = vpop.f32.mrf.mxu0
        %v3012 = vadd.f32 0.0, %v3011
        %v3013 = vpop.f32.mrf.mxu0
        %v3014 = vadd.f32 0.0, %v3013
        %3015 = vmatmul.bf16.gmra.mxu0 %v2877
        %v3016 = vpop.f32.mrf.mxu0
        %v3017 = vadd.f32 0.0, %v3016
        %v3018 = vpop.f32.mrf.mxu0
        %v3019 = vadd.f32 0.0, %v3018
        %3020 = vmatmul.bf16.gmra.mxu0 %v2878
        %v3021 = vpop.f32.mrf.mxu0
        %v3022 = vadd.f32 0.0, %v3021
        %v3023 = vpop.f32.mrf.mxu0
        %v3024 = vadd.f32 0.0, %v3023
        %3025 = vmatmul.bf16.gmra.mxu0 %v2879
        %v3026 = vpop.f32.mrf.mxu0
        %v3027 = vadd.f32 0.0, %v3026
        %v3028 = vpop.f32.mrf.mxu0
        %v3029 = vadd.f32 0.0, %v3028
        %3030 = vmatmul.bf16.gmra.mxu0 %v2880
        %v3031 = vpop.f32.mrf.mxu0
        %v3032 = vadd.f32 0.0, %v3031
        %v3033 = vpop.f32.mrf.mxu0
        %v3034 = vadd.f32 0.0, %v3033
        %3035 = vmatmul.bf16.gmra.mxu0 %v2881
        %v3036 = vpop.f32.mrf.mxu0
        %v3037 = vadd.f32 0.0, %v3036
        %v3038 = vpop.f32.mrf.mxu0
        %v3039 = vadd.f32 0.0, %v3038
        %3040 = vmatmul.bf16.gmra.mxu0 %v2882
        %v3041 = vpop.f32.mrf.mxu0
        %v3042 = vadd.f32 0.0, %v3041
        %v3043 = vpop.f32.mrf.mxu0
        %v3044 = vadd.f32 0.0, %v3043
        %3045 = vmatmul.bf16.gmra.mxu0 %v2883
        %v3046 = vpop.f32.mrf.mxu0
        %v3047 = vadd.f32 0.0, %v3046
        %v3048 = vpop.f32.mrf.mxu0
        %v3049 = vadd.f32 0.0, %v3048
        %3050 = vmatmul.bf16.gmra.mxu0 %v2884
        %v3051 = vpop.f32.mrf.mxu0
        %v3052 = vadd.f32 0.0, %v3051
        %v3053 = vpop.f32.mrf.mxu0
        %v3054 = vadd.f32 0.0, %v3053
        %3055 = vdwg.mxu0
        %v3056 = vpack.c.bf16 %v2922, %v2922
        %v3057 = vpack.c.bf16 %v2924, %v2924
        %v3058 = vpack.c.bf16 %v2927, %v2927
        %v3059 = vpack.c.bf16 %v2929, %v2929
        %v3060 = vpack.c.bf16 %v2932, %v2932
        %v3061 = vpack.c.bf16 %v2934, %v2934
        %v3062 = vpack.c.bf16 %v2937, %v2937
        %v3063 = vpack.c.bf16 %v2939, %v2939
        %v3064 = vpack.c.bf16 %v2942, %v2942
        %v3065 = vpack.c.bf16 %v2944, %v2944
        %v3066 = vpack.c.bf16 %v2947, %v2947
        %v3067 = vpack.c.bf16 %v2949, %v2949
        %v3068 = vpack.c.bf16 %v2952, %v2952
        %v3069 = vpack.c.bf16 %v2954, %v2954
        %v3070 = vpack.c.bf16 %v2957, %v2957
        %v3071 = vpack.c.bf16 %v2959, %v2959
        %v3072 = vpack.c.bf16 %v2962, %v2962
        %v3073 = vpack.c.bf16 %v2964, %v2964
        %v3074 = vpack.c.bf16 %v2967, %v2967
        %v3075 = vpack.c.bf16 %v2969, %v2969
        %v3076 = vpack.c.bf16 %v2972, %v2972
        %v3077 = vpack.c.bf16 %v2974, %v2974
        %v3078 = vpack.c.bf16 %v2977, %v2977
        %v3079 = vpack.c.bf16 %v2979, %v2979
        %v3080 = vpack.c.bf16 %v2982, %v2982
        %v3081 = vpack.c.bf16 %v2984, %v2984
        %v3082 = vpack.c.bf16 %v2987, %v2987
        %v3083 = vpack.c.bf16 %v2989, %v2989
        %v3084 = vpack.c.bf16 %v2992, %v2992
        %v3085 = vpack.c.bf16 %v2994, %v2994
        %v3086 = vpack.c.bf16 %v2997, %v2997
        %v3087 = vpack.c.bf16 %v2999, %v2999
        %v3088 = vpack.c.bf16 %v3002, %v3002
        %v3089 = vpack.c.bf16 %v3004, %v3004
        %v3090 = vpack.c.bf16 %v3007, %v3007
        %v3091 = vpack.c.bf16 %v3009, %v3009
        %v3092 = vpack.c.bf16 %v3012, %v3012
        %v3093 = vpack.c.bf16 %v3014, %v3014
        %v3094 = vpack.c.bf16 %v3017, %v3017
        %v3095 = vpack.c.bf16 %v3019, %v3019
        %v3096 = vpack.c.bf16 %v3022, %v3022
        %v3097 = vpack.c.bf16 %v3024, %v3024
        %v3098 = vpack.c.bf16 %v3027, %v3027
        %v3099 = vpack.c.bf16 %v3029, %v3029
        %v3100 = vpack.c.bf16 %v3032, %v3032
        %v3101 = vpack.c.bf16 %v3034, %v3034
        %v3102 = vpack.c.bf16 %v3037, %v3037
        %v3103 = vpack.c.bf16 %v3039, %v3039
        %v3104 = vpack.c.bf16 %v3042, %v3042
        %v3105 = vpack.c.bf16 %v3044, %v3044
        %v3106 = vpack.c.bf16 %v3047, %v3047
        %v3107 = vpack.c.bf16 %v3049, %v3049
        %v3108 = vpack.c.bf16 %v3052, %v3052
        %v3109 = vpack.c.bf16 %v3054, %v3054
        %v3110 = vld [vmem:[#allocation9] sm:$0xf]
        %v3111 = vld [vmem:[#allocation9 + $0x4] sm:$0xf]
        %v3112 = vld [vmem:[#allocation9 + $0x8] sm:$0xf]
        %v3113 = vld [vmem:[#allocation9 + $0xc] sm:$0xf]
        %v3114 = vld [vmem:[#allocation9 + $0x10] sm:$0xf]
        %v3115 = vld [vmem:[#allocation9 + $0x14] sm:$0xf]
        %v3116 = vld [vmem:[#allocation9 + $0x18] sm:$0xf]
        %v3117 = vld [vmem:[#allocation9 + $0x1c] sm:$0xf]
        %v3118 = vld [vmem:[#allocation9 + $0x20] sm:$0xf]
        %v3119 = vld [vmem:[#allocation9 + $0x24] sm:$0xf]
        %v3120 = vld [vmem:[#allocation9 + $0x28] sm:$0xf]
        %v3121 = vld [vmem:[#allocation9 + $0x2c] sm:$0xf]
        %v3122 = vld [vmem:[#allocation9 + $0x30] sm:$0xf]
        %v3123 = vld [vmem:[#allocation9 + $0x34] sm:$0xf]
        %v3124 = vld [vmem:[#allocation9 + $0x38] sm:$0xf]
        %v3125 = vld [vmem:[#allocation9 + $0x3c] sm:$0xf]
        %s3126 = scalar_lea.vmem [#allocation9], 192
        %v3127 = vld [vmem:[%s3126] sm:$0xf]
        %v3128 = vld [vmem:[%s3126 + $0x4] sm:$0xf]
        %v3129 = vld [vmem:[%s3126 + $0x8] sm:$0xf]
        %v3130 = vld [vmem:[%s3126 + $0xc] sm:$0xf]
        %v3131 = vld [vmem:[%s3126 + $0x10] sm:$0xf]
        %v3132 = vld [vmem:[%s3126 + $0x14] sm:$0xf]
        %v3133 = vld [vmem:[%s3126 + $0x18] sm:$0xf]
        %v3134 = vld [vmem:[%s3126 + $0x1c] sm:$0xf]
        %v3135 = vld [vmem:[%s3126 + $0x20] sm:$0xf]
        %v3136 = vld [vmem:[%s3126 + $0x24] sm:$0xf]
        %v3137 = vld [vmem:[%s3126 + $0x28] sm:$0xf]
        %v3138 = vld [vmem:[%s3126 + $0x2c] sm:$0xf]
        %v3139 = vld [vmem:[%s3126 + $0x30] sm:$0xf]
        %v3140 = vld [vmem:[%s3126 + $0x34] sm:$0xf]
        %v3141 = vld [vmem:[%s3126 + $0x38] sm:$0xf]
        %v3142 = vld [vmem:[%s3126 + $0x3c] sm:$0xf]
        %v3191 = vunpack.c.l.b16 %v3059
        %v3192 = vunpack.c.l.b16 %v3060
        %v3193 = vunpack.c.l.b16 %v3061
        %v3194 = vunpack.c.l.b16 %v3062
        %v3195 = vunpack.c.l.b16 %v3063
        %v3196 = vunpack.c.l.b16 %v3064
        %v3197 = vunpack.c.l.b16 %v3065
        %v3198 = vunpack.c.l.b16 %v3066
        %v3199 = vunpack.c.l.b16 %v3067
        %v3200 = vunpack.c.l.b16 %v3068
        %v3201 = vunpack.c.l.b16 %v3069
        %v3202 = vunpack.c.l.b16 %v3070
        %v3203 = vunpack.c.l.b16 %v3071
        %v3204 = vunpack.c.l.b16 %v3072
        %v3205 = vunpack.c.l.b16 %v3073
        %v3206 = vunpack.c.l.b16 %v3074
        %v3207 = vunpack.c.l.b16 %v3075
        %v3208 = vunpack.c.l.b16 %v3076
        %v3209 = vunpack.c.l.b16 %v3077
        %v3210 = vunpack.c.l.b16 %v3078
        %v3211 = vunpack.c.l.b16 %v3079
        %v3212 = vunpack.c.l.b16 %v3080
        %v3213 = vunpack.c.l.b16 %v3081
        %v3214 = vunpack.c.l.b16 %v3082
        %v3215 = vunpack.c.l.b16 %v3083
        %v3216 = vunpack.c.l.b16 %v3084
        %v3217 = vunpack.c.l.b16 %v3085
        %v3218 = vunpack.c.l.b16 %v3086
        %v3219 = vunpack.c.l.b16 %v3087
        %v3220 = vunpack.c.l.b16 %v3088
        %v3221 = vunpack.c.l.b16 %v3089
        %v3222 = vunpack.c.l.b16 %v3090
        %v3223 = vunpack.c.l.b16 %v3091
        %v3224 = vunpack.c.l.b16 %v3092
        %v3225 = vunpack.c.l.b16 %v3093
        %v3226 = vunpack.c.l.b16 %v3094
        %v3227 = vunpack.c.l.b16 %v3095
        %v3228 = vunpack.c.l.b16 %v3096
        %v3229 = vunpack.c.l.b16 %v3097
        %v3230 = vunpack.c.l.b16 %v3098
        %v3231 = vunpack.c.l.b16 %v3099
        %v3232 = vunpack.c.l.b16 %v3100
        %v3233 = vunpack.c.l.b16 %v3101
        %v3234 = vunpack.c.l.b16 %v3102
        %v3235 = vunpack.c.l.b16 %v3103
        %v3236 = vunpack.c.l.b16 %v3104
        %v3237 = vunpack.c.l.b16 %v3105
        %v3238 = vunpack.c.l.b16 %v3106
        %v3239 = vpack.c.b16 %v3192, %v3191
        %v3240 = vpack.c.b16 %v3194, %v3193
        %v3241 = vpack.c.b16 %v3196, %v3195
        %v3242 = vpack.c.b16 %v3198, %v3197
        %v3243 = vpack.c.b16 %v3200, %v3199
        %v3244 = vpack.c.b16 %v3202, %v3201
        %v3245 = vpack.c.b16 %v3204, %v3203
        %v3246 = vpack.c.b16 %v3206, %v3205
        %v3247 = vpack.c.b16 %v3208, %v3207
        %v3248 = vpack.c.b16 %v3210, %v3209
        %v3249 = vpack.c.b16 %v3212, %v3211
        %v3250 = vpack.c.b16 %v3214, %v3213
        %v3251 = vpack.c.b16 %v3216, %v3215
        %v3252 = vpack.c.b16 %v3218, %v3217
        %v3253 = vpack.c.b16 %v3220, %v3219
        %v3254 = vpack.c.b16 %v3222, %v3221
        %v3255 = vpack.c.b16 %v3224, %v3223
        %v3256 = vpack.c.b16 %v3226, %v3225
        %v3257 = vpack.c.b16 %v3228, %v3227
        %v3258 = vpack.c.b16 %v3230, %v3229
        %v3259 = vpack.c.b16 %v3232, %v3231
        %v3260 = vpack.c.b16 %v3234, %v3233
        %v3261 = vpack.c.b16 %v3236, %v3235
        %v3262 = vpack.c.b16 %v3238, %v3237
        %v3303 = vunpack.c.l.b16 %v3127
        %v3304 = vunpack.c.l.b16 %v3128
        %v3305 = vunpack.c.l.b16 %v3129
        %v3306 = vunpack.c.l.b16 %v3130
        %v3307 = vunpack.c.l.b16 %v3131
        %v3308 = vunpack.c.l.b16 %v3132
        %v3309 = vunpack.c.l.b16 %v3133
        %v3310 = vunpack.c.l.b16 %v3134
        %v3311 = vunpack.c.l.b16 %v3135
        %v3312 = vunpack.c.l.b16 %v3136
        %v3313 = vunpack.c.l.b16 %v3137
        %v3314 = vunpack.c.l.b16 %v3138
        %v3315 = vunpack.c.l.b16 %v3139
        %v3316 = vunpack.c.l.b16 %v3140
        %v3317 = vunpack.c.l.b16 %v3141
        %v3318 = vunpack.c.l.b16 %v3142
        %v3319 = vpack.c.b16 %v3304, %v3303
        %v3320 = vpack.c.b16 %v3306, %v3305
        %v3321 = vpack.c.b16 %v3308, %v3307
        %v3322 = vpack.c.b16 %v3310, %v3309
        %v3323 = vpack.c.b16 %v3312, %v3311
        %v3324 = vpack.c.b16 %v3314, %v3313
        %v3325 = vpack.c.b16 %v3316, %v3315
        %v3326 = vpack.c.b16 %v3318, %v3317
        %3335 = vmatpush.bf16.msra.mxu0 %v3326
        %3336 = vmatpush.bf16.msra.mxu0 %v3325
        %3337 = vmatpush.bf16.msra.mxu0 %v3324
        %3338 = vmatpush.bf16.msra.mxu0 %v3323
        %3339 = vmatpush.bf16.msra.mxu0 %v3322
        %3340 = vmatpush.bf16.msra.mxu0 %v3321
        %3341 = vmatpush.bf16.msra.mxu0 %v3320
        %3342 = vmatpush.bf16.msra.mxu0 %v3319
        %3343 = vmatmul.bf16.gmra.mxu0 %v3239
        %v3344 = vpop.f32.mrf.mxu0
        %v3345 = vadd.f32 0.0, %v3344
        %v3346 = vpop.f32.mrf.mxu0
        %v3347 = vadd.f32 0.0, %v3346
        %3348 = vmatmul.bf16.gmra.mxu0 %v3240
        %v3349 = vpop.f32.mrf.mxu0
        %v3350 = vadd.f32 0.0, %v3349
        %v3351 = vpop.f32.mrf.mxu0
        %v3352 = vadd.f32 0.0, %v3351
        %3353 = vmatmul.bf16.gmra.mxu0 %v3241
        %v3354 = vpop.f32.mrf.mxu0
        %v3355 = vadd.f32 0.0, %v3354
        %v3356 = vpop.f32.mrf.mxu0
        %v3357 = vadd.f32 0.0, %v3356
        %3358 = vmatmul.bf16.gmra.mxu0 %v3242
        %v3359 = vpop.f32.mrf.mxu0
        %v3360 = vadd.f32 0.0, %v3359
        %v3361 = vpop.f32.mrf.mxu0
        %v3362 = vadd.f32 0.0, %v3361
        %3363 = vmatmul.bf16.gmra.mxu0 %v3243
        %v3364 = vpop.f32.mrf.mxu0
        %v3365 = vadd.f32 0.0, %v3364
        %v3366 = vpop.f32.mrf.mxu0
        %v3367 = vadd.f32 0.0, %v3366
        %3368 = vmatmul.bf16.gmra.mxu0 %v3244
        %v3369 = vpop.f32.mrf.mxu0
        %v3370 = vadd.f32 0.0, %v3369
        %v3371 = vpop.f32.mrf.mxu0
        %v3372 = vadd.f32 0.0, %v3371
        %3373 = vmatmul.bf16.gmra.mxu0 %v3245
        %v3374 = vpop.f32.mrf.mxu0
        %v3375 = vadd.f32 0.0, %v3374
        %v3376 = vpop.f32.mrf.mxu0
        %v3377 = vadd.f32 0.0, %v3376
        %3378 = vmatmul.bf16.gmra.mxu0 %v3246
        %v3379 = vpop.f32.mrf.mxu0
        %v3380 = vadd.f32 0.0, %v3379
        %v3381 = vpop.f32.mrf.mxu0
        %v3382 = vadd.f32 0.0, %v3381
        %3383 = vmatmul.bf16.gmra.mxu0 %v3247
        %v3384 = vpop.f32.mrf.mxu0
        %v3385 = vadd.f32 0.0, %v3384
        %v3386 = vpop.f32.mrf.mxu0
        %v3387 = vadd.f32 0.0, %v3386
        %3388 = vmatmul.bf16.gmra.mxu0 %v3248
        %v3389 = vpop.f32.mrf.mxu0
        %v3390 = vadd.f32 0.0, %v3389
        %v3391 = vpop.f32.mrf.mxu0
        %v3392 = vadd.f32 0.0, %v3391
        %3393 = vmatmul.bf16.gmra.mxu0 %v3249
        %v3394 = vpop.f32.mrf.mxu0
        %v3395 = vadd.f32 0.0, %v3394
        %v3396 = vpop.f32.mrf.mxu0
        %v3397 = vadd.f32 0.0, %v3396
        %3398 = vmatmul.bf16.gmra.mxu0 %v3250
        %v3399 = vpop.f32.mrf.mxu0
        %v3400 = vadd.f32 0.0, %v3399
        %v3401 = vpop.f32.mrf.mxu0
        %v3402 = vadd.f32 0.0, %v3401
        %3403 = vmatmul.bf16.gmra.mxu0 %v3251
        %v3404 = vpop.f32.mrf.mxu0
        %v3405 = vadd.f32 0.0, %v3404
        %v3406 = vpop.f32.mrf.mxu0
        %v3407 = vadd.f32 0.0, %v3406
        %3408 = vmatmul.bf16.gmra.mxu0 %v3252
        %v3409 = vpop.f32.mrf.mxu0
        %v3410 = vadd.f32 0.0, %v3409
        %v3411 = vpop.f32.mrf.mxu0
        %v3412 = vadd.f32 0.0, %v3411
        %3413 = vmatmul.bf16.gmra.mxu0 %v3253
        %v3414 = vpop.f32.mrf.mxu0
        %v3415 = vadd.f32 0.0, %v3414
        %v3416 = vpop.f32.mrf.mxu0
        %v3417 = vadd.f32 0.0, %v3416
        %3418 = vmatmul.bf16.gmra.mxu0 %v3254
        %v3419 = vpop.f32.mrf.mxu0
        %v3420 = vadd.f32 0.0, %v3419
        %v3421 = vpop.f32.mrf.mxu0
        %v3422 = vadd.f32 0.0, %v3421
        %3423 = vmatmul.bf16.gmra.mxu0 %v3255
        %v3424 = vpop.f32.mrf.mxu0
        %v3425 = vadd.f32 0.0, %v3424
        %v3426 = vpop.f32.mrf.mxu0
        %v3427 = vadd.f32 0.0, %v3426
        %3428 = vmatmul.bf16.gmra.mxu0 %v3256
        %v3429 = vpop.f32.mrf.mxu0
        %v3430 = vadd.f32 0.0, %v3429
        %v3431 = vpop.f32.mrf.mxu0
        %v3432 = vadd.f32 0.0, %v3431
        %3433 = vmatmul.bf16.gmra.mxu0 %v3257
        %v3434 = vpop.f32.mrf.mxu0
        %v3435 = vadd.f32 0.0, %v3434
        %v3436 = vpop.f32.mrf.mxu0
        %v3437 = vadd.f32 0.0, %v3436
        %3438 = vmatmul.bf16.gmra.mxu0 %v3258
        %v3439 = vpop.f32.mrf.mxu0
        %v3440 = vadd.f32 0.0, %v3439
        %v3441 = vpop.f32.mrf.mxu0
        %v3442 = vadd.f32 0.0, %v3441
        %3443 = vmatmul.bf16.gmra.mxu0 %v3259
        %v3444 = vpop.f32.mrf.mxu0
        %v3445 = vadd.f32 0.0, %v3444
        %v3446 = vpop.f32.mrf.mxu0
        %v3447 = vadd.f32 0.0, %v3446
        %3448 = vmatmul.bf16.gmra.mxu0 %v3260
        %v3449 = vpop.f32.mrf.mxu0
        %v3450 = vadd.f32 0.0, %v3449
        %v3451 = vpop.f32.mrf.mxu0
        %v3452 = vadd.f32 0.0, %v3451
        %3453 = vmatmul.bf16.gmra.mxu0 %v3261
        %v3454 = vpop.f32.mrf.mxu0
        %v3455 = vadd.f32 0.0, %v3454
        %v3456 = vpop.f32.mrf.mxu0
        %v3457 = vadd.f32 0.0, %v3456
        %3458 = vmatmul.bf16.gmra.mxu0 %v3262
        %v3459 = vpop.f32.mrf.mxu0
        %v3460 = vadd.f32 0.0, %v3459
        %v3461 = vpop.f32.mrf.mxu0
        %v3462 = vadd.f32 0.0, %v3461
        %3463 = vdwg.mxu0
        %v3467 = vunpack.c.l.b16 %v3056
        %v3468 = vunpack.c.l.b16 %v3057
        %v3469 = vunpack.c.l.b16 %v3058
        %v3470 = vpack.c.b16 %v3468, %v3467
        %v3471 = vpack.c.b16 %v3191, %v3469
        %v3472 = vpack.c.b16 %v3193, %v3192
        %v3473 = vpack.c.b16 %v3195, %v3194
        %v3474 = vpack.c.b16 %v3197, %v3196
        %v3475 = vpack.c.b16 %v3199, %v3198
        %v3476 = vpack.c.b16 %v3201, %v3200
        %v3477 = vpack.c.b16 %v3203, %v3202
        %v3478 = vpack.c.b16 %v3205, %v3204
        %v3479 = vpack.c.b16 %v3207, %v3206
        %v3480 = vpack.c.b16 %v3209, %v3208
        %v3481 = vpack.c.b16 %v3211, %v3210
        %v3482 = vpack.c.b16 %v3213, %v3212
        %v3483 = vpack.c.b16 %v3215, %v3214
        %v3484 = vpack.c.b16 %v3217, %v3216
        %v3485 = vpack.c.b16 %v3219, %v3218
        %v3486 = vpack.c.b16 %v3221, %v3220
        %v3487 = vpack.c.b16 %v3223, %v3222
        %v3488 = vpack.c.b16 %v3225, %v3224
        %v3489 = vpack.c.b16 %v3227, %v3226
        %v3490 = vpack.c.b16 %v3229, %v3228
        %v3491 = vpack.c.b16 %v3231, %v3230
        %v3492 = vpack.c.b16 %v3233, %v3232
        %v3493 = vpack.c.b16 %v3235, %v3234
        %v3534 = vunpack.c.l.b16 %v3110
        %v3535 = vunpack.c.l.b16 %v3111
        %v3536 = vunpack.c.l.b16 %v3112
        %v3537 = vunpack.c.l.b16 %v3113
        %v3538 = vunpack.c.l.b16 %v3114
        %v3539 = vunpack.c.l.b16 %v3115
        %v3540 = vunpack.c.l.b16 %v3116
        %v3541 = vunpack.c.l.b16 %v3117
        %v3542 = vunpack.c.l.b16 %v3118
        %v3543 = vunpack.c.l.b16 %v3119
        %v3544 = vunpack.c.l.b16 %v3120
        %v3545 = vunpack.c.l.b16 %v3121
        %v3546 = vunpack.c.l.b16 %v3122
        %v3547 = vunpack.c.l.b16 %v3123
        %v3548 = vunpack.c.l.b16 %v3124
        %v3549 = vunpack.c.l.b16 %v3125
        %v3550 = vpack.c.b16 %v3535, %v3534
        %v3551 = vpack.c.b16 %v3537, %v3536
        %v3552 = vpack.c.b16 %v3539, %v3538
        %v3553 = vpack.c.b16 %v3541, %v3540
        %v3554 = vpack.c.b16 %v3543, %v3542
        %v3555 = vpack.c.b16 %v3545, %v3544
        %v3556 = vpack.c.b16 %v3547, %v3546
        %v3557 = vpack.c.b16 %v3549, %v3548
        %3566 = vmatpush.bf16.msra.mxu0 %v3557
        %3567 = vmatpush.bf16.msra.mxu0 %v3556
        %3568 = vmatpush.bf16.msra.mxu0 %v3555
        %3569 = vmatpush.bf16.msra.mxu0 %v3554
        %3570 = vmatpush.bf16.msra.mxu0 %v3553
        %3571 = vmatpush.bf16.msra.mxu0 %v3552
        %3572 = vmatpush.bf16.msra.mxu0 %v3551
        %3573 = vmatpush.bf16.msra.mxu0 %v3550
        %3574 = vmatmul.bf16.gmra.mxu0 %v3470
        %v3575 = vpop.f32.mrf.mxu0
        %v3576 = vadd.f32 %v3345, %v3575
        %v3577 = vpop.f32.mrf.mxu0
        %v3578 = vadd.f32 %v3347, %v3577
        %3579 = vmatmul.bf16.gmra.mxu0 %v3471
        %v3580 = vpop.f32.mrf.mxu0
        %v3581 = vadd.f32 %v3350, %v3580
        %v3582 = vpop.f32.mrf.mxu0
        %v3583 = vadd.f32 %v3352, %v3582
        %3584 = vmatmul.bf16.gmra.mxu0 %v3472
        %v3585 = vpop.f32.mrf.mxu0
        %v3586 = vadd.f32 %v3355, %v3585
        %v3587 = vpop.f32.mrf.mxu0
        %v3588 = vadd.f32 %v3357, %v3587
        %3589 = vmatmul.bf16.gmra.mxu0 %v3473
        %v3590 = vpop.f32.mrf.mxu0
        %v3591 = vadd.f32 %v3360, %v3590
        %v3592 = vpop.f32.mrf.mxu0
        %v3593 = vadd.f32 %v3362, %v3592
        %3594 = vmatmul.bf16.gmra.mxu0 %v3474
        %v3595 = vpop.f32.mrf.mxu0
        %v3596 = vadd.f32 %v3365, %v3595
        %v3597 = vpop.f32.mrf.mxu0
        %v3598 = vadd.f32 %v3367, %v3597
        %3599 = vmatmul.bf16.gmra.mxu0 %v3475
        %v3600 = vpop.f32.mrf.mxu0
        %v3601 = vadd.f32 %v3370, %v3600
        %v3602 = vpop.f32.mrf.mxu0
        %v3603 = vadd.f32 %v3372, %v3602
        %3604 = vmatmul.bf16.gmra.mxu0 %v3476
        %v3605 = vpop.f32.mrf.mxu0
        %v3606 = vadd.f32 %v3375, %v3605
        %v3607 = vpop.f32.mrf.mxu0
        %v3608 = vadd.f32 %v3377, %v3607
        %3609 = vmatmul.bf16.gmra.mxu0 %v3477
        %v3610 = vpop.f32.mrf.mxu0
        %v3611 = vadd.f32 %v3380, %v3610
        %v3612 = vpop.f32.mrf.mxu0
        %v3613 = vadd.f32 %v3382, %v3612
        %3614 = vmatmul.bf16.gmra.mxu0 %v3478
        %v3615 = vpop.f32.mrf.mxu0
        %v3616 = vadd.f32 %v3385, %v3615
        %v3617 = vpop.f32.mrf.mxu0
        %v3618 = vadd.f32 %v3387, %v3617
        %3619 = vmatmul.bf16.gmra.mxu0 %v3479
        %v3620 = vpop.f32.mrf.mxu0
        %v3621 = vadd.f32 %v3390, %v3620
        %v3622 = vpop.f32.mrf.mxu0
        %v3623 = vadd.f32 %v3392, %v3622
        %3624 = vmatmul.bf16.gmra.mxu0 %v3480
        %v3625 = vpop.f32.mrf.mxu0
        %v3626 = vadd.f32 %v3395, %v3625
        %v3627 = vpop.f32.mrf.mxu0
        %v3628 = vadd.f32 %v3397, %v3627
        %3629 = vmatmul.bf16.gmra.mxu0 %v3481
        %v3630 = vpop.f32.mrf.mxu0
        %v3631 = vadd.f32 %v3400, %v3630
        %v3632 = vpop.f32.mrf.mxu0
        %v3633 = vadd.f32 %v3402, %v3632
        %3634 = vmatmul.bf16.gmra.mxu0 %v3482
        %v3635 = vpop.f32.mrf.mxu0
        %v3636 = vadd.f32 %v3405, %v3635
        %v3637 = vpop.f32.mrf.mxu0
        %v3638 = vadd.f32 %v3407, %v3637
        %3639 = vmatmul.bf16.gmra.mxu0 %v3483
        %v3640 = vpop.f32.mrf.mxu0
        %v3641 = vadd.f32 %v3410, %v3640
        %v3642 = vpop.f32.mrf.mxu0
        %v3643 = vadd.f32 %v3412, %v3642
        %3644 = vmatmul.bf16.gmra.mxu0 %v3484
        %v3645 = vpop.f32.mrf.mxu0
        %v3646 = vadd.f32 %v3415, %v3645
        %v3647 = vpop.f32.mrf.mxu0
        %v3648 = vadd.f32 %v3417, %v3647
        %3649 = vmatmul.bf16.gmra.mxu0 %v3485
        %v3650 = vpop.f32.mrf.mxu0
        %v3651 = vadd.f32 %v3420, %v3650
        %v3652 = vpop.f32.mrf.mxu0
        %v3653 = vadd.f32 %v3422, %v3652
        %3654 = vmatmul.bf16.gmra.mxu0 %v3486
        %v3655 = vpop.f32.mrf.mxu0
        %v3656 = vadd.f32 %v3425, %v3655
        %v3657 = vpop.f32.mrf.mxu0
        %v3658 = vadd.f32 %v3427, %v3657
        %3659 = vmatmul.bf16.gmra.mxu0 %v3487
        %v3660 = vpop.f32.mrf.mxu0
        %v3661 = vadd.f32 %v3430, %v3660
        %v3662 = vpop.f32.mrf.mxu0
        %v3663 = vadd.f32 %v3432, %v3662
        %3664 = vmatmul.bf16.gmra.mxu0 %v3488
        %v3665 = vpop.f32.mrf.mxu0
        %v3666 = vadd.f32 %v3435, %v3665
        %v3667 = vpop.f32.mrf.mxu0
        %v3668 = vadd.f32 %v3437, %v3667
        %3669 = vmatmul.bf16.gmra.mxu0 %v3489
        %v3670 = vpop.f32.mrf.mxu0
        %v3671 = vadd.f32 %v3440, %v3670
        %v3672 = vpop.f32.mrf.mxu0
        %v3673 = vadd.f32 %v3442, %v3672
        %3674 = vmatmul.bf16.gmra.mxu0 %v3490
        %v3675 = vpop.f32.mrf.mxu0
        %v3676 = vadd.f32 %v3445, %v3675
        %v3677 = vpop.f32.mrf.mxu0
        %v3678 = vadd.f32 %v3447, %v3677
        %3679 = vmatmul.bf16.gmra.mxu0 %v3491
        %v3680 = vpop.f32.mrf.mxu0
        %v3681 = vadd.f32 %v3450, %v3680
        %v3682 = vpop.f32.mrf.mxu0
        %v3683 = vadd.f32 %v3452, %v3682
        %3684 = vmatmul.bf16.gmra.mxu0 %v3492
        %v3685 = vpop.f32.mrf.mxu0
        %v3686 = vadd.f32 %v3455, %v3685
        %v3687 = vpop.f32.mrf.mxu0
        %v3688 = vadd.f32 %v3457, %v3687
        %3689 = vmatmul.bf16.gmra.mxu0 %v3493
        %v3690 = vpop.f32.mrf.mxu0
        %v3691 = vadd.f32 %v3460, %v3690
        %v3692 = vpop.f32.mrf.mxu0
        %v3693 = vadd.f32 %v3462, %v3692
        %3694 = vdwg.mxu0
        %s3695 = scalar_lea.vmem [#allocation9], 384
        %v3696 = vld [vmem:[%s3695] sm:$0xf]
        %v3697 = vld [vmem:[%s3695 + $0x4] sm:$0xf]
        %v3698 = vld [vmem:[%s3695 + $0x8] sm:$0xf]
        %v3699 = vld [vmem:[%s3695 + $0xc] sm:$0xf]
        %v3700 = vld [vmem:[%s3695 + $0x10] sm:$0xf]
        %v3701 = vld [vmem:[%s3695 + $0x14] sm:$0xf]
        %v3702 = vld [vmem:[%s3695 + $0x18] sm:$0xf]
        %v3703 = vld [vmem:[%s3695 + $0x1c] sm:$0xf]
        %v3704 = vld [vmem:[%s3695 + $0x20] sm:$0xf]
        %v3705 = vld [vmem:[%s3695 + $0x24] sm:$0xf]
        %v3706 = vld [vmem:[%s3695 + $0x28] sm:$0xf]
        %v3707 = vld [vmem:[%s3695 + $0x2c] sm:$0xf]
        %v3708 = vld [vmem:[%s3695 + $0x30] sm:$0xf]
        %v3709 = vld [vmem:[%s3695 + $0x34] sm:$0xf]
        %v3710 = vld [vmem:[%s3695 + $0x38] sm:$0xf]
        %v3711 = vld [vmem:[%s3695 + $0x3c] sm:$0xf]
        %v3715 = vunpack.c.l.b16 %v3107
        %v3716 = vunpack.c.l.b16 %v3108
        %v3717 = vunpack.c.l.b16 %v3109
        %v3718 = vpack.c.b16 %v3237, %v3236
        %v3719 = vpack.c.b16 %v3715, %v3238
        %v3720 = vpack.c.b16 %v3717, %v3716
        %v3740 = vunpack.c.l.b16 %v3696
        %v3741 = vunpack.c.l.b16 %v3697
        %v3742 = vunpack.c.l.b16 %v3698
        %v3743 = vunpack.c.l.b16 %v3699
        %v3744 = vunpack.c.l.b16 %v3700
        %v3745 = vunpack.c.l.b16 %v3701
        %v3746 = vunpack.c.l.b16 %v3702
        %v3747 = vunpack.c.l.b16 %v3703
        %v3748 = vunpack.c.l.b16 %v3704
        %v3749 = vunpack.c.l.b16 %v3705
        %v3750 = vunpack.c.l.b16 %v3706
        %v3751 = vunpack.c.l.b16 %v3707
        %v3752 = vunpack.c.l.b16 %v3708
        %v3753 = vunpack.c.l.b16 %v3709
        %v3754 = vunpack.c.l.b16 %v3710
        %v3755 = vunpack.c.l.b16 %v3711
        %v3756 = vpack.c.b16 %v3741, %v3740
        %v3757 = vpack.c.b16 %v3743, %v3742
        %v3758 = vpack.c.b16 %v3745, %v3744
        %v3759 = vpack.c.b16 %v3747, %v3746
        %v3760 = vpack.c.b16 %v3749, %v3748
        %v3761 = vpack.c.b16 %v3751, %v3750
        %v3762 = vpack.c.b16 %v3753, %v3752
        %v3763 = vpack.c.b16 %v3755, %v3754
        %3772 = vmatpush.bf16.msra.mxu0 %v3763
        %3773 = vmatpush.bf16.msra.mxu0 %v3762
        %3774 = vmatpush.bf16.msra.mxu0 %v3761
        %3775 = vmatpush.bf16.msra.mxu0 %v3760
        %3776 = vmatpush.bf16.msra.mxu0 %v3759
        %3777 = vmatpush.bf16.msra.mxu0 %v3758
        %3778 = vmatpush.bf16.msra.mxu0 %v3757
        %3779 = vmatpush.bf16.msra.mxu0 %v3756
        %3780 = vmatmul.bf16.gmra.mxu0 %v3473
        %v3781 = vpop.f32.mrf.mxu0
        %v3782 = vadd.f32 0.0, %v3781
        %v3783 = vpop.f32.mrf.mxu0
        %v3784 = vadd.f32 0.0, %v3783
        %3785 = vmatmul.bf16.gmra.mxu0 %v3474
        %v3786 = vpop.f32.mrf.mxu0
        %v3787 = vadd.f32 0.0, %v3786
        %v3788 = vpop.f32.mrf.mxu0
        %v3789 = vadd.f32 0.0, %v3788
        %3790 = vmatmul.bf16.gmra.mxu0 %v3475
        %v3791 = vpop.f32.mrf.mxu0
        %v3792 = vadd.f32 0.0, %v3791
        %v3793 = vpop.f32.mrf.mxu0
        %v3794 = vadd.f32 0.0, %v3793
        %3795 = vmatmul.bf16.gmra.mxu0 %v3476
        %v3796 = vpop.f32.mrf.mxu0
        %v3797 = vadd.f32 0.0, %v3796
        %v3798 = vpop.f32.mrf.mxu0
        %v3799 = vadd.f32 0.0, %v3798
        %3800 = vmatmul.bf16.gmra.mxu0 %v3477
        %v3801 = vpop.f32.mrf.mxu0
        %v3802 = vadd.f32 0.0, %v3801
        %v3803 = vpop.f32.mrf.mxu0
        %v3804 = vadd.f32 0.0, %v3803
        %3805 = vmatmul.bf16.gmra.mxu0 %v3478
        %v3806 = vpop.f32.mrf.mxu0
        %v3807 = vadd.f32 0.0, %v3806
        %v3808 = vpop.f32.mrf.mxu0
        %v3809 = vadd.f32 0.0, %v3808
        %3810 = vmatmul.bf16.gmra.mxu0 %v3479
        %v3811 = vpop.f32.mrf.mxu0
        %v3812 = vadd.f32 0.0, %v3811
        %v3813 = vpop.f32.mrf.mxu0
        %v3814 = vadd.f32 0.0, %v3813
        %3815 = vmatmul.bf16.gmra.mxu0 %v3480
        %v3816 = vpop.f32.mrf.mxu0
        %v3817 = vadd.f32 0.0, %v3816
        %v3818 = vpop.f32.mrf.mxu0
        %v3819 = vadd.f32 0.0, %v3818
        %3820 = vmatmul.bf16.gmra.mxu0 %v3481
        %v3821 = vpop.f32.mrf.mxu0
        %v3822 = vadd.f32 0.0, %v3821
        %v3823 = vpop.f32.mrf.mxu0
        %v3824 = vadd.f32 0.0, %v3823
        %3825 = vmatmul.bf16.gmra.mxu0 %v3482
        %v3826 = vpop.f32.mrf.mxu0
        %v3827 = vadd.f32 0.0, %v3826
        %v3828 = vpop.f32.mrf.mxu0
        %v3829 = vadd.f32 0.0, %v3828
        %3830 = vmatmul.bf16.gmra.mxu0 %v3483
        %v3831 = vpop.f32.mrf.mxu0
        %v3832 = vadd.f32 0.0, %v3831
        %v3833 = vpop.f32.mrf.mxu0
        %v3834 = vadd.f32 0.0, %v3833
        %3835 = vmatmul.bf16.gmra.mxu0 %v3484
        %v3836 = vpop.f32.mrf.mxu0
        %v3837 = vadd.f32 0.0, %v3836
        %v3838 = vpop.f32.mrf.mxu0
        %v3839 = vadd.f32 0.0, %v3838
        %3840 = vmatmul.bf16.gmra.mxu0 %v3485
        %v3841 = vpop.f32.mrf.mxu0
        %v3842 = vadd.f32 0.0, %v3841
        %v3843 = vpop.f32.mrf.mxu0
        %v3844 = vadd.f32 0.0, %v3843
        %3845 = vmatmul.bf16.gmra.mxu0 %v3486
        %v3846 = vpop.f32.mrf.mxu0
        %v3847 = vadd.f32 0.0, %v3846
        %v3848 = vpop.f32.mrf.mxu0
        %v3849 = vadd.f32 0.0, %v3848
        %3850 = vmatmul.bf16.gmra.mxu0 %v3487
        %v3851 = vpop.f32.mrf.mxu0
        %v3852 = vadd.f32 0.0, %v3851
        %v3853 = vpop.f32.mrf.mxu0
        %v3854 = vadd.f32 0.0, %v3853
        %3855 = vmatmul.bf16.gmra.mxu0 %v3488
        %v3856 = vpop.f32.mrf.mxu0
        %v3857 = vadd.f32 0.0, %v3856
        %v3858 = vpop.f32.mrf.mxu0
        %v3859 = vadd.f32 0.0, %v3858
        %3860 = vmatmul.bf16.gmra.mxu0 %v3489
        %v3861 = vpop.f32.mrf.mxu0
        %v3862 = vadd.f32 0.0, %v3861
        %v3863 = vpop.f32.mrf.mxu0
        %v3864 = vadd.f32 0.0, %v3863
        %3865 = vmatmul.bf16.gmra.mxu0 %v3490
        %v3866 = vpop.f32.mrf.mxu0
        %v3867 = vadd.f32 0.0, %v3866
        %v3868 = vpop.f32.mrf.mxu0
        %v3869 = vadd.f32 0.0, %v3868
        %3870 = vmatmul.bf16.gmra.mxu0 %v3491
        %v3871 = vpop.f32.mrf.mxu0
        %v3872 = vadd.f32 0.0, %v3871
        %v3873 = vpop.f32.mrf.mxu0
        %v3874 = vadd.f32 0.0, %v3873
        %3875 = vmatmul.bf16.gmra.mxu0 %v3492
        %v3876 = vpop.f32.mrf.mxu0
        %v3877 = vadd.f32 0.0, %v3876
        %v3878 = vpop.f32.mrf.mxu0
        %v3879 = vadd.f32 0.0, %v3878
        %3880 = vmatmul.bf16.gmra.mxu0 %v3493
        %v3881 = vpop.f32.mrf.mxu0
        %v3882 = vadd.f32 0.0, %v3881
        %v3883 = vpop.f32.mrf.mxu0
        %v3884 = vadd.f32 0.0, %v3883
        %3885 = vmatmul.bf16.gmra.mxu0 %v3718
        %v3886 = vpop.f32.mrf.mxu0
        %v3887 = vadd.f32 0.0, %v3886
        %v3888 = vpop.f32.mrf.mxu0
        %v3889 = vadd.f32 0.0, %v3888
        %3890 = vmatmul.bf16.gmra.mxu0 %v3719
        %v3891 = vpop.f32.mrf.mxu0
        %v3892 = vadd.f32 0.0, %v3891
        %v3893 = vpop.f32.mrf.mxu0
        %v3894 = vadd.f32 0.0, %v3893
        %3895 = vmatmul.bf16.gmra.mxu0 %v3720
        %v3896 = vpop.f32.mrf.mxu0
        %v3897 = vadd.f32 0.0, %v3896
        %v3898 = vpop.f32.mrf.mxu0
        %v3899 = vadd.f32 0.0, %v3898
        %3900 = vdwg.mxu0
        %v3901 = vadd.f32 %v3576, %v3782
        %v3902 = vadd.f32 %v3578, %v3784
        %v3903 = vadd.f32 %v3581, %v3787
        %v3904 = vadd.f32 %v3583, %v3789
        %v3905 = vadd.f32 %v3586, %v3792
        %v3906 = vadd.f32 %v3588, %v3794
        %v3907 = vadd.f32 %v3591, %v3797
        %v3908 = vadd.f32 %v3593, %v3799
        %v3909 = vadd.f32 %v3596, %v3802
        %v3910 = vadd.f32 %v3598, %v3804
        %v3911 = vadd.f32 %v3601, %v3807
        %v3912 = vadd.f32 %v3603, %v3809
        %v3913 = vadd.f32 %v3606, %v3812
        %v3914 = vadd.f32 %v3608, %v3814
        %v3915 = vadd.f32 %v3611, %v3817
        %v3916 = vadd.f32 %v3613, %v3819
        %v3917 = vadd.f32 %v3616, %v3822
        %v3918 = vadd.f32 %v3618, %v3824
        %v3919 = vadd.f32 %v3621, %v3827
        %v3920 = vadd.f32 %v3623, %v3829
        %v3921 = vadd.f32 %v3626, %v3832
        %v3922 = vadd.f32 %v3628, %v3834
        %v3923 = vadd.f32 %v3631, %v3837
        %v3924 = vadd.f32 %v3633, %v3839
        %v3925 = vadd.f32 %v3636, %v3842
        %v3926 = vadd.f32 %v3638, %v3844
        %v3927 = vadd.f32 %v3641, %v3847
        %v3928 = vadd.f32 %v3643, %v3849
        %v3929 = vadd.f32 %v3646, %v3852
        %v3930 = vadd.f32 %v3648, %v3854
        %v3931 = vadd.f32 %v3651, %v3857
        %v3932 = vadd.f32 %v3653, %v3859
        %v3933 = vadd.f32 %v3656, %v3862
        %v3934 = vadd.f32 %v3658, %v3864
        %v3935 = vadd.f32 %v3661, %v3867
        %v3936 = vadd.f32 %v3663, %v3869
        %v3937 = vadd.f32 %v3666, %v3872
        %v3938 = vadd.f32 %v3668, %v3874
        %v3939 = vadd.f32 %v3671, %v3877
        %v3940 = vadd.f32 %v3673, %v3879
        %v3941 = vadd.f32 %v3676, %v3882
        %v3942 = vadd.f32 %v3678, %v3884
        %v3943 = vadd.f32 %v3681, %v3887
        %v3944 = vadd.f32 %v3683, %v3889
        %v3945 = vadd.f32 %v3686, %v3892
        %v3946 = vadd.f32 %v3688, %v3894
        %v3947 = vadd.f32 %v3691, %v3897
        %v3948 = vadd.f32 %v3693, %v3899
        %v3949 = vadd.f32 %v3901, 0.0
        %v3950 = vadd.f32 %v3902, 0.0
        %v3951 = vadd.f32 %v3903, 0.0
        %v3952 = vadd.f32 %v3904, 0.0
        %v3953 = vadd.f32 %v3905, 0.0
        %v3954 = vadd.f32 %v3906, 0.0
        %v3955 = vadd.f32 %v3907, 0.0
        %v3956 = vadd.f32 %v3908, 0.0
        %v3957 = vadd.f32 %v3909, 0.0
        %v3958 = vadd.f32 %v3910, 0.0
        %v3959 = vadd.f32 %v3911, 0.0
        %v3960 = vadd.f32 %v3912, 0.0
        %v3961 = vadd.f32 %v3913, 0.0
        %v3962 = vadd.f32 %v3914, 0.0
        %v3963 = vadd.f32 %v3915, 0.0
        %v3964 = vadd.f32 %v3916, 0.0
        %v3965 = vadd.f32 %v3917, 0.0
        %v3966 = vadd.f32 %v3918, 0.0
        %v3967 = vadd.f32 %v3919, 0.0
        %v3968 = vadd.f32 %v3920, 0.0
        %v3969 = vadd.f32 %v3921, 0.0
        %v3970 = vadd.f32 %v3922, 0.0
        %v3971 = vadd.f32 %v3923, 0.0
        %v3972 = vadd.f32 %v3924, 0.0
        %v3973 = vadd.f32 %v3925, 0.0
        %v3974 = vadd.f32 %v3926, 0.0
        %v3975 = vadd.f32 %v3927, 0.0
        %v3976 = vadd.f32 %v3928, 0.0
        %v3977 = vadd.f32 %v3929, 0.0
        %v3978 = vadd.f32 %v3930, 0.0
        %v3979 = vadd.f32 %v3931, 0.0
        %v3980 = vadd.f32 %v3932, 0.0
        %v3981 = vadd.f32 %v3933, 0.0
        %v3982 = vadd.f32 %v3934, 0.0
        %v3983 = vadd.f32 %v3935, 0.0
        %v3984 = vadd.f32 %v3936, 0.0
        %v3985 = vadd.f32 %v3937, 0.0
        %v3986 = vadd.f32 %v3938, 0.0
        %v3987 = vadd.f32 %v3939, 0.0
        %v3988 = vadd.f32 %v3940, 0.0
        %v3989 = vadd.f32 %v3941, 0.0
        %v3990 = vadd.f32 %v3942, 0.0
        %v3991 = vadd.f32 %v3943, 0.0
        %v3992 = vadd.f32 %v3944, 0.0
        %v3993 = vadd.f32 %v3945, 0.0
        %v3994 = vadd.f32 %v3946, 0.0
        %v3995 = vadd.f32 %v3947, 0.0
        %v3996 = vadd.f32 %v3948, 0.0
        %s3997 = scalar_lea.vmem [#allocation9], 64
        %v3998 = vld [vmem:[%s3997] sm:$0xf]
        %v3999 = vld [vmem:[%s3997 + $0x4] sm:$0xf]
        %v4000 = vld [vmem:[%s3997 + $0x8] sm:$0xf]
        %v4001 = vld [vmem:[%s3997 + $0xc] sm:$0xf]
        %v4002 = vld [vmem:[%s3997 + $0x10] sm:$0xf]
        %v4003 = vld [vmem:[%s3997 + $0x14] sm:$0xf]
        %v4004 = vld [vmem:[%s3997 + $0x18] sm:$0xf]
        %v4005 = vld [vmem:[%s3997 + $0x1c] sm:$0xf]
        %v4006 = vld [vmem:[%s3997 + $0x20] sm:$0xf]
        %v4007 = vld [vmem:[%s3997 + $0x24] sm:$0xf]
        %v4008 = vld [vmem:[%s3997 + $0x28] sm:$0xf]
        %v4009 = vld [vmem:[%s3997 + $0x2c] sm:$0xf]
        %v4010 = vld [vmem:[%s3997 + $0x30] sm:$0xf]
        %v4011 = vld [vmem:[%s3997 + $0x34] sm:$0xf]
        %v4012 = vld [vmem:[%s3997 + $0x38] sm:$0xf]
        %v4013 = vld [vmem:[%s3997 + $0x3c] sm:$0xf]
        %s4014 = scalar_lea.vmem [#allocation9], 256
        %v4015 = vld [vmem:[%s4014] sm:$0xf]
        %v4016 = vld [vmem:[%s4014 + $0x4] sm:$0xf]
        %v4017 = vld [vmem:[%s4014 + $0x8] sm:$0xf]
        %v4018 = vld [vmem:[%s4014 + $0xc] sm:$0xf]
        %v4019 = vld [vmem:[%s4014 + $0x10] sm:$0xf]
        %v4020 = vld [vmem:[%s4014 + $0x14] sm:$0xf]
        %v4021 = vld [vmem:[%s4014 + $0x18] sm:$0xf]
        %v4022 = vld [vmem:[%s4014 + $0x1c] sm:$0xf]
        %v4023 = vld [vmem:[%s4014 + $0x20] sm:$0xf]
        %v4024 = vld [vmem:[%s4014 + $0x24] sm:$0xf]
        %v4025 = vld [vmem:[%s4014 + $0x28] sm:$0xf]
        %v4026 = vld [vmem:[%s4014 + $0x2c] sm:$0xf]
        %v4027 = vld [vmem:[%s4014 + $0x30] sm:$0xf]
        %v4028 = vld [vmem:[%s4014 + $0x34] sm:$0xf]
        %v4029 = vld [vmem:[%s4014 + $0x38] sm:$0xf]
        %v4030 = vld [vmem:[%s4014 + $0x3c] sm:$0xf]
        %v4047 = vunpack.c.l.b16 %v4015
        %v4048 = vunpack.c.l.b16 %v4016
        %v4049 = vunpack.c.l.b16 %v4017
        %v4050 = vunpack.c.l.b16 %v4018
        %v4051 = vunpack.c.l.b16 %v4019
        %v4052 = vunpack.c.l.b16 %v4020
        %v4053 = vunpack.c.l.b16 %v4021
        %v4054 = vunpack.c.l.b16 %v4022
        %v4055 = vunpack.c.l.b16 %v4023
        %v4056 = vunpack.c.l.b16 %v4024
        %v4057 = vunpack.c.l.b16 %v4025
        %v4058 = vunpack.c.l.b16 %v4026
        %v4059 = vunpack.c.l.b16 %v4027
        %v4060 = vunpack.c.l.b16 %v4028
        %v4061 = vunpack.c.l.b16 %v4029
        %v4062 = vunpack.c.l.b16 %v4030
        %v4063 = vpack.c.b16 %v4048, %v4047
        %v4064 = vpack.c.b16 %v4050, %v4049
        %v4065 = vpack.c.b16 %v4052, %v4051
        %v4066 = vpack.c.b16 %v4054, %v4053
        %v4067 = vpack.c.b16 %v4056, %v4055
        %v4068 = vpack.c.b16 %v4058, %v4057
        %v4069 = vpack.c.b16 %v4060, %v4059
        %v4070 = vpack.c.b16 %v4062, %v4061
        %4079 = vmatpush.bf16.msra.mxu0 %v4070
        %4080 = vmatpush.bf16.msra.mxu0 %v4069
        %4081 = vmatpush.bf16.msra.mxu0 %v4068
        %4082 = vmatpush.bf16.msra.mxu0 %v4067
        %4083 = vmatpush.bf16.msra.mxu0 %v4066
        %4084 = vmatpush.bf16.msra.mxu0 %v4065
        %4085 = vmatpush.bf16.msra.mxu0 %v4064
        %4086 = vmatpush.bf16.msra.mxu0 %v4063
        %4087 = vmatmul.bf16.gmra.mxu0 %v3239
        %v4088 = vpop.f32.mrf.mxu0
        %v4089 = vadd.f32 0.0, %v4088
        %v4090 = vpop.f32.mrf.mxu0
        %v4091 = vadd.f32 0.0, %v4090
        %4092 = vmatmul.bf16.gmra.mxu0 %v3240
        %v4093 = vpop.f32.mrf.mxu0
        %v4094 = vadd.f32 0.0, %v4093
        %v4095 = vpop.f32.mrf.mxu0
        %v4096 = vadd.f32 0.0, %v4095
        %4097 = vmatmul.bf16.gmra.mxu0 %v3241
        %v4098 = vpop.f32.mrf.mxu0
        %v4099 = vadd.f32 0.0, %v4098
        %v4100 = vpop.f32.mrf.mxu0
        %v4101 = vadd.f32 0.0, %v4100
        %4102 = vmatmul.bf16.gmra.mxu0 %v3242
        %v4103 = vpop.f32.mrf.mxu0
        %v4104 = vadd.f32 0.0, %v4103
        %v4105 = vpop.f32.mrf.mxu0
        %v4106 = vadd.f32 0.0, %v4105
        %4107 = vmatmul.bf16.gmra.mxu0 %v3243
        %v4108 = vpop.f32.mrf.mxu0
        %v4109 = vadd.f32 0.0, %v4108
        %v4110 = vpop.f32.mrf.mxu0
        %v4111 = vadd.f32 0.0, %v4110
        %4112 = vmatmul.bf16.gmra.mxu0 %v3244
        %v4113 = vpop.f32.mrf.mxu0
        %v4114 = vadd.f32 0.0, %v4113
        %v4115 = vpop.f32.mrf.mxu0
        %v4116 = vadd.f32 0.0, %v4115
        %4117 = vmatmul.bf16.gmra.mxu0 %v3245
        %v4118 = vpop.f32.mrf.mxu0
        %v4119 = vadd.f32 0.0, %v4118
        %v4120 = vpop.f32.mrf.mxu0
        %v4121 = vadd.f32 0.0, %v4120
        %4122 = vmatmul.bf16.gmra.mxu0 %v3246
        %v4123 = vpop.f32.mrf.mxu0
        %v4124 = vadd.f32 0.0, %v4123
        %v4125 = vpop.f32.mrf.mxu0
        %v4126 = vadd.f32 0.0, %v4125
        %4127 = vmatmul.bf16.gmra.mxu0 %v3247
        %v4128 = vpop.f32.mrf.mxu0
        %v4129 = vadd.f32 0.0, %v4128
        %v4130 = vpop.f32.mrf.mxu0
        %v4131 = vadd.f32 0.0, %v4130
        %4132 = vmatmul.bf16.gmra.mxu0 %v3248
        %v4133 = vpop.f32.mrf.mxu0
        %v4134 = vadd.f32 0.0, %v4133
        %v4135 = vpop.f32.mrf.mxu0
        %v4136 = vadd.f32 0.0, %v4135
        %4137 = vmatmul.bf16.gmra.mxu0 %v3249
        %v4138 = vpop.f32.mrf.mxu0
        %v4139 = vadd.f32 0.0, %v4138
        %v4140 = vpop.f32.mrf.mxu0
        %v4141 = vadd.f32 0.0, %v4140
        %4142 = vmatmul.bf16.gmra.mxu0 %v3250
        %v4143 = vpop.f32.mrf.mxu0
        %v4144 = vadd.f32 0.0, %v4143
        %v4145 = vpop.f32.mrf.mxu0
        %v4146 = vadd.f32 0.0, %v4145
        %4147 = vmatmul.bf16.gmra.mxu0 %v3251
        %v4148 = vpop.f32.mrf.mxu0
        %v4149 = vadd.f32 0.0, %v4148
        %v4150 = vpop.f32.mrf.mxu0
        %v4151 = vadd.f32 0.0, %v4150
        %4152 = vmatmul.bf16.gmra.mxu0 %v3252
        %v4153 = vpop.f32.mrf.mxu0
        %v4154 = vadd.f32 0.0, %v4153
        %v4155 = vpop.f32.mrf.mxu0
        %v4156 = vadd.f32 0.0, %v4155
        %4157 = vmatmul.bf16.gmra.mxu0 %v3253
        %v4158 = vpop.f32.mrf.mxu0
        %v4159 = vadd.f32 0.0, %v4158
        %v4160 = vpop.f32.mrf.mxu0
        %v4161 = vadd.f32 0.0, %v4160
        %4162 = vmatmul.bf16.gmra.mxu0 %v3254
        %v4163 = vpop.f32.mrf.mxu0
        %v4164 = vadd.f32 0.0, %v4163
        %v4165 = vpop.f32.mrf.mxu0
        %v4166 = vadd.f32 0.0, %v4165
        %4167 = vmatmul.bf16.gmra.mxu0 %v3255
        %v4168 = vpop.f32.mrf.mxu0
        %v4169 = vadd.f32 0.0, %v4168
        %v4170 = vpop.f32.mrf.mxu0
        %v4171 = vadd.f32 0.0, %v4170
        %4172 = vmatmul.bf16.gmra.mxu0 %v3256
        %v4173 = vpop.f32.mrf.mxu0
        %v4174 = vadd.f32 0.0, %v4173
        %v4175 = vpop.f32.mrf.mxu0
        %v4176 = vadd.f32 0.0, %v4175
        %4177 = vmatmul.bf16.gmra.mxu0 %v3257
        %v4178 = vpop.f32.mrf.mxu0
        %v4179 = vadd.f32 0.0, %v4178
        %v4180 = vpop.f32.mrf.mxu0
        %v4181 = vadd.f32 0.0, %v4180
        %4182 = vmatmul.bf16.gmra.mxu0 %v3258
        %v4183 = vpop.f32.mrf.mxu0
        %v4184 = vadd.f32 0.0, %v4183
        %v4185 = vpop.f32.mrf.mxu0
        %v4186 = vadd.f32 0.0, %v4185
        %4187 = vmatmul.bf16.gmra.mxu0 %v3259
        %v4188 = vpop.f32.mrf.mxu0
        %v4189 = vadd.f32 0.0, %v4188
        %v4190 = vpop.f32.mrf.mxu0
        %v4191 = vadd.f32 0.0, %v4190
        %4192 = vmatmul.bf16.gmra.mxu0 %v3260
        %v4193 = vpop.f32.mrf.mxu0
        %v4194 = vadd.f32 0.0, %v4193
        %v4195 = vpop.f32.mrf.mxu0
        %v4196 = vadd.f32 0.0, %v4195
        %4197 = vmatmul.bf16.gmra.mxu0 %v3261
        %v4198 = vpop.f32.mrf.mxu0
        %v4199 = vadd.f32 0.0, %v4198
        %v4200 = vpop.f32.mrf.mxu0
        %v4201 = vadd.f32 0.0, %v4200
        %4202 = vmatmul.bf16.gmra.mxu0 %v3262
        %v4203 = vpop.f32.mrf.mxu0
        %v4204 = vadd.f32 0.0, %v4203
        %v4205 = vpop.f32.mrf.mxu0
        %v4206 = vadd.f32 0.0, %v4205
        %4207 = vdwg.mxu0
        %v4224 = vunpack.c.l.b16 %v3998
        %v4225 = vunpack.c.l.b16 %v3999
        %v4226 = vunpack.c.l.b16 %v4000
        %v4227 = vunpack.c.l.b16 %v4001
        %v4228 = vunpack.c.l.b16 %v4002
        %v4229 = vunpack.c.l.b16 %v4003
        %v4230 = vunpack.c.l.b16 %v4004
        %v4231 = vunpack.c.l.b16 %v4005
        %v4232 = vunpack.c.l.b16 %v4006
        %v4233 = vunpack.c.l.b16 %v4007
        %v4234 = vunpack.c.l.b16 %v4008
        %v4235 = vunpack.c.l.b16 %v4009
        %v4236 = vunpack.c.l.b16 %v4010
        %v4237 = vunpack.c.l.b16 %v4011
        %v4238 = vunpack.c.l.b16 %v4012
        %v4239 = vunpack.c.l.b16 %v4013
        %v4240 = vpack.c.b16 %v4225, %v4224
        %v4241 = vpack.c.b16 %v4227, %v4226
        %v4242 = vpack.c.b16 %v4229, %v4228
        %v4243 = vpack.c.b16 %v4231, %v4230
        %v4244 = vpack.c.b16 %v4233, %v4232
        %v4245 = vpack.c.b16 %v4235, %v4234
        %v4246 = vpack.c.b16 %v4237, %v4236
        %v4247 = vpack.c.b16 %v4239, %v4238
        %4256 = vmatpush.bf16.msra.mxu0 %v4247
        %4257 = vmatpush.bf16.msra.mxu0 %v4246
        %4258 = vmatpush.bf16.msra.mxu0 %v4245
        %4259 = vmatpush.bf16.msra.mxu0 %v4244
        %4260 = vmatpush.bf16.msra.mxu0 %v4243
        %4261 = vmatpush.bf16.msra.mxu0 %v4242
        %4262 = vmatpush.bf16.msra.mxu0 %v4241
        %4263 = vmatpush.bf16.msra.mxu0 %v4240
        %4264 = vmatmul.bf16.gmra.mxu0 %v3470
        %v4265 = vpop.f32.mrf.mxu0
        %v4266 = vadd.f32 %v4089, %v4265
        %v4267 = vpop.f32.mrf.mxu0
        %v4268 = vadd.f32 %v4091, %v4267
        %4269 = vmatmul.bf16.gmra.mxu0 %v3471
        %v4270 = vpop.f32.mrf.mxu0
        %v4271 = vadd.f32 %v4094, %v4270
        %v4272 = vpop.f32.mrf.mxu0
        %v4273 = vadd.f32 %v4096, %v4272
        %4274 = vmatmul.bf16.gmra.mxu0 %v3472
        %v4275 = vpop.f32.mrf.mxu0
        %v4276 = vadd.f32 %v4099, %v4275
        %v4277 = vpop.f32.mrf.mxu0
        %v4278 = vadd.f32 %v4101, %v4277
        %4279 = vmatmul.bf16.gmra.mxu0 %v3473
        %v4280 = vpop.f32.mrf.mxu0
        %v4281 = vadd.f32 %v4104, %v4280
        %v4282 = vpop.f32.mrf.mxu0
        %v4283 = vadd.f32 %v4106, %v4282
        %4284 = vmatmul.bf16.gmra.mxu0 %v3474
        %v4285 = vpop.f32.mrf.mxu0
        %v4286 = vadd.f32 %v4109, %v4285
        %v4287 = vpop.f32.mrf.mxu0
        %v4288 = vadd.f32 %v4111, %v4287
        %4289 = vmatmul.bf16.gmra.mxu0 %v3475
        %v4290 = vpop.f32.mrf.mxu0
        %v4291 = vadd.f32 %v4114, %v4290
        %v4292 = vpop.f32.mrf.mxu0
        %v4293 = vadd.f32 %v4116, %v4292
        %4294 = vmatmul.bf16.gmra.mxu0 %v3476
        %v4295 = vpop.f32.mrf.mxu0
        %v4296 = vadd.f32 %v4119, %v4295
        %v4297 = vpop.f32.mrf.mxu0
        %v4298 = vadd.f32 %v4121, %v4297
        %4299 = vmatmul.bf16.gmra.mxu0 %v3477
        %v4300 = vpop.f32.mrf.mxu0
        %v4301 = vadd.f32 %v4124, %v4300
        %v4302 = vpop.f32.mrf.mxu0
        %v4303 = vadd.f32 %v4126, %v4302
        %4304 = vmatmul.bf16.gmra.mxu0 %v3478
        %v4305 = vpop.f32.mrf.mxu0
        %v4306 = vadd.f32 %v4129, %v4305
        %v4307 = vpop.f32.mrf.mxu0
        %v4308 = vadd.f32 %v4131, %v4307
        %4309 = vmatmul.bf16.gmra.mxu0 %v3479
        %v4310 = vpop.f32.mrf.mxu0
        %v4311 = vadd.f32 %v4134, %v4310
        %v4312 = vpop.f32.mrf.mxu0
        %v4313 = vadd.f32 %v4136, %v4312
        %4314 = vmatmul.bf16.gmra.mxu0 %v3480
        %v4315 = vpop.f32.mrf.mxu0
        %v4316 = vadd.f32 %v4139, %v4315
        %v4317 = vpop.f32.mrf.mxu0
        %v4318 = vadd.f32 %v4141, %v4317
        %4319 = vmatmul.bf16.gmra.mxu0 %v3481
        %v4320 = vpop.f32.mrf.mxu0
        %v4321 = vadd.f32 %v4144, %v4320
        %v4322 = vpop.f32.mrf.mxu0
        %v4323 = vadd.f32 %v4146, %v4322
        %4324 = vmatmul.bf16.gmra.mxu0 %v3482
        %v4325 = vpop.f32.mrf.mxu0
        %v4326 = vadd.f32 %v4149, %v4325
        %v4327 = vpop.f32.mrf.mxu0
        %v4328 = vadd.f32 %v4151, %v4327
        %4329 = vmatmul.bf16.gmra.mxu0 %v3483
        %v4330 = vpop.f32.mrf.mxu0
        %v4331 = vadd.f32 %v4154, %v4330
        %v4332 = vpop.f32.mrf.mxu0
        %v4333 = vadd.f32 %v4156, %v4332
        %4334 = vmatmul.bf16.gmra.mxu0 %v3484
        %v4335 = vpop.f32.mrf.mxu0
        %v4336 = vadd.f32 %v4159, %v4335
        %v4337 = vpop.f32.mrf.mxu0
        %v4338 = vadd.f32 %v4161, %v4337
        %4339 = vmatmul.bf16.gmra.mxu0 %v3485
        %v4340 = vpop.f32.mrf.mxu0
        %v4341 = vadd.f32 %v4164, %v4340
        %v4342 = vpop.f32.mrf.mxu0
        %v4343 = vadd.f32 %v4166, %v4342
        %4344 = vmatmul.bf16.gmra.mxu0 %v3486
        %v4345 = vpop.f32.mrf.mxu0
        %v4346 = vadd.f32 %v4169, %v4345
        %v4347 = vpop.f32.mrf.mxu0
        %v4348 = vadd.f32 %v4171, %v4347
        %4349 = vmatmul.bf16.gmra.mxu0 %v3487
        %v4350 = vpop.f32.mrf.mxu0
        %v4351 = vadd.f32 %v4174, %v4350
        %v4352 = vpop.f32.mrf.mxu0
        %v4353 = vadd.f32 %v4176, %v4352
        %4354 = vmatmul.bf16.gmra.mxu0 %v3488
        %v4355 = vpop.f32.mrf.mxu0
        %v4356 = vadd.f32 %v4179, %v4355
        %v4357 = vpop.f32.mrf.mxu0
        %v4358 = vadd.f32 %v4181, %v4357
        %4359 = vmatmul.bf16.gmra.mxu0 %v3489
        %v4360 = vpop.f32.mrf.mxu0
        %v4361 = vadd.f32 %v4184, %v4360
        %v4362 = vpop.f32.mrf.mxu0
        %v4363 = vadd.f32 %v4186, %v4362
        %4364 = vmatmul.bf16.gmra.mxu0 %v3490
        %v4365 = vpop.f32.mrf.mxu0
        %v4366 = vadd.f32 %v4189, %v4365
        %v4367 = vpop.f32.mrf.mxu0
        %v4368 = vadd.f32 %v4191, %v4367
        %4369 = vmatmul.bf16.gmra.mxu0 %v3491
        %v4370 = vpop.f32.mrf.mxu0
        %v4371 = vadd.f32 %v4194, %v4370
        %v4372 = vpop.f32.mrf.mxu0
        %v4373 = vadd.f32 %v4196, %v4372
        %4374 = vmatmul.bf16.gmra.mxu0 %v3492
        %v4375 = vpop.f32.mrf.mxu0
        %v4376 = vadd.f32 %v4199, %v4375
        %v4377 = vpop.f32.mrf.mxu0
        %v4378 = vadd.f32 %v4201, %v4377
        %4379 = vmatmul.bf16.gmra.mxu0 %v3493
        %v4380 = vpop.f32.mrf.mxu0
        %v4381 = vadd.f32 %v4204, %v4380
        %v4382 = vpop.f32.mrf.mxu0
        %v4383 = vadd.f32 %v4206, %v4382
        %4384 = vdwg.mxu0
        %s4385 = scalar_lea.vmem [#allocation9], 448
        %v4386 = vld [vmem:[%s4385] sm:$0xf]
        %v4387 = vld [vmem:[%s4385 + $0x4] sm:$0xf]
        %v4388 = vld [vmem:[%s4385 + $0x8] sm:$0xf]
        %v4389 = vld [vmem:[%s4385 + $0xc] sm:$0xf]
        %v4390 = vld [vmem:[%s4385 + $0x10] sm:$0xf]
        %v4391 = vld [vmem:[%s4385 + $0x14] sm:$0xf]
        %v4392 = vld [vmem:[%s4385 + $0x18] sm:$0xf]
        %v4393 = vld [vmem:[%s4385 + $0x1c] sm:$0xf]
        %v4394 = vld [vmem:[%s4385 + $0x20] sm:$0xf]
        %v4395 = vld [vmem:[%s4385 + $0x24] sm:$0xf]
        %v4396 = vld [vmem:[%s4385 + $0x28] sm:$0xf]
        %v4397 = vld [vmem:[%s4385 + $0x2c] sm:$0xf]
        %v4398 = vld [vmem:[%s4385 + $0x30] sm:$0xf]
        %v4399 = vld [vmem:[%s4385 + $0x34] sm:$0xf]
        %v4400 = vld [vmem:[%s4385 + $0x38] sm:$0xf]
        %v4401 = vld [vmem:[%s4385 + $0x3c] sm:$0xf]
        %v4418 = vunpack.c.l.b16 %v4386
        %v4419 = vunpack.c.l.b16 %v4387
        %v4420 = vunpack.c.l.b16 %v4388
        %v4421 = vunpack.c.l.b16 %v4389
        %v4422 = vunpack.c.l.b16 %v4390
        %v4423 = vunpack.c.l.b16 %v4391
        %v4424 = vunpack.c.l.b16 %v4392
        %v4425 = vunpack.c.l.b16 %v4393
        %v4426 = vunpack.c.l.b16 %v4394
        %v4427 = vunpack.c.l.b16 %v4395
        %v4428 = vunpack.c.l.b16 %v4396
        %v4429 = vunpack.c.l.b16 %v4397
        %v4430 = vunpack.c.l.b16 %v4398
        %v4431 = vunpack.c.l.b16 %v4399
        %v4432 = vunpack.c.l.b16 %v4400
        %v4433 = vunpack.c.l.b16 %v4401
        %v4434 = vpack.c.b16 %v4419, %v4418
        %v4435 = vpack.c.b16 %v4421, %v4420
        %v4436 = vpack.c.b16 %v4423, %v4422
        %v4437 = vpack.c.b16 %v4425, %v4424
        %v4438 = vpack.c.b16 %v4427, %v4426
        %v4439 = vpack.c.b16 %v4429, %v4428
        %v4440 = vpack.c.b16 %v4431, %v4430
        %v4441 = vpack.c.b16 %v4433, %v4432
        %4450 = vmatpush.bf16.msra.mxu0 %v4441
        %4451 = vmatpush.bf16.msra.mxu0 %v4440
        %4452 = vmatpush.bf16.msra.mxu0 %v4439
        %4453 = vmatpush.bf16.msra.mxu0 %v4438
        %4454 = vmatpush.bf16.msra.mxu0 %v4437
        %4455 = vmatpush.bf16.msra.mxu0 %v4436
        %4456 = vmatpush.bf16.msra.mxu0 %v4435
        %4457 = vmatpush.bf16.msra.mxu0 %v4434
        %4458 = vmatmul.bf16.gmra.mxu0 %v3473
        %v4459 = vpop.f32.mrf.mxu0
        %v4460 = vadd.f32 0.0, %v4459
        %v4461 = vpop.f32.mrf.mxu0
        %v4462 = vadd.f32 0.0, %v4461
        %4463 = vmatmul.bf16.gmra.mxu0 %v3474
        %v4464 = vpop.f32.mrf.mxu0
        %v4465 = vadd.f32 0.0, %v4464
        %v4466 = vpop.f32.mrf.mxu0
        %v4467 = vadd.f32 0.0, %v4466
        %4468 = vmatmul.bf16.gmra.mxu0 %v3475
        %v4469 = vpop.f32.mrf.mxu0
        %v4470 = vadd.f32 0.0, %v4469
        %v4471 = vpop.f32.mrf.mxu0
        %v4472 = vadd.f32 0.0, %v4471
        %4473 = vmatmul.bf16.gmra.mxu0 %v3476
        %v4474 = vpop.f32.mrf.mxu0
        %v4475 = vadd.f32 0.0, %v4474
        %v4476 = vpop.f32.mrf.mxu0
        %v4477 = vadd.f32 0.0, %v4476
        %4478 = vmatmul.bf16.gmra.mxu0 %v3477
        %v4479 = vpop.f32.mrf.mxu0
        %v4480 = vadd.f32 0.0, %v4479
        %v4481 = vpop.f32.mrf.mxu0
        %v4482 = vadd.f32 0.0, %v4481
        %4483 = vmatmul.bf16.gmra.mxu0 %v3478
        %v4484 = vpop.f32.mrf.mxu0
        %v4485 = vadd.f32 0.0, %v4484
        %v4486 = vpop.f32.mrf.mxu0
        %v4487 = vadd.f32 0.0, %v4486
        %4488 = vmatmul.bf16.gmra.mxu0 %v3479
        %v4489 = vpop.f32.mrf.mxu0
        %v4490 = vadd.f32 0.0, %v4489
        %v4491 = vpop.f32.mrf.mxu0
        %v4492 = vadd.f32 0.0, %v4491
        %4493 = vmatmul.bf16.gmra.mxu0 %v3480
        %v4494 = vpop.f32.mrf.mxu0
        %v4495 = vadd.f32 0.0, %v4494
        %v4496 = vpop.f32.mrf.mxu0
        %v4497 = vadd.f32 0.0, %v4496
        %4498 = vmatmul.bf16.gmra.mxu0 %v3481
        %v4499 = vpop.f32.mrf.mxu0
        %v4500 = vadd.f32 0.0, %v4499
        %v4501 = vpop.f32.mrf.mxu0
        %v4502 = vadd.f32 0.0, %v4501
        %4503 = vmatmul.bf16.gmra.mxu0 %v3482
        %v4504 = vpop.f32.mrf.mxu0
        %v4505 = vadd.f32 0.0, %v4504
        %v4506 = vpop.f32.mrf.mxu0
        %v4507 = vadd.f32 0.0, %v4506
        %4508 = vmatmul.bf16.gmra.mxu0 %v3483
        %v4509 = vpop.f32.mrf.mxu0
        %v4510 = vadd.f32 0.0, %v4509
        %v4511 = vpop.f32.mrf.mxu0
        %v4512 = vadd.f32 0.0, %v4511
        %4513 = vmatmul.bf16.gmra.mxu0 %v3484
        %v4514 = vpop.f32.mrf.mxu0
        %v4515 = vadd.f32 0.0, %v4514
        %v4516 = vpop.f32.mrf.mxu0
        %v4517 = vadd.f32 0.0, %v4516
        %4518 = vmatmul.bf16.gmra.mxu0 %v3485
        %v4519 = vpop.f32.mrf.mxu0
        %v4520 = vadd.f32 0.0, %v4519
        %v4521 = vpop.f32.mrf.mxu0
        %v4522 = vadd.f32 0.0, %v4521
        %4523 = vmatmul.bf16.gmra.mxu0 %v3486
        %v4524 = vpop.f32.mrf.mxu0
        %v4525 = vadd.f32 0.0, %v4524
        %v4526 = vpop.f32.mrf.mxu0
        %v4527 = vadd.f32 0.0, %v4526
        %4528 = vmatmul.bf16.gmra.mxu0 %v3487
        %v4529 = vpop.f32.mrf.mxu0
        %v4530 = vadd.f32 0.0, %v4529
        %v4531 = vpop.f32.mrf.mxu0
        %v4532 = vadd.f32 0.0, %v4531
        %4533 = vmatmul.bf16.gmra.mxu0 %v3488
        %v4534 = vpop.f32.mrf.mxu0
        %v4535 = vadd.f32 0.0, %v4534
        %v4536 = vpop.f32.mrf.mxu0
        %v4537 = vadd.f32 0.0, %v4536
        %4538 = vmatmul.bf16.gmra.mxu0 %v3489
        %v4539 = vpop.f32.mrf.mxu0
        %v4540 = vadd.f32 0.0, %v4539
        %v4541 = vpop.f32.mrf.mxu0
        %v4542 = vadd.f32 0.0, %v4541
        %4543 = vmatmul.bf16.gmra.mxu0 %v3490
        %v4544 = vpop.f32.mrf.mxu0
        %v4545 = vadd.f32 0.0, %v4544
        %v4546 = vpop.f32.mrf.mxu0
        %v4547 = vadd.f32 0.0, %v4546
        %4548 = vmatmul.bf16.gmra.mxu0 %v3491
        %v4549 = vpop.f32.mrf.mxu0
        %v4550 = vadd.f32 0.0, %v4549
        %v4551 = vpop.f32.mrf.mxu0
        %v4552 = vadd.f32 0.0, %v4551
        %4553 = vmatmul.bf16.gmra.mxu0 %v3492
        %v4554 = vpop.f32.mrf.mxu0
        %v4555 = vadd.f32 0.0, %v4554
        %v4556 = vpop.f32.mrf.mxu0
        %v4557 = vadd.f32 0.0, %v4556
        %4558 = vmatmul.bf16.gmra.mxu0 %v3493
        %v4559 = vpop.f32.mrf.mxu0
        %v4560 = vadd.f32 0.0, %v4559
        %v4561 = vpop.f32.mrf.mxu0
        %v4562 = vadd.f32 0.0, %v4561
        %4563 = vmatmul.bf16.gmra.mxu0 %v3718
        %v4564 = vpop.f32.mrf.mxu0
        %v4565 = vadd.f32 0.0, %v4564
        %v4566 = vpop.f32.mrf.mxu0
        %v4567 = vadd.f32 0.0, %v4566
        %4568 = vmatmul.bf16.gmra.mxu0 %v3719
        %v4569 = vpop.f32.mrf.mxu0
        %v4570 = vadd.f32 0.0, %v4569
        %v4571 = vpop.f32.mrf.mxu0
        %v4572 = vadd.f32 0.0, %v4571
        %4573 = vmatmul.bf16.gmra.mxu0 %v3720
        %v4574 = vpop.f32.mrf.mxu0
        %v4575 = vadd.f32 0.0, %v4574
        %v4576 = vpop.f32.mrf.mxu0
        %v4577 = vadd.f32 0.0, %v4576
        %4578 = vdwg.mxu0
        %v4579 = vadd.f32 %v4266, %v4460
        %v4580 = vadd.f32 %v4268, %v4462
        %v4581 = vadd.f32 %v4271, %v4465
        %v4582 = vadd.f32 %v4273, %v4467
        %v4583 = vadd.f32 %v4276, %v4470
        %v4584 = vadd.f32 %v4278, %v4472
        %v4585 = vadd.f32 %v4281, %v4475
        %v4586 = vadd.f32 %v4283, %v4477
        %v4587 = vadd.f32 %v4286, %v4480
        %v4588 = vadd.f32 %v4288, %v4482
        %v4589 = vadd.f32 %v4291, %v4485
        %v4590 = vadd.f32 %v4293, %v4487
        %v4591 = vadd.f32 %v4296, %v4490
        %v4592 = vadd.f32 %v4298, %v4492
        %v4593 = vadd.f32 %v4301, %v4495
        %v4594 = vadd.f32 %v4303, %v4497
        %v4595 = vadd.f32 %v4306, %v4500
        %v4596 = vadd.f32 %v4308, %v4502
        %v4597 = vadd.f32 %v4311, %v4505
        %v4598 = vadd.f32 %v4313, %v4507
        %v4599 = vadd.f32 %v4316, %v4510
        %v4600 = vadd.f32 %v4318, %v4512
        %v4601 = vadd.f32 %v4321, %v4515
        %v4602 = vadd.f32 %v4323, %v4517
        %v4603 = vadd.f32 %v4326, %v4520
        %v4604 = vadd.f32 %v4328, %v4522
        %v4605 = vadd.f32 %v4331, %v4525
        %v4606 = vadd.f32 %v4333, %v4527
        %v4607 = vadd.f32 %v4336, %v4530
        %v4608 = vadd.f32 %v4338, %v4532
        %v4609 = vadd.f32 %v4341, %v4535
        %v4610 = vadd.f32 %v4343, %v4537
        %v4611 = vadd.f32 %v4346, %v4540
        %v4612 = vadd.f32 %v4348, %v4542
        %v4613 = vadd.f32 %v4351, %v4545
        %v4614 = vadd.f32 %v4353, %v4547
        %v4615 = vadd.f32 %v4356, %v4550
        %v4616 = vadd.f32 %v4358, %v4552
        %v4617 = vadd.f32 %v4361, %v4555
        %v4618 = vadd.f32 %v4363, %v4557
        %v4619 = vadd.f32 %v4366, %v4560
        %v4620 = vadd.f32 %v4368, %v4562
        %v4621 = vadd.f32 %v4371, %v4565
        %v4622 = vadd.f32 %v4373, %v4567
        %v4623 = vadd.f32 %v4376, %v4570
        %v4624 = vadd.f32 %v4378, %v4572
        %v4625 = vadd.f32 %v4381, %v4575
        %v4626 = vadd.f32 %v4383, %v4577
        %v4675 = vrot.slane %v4579, 1
        %v4676 = vrot.slane %v4580, 1
        %v4677 = vsel %vm2100, %v4675, %v4676
        %v4678 = vrot.slane %v4581, 1
        %v4679 = vsel %vm2100, %v4676, %v4678
        %v4680 = vrot.slane %v4582, 1
        %v4681 = vsel %vm2100, %v4678, %v4680
        %v4682 = vrot.slane %v4583, 1
        %v4683 = vsel %vm2100, %v4680, %v4682
        %v4684 = vrot.slane %v4584, 1
        %v4685 = vsel %vm2100, %v4682, %v4684
        %v4686 = vrot.slane %v4585, 1
        %v4687 = vsel %vm2100, %v4684, %v4686
        %v4688 = vrot.slane %v4586, 1
        %v4689 = vsel %vm2100, %v4686, %v4688
        %v4690 = vrot.slane %v4587, 1
        %v4691 = vsel %vm2100, %v4688, %v4690
        %v4692 = vrot.slane %v4588, 1
        %v4693 = vsel %vm2100, %v4690, %v4692
        %v4694 = vrot.slane %v4589, 1
        %v4695 = vsel %vm2100, %v4692, %v4694
        %v4696 = vrot.slane %v4590, 1
        %v4697 = vsel %vm2100, %v4694, %v4696
        %v4698 = vrot.slane %v4591, 1
        %v4699 = vsel %vm2100, %v4696, %v4698
        %v4700 = vrot.slane %v4592, 1
        %v4701 = vsel %vm2100, %v4698, %v4700
        %v4702 = vrot.slane %v4593, 1
        %v4703 = vsel %vm2100, %v4700, %v4702
        %v4704 = vrot.slane %v4594, 1
        %v4705 = vsel %vm2100, %v4702, %v4704
        %v4706 = vrot.slane %v4595, 1
        %v4707 = vsel %vm2100, %v4704, %v4706
        %v4708 = vrot.slane %v4596, 1
        %v4709 = vsel %vm2100, %v4706, %v4708
        %v4710 = vrot.slane %v4597, 1
        %v4711 = vsel %vm2100, %v4708, %v4710
        %v4712 = vrot.slane %v4598, 1
        %v4713 = vsel %vm2100, %v4710, %v4712
        %v4714 = vrot.slane %v4599, 1
        %v4715 = vsel %vm2100, %v4712, %v4714
        %v4716 = vrot.slane %v4600, 1
        %v4717 = vsel %vm2100, %v4714, %v4716
        %v4718 = vrot.slane %v4601, 1
        %v4719 = vsel %vm2100, %v4716, %v4718
        %v4720 = vrot.slane %v4602, 1
        %v4721 = vsel %vm2100, %v4718, %v4720
        %v4722 = vrot.slane %v4603, 1
        %v4723 = vsel %vm2100, %v4720, %v4722
        %v4724 = vrot.slane %v4604, 1
        %v4725 = vsel %vm2100, %v4722, %v4724
        %v4726 = vrot.slane %v4605, 1
        %v4727 = vsel %vm2100, %v4724, %v4726
        %v4728 = vrot.slane %v4606, 1
        %v4729 = vsel %vm2100, %v4726, %v4728
        %v4730 = vrot.slane %v4607, 1
        %v4731 = vsel %vm2100, %v4728, %v4730
        %v4732 = vrot.slane %v4608, 1
        %v4733 = vsel %vm2100, %v4730, %v4732
        %v4734 = vrot.slane %v4609, 1
        %v4735 = vsel %vm2100, %v4732, %v4734
        %v4736 = vrot.slane %v4610, 1
        %v4737 = vsel %vm2100, %v4734, %v4736
        %v4738 = vrot.slane %v4611, 1
        %v4739 = vsel %vm2100, %v4736, %v4738
        %v4740 = vrot.slane %v4612, 1
        %v4741 = vsel %vm2100, %v4738, %v4740
        %v4742 = vrot.slane %v4613, 1
        %v4743 = vsel %vm2100, %v4740, %v4742
        %v4744 = vrot.slane %v4614, 1
        %v4745 = vsel %vm2100, %v4742, %v4744
        %v4746 = vrot.slane %v4615, 1
        %v4747 = vsel %vm2100, %v4744, %v4746
        %v4748 = vrot.slane %v4616, 1
        %v4749 = vsel %vm2100, %v4746, %v4748
        %v4750 = vrot.slane %v4617, 1
        %v4751 = vsel %vm2100, %v4748, %v4750
        %v4752 = vrot.slane %v4618, 1
        %v4753 = vsel %vm2100, %v4750, %v4752
        %v4754 = vrot.slane %v4619, 1
        %v4755 = vsel %vm2100, %v4752, %v4754
        %v4756 = vrot.slane %v4620, 1
        %v4757 = vsel %vm2100, %v4754, %v4756
        %v4758 = vrot.slane %v4621, 1
        %v4759 = vsel %vm2100, %v4756, %v4758
        %v4760 = vrot.slane %v4622, 1
        %v4761 = vsel %vm2100, %v4758, %v4760
        %v4762 = vrot.slane %v4623, 1
        %v4763 = vsel %vm2100, %v4760, %v4762
        %v4764 = vrot.slane %v4624, 1
        %v4765 = vsel %vm2100, %v4762, %v4764
        %v4766 = vrot.slane %v4625, 1
        %v4767 = vsel %vm2100, %v4764, %v4766
        %v4768 = vrot.slane %v4626, 1
        %v4769 = vsel %vm2100, %v4766, %v4768
        %v4818 = vsel %vm2100, %v4768, 0.0
        %v4819 = vadd.f32 %v3949, %v4677
        %v4820 = vadd.f32 %v3950, %v4679
        %v4821 = vadd.f32 %v3951, %v4681
        %v4822 = vadd.f32 %v3952, %v4683
        %v4823 = vadd.f32 %v3953, %v4685
        %v4824 = vadd.f32 %v3954, %v4687
        %v4825 = vadd.f32 %v3955, %v4689
        %v4826 = vadd.f32 %v3956, %v4691
        %v4827 = vadd.f32 %v3957, %v4693
        %v4828 = vadd.f32 %v3958, %v4695
        %v4829 = vadd.f32 %v3959, %v4697
        %v4830 = vadd.f32 %v3960, %v4699
        %v4831 = vadd.f32 %v3961, %v4701
        %v4832 = vadd.f32 %v3962, %v4703
        %v4833 = vadd.f32 %v3963, %v4705
        %v4834 = vadd.f32 %v3964, %v4707
        %v4835 = vadd.f32 %v3965, %v4709
        %v4836 = vadd.f32 %v3966, %v4711
        %v4837 = vadd.f32 %v3967, %v4713
        %v4838 = vadd.f32 %v3968, %v4715
        %v4839 = vadd.f32 %v3969, %v4717
        %v4840 = vadd.f32 %v3970, %v4719
        %v4841 = vadd.f32 %v3971, %v4721
        %v4842 = vadd.f32 %v3972, %v4723
        %v4843 = vadd.f32 %v3973, %v4725
        %v4844 = vadd.f32 %v3974, %v4727
        %v4845 = vadd.f32 %v3975, %v4729
        %v4846 = vadd.f32 %v3976, %v4731
        %v4847 = vadd.f32 %v3977, %v4733
        %v4848 = vadd.f32 %v3978, %v4735
        %v4849 = vadd.f32 %v3979, %v4737
        %v4850 = vadd.f32 %v3980, %v4739
        %v4851 = vadd.f32 %v3981, %v4741
        %v4852 = vadd.f32 %v3982, %v4743
        %v4853 = vadd.f32 %v3983, %v4745
        %v4854 = vadd.f32 %v3984, %v4747
        %v4855 = vadd.f32 %v3985, %v4749
        %v4856 = vadd.f32 %v3986, %v4751
        %v4857 = vadd.f32 %v3987, %v4753
        %v4858 = vadd.f32 %v3988, %v4755
        %v4859 = vadd.f32 %v3989, %v4757
        %v4860 = vadd.f32 %v3990, %v4759
        %v4861 = vadd.f32 %v3991, %v4761
        %v4862 = vadd.f32 %v3992, %v4763
        %v4863 = vadd.f32 %v3993, %v4765
        %v4864 = vadd.f32 %v3994, %v4767
        %v4865 = vadd.f32 %v3995, %v4769
        %v4866 = vadd.f32 %v3996, %v4818
        %s4867 = scalar_lea.vmem [#allocation9], 128
        %v4868 = vld [vmem:[%s4867] sm:$0xf]
        %v4869 = vld [vmem:[%s4867 + $0x4] sm:$0xf]
        %v4870 = vld [vmem:[%s4867 + $0x8] sm:$0xf]
        %v4871 = vld [vmem:[%s4867 + $0xc] sm:$0xf]
        %v4872 = vld [vmem:[%s4867 + $0x10] sm:$0xf]
        %v4873 = vld [vmem:[%s4867 + $0x14] sm:$0xf]
        %v4874 = vld [vmem:[%s4867 + $0x18] sm:$0xf]
        %v4875 = vld [vmem:[%s4867 + $0x1c] sm:$0xf]
        %v4876 = vld [vmem:[%s4867 + $0x20] sm:$0xf]
        %v4877 = vld [vmem:[%s4867 + $0x24] sm:$0xf]
        %v4878 = vld [vmem:[%s4867 + $0x28] sm:$0xf]
        %v4879 = vld [vmem:[%s4867 + $0x2c] sm:$0xf]
        %v4880 = vld [vmem:[%s4867 + $0x30] sm:$0xf]
        %v4881 = vld [vmem:[%s4867 + $0x34] sm:$0xf]
        %v4882 = vld [vmem:[%s4867 + $0x38] sm:$0xf]
        %v4883 = vld [vmem:[%s4867 + $0x3c] sm:$0xf]
        %s4884 = scalar_lea.vmem [#allocation9], 320
        %v4885 = vld [vmem:[%s4884] sm:$0xf]
        %v4886 = vld [vmem:[%s4884 + $0x4] sm:$0xf]
        %v4887 = vld [vmem:[%s4884 + $0x8] sm:$0xf]
        %v4888 = vld [vmem:[%s4884 + $0xc] sm:$0xf]
        %v4889 = vld [vmem:[%s4884 + $0x10] sm:$0xf]
        %v4890 = vld [vmem:[%s4884 + $0x14] sm:$0xf]
        %v4891 = vld [vmem:[%s4884 + $0x18] sm:$0xf]
        %v4892 = vld [vmem:[%s4884 + $0x1c] sm:$0xf]
        %v4893 = vld [vmem:[%s4884 + $0x20] sm:$0xf]
        %v4894 = vld [vmem:[%s4884 + $0x24] sm:$0xf]
        %v4895 = vld [vmem:[%s4884 + $0x28] sm:$0xf]
        %v4896 = vld [vmem:[%s4884 + $0x2c] sm:$0xf]
        %v4897 = vld [vmem:[%s4884 + $0x30] sm:$0xf]
        %v4898 = vld [vmem:[%s4884 + $0x34] sm:$0xf]
        %v4899 = vld [vmem:[%s4884 + $0x38] sm:$0xf]
        %v4900 = vld [vmem:[%s4884 + $0x3c] sm:$0xf]
        %v4917 = vunpack.c.l.b16 %v4885
        %v4918 = vunpack.c.l.b16 %v4886
        %v4919 = vunpack.c.l.b16 %v4887
        %v4920 = vunpack.c.l.b16 %v4888
        %v4921 = vunpack.c.l.b16 %v4889
        %v4922 = vunpack.c.l.b16 %v4890
        %v4923 = vunpack.c.l.b16 %v4891
        %v4924 = vunpack.c.l.b16 %v4892
        %v4925 = vunpack.c.l.b16 %v4893
        %v4926 = vunpack.c.l.b16 %v4894
        %v4927 = vunpack.c.l.b16 %v4895
        %v4928 = vunpack.c.l.b16 %v4896
        %v4929 = vunpack.c.l.b16 %v4897
        %v4930 = vunpack.c.l.b16 %v4898
        %v4931 = vunpack.c.l.b16 %v4899
        %v4932 = vunpack.c.l.b16 %v4900
        %v4933 = vpack.c.b16 %v4918, %v4917
        %v4934 = vpack.c.b16 %v4920, %v4919
        %v4935 = vpack.c.b16 %v4922, %v4921
        %v4936 = vpack.c.b16 %v4924, %v4923
        %v4937 = vpack.c.b16 %v4926, %v4925
        %v4938 = vpack.c.b16 %v4928, %v4927
        %v4939 = vpack.c.b16 %v4930, %v4929
        %v4940 = vpack.c.b16 %v4932, %v4931
        %4949 = vmatpush.bf16.msra.mxu0 %v4940
        %4950 = vmatpush.bf16.msra.mxu0 %v4939
        %4951 = vmatpush.bf16.msra.mxu0 %v4938
        %4952 = vmatpush.bf16.msra.mxu0 %v4937
        %4953 = vmatpush.bf16.msra.mxu0 %v4936
        %4954 = vmatpush.bf16.msra.mxu0 %v4935
        %4955 = vmatpush.bf16.msra.mxu0 %v4934
        %4956 = vmatpush.bf16.msra.mxu0 %v4933
        %4957 = vmatmul.bf16.gmra.mxu0 %v3239
        %v4958 = vpop.f32.mrf.mxu0
        %v4959 = vadd.f32 0.0, %v4958
        %v4960 = vpop.f32.mrf.mxu0
        %v4961 = vadd.f32 0.0, %v4960
        %4962 = vmatmul.bf16.gmra.mxu0 %v3240
        %v4963 = vpop.f32.mrf.mxu0
        %v4964 = vadd.f32 0.0, %v4963
        %v4965 = vpop.f32.mrf.mxu0
        %v4966 = vadd.f32 0.0, %v4965
        %4967 = vmatmul.bf16.gmra.mxu0 %v3241
        %v4968 = vpop.f32.mrf.mxu0
        %v4969 = vadd.f32 0.0, %v4968
        %v4970 = vpop.f32.mrf.mxu0
        %v4971 = vadd.f32 0.0, %v4970
        %4972 = vmatmul.bf16.gmra.mxu0 %v3242
        %v4973 = vpop.f32.mrf.mxu0
        %v4974 = vadd.f32 0.0, %v4973
        %v4975 = vpop.f32.mrf.mxu0
        %v4976 = vadd.f32 0.0, %v4975
        %4977 = vmatmul.bf16.gmra.mxu0 %v3243
        %v4978 = vpop.f32.mrf.mxu0
        %v4979 = vadd.f32 0.0, %v4978
        %v4980 = vpop.f32.mrf.mxu0
        %v4981 = vadd.f32 0.0, %v4980
        %4982 = vmatmul.bf16.gmra.mxu0 %v3244
        %v4983 = vpop.f32.mrf.mxu0
        %v4984 = vadd.f32 0.0, %v4983
        %v4985 = vpop.f32.mrf.mxu0
        %v4986 = vadd.f32 0.0, %v4985
        %4987 = vmatmul.bf16.gmra.mxu0 %v3245
        %v4988 = vpop.f32.mrf.mxu0
        %v4989 = vadd.f32 0.0, %v4988
        %v4990 = vpop.f32.mrf.mxu0
        %v4991 = vadd.f32 0.0, %v4990
        %4992 = vmatmul.bf16.gmra.mxu0 %v3246
        %v4993 = vpop.f32.mrf.mxu0
        %v4994 = vadd.f32 0.0, %v4993
        %v4995 = vpop.f32.mrf.mxu0
        %v4996 = vadd.f32 0.0, %v4995
        %4997 = vmatmul.bf16.gmra.mxu0 %v3247
        %v4998 = vpop.f32.mrf.mxu0
        %v4999 = vadd.f32 0.0, %v4998
        %v5000 = vpop.f32.mrf.mxu0
        %v5001 = vadd.f32 0.0, %v5000
        %5002 = vmatmul.bf16.gmra.mxu0 %v3248
        %v5003 = vpop.f32.mrf.mxu0
        %v5004 = vadd.f32 0.0, %v5003
        %v5005 = vpop.f32.mrf.mxu0
        %v5006 = vadd.f32 0.0, %v5005
        %5007 = vmatmul.bf16.gmra.mxu0 %v3249
        %v5008 = vpop.f32.mrf.mxu0
        %v5009 = vadd.f32 0.0, %v5008
        %v5010 = vpop.f32.mrf.mxu0
        %v5011 = vadd.f32 0.0, %v5010
        %5012 = vmatmul.bf16.gmra.mxu0 %v3250
        %v5013 = vpop.f32.mrf.mxu0
        %v5014 = vadd.f32 0.0, %v5013
        %v5015 = vpop.f32.mrf.mxu0
        %v5016 = vadd.f32 0.0, %v5015
        %5017 = vmatmul.bf16.gmra.mxu0 %v3251
        %v5018 = vpop.f32.mrf.mxu0
        %v5019 = vadd.f32 0.0, %v5018
        %v5020 = vpop.f32.mrf.mxu0
        %v5021 = vadd.f32 0.0, %v5020
        %5022 = vmatmul.bf16.gmra.mxu0 %v3252
        %v5023 = vpop.f32.mrf.mxu0
        %v5024 = vadd.f32 0.0, %v5023
        %v5025 = vpop.f32.mrf.mxu0
        %v5026 = vadd.f32 0.0, %v5025
        %5027 = vmatmul.bf16.gmra.mxu0 %v3253
        %v5028 = vpop.f32.mrf.mxu0
        %v5029 = vadd.f32 0.0, %v5028
        %v5030 = vpop.f32.mrf.mxu0
        %v5031 = vadd.f32 0.0, %v5030
        %5032 = vmatmul.bf16.gmra.mxu0 %v3254
        %v5033 = vpop.f32.mrf.mxu0
        %v5034 = vadd.f32 0.0, %v5033
        %v5035 = vpop.f32.mrf.mxu0
        %v5036 = vadd.f32 0.0, %v5035
        %5037 = vmatmul.bf16.gmra.mxu0 %v3255
        %v5038 = vpop.f32.mrf.mxu0
        %v5039 = vadd.f32 0.0, %v5038
        %v5040 = vpop.f32.mrf.mxu0
        %v5041 = vadd.f32 0.0, %v5040
        %5042 = vmatmul.bf16.gmra.mxu0 %v3256
        %v5043 = vpop.f32.mrf.mxu0
        %v5044 = vadd.f32 0.0, %v5043
        %v5045 = vpop.f32.mrf.mxu0
        %v5046 = vadd.f32 0.0, %v5045
        %5047 = vmatmul.bf16.gmra.mxu0 %v3257
        %v5048 = vpop.f32.mrf.mxu0
        %v5049 = vadd.f32 0.0, %v5048
        %v5050 = vpop.f32.mrf.mxu0
        %v5051 = vadd.f32 0.0, %v5050
        %5052 = vmatmul.bf16.gmra.mxu0 %v3258
        %v5053 = vpop.f32.mrf.mxu0
        %v5054 = vadd.f32 0.0, %v5053
        %v5055 = vpop.f32.mrf.mxu0
        %v5056 = vadd.f32 0.0, %v5055
        %5057 = vmatmul.bf16.gmra.mxu0 %v3259
        %v5058 = vpop.f32.mrf.mxu0
        %v5059 = vadd.f32 0.0, %v5058
        %v5060 = vpop.f32.mrf.mxu0
        %v5061 = vadd.f32 0.0, %v5060
        %5062 = vmatmul.bf16.gmra.mxu0 %v3260
        %v5063 = vpop.f32.mrf.mxu0
        %v5064 = vadd.f32 0.0, %v5063
        %v5065 = vpop.f32.mrf.mxu0
        %v5066 = vadd.f32 0.0, %v5065
        %5067 = vmatmul.bf16.gmra.mxu0 %v3261
        %v5068 = vpop.f32.mrf.mxu0
        %v5069 = vadd.f32 0.0, %v5068
        %v5070 = vpop.f32.mrf.mxu0
        %v5071 = vadd.f32 0.0, %v5070
        %5072 = vmatmul.bf16.gmra.mxu0 %v3262
        %v5073 = vpop.f32.mrf.mxu0
        %v5074 = vadd.f32 0.0, %v5073
        %v5075 = vpop.f32.mrf.mxu0
        %v5076 = vadd.f32 0.0, %v5075
        %5077 = vdwg.mxu0
        %v5094 = vunpack.c.l.b16 %v4868
        %v5095 = vunpack.c.l.b16 %v4869
        %v5096 = vunpack.c.l.b16 %v4870
        %v5097 = vunpack.c.l.b16 %v4871
        %v5098 = vunpack.c.l.b16 %v4872
        %v5099 = vunpack.c.l.b16 %v4873
        %v5100 = vunpack.c.l.b16 %v4874
        %v5101 = vunpack.c.l.b16 %v4875
        %v5102 = vunpack.c.l.b16 %v4876
        %v5103 = vunpack.c.l.b16 %v4877
        %v5104 = vunpack.c.l.b16 %v4878
        %v5105 = vunpack.c.l.b16 %v4879
        %v5106 = vunpack.c.l.b16 %v4880
        %v5107 = vunpack.c.l.b16 %v4881
        %v5108 = vunpack.c.l.b16 %v4882
        %v5109 = vunpack.c.l.b16 %v4883
        %v5110 = vpack.c.b16 %v5095, %v5094
        %v5111 = vpack.c.b16 %v5097, %v5096
        %v5112 = vpack.c.b16 %v5099, %v5098
        %v5113 = vpack.c.b16 %v5101, %v5100
        %v5114 = vpack.c.b16 %v5103, %v5102
        %v5115 = vpack.c.b16 %v5105, %v5104
        %v5116 = vpack.c.b16 %v5107, %v5106
        %v5117 = vpack.c.b16 %v5109, %v5108
        %5126 = vmatpush.bf16.msra.mxu0 %v5117
        %5127 = vmatpush.bf16.msra.mxu0 %v5116
        %5128 = vmatpush.bf16.msra.mxu0 %v5115
        %5129 = vmatpush.bf16.msra.mxu0 %v5114
        %5130 = vmatpush.bf16.msra.mxu0 %v5113
        %5131 = vmatpush.bf16.msra.mxu0 %v5112
        %5132 = vmatpush.bf16.msra.mxu0 %v5111
        %5133 = vmatpush.bf16.msra.mxu0 %v5110
        %5134 = vmatmul.bf16.gmra.mxu0 %v3470
        %v5135 = vpop.f32.mrf.mxu0
        %v5136 = vadd.f32 %v4959, %v5135
        %v5137 = vpop.f32.mrf.mxu0
        %v5138 = vadd.f32 %v4961, %v5137
        %5139 = vmatmul.bf16.gmra.mxu0 %v3471
        %v5140 = vpop.f32.mrf.mxu0
        %v5141 = vadd.f32 %v4964, %v5140
        %v5142 = vpop.f32.mrf.mxu0
        %v5143 = vadd.f32 %v4966, %v5142
        %5144 = vmatmul.bf16.gmra.mxu0 %v3472
        %v5145 = vpop.f32.mrf.mxu0
        %v5146 = vadd.f32 %v4969, %v5145
        %v5147 = vpop.f32.mrf.mxu0
        %v5148 = vadd.f32 %v4971, %v5147
        %5149 = vmatmul.bf16.gmra.mxu0 %v3473
        %v5150 = vpop.f32.mrf.mxu0
        %v5151 = vadd.f32 %v4974, %v5150
        %v5152 = vpop.f32.mrf.mxu0
        %v5153 = vadd.f32 %v4976, %v5152
        %5154 = vmatmul.bf16.gmra.mxu0 %v3474
        %v5155 = vpop.f32.mrf.mxu0
        %v5156 = vadd.f32 %v4979, %v5155
        %v5157 = vpop.f32.mrf.mxu0
        %v5158 = vadd.f32 %v4981, %v5157
        %5159 = vmatmul.bf16.gmra.mxu0 %v3475
        %v5160 = vpop.f32.mrf.mxu0
        %v5161 = vadd.f32 %v4984, %v5160
        %v5162 = vpop.f32.mrf.mxu0
        %v5163 = vadd.f32 %v4986, %v5162
        %5164 = vmatmul.bf16.gmra.mxu0 %v3476
        %v5165 = vpop.f32.mrf.mxu0
        %v5166 = vadd.f32 %v4989, %v5165
        %v5167 = vpop.f32.mrf.mxu0
        %v5168 = vadd.f32 %v4991, %v5167
        %5169 = vmatmul.bf16.gmra.mxu0 %v3477
        %v5170 = vpop.f32.mrf.mxu0
        %v5171 = vadd.f32 %v4994, %v5170
        %v5172 = vpop.f32.mrf.mxu0
        %v5173 = vadd.f32 %v4996, %v5172
        %5174 = vmatmul.bf16.gmra.mxu0 %v3478
        %v5175 = vpop.f32.mrf.mxu0
        %v5176 = vadd.f32 %v4999, %v5175
        %v5177 = vpop.f32.mrf.mxu0
        %v5178 = vadd.f32 %v5001, %v5177
        %5179 = vmatmul.bf16.gmra.mxu0 %v3479
        %v5180 = vpop.f32.mrf.mxu0
        %v5181 = vadd.f32 %v5004, %v5180
        %v5182 = vpop.f32.mrf.mxu0
        %v5183 = vadd.f32 %v5006, %v5182
        %5184 = vmatmul.bf16.gmra.mxu0 %v3480
        %v5185 = vpop.f32.mrf.mxu0
        %v5186 = vadd.f32 %v5009, %v5185
        %v5187 = vpop.f32.mrf.mxu0
        %v5188 = vadd.f32 %v5011, %v5187
        %5189 = vmatmul.bf16.gmra.mxu0 %v3481
        %v5190 = vpop.f32.mrf.mxu0
        %v5191 = vadd.f32 %v5014, %v5190
        %v5192 = vpop.f32.mrf.mxu0
        %v5193 = vadd.f32 %v5016, %v5192
        %5194 = vmatmul.bf16.gmra.mxu0 %v3482
        %v5195 = vpop.f32.mrf.mxu0
        %v5196 = vadd.f32 %v5019, %v5195
        %v5197 = vpop.f32.mrf.mxu0
        %v5198 = vadd.f32 %v5021, %v5197
        %5199 = vmatmul.bf16.gmra.mxu0 %v3483
        %v5200 = vpop.f32.mrf.mxu0
        %v5201 = vadd.f32 %v5024, %v5200
        %v5202 = vpop.f32.mrf.mxu0
        %v5203 = vadd.f32 %v5026, %v5202
        %5204 = vmatmul.bf16.gmra.mxu0 %v3484
        %v5205 = vpop.f32.mrf.mxu0
        %v5206 = vadd.f32 %v5029, %v5205
        %v5207 = vpop.f32.mrf.mxu0
        %v5208 = vadd.f32 %v5031, %v5207
        %5209 = vmatmul.bf16.gmra.mxu0 %v3485
        %v5210 = vpop.f32.mrf.mxu0
        %v5211 = vadd.f32 %v5034, %v5210
        %v5212 = vpop.f32.mrf.mxu0
        %v5213 = vadd.f32 %v5036, %v5212
        %5214 = vmatmul.bf16.gmra.mxu0 %v3486
        %v5215 = vpop.f32.mrf.mxu0
        %v5216 = vadd.f32 %v5039, %v5215
        %v5217 = vpop.f32.mrf.mxu0
        %v5218 = vadd.f32 %v5041, %v5217
        %5219 = vmatmul.bf16.gmra.mxu0 %v3487
        %v5220 = vpop.f32.mrf.mxu0
        %v5221 = vadd.f32 %v5044, %v5220
        %v5222 = vpop.f32.mrf.mxu0
        %v5223 = vadd.f32 %v5046, %v5222
        %5224 = vmatmul.bf16.gmra.mxu0 %v3488
        %v5225 = vpop.f32.mrf.mxu0
        %v5226 = vadd.f32 %v5049, %v5225
        %v5227 = vpop.f32.mrf.mxu0
        %v5228 = vadd.f32 %v5051, %v5227
        %5229 = vmatmul.bf16.gmra.mxu0 %v3489
        %v5230 = vpop.f32.mrf.mxu0
        %v5231 = vadd.f32 %v5054, %v5230
        %v5232 = vpop.f32.mrf.mxu0
        %v5233 = vadd.f32 %v5056, %v5232
        %5234 = vmatmul.bf16.gmra.mxu0 %v3490
        %v5235 = vpop.f32.mrf.mxu0
        %v5236 = vadd.f32 %v5059, %v5235
        %v5237 = vpop.f32.mrf.mxu0
        %v5238 = vadd.f32 %v5061, %v5237
        %5239 = vmatmul.bf16.gmra.mxu0 %v3491
        %v5240 = vpop.f32.mrf.mxu0
        %v5241 = vadd.f32 %v5064, %v5240
        %v5242 = vpop.f32.mrf.mxu0
        %v5243 = vadd.f32 %v5066, %v5242
        %5244 = vmatmul.bf16.gmra.mxu0 %v3492
        %v5245 = vpop.f32.mrf.mxu0
        %v5246 = vadd.f32 %v5069, %v5245
        %v5247 = vpop.f32.mrf.mxu0
        %v5248 = vadd.f32 %v5071, %v5247
        %5249 = vmatmul.bf16.gmra.mxu0 %v3493
        %v5250 = vpop.f32.mrf.mxu0
        %v5251 = vadd.f32 %v5074, %v5250
        %v5252 = vpop.f32.mrf.mxu0
        %v5253 = vadd.f32 %v5076, %v5252
        %5254 = vdwg.mxu0
        %s5255 = scalar_lea.vmem [#allocation9], 512
        %v5256 = vld [vmem:[%s5255] sm:$0xf]
        %v5257 = vld [vmem:[%s5255 + $0x4] sm:$0xf]
        %v5258 = vld [vmem:[%s5255 + $0x8] sm:$0xf]
        %v5259 = vld [vmem:[%s5255 + $0xc] sm:$0xf]
        %v5260 = vld [vmem:[%s5255 + $0x10] sm:$0xf]
        %v5261 = vld [vmem:[%s5255 + $0x14] sm:$0xf]
        %v5262 = vld [vmem:[%s5255 + $0x18] sm:$0xf]
        %v5263 = vld [vmem:[%s5255 + $0x1c] sm:$0xf]
        %v5264 = vld [vmem:[%s5255 + $0x20] sm:$0xf]
        %v5265 = vld [vmem:[%s5255 + $0x24] sm:$0xf]
        %v5266 = vld [vmem:[%s5255 + $0x28] sm:$0xf]
        %v5267 = vld [vmem:[%s5255 + $0x2c] sm:$0xf]
        %v5268 = vld [vmem:[%s5255 + $0x30] sm:$0xf]
        %v5269 = vld [vmem:[%s5255 + $0x34] sm:$0xf]
        %v5270 = vld [vmem:[%s5255 + $0x38] sm:$0xf]
        %v5271 = vld [vmem:[%s5255 + $0x3c] sm:$0xf]
        %v5288 = vunpack.c.l.b16 %v5256
        %v5289 = vunpack.c.l.b16 %v5257
        %v5290 = vunpack.c.l.b16 %v5258
        %v5291 = vunpack.c.l.b16 %v5259
        %v5292 = vunpack.c.l.b16 %v5260
        %v5293 = vunpack.c.l.b16 %v5261
        %v5294 = vunpack.c.l.b16 %v5262
        %v5295 = vunpack.c.l.b16 %v5263
        %v5296 = vunpack.c.l.b16 %v5264
        %v5297 = vunpack.c.l.b16 %v5265
        %v5298 = vunpack.c.l.b16 %v5266
        %v5299 = vunpack.c.l.b16 %v5267
        %v5300 = vunpack.c.l.b16 %v5268
        %v5301 = vunpack.c.l.b16 %v5269
        %v5302 = vunpack.c.l.b16 %v5270
        %v5303 = vunpack.c.l.b16 %v5271
        %v5304 = vpack.c.b16 %v5289, %v5288
        %v5305 = vpack.c.b16 %v5291, %v5290
        %v5306 = vpack.c.b16 %v5293, %v5292
        %v5307 = vpack.c.b16 %v5295, %v5294
        %v5308 = vpack.c.b16 %v5297, %v5296
        %v5309 = vpack.c.b16 %v5299, %v5298
        %v5310 = vpack.c.b16 %v5301, %v5300
        %v5311 = vpack.c.b16 %v5303, %v5302
        %5320 = vmatpush.bf16.msra.mxu0 %v5311
        %5321 = vmatpush.bf16.msra.mxu0 %v5310
        %5322 = vmatpush.bf16.msra.mxu0 %v5309
        %5323 = vmatpush.bf16.msra.mxu0 %v5308
        %5324 = vmatpush.bf16.msra.mxu0 %v5307
        %5325 = vmatpush.bf16.msra.mxu0 %v5306
        %5326 = vmatpush.bf16.msra.mxu0 %v5305
        %5327 = vmatpush.bf16.msra.mxu0 %v5304
        %5328 = vmatmul.bf16.gmra.mxu0 %v3473
        %v5329 = vpop.f32.mrf.mxu0
        %v5330 = vadd.f32 0.0, %v5329
        %v5331 = vpop.f32.mrf.mxu0
        %v5332 = vadd.f32 0.0, %v5331
        %5333 = vmatmul.bf16.gmra.mxu0 %v3474
        %v5334 = vpop.f32.mrf.mxu0
        %v5335 = vadd.f32 0.0, %v5334
        %v5336 = vpop.f32.mrf.mxu0
        %v5337 = vadd.f32 0.0, %v5336
        %5338 = vmatmul.bf16.gmra.mxu0 %v3475
        %v5339 = vpop.f32.mrf.mxu0
        %v5340 = vadd.f32 0.0, %v5339
        %v5341 = vpop.f32.mrf.mxu0
        %v5342 = vadd.f32 0.0, %v5341
        %5343 = vmatmul.bf16.gmra.mxu0 %v3476
        %v5344 = vpop.f32.mrf.mxu0
        %v5345 = vadd.f32 0.0, %v5344
        %v5346 = vpop.f32.mrf.mxu0
        %v5347 = vadd.f32 0.0, %v5346
        %5348 = vmatmul.bf16.gmra.mxu0 %v3477
        %v5349 = vpop.f32.mrf.mxu0
        %v5350 = vadd.f32 0.0, %v5349
        %v5351 = vpop.f32.mrf.mxu0
        %v5352 = vadd.f32 0.0, %v5351
        %5353 = vmatmul.bf16.gmra.mxu0 %v3478
        %v5354 = vpop.f32.mrf.mxu0
        %v5355 = vadd.f32 0.0, %v5354
        %v5356 = vpop.f32.mrf.mxu0
        %v5357 = vadd.f32 0.0, %v5356
        %5358 = vmatmul.bf16.gmra.mxu0 %v3479
        %v5359 = vpop.f32.mrf.mxu0
        %v5360 = vadd.f32 0.0, %v5359
        %v5361 = vpop.f32.mrf.mxu0
        %v5362 = vadd.f32 0.0, %v5361
        %5363 = vmatmul.bf16.gmra.mxu0 %v3480
        %v5364 = vpop.f32.mrf.mxu0
        %v5365 = vadd.f32 0.0, %v5364
        %v5366 = vpop.f32.mrf.mxu0
        %v5367 = vadd.f32 0.0, %v5366
        %5368 = vmatmul.bf16.gmra.mxu0 %v3481
        %v5369 = vpop.f32.mrf.mxu0
        %v5370 = vadd.f32 0.0, %v5369
        %v5371 = vpop.f32.mrf.mxu0
        %v5372 = vadd.f32 0.0, %v5371
        %5373 = vmatmul.bf16.gmra.mxu0 %v3482
        %v5374 = vpop.f32.mrf.mxu0
        %v5375 = vadd.f32 0.0, %v5374
        %v5376 = vpop.f32.mrf.mxu0
        %v5377 = vadd.f32 0.0, %v5376
        %5378 = vmatmul.bf16.gmra.mxu0 %v3483
        %v5379 = vpop.f32.mrf.mxu0
        %v5380 = vadd.f32 0.0, %v5379
        %v5381 = vpop.f32.mrf.mxu0
        %v5382 = vadd.f32 0.0, %v5381
        %5383 = vmatmul.bf16.gmra.mxu0 %v3484
        %v5384 = vpop.f32.mrf.mxu0
        %v5385 = vadd.f32 0.0, %v5384
        %v5386 = vpop.f32.mrf.mxu0
        %v5387 = vadd.f32 0.0, %v5386
        %5388 = vmatmul.bf16.gmra.mxu0 %v3485
        %v5389 = vpop.f32.mrf.mxu0
        %v5390 = vadd.f32 0.0, %v5389
        %v5391 = vpop.f32.mrf.mxu0
        %v5392 = vadd.f32 0.0, %v5391
        %5393 = vmatmul.bf16.gmra.mxu0 %v3486
        %v5394 = vpop.f32.mrf.mxu0
        %v5395 = vadd.f32 0.0, %v5394
        %v5396 = vpop.f32.mrf.mxu0
        %v5397 = vadd.f32 0.0, %v5396
        %5398 = vmatmul.bf16.gmra.mxu0 %v3487
        %v5399 = vpop.f32.mrf.mxu0
        %v5400 = vadd.f32 0.0, %v5399
        %v5401 = vpop.f32.mrf.mxu0
        %v5402 = vadd.f32 0.0, %v5401
        %5403 = vmatmul.bf16.gmra.mxu0 %v3488
        %v5404 = vpop.f32.mrf.mxu0
        %v5405 = vadd.f32 0.0, %v5404
        %v5406 = vpop.f32.mrf.mxu0
        %v5407 = vadd.f32 0.0, %v5406
        %5408 = vmatmul.bf16.gmra.mxu0 %v3489
        %v5409 = vpop.f32.mrf.mxu0
        %v5410 = vadd.f32 0.0, %v5409
        %v5411 = vpop.f32.mrf.mxu0
        %v5412 = vadd.f32 0.0, %v5411
        %5413 = vmatmul.bf16.gmra.mxu0 %v3490
        %v5414 = vpop.f32.mrf.mxu0
        %v5415 = vadd.f32 0.0, %v5414
        %v5416 = vpop.f32.mrf.mxu0
        %v5417 = vadd.f32 0.0, %v5416
        %5418 = vmatmul.bf16.gmra.mxu0 %v3491
        %v5419 = vpop.f32.mrf.mxu0
        %v5420 = vadd.f32 0.0, %v5419
        %v5421 = vpop.f32.mrf.mxu0
        %v5422 = vadd.f32 0.0, %v5421
        %5423 = vmatmul.bf16.gmra.mxu0 %v3492
        %v5424 = vpop.f32.mrf.mxu0
        %v5425 = vadd.f32 0.0, %v5424
        %v5426 = vpop.f32.mrf.mxu0
        %v5427 = vadd.f32 0.0, %v5426
        %5428 = vmatmul.bf16.gmra.mxu0 %v3493
        %v5429 = vpop.f32.mrf.mxu0
        %v5430 = vadd.f32 0.0, %v5429
        %v5431 = vpop.f32.mrf.mxu0
        %v5432 = vadd.f32 0.0, %v5431
        %5433 = vmatmul.bf16.gmra.mxu0 %v3718
        %v5434 = vpop.f32.mrf.mxu0
        %v5435 = vadd.f32 0.0, %v5434
        %v5436 = vpop.f32.mrf.mxu0
        %v5437 = vadd.f32 0.0, %v5436
        %5438 = vmatmul.bf16.gmra.mxu0 %v3719
        %v5439 = vpop.f32.mrf.mxu0
        %v5440 = vadd.f32 0.0, %v5439
        %v5441 = vpop.f32.mrf.mxu0
        %v5442 = vadd.f32 0.0, %v5441
        %5443 = vmatmul.bf16.gmra.mxu0 %v3720
        %v5444 = vpop.f32.mrf.mxu0
        %v5445 = vadd.f32 0.0, %v5444
        %v5446 = vpop.f32.mrf.mxu0
        %v5447 = vadd.f32 0.0, %v5446
        %5448 = vdwg.mxu0
        %v5449 = vadd.f32 %v5136, %v5330
        %v5450 = vadd.f32 %v5138, %v5332
        %v5451 = vadd.f32 %v5141, %v5335
        %v5452 = vadd.f32 %v5143, %v5337
        %v5453 = vadd.f32 %v5146, %v5340
        %v5454 = vadd.f32 %v5148, %v5342
        %v5455 = vadd.f32 %v5151, %v5345
        %v5456 = vadd.f32 %v5153, %v5347
        %v5457 = vadd.f32 %v5156, %v5350
        %v5458 = vadd.f32 %v5158, %v5352
        %v5459 = vadd.f32 %v5161, %v5355
        %v5460 = vadd.f32 %v5163, %v5357
        %v5461 = vadd.f32 %v5166, %v5360
        %v5462 = vadd.f32 %v5168, %v5362
        %v5463 = vadd.f32 %v5171, %v5365
        %v5464 = vadd.f32 %v5173, %v5367
        %v5465 = vadd.f32 %v5176, %v5370
        %v5466 = vadd.f32 %v5178, %v5372
        %v5467 = vadd.f32 %v5181, %v5375
        %v5468 = vadd.f32 %v5183, %v5377
        %v5469 = vadd.f32 %v5186, %v5380
        %v5470 = vadd.f32 %v5188, %v5382
        %v5471 = vadd.f32 %v5191, %v5385
        %v5472 = vadd.f32 %v5193, %v5387
        %v5473 = vadd.f32 %v5196, %v5390
        %v5474 = vadd.f32 %v5198, %v5392
        %v5475 = vadd.f32 %v5201, %v5395
        %v5476 = vadd.f32 %v5203, %v5397
        %v5477 = vadd.f32 %v5206, %v5400
        %v5478 = vadd.f32 %v5208, %v5402
        %v5479 = vadd.f32 %v5211, %v5405
        %v5480 = vadd.f32 %v5213, %v5407
        %v5481 = vadd.f32 %v5216, %v5410
        %v5482 = vadd.f32 %v5218, %v5412
        %v5483 = vadd.f32 %v5221, %v5415
        %v5484 = vadd.f32 %v5223, %v5417
        %v5485 = vadd.f32 %v5226, %v5420
        %v5486 = vadd.f32 %v5228, %v5422
        %v5487 = vadd.f32 %v5231, %v5425
        %v5488 = vadd.f32 %v5233, %v5427
        %v5489 = vadd.f32 %v5236, %v5430
        %v5490 = vadd.f32 %v5238, %v5432
        %v5491 = vadd.f32 %v5241, %v5435
        %v5492 = vadd.f32 %v5243, %v5437
        %v5493 = vadd.f32 %v5246, %v5440
        %v5494 = vadd.f32 %v5248, %v5442
        %v5495 = vadd.f32 %v5251, %v5445
        %v5496 = vadd.f32 %v5253, %v5447
        %v5545 = vrot.slane %v5449, 2
        %v5546 = vrot.slane %v5450, 2
        %v5547 = vsel %vm2539, %v5545, %v5546
        %v5548 = vrot.slane %v5451, 2
        %v5549 = vsel %vm2539, %v5546, %v5548
        %v5550 = vrot.slane %v5452, 2
        %v5551 = vsel %vm2539, %v5548, %v5550
        %v5552 = vrot.slane %v5453, 2
        %v5553 = vsel %vm2539, %v5550, %v5552
        %v5554 = vrot.slane %v5454, 2
        %v5555 = vsel %vm2539, %v5552, %v5554
        %v5556 = vrot.slane %v5455, 2
        %v5557 = vsel %vm2539, %v5554, %v5556
        %v5558 = vrot.slane %v5456, 2
        %v5559 = vsel %vm2539, %v5556, %v5558
        %v5560 = vrot.slane %v5457, 2
        %v5561 = vsel %vm2539, %v5558, %v5560
        %v5562 = vrot.slane %v5458, 2
        %v5563 = vsel %vm2539, %v5560, %v5562
        %v5564 = vrot.slane %v5459, 2
        %v5565 = vsel %vm2539, %v5562, %v5564
        %v5566 = vrot.slane %v5460, 2
        %v5567 = vsel %vm2539, %v5564, %v5566
        %v5568 = vrot.slane %v5461, 2
        %v5569 = vsel %vm2539, %v5566, %v5568
        %v5570 = vrot.slane %v5462, 2
        %v5571 = vsel %vm2539, %v5568, %v5570
        %v5572 = vrot.slane %v5463, 2
        %v5573 = vsel %vm2539, %v5570, %v5572
        %v5574 = vrot.slane %v5464, 2
        %v5575 = vsel %vm2539, %v5572, %v5574
        %v5576 = vrot.slane %v5465, 2
        %v5577 = vsel %vm2539, %v5574, %v5576
        %v5578 = vrot.slane %v5466, 2
        %v5579 = vsel %vm2539, %v5576, %v5578
        %v5580 = vrot.slane %v5467, 2
        %v5581 = vsel %vm2539, %v5578, %v5580
        %v5582 = vrot.slane %v5468, 2
        %v5583 = vsel %vm2539, %v5580, %v5582
        %v5584 = vrot.slane %v5469, 2
        %v5585 = vsel %vm2539, %v5582, %v5584
        %v5586 = vrot.slane %v5470, 2
        %v5587 = vsel %vm2539, %v5584, %v5586
        %v5588 = vrot.slane %v5471, 2
        %v5589 = vsel %vm2539, %v5586, %v5588
        %v5590 = vrot.slane %v5472, 2
        %v5591 = vsel %vm2539, %v5588, %v5590
        %v5592 = vrot.slane %v5473, 2
        %v5593 = vsel %vm2539, %v5590, %v5592
        %v5594 = vrot.slane %v5474, 2
        %v5595 = vsel %vm2539, %v5592, %v5594
        %v5596 = vrot.slane %v5475, 2
        %v5597 = vsel %vm2539, %v5594, %v5596
        %v5598 = vrot.slane %v5476, 2
        %v5599 = vsel %vm2539, %v5596, %v5598
        %v5600 = vrot.slane %v5477, 2
        %v5601 = vsel %vm2539, %v5598, %v5600
        %v5602 = vrot.slane %v5478, 2
        %v5603 = vsel %vm2539, %v5600, %v5602
        %v5604 = vrot.slane %v5479, 2
        %v5605 = vsel %vm2539, %v5602, %v5604
        %v5606 = vrot.slane %v5480, 2
        %v5607 = vsel %vm2539, %v5604, %v5606
        %v5608 = vrot.slane %v5481, 2
        %v5609 = vsel %vm2539, %v5606, %v5608
        %v5610 = vrot.slane %v5482, 2
        %v5611 = vsel %vm2539, %v5608, %v5610
        %v5612 = vrot.slane %v5483, 2
        %v5613 = vsel %vm2539, %v5610, %v5612
        %v5614 = vrot.slane %v5484, 2
        %v5615 = vsel %vm2539, %v5612, %v5614
        %v5616 = vrot.slane %v5485, 2
        %v5617 = vsel %vm2539, %v5614, %v5616
        %v5618 = vrot.slane %v5486, 2
        %v5619 = vsel %vm2539, %v5616, %v5618
        %v5620 = vrot.slane %v5487, 2
        %v5621 = vsel %vm2539, %v5618, %v5620
        %v5622 = vrot.slane %v5488, 2
        %v5623 = vsel %vm2539, %v5620, %v5622
        %v5624 = vrot.slane %v5489, 2
        %v5625 = vsel %vm2539, %v5622, %v5624
        %v5626 = vrot.slane %v5490, 2
        %v5627 = vsel %vm2539, %v5624, %v5626
        %v5628 = vrot.slane %v5491, 2
        %v5629 = vsel %vm2539, %v5626, %v5628
        %v5630 = vrot.slane %v5492, 2
        %v5631 = vsel %vm2539, %v5628, %v5630
        %v5632 = vrot.slane %v5493, 2
        %v5633 = vsel %vm2539, %v5630, %v5632
        %v5634 = vrot.slane %v5494, 2
        %v5635 = vsel %vm2539, %v5632, %v5634
        %v5636 = vrot.slane %v5495, 2
        %v5637 = vsel %vm2539, %v5634, %v5636
        %v5638 = vrot.slane %v5496, 2
        %v5639 = vsel %vm2539, %v5636, %v5638
        %v5688 = vsel %vm2539, %v5638, 0.0
        %v5689 = vadd.f32 %v4819, %v5547
        %v5690 = vadd.f32 %v4820, %v5549
        %v5691 = vadd.f32 %v4821, %v5551
        %v5692 = vadd.f32 %v4822, %v5553
        %v5693 = vadd.f32 %v4823, %v5555
        %v5694 = vadd.f32 %v4824, %v5557
        %v5695 = vadd.f32 %v4825, %v5559
        %v5696 = vadd.f32 %v4826, %v5561
        %v5697 = vadd.f32 %v4827, %v5563
        %v5698 = vadd.f32 %v4828, %v5565
        %v5699 = vadd.f32 %v4829, %v5567
        %v5700 = vadd.f32 %v4830, %v5569
        %v5701 = vadd.f32 %v4831, %v5571
        %v5702 = vadd.f32 %v4832, %v5573
        %v5703 = vadd.f32 %v4833, %v5575
        %v5704 = vadd.f32 %v4834, %v5577
        %v5705 = vadd.f32 %v4835, %v5579
        %v5706 = vadd.f32 %v4836, %v5581
        %v5707 = vadd.f32 %v4837, %v5583
        %v5708 = vadd.f32 %v4838, %v5585
        %v5709 = vadd.f32 %v4839, %v5587
        %v5710 = vadd.f32 %v4840, %v5589
        %v5711 = vadd.f32 %v4841, %v5591
        %v5712 = vadd.f32 %v4842, %v5593
        %v5713 = vadd.f32 %v4843, %v5595
        %v5714 = vadd.f32 %v4844, %v5597
        %v5715 = vadd.f32 %v4845, %v5599
        %v5716 = vadd.f32 %v4846, %v5601
        %v5717 = vadd.f32 %v4847, %v5603
        %v5718 = vadd.f32 %v4848, %v5605
        %v5719 = vadd.f32 %v4849, %v5607
        %v5720 = vadd.f32 %v4850, %v5609
        %v5721 = vadd.f32 %v4851, %v5611
        %v5722 = vadd.f32 %v4852, %v5613
        %v5723 = vadd.f32 %v4853, %v5615
        %v5724 = vadd.f32 %v4854, %v5617
        %v5725 = vadd.f32 %v4855, %v5619
        %v5726 = vadd.f32 %v4856, %v5621
        %v5727 = vadd.f32 %v4857, %v5623
        %v5728 = vadd.f32 %v4858, %v5625
        %v5729 = vadd.f32 %v4859, %v5627
        %v5730 = vadd.f32 %v4860, %v5629
        %v5731 = vadd.f32 %v4861, %v5631
        %v5732 = vadd.f32 %v4862, %v5633
        %v5733 = vadd.f32 %v4863, %v5635
        %v5734 = vadd.f32 %v4864, %v5637
        %v5735 = vadd.f32 %v4865, %v5639
        %v5736 = vadd.f32 %v4866, %v5688
        %v5737 = vld [vmem:[%s8] sm:$0x1]
        %v5738 = vperm.slane %v5737, 0
        %v5739 = vmul.f32 %v5689, %v5738
        %v5740 = vmul.f32 %v5690, %v5738
        %v5741 = vmul.f32 %v5691, %v5738
        %v5742 = vmul.f32 %v5692, %v5738
        %v5743 = vmul.f32 %v5693, %v5738
        %v5744 = vmul.f32 %v5694, %v5738
        %v5745 = vmul.f32 %v5695, %v5738
        %v5746 = vmul.f32 %v5696, %v5738
        %v5747 = vmul.f32 %v5697, %v5738
        %v5748 = vmul.f32 %v5698, %v5738
        %v5749 = vmul.f32 %v5699, %v5738
        %v5750 = vmul.f32 %v5700, %v5738
        %v5751 = vmul.f32 %v5701, %v5738
        %v5752 = vmul.f32 %v5702, %v5738
        %v5753 = vmul.f32 %v5703, %v5738
        %v5754 = vmul.f32 %v5704, %v5738
        %v5755 = vmul.f32 %v5705, %v5738
        %v5756 = vmul.f32 %v5706, %v5738
        %v5757 = vmul.f32 %v5707, %v5738
        %v5758 = vmul.f32 %v5708, %v5738
        %v5759 = vmul.f32 %v5709, %v5738
        %v5760 = vmul.f32 %v5710, %v5738
        %v5761 = vmul.f32 %v5711, %v5738
        %v5762 = vmul.f32 %v5712, %v5738
        %v5763 = vmul.f32 %v5713, %v5738
        %v5764 = vmul.f32 %v5714, %v5738
        %v5765 = vmul.f32 %v5715, %v5738
        %v5766 = vmul.f32 %v5716, %v5738
        %v5767 = vmul.f32 %v5717, %v5738
        %v5768 = vmul.f32 %v5718, %v5738
        %v5769 = vmul.f32 %v5719, %v5738
        %v5770 = vmul.f32 %v5720, %v5738
        %v5771 = vmul.f32 %v5721, %v5738
        %v5772 = vmul.f32 %v5722, %v5738
        %v5773 = vmul.f32 %v5723, %v5738
        %v5774 = vmul.f32 %v5724, %v5738
        %v5775 = vmul.f32 %v5725, %v5738
        %v5776 = vmul.f32 %v5726, %v5738
        %v5777 = vmul.f32 %v5727, %v5738
        %v5778 = vmul.f32 %v5728, %v5738
        %v5779 = vmul.f32 %v5729, %v5738
        %v5780 = vmul.f32 %v5730, %v5738
        %v5781 = vmul.f32 %v5731, %v5738
        %v5782 = vmul.f32 %v5732, %v5738
        %v5783 = vmul.f32 %v5733, %v5738
        %v5784 = vmul.f32 %v5734, %v5738
        %v5785 = vmul.f32 %v5735, %v5738
        %v5786 = vmul.f32 %v5736, %v5738
        %v5787 = vld [vmem:[%s8 + $0x1] sm:$0x1]
        %v5788 = vperm.slane %v5787, 0
        %v5789 = vadd.f32 %v5739, %v5788
        %v5790 = vadd.f32 %v5740, %v5788
        %v5791 = vadd.f32 %v5741, %v5788
        %v5792 = vadd.f32 %v5742, %v5788
        %v5793 = vadd.f32 %v5743, %v5788
        %v5794 = vadd.f32 %v5744, %v5788
        %v5795 = vadd.f32 %v5745, %v5788
        %v5796 = vadd.f32 %v5746, %v5788
        %v5797 = vadd.f32 %v5747, %v5788
        %v5798 = vadd.f32 %v5748, %v5788
        %v5799 = vadd.f32 %v5749, %v5788
        %v5800 = vadd.f32 %v5750, %v5788
        %v5801 = vadd.f32 %v5751, %v5788
        %v5802 = vadd.f32 %v5752, %v5788
        %v5803 = vadd.f32 %v5753, %v5788
        %v5804 = vadd.f32 %v5754, %v5788
        %v5805 = vadd.f32 %v5755, %v5788
        %v5806 = vadd.f32 %v5756, %v5788
        %v5807 = vadd.f32 %v5757, %v5788
        %v5808 = vadd.f32 %v5758, %v5788
        %v5809 = vadd.f32 %v5759, %v5788
        %v5810 = vadd.f32 %v5760, %v5788
        %v5811 = vadd.f32 %v5761, %v5788
        %v5812 = vadd.f32 %v5762, %v5788
        %v5813 = vadd.f32 %v5763, %v5788
        %v5814 = vadd.f32 %v5764, %v5788
        %v5815 = vadd.f32 %v5765, %v5788
        %v5816 = vadd.f32 %v5766, %v5788
        %v5817 = vadd.f32 %v5767, %v5788
        %v5818 = vadd.f32 %v5768, %v5788
        %v5819 = vadd.f32 %v5769, %v5788
        %v5820 = vadd.f32 %v5770, %v5788
        %v5821 = vadd.f32 %v5771, %v5788
        %v5822 = vadd.f32 %v5772, %v5788
        %v5823 = vadd.f32 %v5773, %v5788
        %v5824 = vadd.f32 %v5774, %v5788
        %v5825 = vadd.f32 %v5775, %v5788
        %v5826 = vadd.f32 %v5776, %v5788
        %v5827 = vadd.f32 %v5777, %v5788
        %v5828 = vadd.f32 %v5778, %v5788
        %v5829 = vadd.f32 %v5779, %v5788
        %v5830 = vadd.f32 %v5780, %v5788
        %v5831 = vadd.f32 %v5781, %v5788
        %v5832 = vadd.f32 %v5782, %v5788
        %v5833 = vadd.f32 %v5783, %v5788
        %v5834 = vadd.f32 %v5784, %v5788
        %v5835 = vadd.f32 %v5785, %v5788
        %v5836 = vadd.f32 %v5786, %v5788
        %vm5837 = vcmp.ge.f32.partialorder %v5789, 0.0
        %vm5838 = vcmp.ge.f32.partialorder %v5790, 0.0
        %vm5839 = vcmp.ge.f32.partialorder %v5791, 0.0
        %vm5840 = vcmp.ge.f32.partialorder %v5792, 0.0
        %vm5841 = vcmp.ge.f32.partialorder %v5793, 0.0
        %vm5842 = vcmp.ge.f32.partialorder %v5794, 0.0
        %vm5843 = vcmp.ge.f32.partialorder %v5795, 0.0
        %vm5844 = vcmp.ge.f32.partialorder %v5796, 0.0
        %vm5845 = vcmp.ge.f32.partialorder %v5797, 0.0
        %vm5846 = vcmp.ge.f32.partialorder %v5798, 0.0
        %vm5847 = vcmp.ge.f32.partialorder %v5799, 0.0
        %vm5848 = vcmp.ge.f32.partialorder %v5800, 0.0
        %vm5849 = vcmp.ge.f32.partialorder %v5801, 0.0
        %vm5850 = vcmp.ge.f32.partialorder %v5802, 0.0
        %vm5851 = vcmp.ge.f32.partialorder %v5803, 0.0
        %vm5852 = vcmp.ge.f32.partialorder %v5804, 0.0
        %vm5853 = vcmp.ge.f32.partialorder %v5805, 0.0
        %vm5854 = vcmp.ge.f32.partialorder %v5806, 0.0
        %vm5855 = vcmp.ge.f32.partialorder %v5807, 0.0
        %vm5856 = vcmp.ge.f32.partialorder %v5808, 0.0
        %vm5857 = vcmp.ge.f32.partialorder %v5809, 0.0
        %vm5858 = vcmp.ge.f32.partialorder %v5810, 0.0
        %vm5859 = vcmp.ge.f32.partialorder %v5811, 0.0
        %vm5860 = vcmp.ge.f32.partialorder %v5812, 0.0
        %vm5861 = vcmp.ge.f32.partialorder %v5813, 0.0
        %vm5862 = vcmp.ge.f32.partialorder %v5814, 0.0
        %vm5863 = vcmp.ge.f32.partialorder %v5815, 0.0
        %vm5864 = vcmp.ge.f32.partialorder %v5816, 0.0
        %vm5865 = vcmp.ge.f32.partialorder %v5817, 0.0
        %vm5866 = vcmp.ge.f32.partialorder %v5818, 0.0
        %vm5867 = vcmp.ge.f32.partialorder %v5819, 0.0
        %vm5868 = vcmp.ge.f32.partialorder %v5820, 0.0
        %vm5869 = vcmp.ge.f32.partialorder %v5821, 0.0
        %vm5870 = vcmp.ge.f32.partialorder %v5822, 0.0
        %vm5871 = vcmp.ge.f32.partialorder %v5823, 0.0
        %vm5872 = vcmp.ge.f32.partialorder %v5824, 0.0
        %vm5873 = vcmp.ge.f32.partialorder %v5825, 0.0
        %vm5874 = vcmp.ge.f32.partialorder %v5826, 0.0
        %vm5875 = vcmp.ge.f32.partialorder %v5827, 0.0
        %vm5876 = vcmp.ge.f32.partialorder %v5828, 0.0
        %vm5877 = vcmp.ge.f32.partialorder %v5829, 0.0
        %vm5878 = vcmp.ge.f32.partialorder %v5830, 0.0
        %vm5879 = vcmp.ge.f32.partialorder %v5831, 0.0
        %vm5880 = vcmp.ge.f32.partialorder %v5832, 0.0
        %vm5881 = vcmp.ge.f32.partialorder %v5833, 0.0
        %vm5882 = vcmp.ge.f32.partialorder %v5834, 0.0
        %vm5883 = vcmp.ge.f32.partialorder %v5835, 0.0
        %vm5884 = vcmp.ge.f32.partialorder %v5836, 0.0
        %v5885 = vmul.f32 %v5789, 0.2
        %v5886 = vmul.f32 %v5790, 0.2
        %v5887 = vmul.f32 %v5791, 0.2
        %v5888 = vmul.f32 %v5792, 0.2
        %v5889 = vmul.f32 %v5793, 0.2
        %v5890 = vmul.f32 %v5794, 0.2
        %v5891 = vmul.f32 %v5795, 0.2
        %v5892 = vmul.f32 %v5796, 0.2
        %v5893 = vmul.f32 %v5797, 0.2
        %v5894 = vmul.f32 %v5798, 0.2
        %v5895 = vmul.f32 %v5799, 0.2
        %v5896 = vmul.f32 %v5800, 0.2
        %v5897 = vmul.f32 %v5801, 0.2
        %v5898 = vmul.f32 %v5802, 0.2
        %v5899 = vmul.f32 %v5803, 0.2
        %v5900 = vmul.f32 %v5804, 0.2
        %v5901 = vmul.f32 %v5805, 0.2
        %v5902 = vmul.f32 %v5806, 0.2
        %v5903 = vmul.f32 %v5807, 0.2
        %v5904 = vmul.f32 %v5808, 0.2
        %v5905 = vmul.f32 %v5809, 0.2
        %v5906 = vmul.f32 %v5810, 0.2
        %v5907 = vmul.f32 %v5811, 0.2
        %v5908 = vmul.f32 %v5812, 0.2
        %v5909 = vmul.f32 %v5813, 0.2
        %v5910 = vmul.f32 %v5814, 0.2
        %v5911 = vmul.f32 %v5815, 0.2
        %v5912 = vmul.f32 %v5816, 0.2
        %v5913 = vmul.f32 %v5817, 0.2
        %v5914 = vmul.f32 %v5818, 0.2
        %v5915 = vmul.f32 %v5819, 0.2
        %v5916 = vmul.f32 %v5820, 0.2
        %v5917 = vmul.f32 %v5821, 0.2
        %v5918 = vmul.f32 %v5822, 0.2
        %v5919 = vmul.f32 %v5823, 0.2
        %v5920 = vmul.f32 %v5824, 0.2
        %v5921 = vmul.f32 %v5825, 0.2
        %v5922 = vmul.f32 %v5826, 0.2
        %v5923 = vmul.f32 %v5827, 0.2
        %v5924 = vmul.f32 %v5828, 0.2
        %v5925 = vmul.f32 %v5829, 0.2
        %v5926 = vmul.f32 %v5830, 0.2
        %v5927 = vmul.f32 %v5831, 0.2
        %v5928 = vmul.f32 %v5832, 0.2
        %v5929 = vmul.f32 %v5833, 0.2
        %v5930 = vmul.f32 %v5834, 0.2
        %v5931 = vmul.f32 %v5835, 0.2
        %v5932 = vmul.f32 %v5836, 0.2
        %v5933 = vsel %vm5837, %v5789, %v5885
        %v5934 = vsel %vm5838, %v5790, %v5886
        %v5935 = vsel %vm5839, %v5791, %v5887
        %v5936 = vsel %vm5840, %v5792, %v5888
        %v5937 = vsel %vm5841, %v5793, %v5889
        %v5938 = vsel %vm5842, %v5794, %v5890
        %v5939 = vsel %vm5843, %v5795, %v5891
        %v5940 = vsel %vm5844, %v5796, %v5892
        %v5941 = vsel %vm5845, %v5797, %v5893
        %v5942 = vsel %vm5846, %v5798, %v5894
        %v5943 = vsel %vm5847, %v5799, %v5895
        %v5944 = vsel %vm5848, %v5800, %v5896
        %v5945 = vsel %vm5849, %v5801, %v5897
        %v5946 = vsel %vm5850, %v5802, %v5898
        %v5947 = vsel %vm5851, %v5803, %v5899
        %v5948 = vsel %vm5852, %v5804, %v5900
        %v5949 = vsel %vm5853, %v5805, %v5901
        %v5950 = vsel %vm5854, %v5806, %v5902
        %v5951 = vsel %vm5855, %v5807, %v5903
        %v5952 = vsel %vm5856, %v5808, %v5904
        %v5953 = vsel %vm5857, %v5809, %v5905
        %v5954 = vsel %vm5858, %v5810, %v5906
        %v5955 = vsel %vm5859, %v5811, %v5907
        %v5956 = vsel %vm5860, %v5812, %v5908
        %v5957 = vsel %vm5861, %v5813, %v5909
        %v5958 = vsel %vm5862, %v5814, %v5910
        %v5959 = vsel %vm5863, %v5815, %v5911
        %v5960 = vsel %vm5864, %v5816, %v5912
        %v5961 = vsel %vm5865, %v5817, %v5913
        %v5962 = vsel %vm5866, %v5818, %v5914
        %v5963 = vsel %vm5867, %v5819, %v5915
        %v5964 = vsel %vm5868, %v5820, %v5916
        %v5965 = vsel %vm5869, %v5821, %v5917
        %v5966 = vsel %vm5870, %v5822, %v5918
        %v5967 = vsel %vm5871, %v5823, %v5919
        %v5968 = vsel %vm5872, %v5824, %v5920
        %v5969 = vsel %vm5873, %v5825, %v5921
        %v5970 = vsel %vm5874, %v5826, %v5922
        %v5971 = vsel %vm5875, %v5827, %v5923
        %v5972 = vsel %vm5876, %v5828, %v5924
        %v5973 = vsel %vm5877, %v5829, %v5925
        %v5974 = vsel %vm5878, %v5830, %v5926
        %v5975 = vsel %vm5879, %v5831, %v5927
        %v5976 = vsel %vm5880, %v5832, %v5928
        %v5977 = vsel %vm5881, %v5833, %v5929
        %v5978 = vsel %vm5882, %v5834, %v5930
        %v5979 = vsel %vm5883, %v5835, %v5931
        %v5980 = vsel %vm5884, %v5836, %v5932
        %vm6029 = vcmask 1040384
        %v6030 = vrot.slane %v5933, 7
        %v6031 = vrot.slane %v5934, 7
        %v6032 = vsel %vm6029, %v6030, %v6031
        %v6033 = vrot.slane %v5935, 7
        %v6034 = vsel %vm6029, %v6031, %v6033
        %v6035 = vrot.slane %v5936, 7
        %v6036 = vsel %vm6029, %v6033, %v6035
        %v6037 = vrot.slane %v5937, 7
        %v6038 = vsel %vm6029, %v6035, %v6037
        %v6039 = vrot.slane %v5938, 7
        %v6040 = vsel %vm6029, %v6037, %v6039
        %v6041 = vrot.slane %v5939, 7
        %v6042 = vsel %vm6029, %v6039, %v6041
        %v6043 = vrot.slane %v5940, 7
        %v6044 = vsel %vm6029, %v6041, %v6043
        %v6045 = vrot.slane %v5941, 7
        %v6046 = vsel %vm6029, %v6043, %v6045
        %v6047 = vrot.slane %v5942, 7
        %v6048 = vsel %vm6029, %v6045, %v6047
        %v6049 = vrot.slane %v5943, 7
        %v6050 = vsel %vm6029, %v6047, %v6049
        %v6051 = vrot.slane %v5944, 7
        %v6052 = vsel %vm6029, %v6049, %v6051
        %v6053 = vrot.slane %v5945, 7
        %v6054 = vsel %vm6029, %v6051, %v6053
        %v6055 = vrot.slane %v5946, 7
        %v6056 = vsel %vm6029, %v6053, %v6055
        %v6057 = vrot.slane %v5947, 7
        %v6058 = vsel %vm6029, %v6055, %v6057
        %v6059 = vrot.slane %v5948, 7
        %v6060 = vsel %vm6029, %v6057, %v6059
        %v6061 = vrot.slane %v5949, 7
        %v6062 = vsel %vm6029, %v6059, %v6061
        %v6063 = vrot.slane %v5950, 7
        %v6064 = vsel %vm6029, %v6061, %v6063
        %v6065 = vrot.slane %v5951, 7
        %v6066 = vsel %vm6029, %v6063, %v6065
        %v6067 = vrot.slane %v5952, 7
        %v6068 = vsel %vm6029, %v6065, %v6067
        %v6069 = vrot.slane %v5953, 7
        %v6070 = vsel %vm6029, %v6067, %v6069
        %v6071 = vrot.slane %v5954, 7
        %v6072 = vsel %vm6029, %v6069, %v6071
        %v6073 = vrot.slane %v5955, 7
        %v6074 = vsel %vm6029, %v6071, %v6073
        %v6075 = vrot.slane %v5956, 7
        %v6076 = vsel %vm6029, %v6073, %v6075
        %v6077 = vrot.slane %v5957, 7
        %v6078 = vsel %vm6029, %v6075, %v6077
        %v6079 = vrot.slane %v5958, 7
        %v6080 = vsel %vm6029, %v6077, %v6079
        %v6081 = vrot.slane %v5959, 7
        %v6082 = vsel %vm6029, %v6079, %v6081
        %v6083 = vrot.slane %v5960, 7
        %v6084 = vsel %vm6029, %v6081, %v6083
        %v6085 = vrot.slane %v5961, 7
        %v6086 = vsel %vm6029, %v6083, %v6085
        %v6087 = vrot.slane %v5962, 7
        %v6088 = vsel %vm6029, %v6085, %v6087
        %v6089 = vrot.slane %v5963, 7
        %v6090 = vsel %vm6029, %v6087, %v6089
        %v6091 = vrot.slane %v5964, 7
        %v6092 = vsel %vm6029, %v6089, %v6091
        %v6093 = vrot.slane %v5965, 7
        %v6094 = vsel %vm6029, %v6091, %v6093
        %v6095 = vrot.slane %v5966, 7
        %v6096 = vsel %vm6029, %v6093, %v6095
        %v6097 = vrot.slane %v5967, 7
        %v6098 = vsel %vm6029, %v6095, %v6097
        %v6099 = vrot.slane %v5968, 7
        %v6100 = vsel %vm6029, %v6097, %v6099
        %v6101 = vrot.slane %v5969, 7
        %v6102 = vsel %vm6029, %v6099, %v6101
        %v6103 = vrot.slane %v5970, 7
        %v6104 = vsel %vm6029, %v6101, %v6103
        %v6105 = vrot.slane %v5971, 7
        %v6106 = vsel %vm6029, %v6103, %v6105
        %v6107 = vrot.slane %v5972, 7
        %v6108 = vsel %vm6029, %v6105, %v6107
        %v6109 = vrot.slane %v5973, 7
        %v6110 = vsel %vm6029, %v6107, %v6109
        %v6111 = vrot.slane %v5974, 7
        %v6112 = vsel %vm6029, %v6109, %v6111
        %v6113 = vrot.slane %v5975, 7
        %v6114 = vsel %vm6029, %v6111, %v6113
        %v6115 = vrot.slane %v5976, 7
        %v6116 = vsel %vm6029, %v6113, %v6115
        %v6117 = vrot.slane %v5977, 7
        %v6118 = vsel %vm6029, %v6115, %v6117
        %v6119 = vrot.slane %v5978, 7
        %v6120 = vsel %vm6029, %v6117, %v6119
        %v6121 = vrot.slane %v5979, 7
        %v6122 = vsel %vm6029, %v6119, %v6121
        %v6123 = vrot.slane %v5980, 7
        %v6124 = vsel %vm6029, %v6121, %v6123
        %v6174 = vsel %vm6029, 0.0, %v6030
        %v6175 = vsel %vm6029, %v6123, 0.0
        %v6176 = vld [vmem:[%s11] sm:$0xff]
        %v6177 = vld [vmem:[%s11 + $0x8] sm:$0xff]
        %v6178 = vld [vmem:[%s11 + $0x10] sm:$0xff]
        %v6179 = vld [vmem:[%s11 + $0x18] sm:$0xff]
        %v6180 = vld [vmem:[%s11 + $0x20] sm:$0xff]
        %v6181 = vld [vmem:[%s11 + $0x28] sm:$0xff]
        %v6182 = vld [vmem:[%s11 + $0x30] sm:$0xff]
        %v6183 = vld [vmem:[%s11 + $0x38] sm:$0xff]
        %v6184 = vld [vmem:[%s11 + $0x40] sm:$0xff]
        %v6185 = vld [vmem:[%s11 + $0x48] sm:$0xff]
        %v6186 = vld [vmem:[%s11 + $0x50] sm:$0xff]
        %v6187 = vld [vmem:[%s11 + $0x58] sm:$0xff]
        %v6188 = vld [vmem:[%s11 + $0x60] sm:$0xff]
        %v6189 = vld [vmem:[%s11 + $0x68] sm:$0xff]
        %v6190 = vld [vmem:[%s11 + $0x70] sm:$0xff]
        %v6191 = vld [vmem:[%s11 + $0x78] sm:$0xff]
        %v6192 = vld [vmem:[%s11 + $0x80] sm:$0xff]
        %v6193 = vld [vmem:[%s11 + $0x88] sm:$0xff]
        %v6194 = vld [vmem:[%s11 + $0x90] sm:$0xff]
        %v6195 = vld [vmem:[%s11 + $0x98] sm:$0xff]
        %v6196 = vld [vmem:[%s11 + $0xa0] sm:$0xff]
        %v6197 = vld [vmem:[%s11 + $0xa8] sm:$0xff]
        %v6198 = vld [vmem:[%s11 + $0xb0] sm:$0xff]
        %v6199 = vld [vmem:[%s11 + $0xb8] sm:$0xff]
        %v6200 = vld [vmem:[%s11 + $0xc0] sm:$0xff]
        %v6201 = vld [vmem:[%s11 + $0xc8] sm:$0xff]
        %v6202 = vld [vmem:[%s11 + $0xd0] sm:$0xff]
        %v6203 = vld [vmem:[%s11 + $0xd8] sm:$0xff]
        %v6204 = vld [vmem:[%s11 + $0xe0] sm:$0xff]
        %v6205 = vld [vmem:[%s11 + $0xe8] sm:$0xff]
        %v6206 = vld [vmem:[%s11 + $0xf0] sm:$0xff]
        %v6207 = vld [vmem:[%s11 + $0xf8] sm:$0xff]
        %v6208 = vld [vmem:[%s11 + $0x100] sm:$0xff]
        %v6209 = vld [vmem:[%s11 + $0x108] sm:$0xff]
        %v6210 = vld [vmem:[%s11 + $0x110] sm:$0xff]
        %v6211 = vld [vmem:[%s11 + $0x118] sm:$0xff]
        %v6212 = vld [vmem:[%s11 + $0x120] sm:$0xff]
        %v6213 = vld [vmem:[%s11 + $0x128] sm:$0xff]
        %v6214 = vld [vmem:[%s11 + $0x130] sm:$0xff]
        %v6215 = vld [vmem:[%s11 + $0x138] sm:$0xff]
        %v6216 = vld [vmem:[%s11 + $0x140] sm:$0xff]
        %v6217 = vld [vmem:[%s11 + $0x148] sm:$0xff]
        %v6218 = vld [vmem:[%s11 + $0x150] sm:$0xff]
        %v6219 = vld [vmem:[%s11 + $0x158] sm:$0xff]
        %v6220 = vld [vmem:[%s11 + $0x160] sm:$0xff]
        %v6221 = vld [vmem:[%s11 + $0x168] sm:$0xff]
        %v6222 = vld [vmem:[%s11 + $0x170] sm:$0xff]
        %v6223 = vld [vmem:[%s11 + $0x178] sm:$0xff]
        %v6224 = vld [vmem:[%s11 + $0x180] sm:$0xff]
        %v6225 = vld [vmem:[%s11 + $0x188] sm:$0xff]
        %v6226 = vld [vmem:[%s11 + $0x190] sm:$0xff]
        %v6227 = vld [vmem:[%s11 + $0x198] sm:$0xff]
        %v6228 = vld [vmem:[%s11 + $0x1a0] sm:$0xff]
        %v6229 = vld [vmem:[%s11 + $0x1a8] sm:$0xff]
        %6231 = vset.pattern.permute.xlu0 0
        %6232 = vperm.xlu0 %6231, %v6176
        %v6233 = vpop.permute.xlu0 %6232
        %6236 = vset.pattern.permute.xlu0 0
        %6237 = vperm.xlu0 %6236, %v6177
        %v6238 = vpop.permute.xlu0 %6237
        %6241 = vset.pattern.permute.xlu0 0
        %6242 = vperm.xlu0 %6241, %v6178
        %v6243 = vpop.permute.xlu0 %6242
        %6246 = vset.pattern.permute.xlu0 0
        %6247 = vperm.xlu0 %6246, %v6179
        %v6248 = vpop.permute.xlu0 %6247
        %6251 = vset.pattern.permute.xlu0 0
        %6252 = vperm.xlu0 %6251, %v6180
        %v6253 = vpop.permute.xlu0 %6252
        %6256 = vset.pattern.permute.xlu0 0
        %6257 = vperm.xlu0 %6256, %v6181
        %v6258 = vpop.permute.xlu0 %6257
        %6261 = vset.pattern.permute.xlu0 0
        %6262 = vperm.xlu0 %6261, %v6182
        %v6263 = vpop.permute.xlu0 %6262
        %6266 = vset.pattern.permute.xlu0 0
        %6267 = vperm.xlu0 %6266, %v6183
        %v6268 = vpop.permute.xlu0 %6267
        %6271 = vset.pattern.permute.xlu0 0
        %6272 = vperm.xlu0 %6271, %v6184
        %v6273 = vpop.permute.xlu0 %6272
        %6276 = vset.pattern.permute.xlu0 0
        %6277 = vperm.xlu0 %6276, %v6185
        %v6278 = vpop.permute.xlu0 %6277
        %6281 = vset.pattern.permute.xlu0 0
        %6282 = vperm.xlu0 %6281, %v6186
        %v6283 = vpop.permute.xlu0 %6282
        %6286 = vset.pattern.permute.xlu0 0
        %6287 = vperm.xlu0 %6286, %v6187
        %v6288 = vpop.permute.xlu0 %6287
        %6291 = vset.pattern.permute.xlu0 0
        %6292 = vperm.xlu0 %6291, %v6188
        %v6293 = vpop.permute.xlu0 %6292
        %6296 = vset.pattern.permute.xlu0 0
        %6297 = vperm.xlu0 %6296, %v6189
        %v6298 = vpop.permute.xlu0 %6297
        %6301 = vset.pattern.permute.xlu0 0
        %6302 = vperm.xlu0 %6301, %v6190
        %v6303 = vpop.permute.xlu0 %6302
        %6306 = vset.pattern.permute.xlu0 0
        %6307 = vperm.xlu0 %6306, %v6191
        %v6308 = vpop.permute.xlu0 %6307
        %6311 = vset.pattern.permute.xlu0 0
        %6312 = vperm.xlu0 %6311, %v6192
        %v6313 = vpop.permute.xlu0 %6312
        %6316 = vset.pattern.permute.xlu0 0
        %6317 = vperm.xlu0 %6316, %v6193
        %v6318 = vpop.permute.xlu0 %6317
        %6321 = vset.pattern.permute.xlu0 0
        %6322 = vperm.xlu0 %6321, %v6194
        %v6323 = vpop.permute.xlu0 %6322
        %6326 = vset.pattern.permute.xlu0 0
        %6327 = vperm.xlu0 %6326, %v6195
        %v6328 = vpop.permute.xlu0 %6327
        %6331 = vset.pattern.permute.xlu0 0
        %6332 = vperm.xlu0 %6331, %v6196
        %v6333 = vpop.permute.xlu0 %6332
        %6336 = vset.pattern.permute.xlu0 0
        %6337 = vperm.xlu0 %6336, %v6197
        %v6338 = vpop.permute.xlu0 %6337
        %6341 = vset.pattern.permute.xlu0 0
        %6342 = vperm.xlu0 %6341, %v6198
        %v6343 = vpop.permute.xlu0 %6342
        %6346 = vset.pattern.permute.xlu0 0
        %6347 = vperm.xlu0 %6346, %v6199
        %v6348 = vpop.permute.xlu0 %6347
        %6351 = vset.pattern.permute.xlu0 0
        %6352 = vperm.xlu0 %6351, %v6200
        %v6353 = vpop.permute.xlu0 %6352
        %6356 = vset.pattern.permute.xlu0 0
        %6357 = vperm.xlu0 %6356, %v6201
        %v6358 = vpop.permute.xlu0 %6357
        %6361 = vset.pattern.permute.xlu0 0
        %6362 = vperm.xlu0 %6361, %v6202
        %v6363 = vpop.permute.xlu0 %6362
        %6366 = vset.pattern.permute.xlu0 0
        %6367 = vperm.xlu0 %6366, %v6203
        %v6368 = vpop.permute.xlu0 %6367
        %6371 = vset.pattern.permute.xlu0 0
        %6372 = vperm.xlu0 %6371, %v6204
        %v6373 = vpop.permute.xlu0 %6372
        %6376 = vset.pattern.permute.xlu0 0
        %6377 = vperm.xlu0 %6376, %v6205
        %v6378 = vpop.permute.xlu0 %6377
        %6381 = vset.pattern.permute.xlu0 0
        %6382 = vperm.xlu0 %6381, %v6206
        %v6383 = vpop.permute.xlu0 %6382
        %6386 = vset.pattern.permute.xlu0 0
        %6387 = vperm.xlu0 %6386, %v6207
        %v6388 = vpop.permute.xlu0 %6387
        %6391 = vset.pattern.permute.xlu0 0
        %6392 = vperm.xlu0 %6391, %v6208
        %v6393 = vpop.permute.xlu0 %6392
        %6396 = vset.pattern.permute.xlu0 0
        %6397 = vperm.xlu0 %6396, %v6209
        %v6398 = vpop.permute.xlu0 %6397
        %6401 = vset.pattern.permute.xlu0 0
        %6402 = vperm.xlu0 %6401, %v6210
        %v6403 = vpop.permute.xlu0 %6402
        %6406 = vset.pattern.permute.xlu0 0
        %6407 = vperm.xlu0 %6406, %v6211
        %v6408 = vpop.permute.xlu0 %6407
        %6411 = vset.pattern.permute.xlu0 0
        %6412 = vperm.xlu0 %6411, %v6212
        %v6413 = vpop.permute.xlu0 %6412
        %6416 = vset.pattern.permute.xlu0 0
        %6417 = vperm.xlu0 %6416, %v6213
        %v6418 = vpop.permute.xlu0 %6417
        %6421 = vset.pattern.permute.xlu0 0
        %6422 = vperm.xlu0 %6421, %v6214
        %v6423 = vpop.permute.xlu0 %6422
        %6426 = vset.pattern.permute.xlu0 0
        %6427 = vperm.xlu0 %6426, %v6215
        %v6428 = vpop.permute.xlu0 %6427
        %6431 = vset.pattern.permute.xlu0 0
        %6432 = vperm.xlu0 %6431, %v6216
        %v6433 = vpop.permute.xlu0 %6432
        %6436 = vset.pattern.permute.xlu0 0
        %6437 = vperm.xlu0 %6436, %v6217
        %v6438 = vpop.permute.xlu0 %6437
        %6441 = vset.pattern.permute.xlu0 0
        %6442 = vperm.xlu0 %6441, %v6218
        %v6443 = vpop.permute.xlu0 %6442
        %6446 = vset.pattern.permute.xlu0 0
        %6447 = vperm.xlu0 %6446, %v6219
        %v6448 = vpop.permute.xlu0 %6447
        %6451 = vset.pattern.permute.xlu0 0
        %6452 = vperm.xlu0 %6451, %v6220
        %v6453 = vpop.permute.xlu0 %6452
        %6456 = vset.pattern.permute.xlu0 0
        %6457 = vperm.xlu0 %6456, %v6221
        %v6458 = vpop.permute.xlu0 %6457
        %6461 = vset.pattern.permute.xlu0 0
        %6462 = vperm.xlu0 %6461, %v6222
        %v6463 = vpop.permute.xlu0 %6462
        %6466 = vset.pattern.permute.xlu0 0
        %6467 = vperm.xlu0 %6466, %v6223
        %v6468 = vpop.permute.xlu0 %6467
        %6471 = vset.pattern.permute.xlu0 0
        %6472 = vperm.xlu0 %6471, %v6224
        %v6473 = vpop.permute.xlu0 %6472
        %6476 = vset.pattern.permute.xlu0 0
        %6477 = vperm.xlu0 %6476, %v6225
        %v6478 = vpop.permute.xlu0 %6477
        %6481 = vset.pattern.permute.xlu0 0
        %6482 = vperm.xlu0 %6481, %v6226
        %v6483 = vpop.permute.xlu0 %6482
        %6486 = vset.pattern.permute.xlu0 0
        %6487 = vperm.xlu0 %6486, %v6227
        %v6488 = vpop.permute.xlu0 %6487
        %6491 = vset.pattern.permute.xlu0 0
        %6492 = vperm.xlu0 %6491, %v6228
        %v6493 = vpop.permute.xlu0 %6492
        %6496 = vset.pattern.permute.xlu0 0
        %6497 = vperm.xlu0 %6496, %v6229
        %v6498 = vpop.permute.xlu0 %6497
        %v6500 = vmul.f32 %v6233, 0.0
        %v6501 = vmul.f32 %v6238, 0.0
        %v6502 = vmul.f32 %v6243, 0.0
        %v6503 = vmul.f32 %v6174, %v6248
        %v6504 = vmul.f32 %v6032, %v6253
        %v6505 = vmul.f32 %v6034, %v6258
        %v6506 = vmul.f32 %v6036, %v6263
        %v6507 = vmul.f32 %v6038, %v6268
        %v6508 = vmul.f32 %v6040, %v6273
        %v6509 = vmul.f32 %v6042, %v6278
        %v6510 = vmul.f32 %v6044, %v6283
        %v6511 = vmul.f32 %v6046, %v6288
        %v6512 = vmul.f32 %v6048, %v6293
        %v6513 = vmul.f32 %v6050, %v6298
        %v6514 = vmul.f32 %v6052, %v6303
        %v6515 = vmul.f32 %v6054, %v6308
        %v6516 = vmul.f32 %v6056, %v6313
        %v6517 = vmul.f32 %v6058, %v6318
        %v6518 = vmul.f32 %v6060, %v6323
        %v6519 = vmul.f32 %v6062, %v6328
        %v6520 = vmul.f32 %v6064, %v6333
        %v6521 = vmul.f32 %v6066, %v6338
        %v6522 = vmul.f32 %v6068, %v6343
        %v6523 = vmul.f32 %v6070, %v6348
        %v6524 = vmul.f32 %v6072, %v6353
        %v6525 = vmul.f32 %v6074, %v6358
        %v6526 = vmul.f32 %v6076, %v6363
        %v6527 = vmul.f32 %v6078, %v6368
        %v6528 = vmul.f32 %v6080, %v6373
        %v6529 = vmul.f32 %v6082, %v6378
        %v6530 = vmul.f32 %v6084, %v6383
        %v6531 = vmul.f32 %v6086, %v6388
        %v6532 = vmul.f32 %v6088, %v6393
        %v6533 = vmul.f32 %v6090, %v6398
        %v6534 = vmul.f32 %v6092, %v6403
        %v6535 = vmul.f32 %v6094, %v6408
        %v6536 = vmul.f32 %v6096, %v6413
        %v6537 = vmul.f32 %v6098, %v6418
        %v6538 = vmul.f32 %v6100, %v6423
        %v6539 = vmul.f32 %v6102, %v6428
        %v6540 = vmul.f32 %v6104, %v6433
        %v6541 = vmul.f32 %v6106, %v6438
        %v6542 = vmul.f32 %v6108, %v6443
        %v6543 = vmul.f32 %v6110, %v6448
        %v6544 = vmul.f32 %v6112, %v6453
        %v6545 = vmul.f32 %v6114, %v6458
        %v6546 = vmul.f32 %v6116, %v6463
        %v6547 = vmul.f32 %v6118, %v6468
        %v6548 = vmul.f32 %v6120, %v6473
        %v6549 = vmul.f32 %v6122, %v6478
        %v6550 = vmul.f32 %v6124, %v6483
        %v6551 = vmul.f32 %v6175, %v6488
        %v6552 = vmul.f32 %v6493, 0.0
        %v6553 = vmul.f32 %v6498, 0.0
        %v6554 = vpack.c.bf16 %v6500, %v6500
        %v6555 = vpack.c.bf16 %v6501, %v6501
        %v6556 = vpack.c.bf16 %v6502, %v6502
        %v6557 = vpack.c.bf16 %v6503, %v6503
        %v6558 = vpack.c.bf16 %v6504, %v6504
        %v6559 = vpack.c.bf16 %v6505, %v6505
        %v6560 = vpack.c.bf16 %v6506, %v6506
        %v6561 = vpack.c.bf16 %v6507, %v6507
        %v6562 = vpack.c.bf16 %v6508, %v6508
        %v6563 = vpack.c.bf16 %v6509, %v6509
        %v6564 = vpack.c.bf16 %v6510, %v6510
        %v6565 = vpack.c.bf16 %v6511, %v6511
        %v6566 = vpack.c.bf16 %v6512, %v6512
        %v6567 = vpack.c.bf16 %v6513, %v6513
        %v6568 = vpack.c.bf16 %v6514, %v6514
        %v6569 = vpack.c.bf16 %v6515, %v6515
        %v6570 = vpack.c.bf16 %v6516, %v6516
        %v6571 = vpack.c.bf16 %v6517, %v6517
        %v6572 = vpack.c.bf16 %v6518, %v6518
        %v6573 = vpack.c.bf16 %v6519, %v6519
        %v6574 = vpack.c.bf16 %v6520, %v6520
        %v6575 = vpack.c.bf16 %v6521, %v6521
        %v6576 = vpack.c.bf16 %v6522, %v6522
        %v6577 = vpack.c.bf16 %v6523, %v6523
        %v6578 = vpack.c.bf16 %v6524, %v6524
        %v6579 = vpack.c.bf16 %v6525, %v6525
        %v6580 = vpack.c.bf16 %v6526, %v6526
        %v6581 = vpack.c.bf16 %v6527, %v6527
        %v6582 = vpack.c.bf16 %v6528, %v6528
        %v6583 = vpack.c.bf16 %v6529, %v6529
        %v6584 = vpack.c.bf16 %v6530, %v6530
        %v6585 = vpack.c.bf16 %v6531, %v6531
        %v6586 = vpack.c.bf16 %v6532, %v6532
        %v6587 = vpack.c.bf16 %v6533, %v6533
        %v6588 = vpack.c.bf16 %v6534, %v6534
        %v6589 = vpack.c.bf16 %v6535, %v6535
        %v6590 = vpack.c.bf16 %v6536, %v6536
        %v6591 = vpack.c.bf16 %v6537, %v6537
        %v6592 = vpack.c.bf16 %v6538, %v6538
        %v6593 = vpack.c.bf16 %v6539, %v6539
        %v6594 = vpack.c.bf16 %v6540, %v6540
        %v6595 = vpack.c.bf16 %v6541, %v6541
        %v6596 = vpack.c.bf16 %v6542, %v6542
        %v6597 = vpack.c.bf16 %v6543, %v6543
        %v6598 = vpack.c.bf16 %v6544, %v6544
        %v6599 = vpack.c.bf16 %v6545, %v6545
        %v6600 = vpack.c.bf16 %v6546, %v6546
        %v6601 = vpack.c.bf16 %v6547, %v6547
        %v6602 = vpack.c.bf16 %v6548, %v6548
        %v6603 = vpack.c.bf16 %v6549, %v6549
        %v6604 = vpack.c.bf16 %v6550, %v6550
        %v6605 = vpack.c.bf16 %v6551, %v6551
        %v6606 = vpack.c.bf16 %v6552, %v6552
        %v6607 = vpack.c.bf16 %v6553, %v6553
        %v6608 = vld [vmem:[#allocation10] sm:$0xf]
        %v6609 = vld [vmem:[#allocation10 + $0x4] sm:$0xf]
        %v6610 = vld [vmem:[#allocation10 + $0x8] sm:$0xf]
        %v6611 = vld [vmem:[#allocation10 + $0xc] sm:$0xf]
        %v6612 = vld [vmem:[#allocation10 + $0x10] sm:$0xf]
        %v6613 = vld [vmem:[#allocation10 + $0x14] sm:$0xf]
        %v6614 = vld [vmem:[#allocation10 + $0x18] sm:$0xf]
        %v6615 = vld [vmem:[#allocation10 + $0x1c] sm:$0xf]
        %v6616 = vld [vmem:[#allocation10 + $0x20] sm:$0xf]
        %v6617 = vld [vmem:[#allocation10 + $0x24] sm:$0xf]
        %v6618 = vld [vmem:[#allocation10 + $0x28] sm:$0xf]
        %v6619 = vld [vmem:[#allocation10 + $0x2c] sm:$0xf]
        %v6620 = vld [vmem:[#allocation10 + $0x30] sm:$0xf]
        %v6621 = vld [vmem:[#allocation10 + $0x34] sm:$0xf]
        %v6622 = vld [vmem:[#allocation10 + $0x38] sm:$0xf]
        %v6623 = vld [vmem:[#allocation10 + $0x3c] sm:$0xf]
        %s6624 = scalar_lea.vmem [#allocation10], 192
        %v6625 = vld [vmem:[%s6624] sm:$0xf]
        %v6626 = vld [vmem:[%s6624 + $0x4] sm:$0xf]
        %v6627 = vld [vmem:[%s6624 + $0x8] sm:$0xf]
        %v6628 = vld [vmem:[%s6624 + $0xc] sm:$0xf]
        %v6629 = vld [vmem:[%s6624 + $0x10] sm:$0xf]
        %v6630 = vld [vmem:[%s6624 + $0x14] sm:$0xf]
        %v6631 = vld [vmem:[%s6624 + $0x18] sm:$0xf]
        %v6632 = vld [vmem:[%s6624 + $0x1c] sm:$0xf]
        %v6633 = vld [vmem:[%s6624 + $0x20] sm:$0xf]
        %v6634 = vld [vmem:[%s6624 + $0x24] sm:$0xf]
        %v6635 = vld [vmem:[%s6624 + $0x28] sm:$0xf]
        %v6636 = vld [vmem:[%s6624 + $0x2c] sm:$0xf]
        %v6637 = vld [vmem:[%s6624 + $0x30] sm:$0xf]
        %v6638 = vld [vmem:[%s6624 + $0x34] sm:$0xf]
        %v6639 = vld [vmem:[%s6624 + $0x38] sm:$0xf]
        %v6640 = vld [vmem:[%s6624 + $0x3c] sm:$0xf]
        %v6689 = vunpack.c.l.b16 %v6557
        %v6690 = vunpack.c.l.b16 %v6558
        %v6691 = vunpack.c.l.b16 %v6559
        %v6692 = vunpack.c.l.b16 %v6560
        %v6693 = vunpack.c.l.b16 %v6561
        %v6694 = vunpack.c.l.b16 %v6562
        %v6695 = vunpack.c.l.b16 %v6563
        %v6696 = vunpack.c.l.b16 %v6564
        %v6697 = vunpack.c.l.b16 %v6565
        %v6698 = vunpack.c.l.b16 %v6566
        %v6699 = vunpack.c.l.b16 %v6567
        %v6700 = vunpack.c.l.b16 %v6568
        %v6701 = vunpack.c.l.b16 %v6569
        %v6702 = vunpack.c.l.b16 %v6570
        %v6703 = vunpack.c.l.b16 %v6571
        %v6704 = vunpack.c.l.b16 %v6572
        %v6705 = vunpack.c.l.b16 %v6573
        %v6706 = vunpack.c.l.b16 %v6574
        %v6707 = vunpack.c.l.b16 %v6575
        %v6708 = vunpack.c.l.b16 %v6576
        %v6709 = vunpack.c.l.b16 %v6577
        %v6710 = vunpack.c.l.b16 %v6578
        %v6711 = vunpack.c.l.b16 %v6579
        %v6712 = vunpack.c.l.b16 %v6580
        %v6713 = vunpack.c.l.b16 %v6581
        %v6714 = vunpack.c.l.b16 %v6582
        %v6715 = vunpack.c.l.b16 %v6583
        %v6716 = vunpack.c.l.b16 %v6584
        %v6717 = vunpack.c.l.b16 %v6585
        %v6718 = vunpack.c.l.b16 %v6586
        %v6719 = vunpack.c.l.b16 %v6587
        %v6720 = vunpack.c.l.b16 %v6588
        %v6721 = vunpack.c.l.b16 %v6589
        %v6722 = vunpack.c.l.b16 %v6590
        %v6723 = vunpack.c.l.b16 %v6591
        %v6724 = vunpack.c.l.b16 %v6592
        %v6725 = vunpack.c.l.b16 %v6593
        %v6726 = vunpack.c.l.b16 %v6594
        %v6727 = vunpack.c.l.b16 %v6595
        %v6728 = vunpack.c.l.b16 %v6596
        %v6729 = vunpack.c.l.b16 %v6597
        %v6730 = vunpack.c.l.b16 %v6598
        %v6731 = vunpack.c.l.b16 %v6599
        %v6732 = vunpack.c.l.b16 %v6600
        %v6733 = vunpack.c.l.b16 %v6601
        %v6734 = vunpack.c.l.b16 %v6602
        %v6735 = vunpack.c.l.b16 %v6603
        %v6736 = vunpack.c.l.b16 %v6604
        %v6737 = vpack.c.b16 %v6690, %v6689
        %v6738 = vpack.c.b16 %v6692, %v6691
        %v6739 = vpack.c.b16 %v6694, %v6693
        %v6740 = vpack.c.b16 %v6696, %v6695
        %v6741 = vpack.c.b16 %v6698, %v6697
        %v6742 = vpack.c.b16 %v6700, %v6699
        %v6743 = vpack.c.b16 %v6702, %v6701
        %v6744 = vpack.c.b16 %v6704, %v6703
        %v6745 = vpack.c.b16 %v6706, %v6705
        %v6746 = vpack.c.b16 %v6708, %v6707
        %v6747 = vpack.c.b16 %v6710, %v6709
        %v6748 = vpack.c.b16 %v6712, %v6711
        %v6749 = vpack.c.b16 %v6714, %v6713
        %v6750 = vpack.c.b16 %v6716, %v6715
        %v6751 = vpack.c.b16 %v6718, %v6717
        %v6752 = vpack.c.b16 %v6720, %v6719
        %v6753 = vpack.c.b16 %v6722, %v6721
        %v6754 = vpack.c.b16 %v6724, %v6723
        %v6755 = vpack.c.b16 %v6726, %v6725
        %v6756 = vpack.c.b16 %v6728, %v6727
        %v6757 = vpack.c.b16 %v6730, %v6729
        %v6758 = vpack.c.b16 %v6732, %v6731
        %v6759 = vpack.c.b16 %v6734, %v6733
        %v6760 = vpack.c.b16 %v6736, %v6735
        %v6801 = vunpack.c.l.b16 %v6625
        %v6802 = vunpack.c.l.b16 %v6626
        %v6803 = vunpack.c.l.b16 %v6627
        %v6804 = vunpack.c.l.b16 %v6628
        %v6805 = vunpack.c.l.b16 %v6629
        %v6806 = vunpack.c.l.b16 %v6630
        %v6807 = vunpack.c.l.b16 %v6631
        %v6808 = vunpack.c.l.b16 %v6632
        %v6809 = vunpack.c.l.b16 %v6633
        %v6810 = vunpack.c.l.b16 %v6634
        %v6811 = vunpack.c.l.b16 %v6635
        %v6812 = vunpack.c.l.b16 %v6636
        %v6813 = vunpack.c.l.b16 %v6637
        %v6814 = vunpack.c.l.b16 %v6638
        %v6815 = vunpack.c.l.b16 %v6639
        %v6816 = vunpack.c.l.b16 %v6640
        %v6817 = vpack.c.b16 %v6802, %v6801
        %v6818 = vpack.c.b16 %v6804, %v6803
        %v6819 = vpack.c.b16 %v6806, %v6805
        %v6820 = vpack.c.b16 %v6808, %v6807
        %v6821 = vpack.c.b16 %v6810, %v6809
        %v6822 = vpack.c.b16 %v6812, %v6811
        %v6823 = vpack.c.b16 %v6814, %v6813
        %v6824 = vpack.c.b16 %v6816, %v6815
        %6833 = vmatpush.bf16.msra.mxu0 %v6824
        %6834 = vmatpush.bf16.msra.mxu0 %v6823
        %6835 = vmatpush.bf16.msra.mxu0 %v6822
        %6836 = vmatpush.bf16.msra.mxu0 %v6821
        %6837 = vmatpush.bf16.msra.mxu0 %v6820
        %6838 = vmatpush.bf16.msra.mxu0 %v6819
        %6839 = vmatpush.bf16.msra.mxu0 %v6818
        %6840 = vmatpush.bf16.msra.mxu0 %v6817
        %6841 = vmatmul.bf16.gmra.mxu0 %v6737
        %v6842 = vpop.f32.mrf.mxu0
        %v6843 = vadd.f32 0.0, %v6842
        %v6844 = vpop.f32.mrf.mxu0
        %v6845 = vadd.f32 0.0, %v6844
        %6846 = vmatmul.bf16.gmra.mxu0 %v6738
        %v6847 = vpop.f32.mrf.mxu0
        %v6848 = vpop.f32.mrf.mxu0
        %v6849 = vadd.f32 0.0, %v6848
        %6850 = vmatmul.bf16.gmra.mxu0 %v6739
        %v6851 = vpop.f32.mrf.mxu0
        %v6852 = vadd.f32 0.0, %v6851
        %v6853 = vpop.f32.mrf.mxu0
        %6854 = vmatmul.bf16.gmra.mxu0 %v6740
        %v6855 = vpop.f32.mrf.mxu0
        %v6856 = vadd.f32 0.0, %v6855
        %v6857 = vpop.f32.mrf.mxu0
        %v6858 = vadd.f32 0.0, %v6857
        %6859 = vmatmul.bf16.gmra.mxu0 %v6741
        %v6860 = vpop.f32.mrf.mxu0
        %v6861 = vpop.f32.mrf.mxu0
        %v6862 = vadd.f32 0.0, %v6861
        %6863 = vmatmul.bf16.gmra.mxu0 %v6742
        %v6864 = vpop.f32.mrf.mxu0
        %v6865 = vadd.f32 0.0, %v6864
        %v6866 = vpop.f32.mrf.mxu0
        %6867 = vmatmul.bf16.gmra.mxu0 %v6743
        %v6868 = vpop.f32.mrf.mxu0
        %v6869 = vadd.f32 0.0, %v6868
        %v6870 = vpop.f32.mrf.mxu0
        %v6871 = vadd.f32 0.0, %v6870
        %6872 = vmatmul.bf16.gmra.mxu0 %v6744
        %v6873 = vpop.f32.mrf.mxu0
        %v6874 = vpop.f32.mrf.mxu0
        %v6875 = vadd.f32 0.0, %v6874
        %6876 = vmatmul.bf16.gmra.mxu0 %v6745
        %v6877 = vpop.f32.mrf.mxu0
        %v6878 = vadd.f32 0.0, %v6877
        %v6879 = vpop.f32.mrf.mxu0
        %6880 = vmatmul.bf16.gmra.mxu0 %v6746
        %v6881 = vpop.f32.mrf.mxu0
        %v6882 = vadd.f32 0.0, %v6881
        %v6883 = vpop.f32.mrf.mxu0
        %v6884 = vadd.f32 0.0, %v6883
        %6885 = vmatmul.bf16.gmra.mxu0 %v6747
        %v6886 = vpop.f32.mrf.mxu0
        %v6887 = vpop.f32.mrf.mxu0
        %v6888 = vadd.f32 0.0, %v6887
        %6889 = vmatmul.bf16.gmra.mxu0 %v6748
        %v6890 = vpop.f32.mrf.mxu0
        %v6891 = vadd.f32 0.0, %v6890
        %v6892 = vpop.f32.mrf.mxu0
        %6893 = vmatmul.bf16.gmra.mxu0 %v6749
        %v6894 = vpop.f32.mrf.mxu0
        %v6895 = vadd.f32 0.0, %v6894
        %v6896 = vpop.f32.mrf.mxu0
        %v6897 = vadd.f32 0.0, %v6896
        %6898 = vmatmul.bf16.gmra.mxu0 %v6750
        %v6899 = vpop.f32.mrf.mxu0
        %v6900 = vpop.f32.mrf.mxu0
        %v6901 = vadd.f32 0.0, %v6900
        %6902 = vmatmul.bf16.gmra.mxu0 %v6751
        %v6903 = vpop.f32.mrf.mxu0
        %v6904 = vadd.f32 0.0, %v6903
        %v6905 = vpop.f32.mrf.mxu0
        %6906 = vmatmul.bf16.gmra.mxu0 %v6752
        %v6907 = vpop.f32.mrf.mxu0
        %v6908 = vadd.f32 0.0, %v6907
        %v6909 = vpop.f32.mrf.mxu0
        %v6910 = vadd.f32 0.0, %v6909
        %6911 = vmatmul.bf16.gmra.mxu0 %v6753
        %v6912 = vpop.f32.mrf.mxu0
        %v6913 = vpop.f32.mrf.mxu0
        %v6914 = vadd.f32 0.0, %v6913
        %6915 = vmatmul.bf16.gmra.mxu0 %v6754
        %v6916 = vpop.f32.mrf.mxu0
        %v6917 = vadd.f32 0.0, %v6916
        %v6918 = vpop.f32.mrf.mxu0
        %6919 = vmatmul.bf16.gmra.mxu0 %v6755
        %v6920 = vpop.f32.mrf.mxu0
        %v6921 = vadd.f32 0.0, %v6920
        %v6922 = vpop.f32.mrf.mxu0
        %v6923 = vadd.f32 0.0, %v6922
        %6924 = vmatmul.bf16.gmra.mxu0 %v6756
        %v6925 = vpop.f32.mrf.mxu0
        %v6926 = vpop.f32.mrf.mxu0
        %v6927 = vadd.f32 0.0, %v6926
        %6928 = vmatmul.bf16.gmra.mxu0 %v6757
        %v6929 = vpop.f32.mrf.mxu0
        %v6930 = vadd.f32 0.0, %v6929
        %v6931 = vpop.f32.mrf.mxu0
        %6932 = vmatmul.bf16.gmra.mxu0 %v6758
        %v6933 = vpop.f32.mrf.mxu0
        %v6934 = vadd.f32 0.0, %v6933
        %v6935 = vpop.f32.mrf.mxu0
        %v6936 = vadd.f32 0.0, %v6935
        %6937 = vmatmul.bf16.gmra.mxu0 %v6759
        %v6938 = vpop.f32.mrf.mxu0
        %v6939 = vpop.f32.mrf.mxu0
        %v6940 = vadd.f32 0.0, %v6939
        %6941 = vmatmul.bf16.gmra.mxu0 %v6760
        %v6942 = vpop.f32.mrf.mxu0
        %v6943 = vadd.f32 0.0, %v6942
        %v6944 = vpop.f32.mrf.mxu0
        %6945 = vdwg.mxu0
        %v6949 = vunpack.c.l.b16 %v6554
        %v6950 = vunpack.c.l.b16 %v6555
        %v6951 = vunpack.c.l.b16 %v6556
        %v6952 = vpack.c.b16 %v6950, %v6949
        %v6953 = vpack.c.b16 %v6689, %v6951
        %v6954 = vpack.c.b16 %v6691, %v6690
        %v6955 = vpack.c.b16 %v6693, %v6692
        %v6956 = vpack.c.b16 %v6695, %v6694
        %v6957 = vpack.c.b16 %v6697, %v6696
        %v6958 = vpack.c.b16 %v6699, %v6698
        %v6959 = vpack.c.b16 %v6701, %v6700
        %v6960 = vpack.c.b16 %v6703, %v6702
        %v6961 = vpack.c.b16 %v6705, %v6704
        %v6962 = vpack.c.b16 %v6707, %v6706
        %v6963 = vpack.c.b16 %v6709, %v6708
        %v6964 = vpack.c.b16 %v6711, %v6710
        %v6965 = vpack.c.b16 %v6713, %v6712
        %v6966 = vpack.c.b16 %v6715, %v6714
        %v6967 = vpack.c.b16 %v6717, %v6716
        %v6968 = vpack.c.b16 %v6719, %v6718
        %v6969 = vpack.c.b16 %v6721, %v6720
        %v6970 = vpack.c.b16 %v6723, %v6722
        %v6971 = vpack.c.b16 %v6725, %v6724
        %v6972 = vpack.c.b16 %v6727, %v6726
        %v6973 = vpack.c.b16 %v6729, %v6728
        %v6974 = vpack.c.b16 %v6731, %v6730
        %v6975 = vpack.c.b16 %v6733, %v6732
        %v7016 = vunpack.c.l.b16 %v6608
        %v7017 = vunpack.c.l.b16 %v6609
        %v7018 = vunpack.c.l.b16 %v6610
        %v7019 = vunpack.c.l.b16 %v6611
        %v7020 = vunpack.c.l.b16 %v6612
        %v7021 = vunpack.c.l.b16 %v6613
        %v7022 = vunpack.c.l.b16 %v6614
        %v7023 = vunpack.c.l.b16 %v6615
        %v7024 = vunpack.c.l.b16 %v6616
        %v7025 = vunpack.c.l.b16 %v6617
        %v7026 = vunpack.c.l.b16 %v6618
        %v7027 = vunpack.c.l.b16 %v6619
        %v7028 = vunpack.c.l.b16 %v6620
        %v7029 = vunpack.c.l.b16 %v6621
        %v7030 = vunpack.c.l.b16 %v6622
        %v7031 = vunpack.c.l.b16 %v6623
        %v7032 = vpack.c.b16 %v7017, %v7016
        %v7033 = vpack.c.b16 %v7019, %v7018
        %v7034 = vpack.c.b16 %v7021, %v7020
        %v7035 = vpack.c.b16 %v7023, %v7022
        %v7036 = vpack.c.b16 %v7025, %v7024
        %v7037 = vpack.c.b16 %v7027, %v7026
        %v7038 = vpack.c.b16 %v7029, %v7028
        %v7039 = vpack.c.b16 %v7031, %v7030
        %7048 = vmatpush.bf16.msra.mxu0 %v7039
        %7049 = vmatpush.bf16.msra.mxu0 %v7038
        %7050 = vmatpush.bf16.msra.mxu0 %v7037
        %7051 = vmatpush.bf16.msra.mxu0 %v7036
        %7052 = vmatpush.bf16.msra.mxu0 %v7035
        %7053 = vmatpush.bf16.msra.mxu0 %v7034
        %7054 = vmatpush.bf16.msra.mxu0 %v7033
        %7055 = vmatpush.bf16.msra.mxu0 %v7032
        %7056 = vmatmul.bf16.gmra.mxu0 %v6952
        %v7057 = vpop.f32.mrf.mxu0
        %v7058 = vadd.f32 %v6843, %v7057
        %v7059 = vpop.f32.mrf.mxu0
        %v7060 = vadd.f32 %v6845, %v7059
        %7061 = vmatmul.bf16.gmra.mxu0 %v6953
        %v7062 = vpop.f32.mrf.mxu0
        %v7063 = vpop.f32.mrf.mxu0
        %v7064 = vadd.f32 %v6849, %v7063
        %7065 = vmatmul.bf16.gmra.mxu0 %v6954
        %v7066 = vpop.f32.mrf.mxu0
        %v7067 = vadd.f32 %v6852, %v7066
        %v7068 = vpop.f32.mrf.mxu0
        %7069 = vmatmul.bf16.gmra.mxu0 %v6955
        %v7070 = vpop.f32.mrf.mxu0
        %v7071 = vadd.f32 %v6856, %v7070
        %v7072 = vpop.f32.mrf.mxu0
        %v7073 = vadd.f32 %v6858, %v7072
        %7074 = vmatmul.bf16.gmra.mxu0 %v6956
        %v7075 = vpop.f32.mrf.mxu0
        %v7076 = vpop.f32.mrf.mxu0
        %v7077 = vadd.f32 %v6862, %v7076
        %7078 = vmatmul.bf16.gmra.mxu0 %v6957
        %v7079 = vpop.f32.mrf.mxu0
        %v7080 = vadd.f32 %v6865, %v7079
        %v7081 = vpop.f32.mrf.mxu0
        %7082 = vmatmul.bf16.gmra.mxu0 %v6958
        %v7083 = vpop.f32.mrf.mxu0
        %v7084 = vadd.f32 %v6869, %v7083
        %v7085 = vpop.f32.mrf.mxu0
        %v7086 = vadd.f32 %v6871, %v7085
        %7087 = vmatmul.bf16.gmra.mxu0 %v6959
        %v7088 = vpop.f32.mrf.mxu0
        %v7089 = vpop.f32.mrf.mxu0
        %v7090 = vadd.f32 %v6875, %v7089
        %7091 = vmatmul.bf16.gmra.mxu0 %v6960
        %v7092 = vpop.f32.mrf.mxu0
        %v7093 = vadd.f32 %v6878, %v7092
        %v7094 = vpop.f32.mrf.mxu0
        %7095 = vmatmul.bf16.gmra.mxu0 %v6961
        %v7096 = vpop.f32.mrf.mxu0
        %v7097 = vadd.f32 %v6882, %v7096
        %v7098 = vpop.f32.mrf.mxu0
        %v7099 = vadd.f32 %v6884, %v7098
        %7100 = vmatmul.bf16.gmra.mxu0 %v6962
        %v7101 = vpop.f32.mrf.mxu0
        %v7102 = vpop.f32.mrf.mxu0
        %v7103 = vadd.f32 %v6888, %v7102
        %7104 = vmatmul.bf16.gmra.mxu0 %v6963
        %v7105 = vpop.f32.mrf.mxu0
        %v7106 = vadd.f32 %v6891, %v7105
        %v7107 = vpop.f32.mrf.mxu0
        %7108 = vmatmul.bf16.gmra.mxu0 %v6964
        %v7109 = vpop.f32.mrf.mxu0
        %v7110 = vadd.f32 %v6895, %v7109
        %v7111 = vpop.f32.mrf.mxu0
        %v7112 = vadd.f32 %v6897, %v7111
        %7113 = vmatmul.bf16.gmra.mxu0 %v6965
        %v7114 = vpop.f32.mrf.mxu0
        %v7115 = vpop.f32.mrf.mxu0
        %v7116 = vadd.f32 %v6901, %v7115
        %7117 = vmatmul.bf16.gmra.mxu0 %v6966
        %v7118 = vpop.f32.mrf.mxu0
        %v7119 = vadd.f32 %v6904, %v7118
        %v7120 = vpop.f32.mrf.mxu0
        %7121 = vmatmul.bf16.gmra.mxu0 %v6967
        %v7122 = vpop.f32.mrf.mxu0
        %v7123 = vadd.f32 %v6908, %v7122
        %v7124 = vpop.f32.mrf.mxu0
        %v7125 = vadd.f32 %v6910, %v7124
        %7126 = vmatmul.bf16.gmra.mxu0 %v6968
        %v7127 = vpop.f32.mrf.mxu0
        %v7128 = vpop.f32.mrf.mxu0
        %v7129 = vadd.f32 %v6914, %v7128
        %7130 = vmatmul.bf16.gmra.mxu0 %v6969
        %v7131 = vpop.f32.mrf.mxu0
        %v7132 = vadd.f32 %v6917, %v7131
        %v7133 = vpop.f32.mrf.mxu0
        %7134 = vmatmul.bf16.gmra.mxu0 %v6970
        %v7135 = vpop.f32.mrf.mxu0
        %v7136 = vadd.f32 %v6921, %v7135
        %v7137 = vpop.f32.mrf.mxu0
        %v7138 = vadd.f32 %v6923, %v7137
        %7139 = vmatmul.bf16.gmra.mxu0 %v6971
        %v7140 = vpop.f32.mrf.mxu0
        %v7141 = vpop.f32.mrf.mxu0
        %v7142 = vadd.f32 %v6927, %v7141
        %7143 = vmatmul.bf16.gmra.mxu0 %v6972
        %v7144 = vpop.f32.mrf.mxu0
        %v7145 = vadd.f32 %v6930, %v7144
        %v7146 = vpop.f32.mrf.mxu0
        %7147 = vmatmul.bf16.gmra.mxu0 %v6973
        %v7148 = vpop.f32.mrf.mxu0
        %v7149 = vadd.f32 %v6934, %v7148
        %v7150 = vpop.f32.mrf.mxu0
        %v7151 = vadd.f32 %v6936, %v7150
        %7152 = vmatmul.bf16.gmra.mxu0 %v6974
        %v7153 = vpop.f32.mrf.mxu0
        %v7154 = vpop.f32.mrf.mxu0
        %v7155 = vadd.f32 %v6940, %v7154
        %7156 = vmatmul.bf16.gmra.mxu0 %v6975
        %v7157 = vpop.f32.mrf.mxu0
        %v7158 = vadd.f32 %v6943, %v7157
        %v7159 = vpop.f32.mrf.mxu0
        %7160 = vdwg.mxu0
        %s7161 = scalar_lea.vmem [#allocation10], 384
        %v7162 = vld [vmem:[%s7161] sm:$0xf]
        %v7163 = vld [vmem:[%s7161 + $0x4] sm:$0xf]
        %v7164 = vld [vmem:[%s7161 + $0x8] sm:$0xf]
        %v7165 = vld [vmem:[%s7161 + $0xc] sm:$0xf]
        %v7166 = vld [vmem:[%s7161 + $0x10] sm:$0xf]
        %v7167 = vld [vmem:[%s7161 + $0x14] sm:$0xf]
        %v7168 = vld [vmem:[%s7161 + $0x18] sm:$0xf]
        %v7169 = vld [vmem:[%s7161 + $0x1c] sm:$0xf]
        %v7170 = vld [vmem:[%s7161 + $0x20] sm:$0xf]
        %v7171 = vld [vmem:[%s7161 + $0x24] sm:$0xf]
        %v7172 = vld [vmem:[%s7161 + $0x28] sm:$0xf]
        %v7173 = vld [vmem:[%s7161 + $0x2c] sm:$0xf]
        %v7174 = vld [vmem:[%s7161 + $0x30] sm:$0xf]
        %v7175 = vld [vmem:[%s7161 + $0x34] sm:$0xf]
        %v7176 = vld [vmem:[%s7161 + $0x38] sm:$0xf]
        %v7177 = vld [vmem:[%s7161 + $0x3c] sm:$0xf]
        %v7181 = vunpack.c.l.b16 %v6605
        %v7182 = vunpack.c.l.b16 %v6606
        %v7183 = vunpack.c.l.b16 %v6607
        %v7184 = vpack.c.b16 %v6735, %v6734
        %v7185 = vpack.c.b16 %v7181, %v6736
        %v7186 = vpack.c.b16 %v7183, %v7182
        %v7206 = vunpack.c.l.b16 %v7162
        %v7207 = vunpack.c.l.b16 %v7163
        %v7208 = vunpack.c.l.b16 %v7164
        %v7209 = vunpack.c.l.b16 %v7165
        %v7210 = vunpack.c.l.b16 %v7166
        %v7211 = vunpack.c.l.b16 %v7167
        %v7212 = vunpack.c.l.b16 %v7168
        %v7213 = vunpack.c.l.b16 %v7169
        %v7214 = vunpack.c.l.b16 %v7170
        %v7215 = vunpack.c.l.b16 %v7171
        %v7216 = vunpack.c.l.b16 %v7172
        %v7217 = vunpack.c.l.b16 %v7173
        %v7218 = vunpack.c.l.b16 %v7174
        %v7219 = vunpack.c.l.b16 %v7175
        %v7220 = vunpack.c.l.b16 %v7176
        %v7221 = vunpack.c.l.b16 %v7177
        %v7222 = vpack.c.b16 %v7207, %v7206
        %v7223 = vpack.c.b16 %v7209, %v7208
        %v7224 = vpack.c.b16 %v7211, %v7210
        %v7225 = vpack.c.b16 %v7213, %v7212
        %v7226 = vpack.c.b16 %v7215, %v7214
        %v7227 = vpack.c.b16 %v7217, %v7216
        %v7228 = vpack.c.b16 %v7219, %v7218
        %v7229 = vpack.c.b16 %v7221, %v7220
        %7238 = vmatpush.bf16.msra.mxu0 %v7229
        %7239 = vmatpush.bf16.msra.mxu0 %v7228
        %7240 = vmatpush.bf16.msra.mxu0 %v7227
        %7241 = vmatpush.bf16.msra.mxu0 %v7226
        %7242 = vmatpush.bf16.msra.mxu0 %v7225
        %7243 = vmatpush.bf16.msra.mxu0 %v7224
        %7244 = vmatpush.bf16.msra.mxu0 %v7223
        %7245 = vmatpush.bf16.msra.mxu0 %v7222
        %7246 = vmatmul.bf16.gmra.mxu0 %v6955
        %v7247 = vpop.f32.mrf.mxu0
        %v7248 = vadd.f32 0.0, %v7247
        %v7249 = vpop.f32.mrf.mxu0
        %v7250 = vadd.f32 0.0, %v7249
        %7251 = vmatmul.bf16.gmra.mxu0 %v6956
        %v7252 = vpop.f32.mrf.mxu0
        %v7253 = vpop.f32.mrf.mxu0
        %v7254 = vadd.f32 0.0, %v7253
        %7255 = vmatmul.bf16.gmra.mxu0 %v6957
        %v7256 = vpop.f32.mrf.mxu0
        %v7257 = vadd.f32 0.0, %v7256
        %v7258 = vpop.f32.mrf.mxu0
        %7259 = vmatmul.bf16.gmra.mxu0 %v6958
        %v7260 = vpop.f32.mrf.mxu0
        %v7261 = vadd.f32 0.0, %v7260
        %v7262 = vpop.f32.mrf.mxu0
        %v7263 = vadd.f32 0.0, %v7262
        %7264 = vmatmul.bf16.gmra.mxu0 %v6959
        %v7265 = vpop.f32.mrf.mxu0
        %v7266 = vpop.f32.mrf.mxu0
        %v7267 = vadd.f32 0.0, %v7266
        %7268 = vmatmul.bf16.gmra.mxu0 %v6960
        %v7269 = vpop.f32.mrf.mxu0
        %v7270 = vadd.f32 0.0, %v7269
        %v7271 = vpop.f32.mrf.mxu0
        %7272 = vmatmul.bf16.gmra.mxu0 %v6961
        %v7273 = vpop.f32.mrf.mxu0
        %v7274 = vadd.f32 0.0, %v7273
        %v7275 = vpop.f32.mrf.mxu0
        %v7276 = vadd.f32 0.0, %v7275
        %7277 = vmatmul.bf16.gmra.mxu0 %v6962
        %v7278 = vpop.f32.mrf.mxu0
        %v7279 = vpop.f32.mrf.mxu0
        %v7280 = vadd.f32 0.0, %v7279
        %7281 = vmatmul.bf16.gmra.mxu0 %v6963
        %v7282 = vpop.f32.mrf.mxu0
        %v7283 = vadd.f32 0.0, %v7282
        %v7284 = vpop.f32.mrf.mxu0
        %7285 = vmatmul.bf16.gmra.mxu0 %v6964
        %v7286 = vpop.f32.mrf.mxu0
        %v7287 = vadd.f32 0.0, %v7286
        %v7288 = vpop.f32.mrf.mxu0
        %v7289 = vadd.f32 0.0, %v7288
        %7290 = vmatmul.bf16.gmra.mxu0 %v6965
        %v7291 = vpop.f32.mrf.mxu0
        %v7292 = vpop.f32.mrf.mxu0
        %v7293 = vadd.f32 0.0, %v7292
        %7294 = vmatmul.bf16.gmra.mxu0 %v6966
        %v7295 = vpop.f32.mrf.mxu0
        %v7296 = vadd.f32 0.0, %v7295
        %v7297 = vpop.f32.mrf.mxu0
        %7298 = vmatmul.bf16.gmra.mxu0 %v6967
        %v7299 = vpop.f32.mrf.mxu0
        %v7300 = vadd.f32 0.0, %v7299
        %v7301 = vpop.f32.mrf.mxu0
        %v7302 = vadd.f32 0.0, %v7301
        %7303 = vmatmul.bf16.gmra.mxu0 %v6968
        %v7304 = vpop.f32.mrf.mxu0
        %v7305 = vpop.f32.mrf.mxu0
        %v7306 = vadd.f32 0.0, %v7305
        %7307 = vmatmul.bf16.gmra.mxu0 %v6969
        %v7308 = vpop.f32.mrf.mxu0
        %v7309 = vadd.f32 0.0, %v7308
        %v7310 = vpop.f32.mrf.mxu0
        %7311 = vmatmul.bf16.gmra.mxu0 %v6970
        %v7312 = vpop.f32.mrf.mxu0
        %v7313 = vadd.f32 0.0, %v7312
        %v7314 = vpop.f32.mrf.mxu0
        %v7315 = vadd.f32 0.0, %v7314
        %7316 = vmatmul.bf16.gmra.mxu0 %v6971
        %v7317 = vpop.f32.mrf.mxu0
        %v7318 = vpop.f32.mrf.mxu0
        %v7319 = vadd.f32 0.0, %v7318
        %7320 = vmatmul.bf16.gmra.mxu0 %v6972
        %v7321 = vpop.f32.mrf.mxu0
        %v7322 = vadd.f32 0.0, %v7321
        %v7323 = vpop.f32.mrf.mxu0
        %7324 = vmatmul.bf16.gmra.mxu0 %v6973
        %v7325 = vpop.f32.mrf.mxu0
        %v7326 = vadd.f32 0.0, %v7325
        %v7327 = vpop.f32.mrf.mxu0
        %v7328 = vadd.f32 0.0, %v7327
        %7329 = vmatmul.bf16.gmra.mxu0 %v6974
        %v7330 = vpop.f32.mrf.mxu0
        %v7331 = vpop.f32.mrf.mxu0
        %v7332 = vadd.f32 0.0, %v7331
        %7333 = vmatmul.bf16.gmra.mxu0 %v6975
        %v7334 = vpop.f32.mrf.mxu0
        %v7335 = vadd.f32 0.0, %v7334
        %v7336 = vpop.f32.mrf.mxu0
        %7337 = vmatmul.bf16.gmra.mxu0 %v7184
        %v7338 = vpop.f32.mrf.mxu0
        %v7339 = vadd.f32 0.0, %v7338
        %v7340 = vpop.f32.mrf.mxu0
        %v7341 = vadd.f32 0.0, %v7340
        %7342 = vmatmul.bf16.gmra.mxu0 %v7185
        %v7343 = vpop.f32.mrf.mxu0
        %v7344 = vpop.f32.mrf.mxu0
        %v7345 = vadd.f32 0.0, %v7344
        %7346 = vmatmul.bf16.gmra.mxu0 %v7186
        %v7347 = vpop.f32.mrf.mxu0
        %v7348 = vadd.f32 0.0, %v7347
        %v7349 = vpop.f32.mrf.mxu0
        %7350 = vdwg.mxu0
        %v7351 = vadd.f32 %v7058, %v7248
        %v7352 = vadd.f32 %v7060, %v7250
        %v7353 = vadd.f32 %v7064, %v7254
        %v7354 = vadd.f32 %v7067, %v7257
        %v7355 = vadd.f32 %v7071, %v7261
        %v7356 = vadd.f32 %v7073, %v7263
        %v7357 = vadd.f32 %v7077, %v7267
        %v7358 = vadd.f32 %v7080, %v7270
        %v7359 = vadd.f32 %v7084, %v7274
        %v7360 = vadd.f32 %v7086, %v7276
        %v7361 = vadd.f32 %v7090, %v7280
        %v7362 = vadd.f32 %v7093, %v7283
        %v7363 = vadd.f32 %v7097, %v7287
        %v7364 = vadd.f32 %v7099, %v7289
        %v7365 = vadd.f32 %v7103, %v7293
        %v7366 = vadd.f32 %v7106, %v7296
        %v7367 = vadd.f32 %v7110, %v7300
        %v7368 = vadd.f32 %v7112, %v7302
        %v7369 = vadd.f32 %v7116, %v7306
        %v7370 = vadd.f32 %v7119, %v7309
        %v7371 = vadd.f32 %v7123, %v7313
        %v7372 = vadd.f32 %v7125, %v7315
        %v7373 = vadd.f32 %v7129, %v7319
        %v7374 = vadd.f32 %v7132, %v7322
        %v7375 = vadd.f32 %v7136, %v7326
        %v7376 = vadd.f32 %v7138, %v7328
        %v7377 = vadd.f32 %v7142, %v7332
        %v7378 = vadd.f32 %v7145, %v7335
        %v7379 = vadd.f32 %v7149, %v7339
        %v7380 = vadd.f32 %v7151, %v7341
        %v7381 = vadd.f32 %v7155, %v7345
        %v7382 = vadd.f32 %v7158, %v7348
        %v7383 = vadd.f32 %v7351, 0.0
        %v7384 = vadd.f32 %v7352, 0.0
        %v7385 = vadd.f32 %v7353, 0.0
        %v7386 = vadd.f32 %v7354, 0.0
        %v7387 = vadd.f32 %v7355, 0.0
        %v7388 = vadd.f32 %v7356, 0.0
        %v7389 = vadd.f32 %v7357, 0.0
        %v7390 = vadd.f32 %v7358, 0.0
        %v7391 = vadd.f32 %v7359, 0.0
        %v7392 = vadd.f32 %v7360, 0.0
        %v7393 = vadd.f32 %v7361, 0.0
        %v7394 = vadd.f32 %v7362, 0.0
        %v7395 = vadd.f32 %v7363, 0.0
        %v7396 = vadd.f32 %v7364, 0.0
        %v7397 = vadd.f32 %v7365, 0.0
        %v7398 = vadd.f32 %v7366, 0.0
        %v7399 = vadd.f32 %v7367, 0.0
        %v7400 = vadd.f32 %v7368, 0.0
        %v7401 = vadd.f32 %v7369, 0.0
        %v7402 = vadd.f32 %v7370, 0.0
        %v7403 = vadd.f32 %v7371, 0.0
        %v7404 = vadd.f32 %v7372, 0.0
        %v7405 = vadd.f32 %v7373, 0.0
        %v7406 = vadd.f32 %v7374, 0.0
        %v7407 = vadd.f32 %v7375, 0.0
        %v7408 = vadd.f32 %v7376, 0.0
        %v7409 = vadd.f32 %v7377, 0.0
        %v7410 = vadd.f32 %v7378, 0.0
        %v7411 = vadd.f32 %v7379, 0.0
        %v7412 = vadd.f32 %v7380, 0.0
        %v7413 = vadd.f32 %v7381, 0.0
        %v7414 = vadd.f32 %v7382, 0.0
        %s7415 = scalar_lea.vmem [#allocation10], 64
        %v7416 = vld [vmem:[%s7415] sm:$0xf]
        %v7417 = vld [vmem:[%s7415 + $0x4] sm:$0xf]
        %v7418 = vld [vmem:[%s7415 + $0x8] sm:$0xf]
        %v7419 = vld [vmem:[%s7415 + $0xc] sm:$0xf]
        %v7420 = vld [vmem:[%s7415 + $0x10] sm:$0xf]
        %v7421 = vld [vmem:[%s7415 + $0x14] sm:$0xf]
        %v7422 = vld [vmem:[%s7415 + $0x18] sm:$0xf]
        %v7423 = vld [vmem:[%s7415 + $0x1c] sm:$0xf]
        %v7424 = vld [vmem:[%s7415 + $0x20] sm:$0xf]
        %v7425 = vld [vmem:[%s7415 + $0x24] sm:$0xf]
        %v7426 = vld [vmem:[%s7415 + $0x28] sm:$0xf]
        %v7427 = vld [vmem:[%s7415 + $0x2c] sm:$0xf]
        %v7428 = vld [vmem:[%s7415 + $0x30] sm:$0xf]
        %v7429 = vld [vmem:[%s7415 + $0x34] sm:$0xf]
        %v7430 = vld [vmem:[%s7415 + $0x38] sm:$0xf]
        %v7431 = vld [vmem:[%s7415 + $0x3c] sm:$0xf]
        %s7432 = scalar_lea.vmem [#allocation10], 256
        %v7433 = vld [vmem:[%s7432] sm:$0xf]
        %v7434 = vld [vmem:[%s7432 + $0x4] sm:$0xf]
        %v7435 = vld [vmem:[%s7432 + $0x8] sm:$0xf]
        %v7436 = vld [vmem:[%s7432 + $0xc] sm:$0xf]
        %v7437 = vld [vmem:[%s7432 + $0x10] sm:$0xf]
        %v7438 = vld [vmem:[%s7432 + $0x14] sm:$0xf]
        %v7439 = vld [vmem:[%s7432 + $0x18] sm:$0xf]
        %v7440 = vld [vmem:[%s7432 + $0x1c] sm:$0xf]
        %v7441 = vld [vmem:[%s7432 + $0x20] sm:$0xf]
        %v7442 = vld [vmem:[%s7432 + $0x24] sm:$0xf]
        %v7443 = vld [vmem:[%s7432 + $0x28] sm:$0xf]
        %v7444 = vld [vmem:[%s7432 + $0x2c] sm:$0xf]
        %v7445 = vld [vmem:[%s7432 + $0x30] sm:$0xf]
        %v7446 = vld [vmem:[%s7432 + $0x34] sm:$0xf]
        %v7447 = vld [vmem:[%s7432 + $0x38] sm:$0xf]
        %v7448 = vld [vmem:[%s7432 + $0x3c] sm:$0xf]
        %v7465 = vunpack.c.l.b16 %v7433
        %v7466 = vunpack.c.l.b16 %v7434
        %v7467 = vunpack.c.l.b16 %v7435
        %v7468 = vunpack.c.l.b16 %v7436
        %v7469 = vunpack.c.l.b16 %v7437
        %v7470 = vunpack.c.l.b16 %v7438
        %v7471 = vunpack.c.l.b16 %v7439
        %v7472 = vunpack.c.l.b16 %v7440
        %v7473 = vunpack.c.l.b16 %v7441
        %v7474 = vunpack.c.l.b16 %v7442
        %v7475 = vunpack.c.l.b16 %v7443
        %v7476 = vunpack.c.l.b16 %v7444
        %v7477 = vunpack.c.l.b16 %v7445
        %v7478 = vunpack.c.l.b16 %v7446
        %v7479 = vunpack.c.l.b16 %v7447
        %v7480 = vunpack.c.l.b16 %v7448
        %v7481 = vpack.c.b16 %v7466, %v7465
        %v7482 = vpack.c.b16 %v7468, %v7467
        %v7483 = vpack.c.b16 %v7470, %v7469
        %v7484 = vpack.c.b16 %v7472, %v7471
        %v7485 = vpack.c.b16 %v7474, %v7473
        %v7486 = vpack.c.b16 %v7476, %v7475
        %v7487 = vpack.c.b16 %v7478, %v7477
        %v7488 = vpack.c.b16 %v7480, %v7479
        %7497 = vmatpush.bf16.msra.mxu0 %v7488
        %7498 = vmatpush.bf16.msra.mxu0 %v7487
        %7499 = vmatpush.bf16.msra.mxu0 %v7486
        %7500 = vmatpush.bf16.msra.mxu0 %v7485
        %7501 = vmatpush.bf16.msra.mxu0 %v7484
        %7502 = vmatpush.bf16.msra.mxu0 %v7483
        %7503 = vmatpush.bf16.msra.mxu0 %v7482
        %7504 = vmatpush.bf16.msra.mxu0 %v7481
        %7505 = vmatmul.bf16.gmra.mxu0 %v6737
        %v7506 = vpop.f32.mrf.mxu0
        %v7507 = vadd.f32 0.0, %v7506
        %v7508 = vpop.f32.mrf.mxu0
        %v7509 = vadd.f32 0.0, %v7508
        %7510 = vmatmul.bf16.gmra.mxu0 %v6738
        %v7511 = vpop.f32.mrf.mxu0
        %v7512 = vadd.f32 0.0, %v7511
        %v7513 = vpop.f32.mrf.mxu0
        %v7514 = vadd.f32 0.0, %v7513
        %7515 = vmatmul.bf16.gmra.mxu0 %v6739
        %v7516 = vpop.f32.mrf.mxu0
        %v7517 = vadd.f32 0.0, %v7516
        %v7518 = vpop.f32.mrf.mxu0
        %v7519 = vadd.f32 0.0, %v7518
        %7520 = vmatmul.bf16.gmra.mxu0 %v6740
        %v7521 = vpop.f32.mrf.mxu0
        %v7522 = vadd.f32 0.0, %v7521
        %v7523 = vpop.f32.mrf.mxu0
        %v7524 = vadd.f32 0.0, %v7523
        %7525 = vmatmul.bf16.gmra.mxu0 %v6741
        %v7526 = vpop.f32.mrf.mxu0
        %v7527 = vadd.f32 0.0, %v7526
        %v7528 = vpop.f32.mrf.mxu0
        %v7529 = vadd.f32 0.0, %v7528
        %7530 = vmatmul.bf16.gmra.mxu0 %v6742
        %v7531 = vpop.f32.mrf.mxu0
        %v7532 = vadd.f32 0.0, %v7531
        %v7533 = vpop.f32.mrf.mxu0
        %v7534 = vadd.f32 0.0, %v7533
        %7535 = vmatmul.bf16.gmra.mxu0 %v6743
        %v7536 = vpop.f32.mrf.mxu0
        %v7537 = vadd.f32 0.0, %v7536
        %v7538 = vpop.f32.mrf.mxu0
        %v7539 = vadd.f32 0.0, %v7538
        %7540 = vmatmul.bf16.gmra.mxu0 %v6744
        %v7541 = vpop.f32.mrf.mxu0
        %v7542 = vadd.f32 0.0, %v7541
        %v7543 = vpop.f32.mrf.mxu0
        %v7544 = vadd.f32 0.0, %v7543
        %7545 = vmatmul.bf16.gmra.mxu0 %v6745
        %v7546 = vpop.f32.mrf.mxu0
        %v7547 = vadd.f32 0.0, %v7546
        %v7548 = vpop.f32.mrf.mxu0
        %v7549 = vadd.f32 0.0, %v7548
        %7550 = vmatmul.bf16.gmra.mxu0 %v6746
        %v7551 = vpop.f32.mrf.mxu0
        %v7552 = vadd.f32 0.0, %v7551
        %v7553 = vpop.f32.mrf.mxu0
        %v7554 = vadd.f32 0.0, %v7553
        %7555 = vmatmul.bf16.gmra.mxu0 %v6747
        %v7556 = vpop.f32.mrf.mxu0
        %v7557 = vadd.f32 0.0, %v7556
        %v7558 = vpop.f32.mrf.mxu0
        %v7559 = vadd.f32 0.0, %v7558
        %7560 = vmatmul.bf16.gmra.mxu0 %v6748
        %v7561 = vpop.f32.mrf.mxu0
        %v7562 = vadd.f32 0.0, %v7561
        %v7563 = vpop.f32.mrf.mxu0
        %v7564 = vadd.f32 0.0, %v7563
        %7565 = vmatmul.bf16.gmra.mxu0 %v6749
        %v7566 = vpop.f32.mrf.mxu0
        %v7567 = vadd.f32 0.0, %v7566
        %v7568 = vpop.f32.mrf.mxu0
        %v7569 = vadd.f32 0.0, %v7568
        %7570 = vmatmul.bf16.gmra.mxu0 %v6750
        %v7571 = vpop.f32.mrf.mxu0
        %v7572 = vadd.f32 0.0, %v7571
        %v7573 = vpop.f32.mrf.mxu0
        %v7574 = vadd.f32 0.0, %v7573
        %7575 = vmatmul.bf16.gmra.mxu0 %v6751
        %v7576 = vpop.f32.mrf.mxu0
        %v7577 = vadd.f32 0.0, %v7576
        %v7578 = vpop.f32.mrf.mxu0
        %v7579 = vadd.f32 0.0, %v7578
        %7580 = vmatmul.bf16.gmra.mxu0 %v6752
        %v7581 = vpop.f32.mrf.mxu0
        %v7582 = vadd.f32 0.0, %v7581
        %v7583 = vpop.f32.mrf.mxu0
        %v7584 = vadd.f32 0.0, %v7583
        %7585 = vmatmul.bf16.gmra.mxu0 %v6753
        %v7586 = vpop.f32.mrf.mxu0
        %v7587 = vadd.f32 0.0, %v7586
        %v7588 = vpop.f32.mrf.mxu0
        %v7589 = vadd.f32 0.0, %v7588
        %7590 = vmatmul.bf16.gmra.mxu0 %v6754
        %v7591 = vpop.f32.mrf.mxu0
        %v7592 = vadd.f32 0.0, %v7591
        %v7593 = vpop.f32.mrf.mxu0
        %v7594 = vadd.f32 0.0, %v7593
        %7595 = vmatmul.bf16.gmra.mxu0 %v6755
        %v7596 = vpop.f32.mrf.mxu0
        %v7597 = vadd.f32 0.0, %v7596
        %v7598 = vpop.f32.mrf.mxu0
        %v7599 = vadd.f32 0.0, %v7598
        %7600 = vmatmul.bf16.gmra.mxu0 %v6756
        %v7601 = vpop.f32.mrf.mxu0
        %v7602 = vadd.f32 0.0, %v7601
        %v7603 = vpop.f32.mrf.mxu0
        %v7604 = vadd.f32 0.0, %v7603
        %7605 = vmatmul.bf16.gmra.mxu0 %v6757
        %v7606 = vpop.f32.mrf.mxu0
        %v7607 = vadd.f32 0.0, %v7606
        %v7608 = vpop.f32.mrf.mxu0
        %v7609 = vadd.f32 0.0, %v7608
        %7610 = vmatmul.bf16.gmra.mxu0 %v6758
        %v7611 = vpop.f32.mrf.mxu0
        %v7612 = vadd.f32 0.0, %v7611
        %v7613 = vpop.f32.mrf.mxu0
        %v7614 = vadd.f32 0.0, %v7613
        %7615 = vmatmul.bf16.gmra.mxu0 %v6759
        %v7616 = vpop.f32.mrf.mxu0
        %v7617 = vadd.f32 0.0, %v7616
        %v7618 = vpop.f32.mrf.mxu0
        %v7619 = vadd.f32 0.0, %v7618
        %7620 = vmatmul.bf16.gmra.mxu0 %v6760
        %v7621 = vpop.f32.mrf.mxu0
        %v7622 = vadd.f32 0.0, %v7621
        %v7623 = vpop.f32.mrf.mxu0
        %v7624 = vadd.f32 0.0, %v7623
        %7625 = vdwg.mxu0
        %v7642 = vunpack.c.l.b16 %v7416
        %v7643 = vunpack.c.l.b16 %v7417
        %v7644 = vunpack.c.l.b16 %v7418
        %v7645 = vunpack.c.l.b16 %v7419
        %v7646 = vunpack.c.l.b16 %v7420
        %v7647 = vunpack.c.l.b16 %v7421
        %v7648 = vunpack.c.l.b16 %v7422
        %v7649 = vunpack.c.l.b16 %v7423
        %v7650 = vunpack.c.l.b16 %v7424
        %v7651 = vunpack.c.l.b16 %v7425
        %v7652 = vunpack.c.l.b16 %v7426
        %v7653 = vunpack.c.l.b16 %v7427
        %v7654 = vunpack.c.l.b16 %v7428
        %v7655 = vunpack.c.l.b16 %v7429
        %v7656 = vunpack.c.l.b16 %v7430
        %v7657 = vunpack.c.l.b16 %v7431
        %v7658 = vpack.c.b16 %v7643, %v7642
        %v7659 = vpack.c.b16 %v7645, %v7644
        %v7660 = vpack.c.b16 %v7647, %v7646
        %v7661 = vpack.c.b16 %v7649, %v7648
        %v7662 = vpack.c.b16 %v7651, %v7650
        %v7663 = vpack.c.b16 %v7653, %v7652
        %v7664 = vpack.c.b16 %v7655, %v7654
        %v7665 = vpack.c.b16 %v7657, %v7656
        %7674 = vmatpush.bf16.msra.mxu0 %v7665
        %7675 = vmatpush.bf16.msra.mxu0 %v7664
        %7676 = vmatpush.bf16.msra.mxu0 %v7663
        %7677 = vmatpush.bf16.msra.mxu0 %v7662
        %7678 = vmatpush.bf16.msra.mxu0 %v7661
        %7679 = vmatpush.bf16.msra.mxu0 %v7660
        %7680 = vmatpush.bf16.msra.mxu0 %v7659
        %7681 = vmatpush.bf16.msra.mxu0 %v7658
        %7682 = vmatmul.bf16.gmra.mxu0 %v6952
        %v7683 = vpop.f32.mrf.mxu0
        %v7684 = vadd.f32 %v7507, %v7683
        %v7685 = vpop.f32.mrf.mxu0
        %v7686 = vadd.f32 %v7509, %v7685
        %7687 = vmatmul.bf16.gmra.mxu0 %v6953
        %v7688 = vpop.f32.mrf.mxu0
        %v7689 = vadd.f32 %v7512, %v7688
        %v7690 = vpop.f32.mrf.mxu0
        %v7691 = vadd.f32 %v7514, %v7690
        %7692 = vmatmul.bf16.gmra.mxu0 %v6954
        %v7693 = vpop.f32.mrf.mxu0
        %v7694 = vadd.f32 %v7517, %v7693
        %v7695 = vpop.f32.mrf.mxu0
        %v7696 = vadd.f32 %v7519, %v7695
        %7697 = vmatmul.bf16.gmra.mxu0 %v6955
        %v7698 = vpop.f32.mrf.mxu0
        %v7699 = vadd.f32 %v7522, %v7698
        %v7700 = vpop.f32.mrf.mxu0
        %v7701 = vadd.f32 %v7524, %v7700
        %7702 = vmatmul.bf16.gmra.mxu0 %v6956
        %v7703 = vpop.f32.mrf.mxu0
        %v7704 = vadd.f32 %v7527, %v7703
        %v7705 = vpop.f32.mrf.mxu0
        %v7706 = vadd.f32 %v7529, %v7705
        %7707 = vmatmul.bf16.gmra.mxu0 %v6957
        %v7708 = vpop.f32.mrf.mxu0
        %v7709 = vadd.f32 %v7532, %v7708
        %v7710 = vpop.f32.mrf.mxu0
        %v7711 = vadd.f32 %v7534, %v7710
        %7712 = vmatmul.bf16.gmra.mxu0 %v6958
        %v7713 = vpop.f32.mrf.mxu0
        %v7714 = vadd.f32 %v7537, %v7713
        %v7715 = vpop.f32.mrf.mxu0
        %v7716 = vadd.f32 %v7539, %v7715
        %7717 = vmatmul.bf16.gmra.mxu0 %v6959
        %v7718 = vpop.f32.mrf.mxu0
        %v7719 = vadd.f32 %v7542, %v7718
        %v7720 = vpop.f32.mrf.mxu0
        %v7721 = vadd.f32 %v7544, %v7720
        %7722 = vmatmul.bf16.gmra.mxu0 %v6960
        %v7723 = vpop.f32.mrf.mxu0
        %v7724 = vadd.f32 %v7547, %v7723
        %v7725 = vpop.f32.mrf.mxu0
        %v7726 = vadd.f32 %v7549, %v7725
        %7727 = vmatmul.bf16.gmra.mxu0 %v6961
        %v7728 = vpop.f32.mrf.mxu0
        %v7729 = vadd.f32 %v7552, %v7728
        %v7730 = vpop.f32.mrf.mxu0
        %v7731 = vadd.f32 %v7554, %v7730
        %7732 = vmatmul.bf16.gmra.mxu0 %v6962
        %v7733 = vpop.f32.mrf.mxu0
        %v7734 = vadd.f32 %v7557, %v7733
        %v7735 = vpop.f32.mrf.mxu0
        %v7736 = vadd.f32 %v7559, %v7735
        %7737 = vmatmul.bf16.gmra.mxu0 %v6963
        %v7738 = vpop.f32.mrf.mxu0
        %v7739 = vadd.f32 %v7562, %v7738
        %v7740 = vpop.f32.mrf.mxu0
        %v7741 = vadd.f32 %v7564, %v7740
        %7742 = vmatmul.bf16.gmra.mxu0 %v6964
        %v7743 = vpop.f32.mrf.mxu0
        %v7744 = vadd.f32 %v7567, %v7743
        %v7745 = vpop.f32.mrf.mxu0
        %v7746 = vadd.f32 %v7569, %v7745
        %7747 = vmatmul.bf16.gmra.mxu0 %v6965
        %v7748 = vpop.f32.mrf.mxu0
        %v7749 = vadd.f32 %v7572, %v7748
        %v7750 = vpop.f32.mrf.mxu0
        %v7751 = vadd.f32 %v7574, %v7750
        %7752 = vmatmul.bf16.gmra.mxu0 %v6966
        %v7753 = vpop.f32.mrf.mxu0
        %v7754 = vadd.f32 %v7577, %v7753
        %v7755 = vpop.f32.mrf.mxu0
        %v7756 = vadd.f32 %v7579, %v7755
        %7757 = vmatmul.bf16.gmra.mxu0 %v6967
        %v7758 = vpop.f32.mrf.mxu0
        %v7759 = vadd.f32 %v7582, %v7758
        %v7760 = vpop.f32.mrf.mxu0
        %v7761 = vadd.f32 %v7584, %v7760
        %7762 = vmatmul.bf16.gmra.mxu0 %v6968
        %v7763 = vpop.f32.mrf.mxu0
        %v7764 = vadd.f32 %v7587, %v7763
        %v7765 = vpop.f32.mrf.mxu0
        %v7766 = vadd.f32 %v7589, %v7765
        %7767 = vmatmul.bf16.gmra.mxu0 %v6969
        %v7768 = vpop.f32.mrf.mxu0
        %v7769 = vadd.f32 %v7592, %v7768
        %v7770 = vpop.f32.mrf.mxu0
        %v7771 = vadd.f32 %v7594, %v7770
        %7772 = vmatmul.bf16.gmra.mxu0 %v6970
        %v7773 = vpop.f32.mrf.mxu0
        %v7774 = vadd.f32 %v7597, %v7773
        %v7775 = vpop.f32.mrf.mxu0
        %v7776 = vadd.f32 %v7599, %v7775
        %7777 = vmatmul.bf16.gmra.mxu0 %v6971
        %v7778 = vpop.f32.mrf.mxu0
        %v7779 = vadd.f32 %v7602, %v7778
        %v7780 = vpop.f32.mrf.mxu0
        %v7781 = vadd.f32 %v7604, %v7780
        %7782 = vmatmul.bf16.gmra.mxu0 %v6972
        %v7783 = vpop.f32.mrf.mxu0
        %v7784 = vadd.f32 %v7607, %v7783
        %v7785 = vpop.f32.mrf.mxu0
        %v7786 = vadd.f32 %v7609, %v7785
        %7787 = vmatmul.bf16.gmra.mxu0 %v6973
        %v7788 = vpop.f32.mrf.mxu0
        %v7789 = vadd.f32 %v7612, %v7788
        %v7790 = vpop.f32.mrf.mxu0
        %v7791 = vadd.f32 %v7614, %v7790
        %7792 = vmatmul.bf16.gmra.mxu0 %v6974
        %v7793 = vpop.f32.mrf.mxu0
        %v7794 = vadd.f32 %v7617, %v7793
        %v7795 = vpop.f32.mrf.mxu0
        %v7796 = vadd.f32 %v7619, %v7795
        %7797 = vmatmul.bf16.gmra.mxu0 %v6975
        %v7798 = vpop.f32.mrf.mxu0
        %v7799 = vadd.f32 %v7622, %v7798
        %v7800 = vpop.f32.mrf.mxu0
        %v7801 = vadd.f32 %v7624, %v7800
        %7802 = vdwg.mxu0
        %s7803 = scalar_lea.vmem [#allocation10], 448
        %v7804 = vld [vmem:[%s7803] sm:$0xf]
        %v7805 = vld [vmem:[%s7803 + $0x4] sm:$0xf]
        %v7806 = vld [vmem:[%s7803 + $0x8] sm:$0xf]
        %v7807 = vld [vmem:[%s7803 + $0xc] sm:$0xf]
        %v7808 = vld [vmem:[%s7803 + $0x10] sm:$0xf]
        %v7809 = vld [vmem:[%s7803 + $0x14] sm:$0xf]
        %v7810 = vld [vmem:[%s7803 + $0x18] sm:$0xf]
        %v7811 = vld [vmem:[%s7803 + $0x1c] sm:$0xf]
        %v7812 = vld [vmem:[%s7803 + $0x20] sm:$0xf]
        %v7813 = vld [vmem:[%s7803 + $0x24] sm:$0xf]
        %v7814 = vld [vmem:[%s7803 + $0x28] sm:$0xf]
        %v7815 = vld [vmem:[%s7803 + $0x2c] sm:$0xf]
        %v7816 = vld [vmem:[%s7803 + $0x30] sm:$0xf]
        %v7817 = vld [vmem:[%s7803 + $0x34] sm:$0xf]
        %v7818 = vld [vmem:[%s7803 + $0x38] sm:$0xf]
        %v7819 = vld [vmem:[%s7803 + $0x3c] sm:$0xf]
        %v7836 = vunpack.c.l.b16 %v7804
        %v7837 = vunpack.c.l.b16 %v7805
        %v7838 = vunpack.c.l.b16 %v7806
        %v7839 = vunpack.c.l.b16 %v7807
        %v7840 = vunpack.c.l.b16 %v7808
        %v7841 = vunpack.c.l.b16 %v7809
        %v7842 = vunpack.c.l.b16 %v7810
        %v7843 = vunpack.c.l.b16 %v7811
        %v7844 = vunpack.c.l.b16 %v7812
        %v7845 = vunpack.c.l.b16 %v7813
        %v7846 = vunpack.c.l.b16 %v7814
        %v7847 = vunpack.c.l.b16 %v7815
        %v7848 = vunpack.c.l.b16 %v7816
        %v7849 = vunpack.c.l.b16 %v7817
        %v7850 = vunpack.c.l.b16 %v7818
        %v7851 = vunpack.c.l.b16 %v7819
        %v7852 = vpack.c.b16 %v7837, %v7836
        %v7853 = vpack.c.b16 %v7839, %v7838
        %v7854 = vpack.c.b16 %v7841, %v7840
        %v7855 = vpack.c.b16 %v7843, %v7842
        %v7856 = vpack.c.b16 %v7845, %v7844
        %v7857 = vpack.c.b16 %v7847, %v7846
        %v7858 = vpack.c.b16 %v7849, %v7848
        %v7859 = vpack.c.b16 %v7851, %v7850
        %7868 = vmatpush.bf16.msra.mxu0 %v7859
        %7869 = vmatpush.bf16.msra.mxu0 %v7858
        %7870 = vmatpush.bf16.msra.mxu0 %v7857
        %7871 = vmatpush.bf16.msra.mxu0 %v7856
        %7872 = vmatpush.bf16.msra.mxu0 %v7855
        %7873 = vmatpush.bf16.msra.mxu0 %v7854
        %7874 = vmatpush.bf16.msra.mxu0 %v7853
        %7875 = vmatpush.bf16.msra.mxu0 %v7852
        %7876 = vmatmul.bf16.gmra.mxu0 %v6955
        %v7877 = vpop.f32.mrf.mxu0
        %v7878 = vadd.f32 0.0, %v7877
        %v7879 = vpop.f32.mrf.mxu0
        %v7880 = vadd.f32 0.0, %v7879
        %7881 = vmatmul.bf16.gmra.mxu0 %v6956
        %v7882 = vpop.f32.mrf.mxu0
        %v7883 = vadd.f32 0.0, %v7882
        %v7884 = vpop.f32.mrf.mxu0
        %v7885 = vadd.f32 0.0, %v7884
        %7886 = vmatmul.bf16.gmra.mxu0 %v6957
        %v7887 = vpop.f32.mrf.mxu0
        %v7888 = vadd.f32 0.0, %v7887
        %v7889 = vpop.f32.mrf.mxu0
        %v7890 = vadd.f32 0.0, %v7889
        %7891 = vmatmul.bf16.gmra.mxu0 %v6958
        %v7892 = vpop.f32.mrf.mxu0
        %v7893 = vadd.f32 0.0, %v7892
        %v7894 = vpop.f32.mrf.mxu0
        %v7895 = vadd.f32 0.0, %v7894
        %7896 = vmatmul.bf16.gmra.mxu0 %v6959
        %v7897 = vpop.f32.mrf.mxu0
        %v7898 = vadd.f32 0.0, %v7897
        %v7899 = vpop.f32.mrf.mxu0
        %v7900 = vadd.f32 0.0, %v7899
        %7901 = vmatmul.bf16.gmra.mxu0 %v6960
        %v7902 = vpop.f32.mrf.mxu0
        %v7903 = vadd.f32 0.0, %v7902
        %v7904 = vpop.f32.mrf.mxu0
        %v7905 = vadd.f32 0.0, %v7904
        %7906 = vmatmul.bf16.gmra.mxu0 %v6961
        %v7907 = vpop.f32.mrf.mxu0
        %v7908 = vadd.f32 0.0, %v7907
        %v7909 = vpop.f32.mrf.mxu0
        %v7910 = vadd.f32 0.0, %v7909
        %7911 = vmatmul.bf16.gmra.mxu0 %v6962
        %v7912 = vpop.f32.mrf.mxu0
        %v7913 = vadd.f32 0.0, %v7912
        %v7914 = vpop.f32.mrf.mxu0
        %v7915 = vadd.f32 0.0, %v7914
        %7916 = vmatmul.bf16.gmra.mxu0 %v6963
        %v7917 = vpop.f32.mrf.mxu0
        %v7918 = vadd.f32 0.0, %v7917
        %v7919 = vpop.f32.mrf.mxu0
        %v7920 = vadd.f32 0.0, %v7919
        %7921 = vmatmul.bf16.gmra.mxu0 %v6964
        %v7922 = vpop.f32.mrf.mxu0
        %v7923 = vadd.f32 0.0, %v7922
        %v7924 = vpop.f32.mrf.mxu0
        %v7925 = vadd.f32 0.0, %v7924
        %7926 = vmatmul.bf16.gmra.mxu0 %v6965
        %v7927 = vpop.f32.mrf.mxu0
        %v7928 = vadd.f32 0.0, %v7927
        %v7929 = vpop.f32.mrf.mxu0
        %v7930 = vadd.f32 0.0, %v7929
        %7931 = vmatmul.bf16.gmra.mxu0 %v6966
        %v7932 = vpop.f32.mrf.mxu0
        %v7933 = vadd.f32 0.0, %v7932
        %v7934 = vpop.f32.mrf.mxu0
        %v7935 = vadd.f32 0.0, %v7934
        %7936 = vmatmul.bf16.gmra.mxu0 %v6967
        %v7937 = vpop.f32.mrf.mxu0
        %v7938 = vadd.f32 0.0, %v7937
        %v7939 = vpop.f32.mrf.mxu0
        %v7940 = vadd.f32 0.0, %v7939
        %7941 = vmatmul.bf16.gmra.mxu0 %v6968
        %v7942 = vpop.f32.mrf.mxu0
        %v7943 = vadd.f32 0.0, %v7942
        %v7944 = vpop.f32.mrf.mxu0
        %v7945 = vadd.f32 0.0, %v7944
        %7946 = vmatmul.bf16.gmra.mxu0 %v6969
        %v7947 = vpop.f32.mrf.mxu0
        %v7948 = vadd.f32 0.0, %v7947
        %v7949 = vpop.f32.mrf.mxu0
        %v7950 = vadd.f32 0.0, %v7949
        %7951 = vmatmul.bf16.gmra.mxu0 %v6970
        %v7952 = vpop.f32.mrf.mxu0
        %v7953 = vadd.f32 0.0, %v7952
        %v7954 = vpop.f32.mrf.mxu0
        %v7955 = vadd.f32 0.0, %v7954
        %7956 = vmatmul.bf16.gmra.mxu0 %v6971
        %v7957 = vpop.f32.mrf.mxu0
        %v7958 = vadd.f32 0.0, %v7957
        %v7959 = vpop.f32.mrf.mxu0
        %v7960 = vadd.f32 0.0, %v7959
        %7961 = vmatmul.bf16.gmra.mxu0 %v6972
        %v7962 = vpop.f32.mrf.mxu0
        %v7963 = vadd.f32 0.0, %v7962
        %v7964 = vpop.f32.mrf.mxu0
        %v7965 = vadd.f32 0.0, %v7964
        %7966 = vmatmul.bf16.gmra.mxu0 %v6973
        %v7967 = vpop.f32.mrf.mxu0
        %v7968 = vadd.f32 0.0, %v7967
        %v7969 = vpop.f32.mrf.mxu0
        %v7970 = vadd.f32 0.0, %v7969
        %7971 = vmatmul.bf16.gmra.mxu0 %v6974
        %v7972 = vpop.f32.mrf.mxu0
        %v7973 = vadd.f32 0.0, %v7972
        %v7974 = vpop.f32.mrf.mxu0
        %v7975 = vadd.f32 0.0, %v7974
        %7976 = vmatmul.bf16.gmra.mxu0 %v6975
        %v7977 = vpop.f32.mrf.mxu0
        %v7978 = vadd.f32 0.0, %v7977
        %v7979 = vpop.f32.mrf.mxu0
        %v7980 = vadd.f32 0.0, %v7979
        %7981 = vmatmul.bf16.gmra.mxu0 %v7184
        %v7982 = vpop.f32.mrf.mxu0
        %v7983 = vadd.f32 0.0, %v7982
        %v7984 = vpop.f32.mrf.mxu0
        %v7985 = vadd.f32 0.0, %v7984
        %7986 = vmatmul.bf16.gmra.mxu0 %v7185
        %v7987 = vpop.f32.mrf.mxu0
        %v7988 = vadd.f32 0.0, %v7987
        %v7989 = vpop.f32.mrf.mxu0
        %v7990 = vadd.f32 0.0, %v7989
        %7991 = vmatmul.bf16.gmra.mxu0 %v7186
        %v7992 = vpop.f32.mrf.mxu0
        %v7993 = vadd.f32 0.0, %v7992
        %v7994 = vpop.f32.mrf.mxu0
        %v7995 = vadd.f32 0.0, %v7994
        %7996 = vdwg.mxu0
        %v7997 = vadd.f32 %v7684, %v7878
        %v7998 = vadd.f32 %v7686, %v7880
        %v7999 = vadd.f32 %v7689, %v7883
        %v8000 = vadd.f32 %v7691, %v7885
        %v8001 = vadd.f32 %v7694, %v7888
        %v8002 = vadd.f32 %v7696, %v7890
        %v8003 = vadd.f32 %v7699, %v7893
        %v8004 = vadd.f32 %v7701, %v7895
        %v8005 = vadd.f32 %v7704, %v7898
        %v8006 = vadd.f32 %v7706, %v7900
        %v8007 = vadd.f32 %v7709, %v7903
        %v8008 = vadd.f32 %v7711, %v7905
        %v8009 = vadd.f32 %v7714, %v7908
        %v8010 = vadd.f32 %v7716, %v7910
        %v8011 = vadd.f32 %v7719, %v7913
        %v8012 = vadd.f32 %v7721, %v7915
        %v8013 = vadd.f32 %v7724, %v7918
        %v8014 = vadd.f32 %v7726, %v7920
        %v8015 = vadd.f32 %v7729, %v7923
        %v8016 = vadd.f32 %v7731, %v7925
        %v8017 = vadd.f32 %v7734, %v7928
        %v8018 = vadd.f32 %v7736, %v7930
        %v8019 = vadd.f32 %v7739, %v7933
        %v8020 = vadd.f32 %v7741, %v7935
        %v8021 = vadd.f32 %v7744, %v7938
        %v8022 = vadd.f32 %v7746, %v7940
        %v8023 = vadd.f32 %v7749, %v7943
        %v8024 = vadd.f32 %v7751, %v7945
        %v8025 = vadd.f32 %v7754, %v7948
        %v8026 = vadd.f32 %v7756, %v7950
        %v8027 = vadd.f32 %v7759, %v7953
        %v8028 = vadd.f32 %v7761, %v7955
        %v8029 = vadd.f32 %v7764, %v7958
        %v8030 = vadd.f32 %v7766, %v7960
        %v8031 = vadd.f32 %v7769, %v7963
        %v8032 = vadd.f32 %v7771, %v7965
        %v8033 = vadd.f32 %v7774, %v7968
        %v8034 = vadd.f32 %v7776, %v7970
        %v8035 = vadd.f32 %v7779, %v7973
        %v8036 = vadd.f32 %v7781, %v7975
        %v8037 = vadd.f32 %v7784, %v7978
        %v8038 = vadd.f32 %v7786, %v7980
        %v8039 = vadd.f32 %v7789, %v7983
        %v8040 = vadd.f32 %v7791, %v7985
        %v8041 = vadd.f32 %v7794, %v7988
        %v8042 = vadd.f32 %v7796, %v7990
        %v8043 = vadd.f32 %v7799, %v7993
        %v8044 = vadd.f32 %v7801, %v7995
        %v8093 = vrot.slane %v7997, 1
        %v8094 = vrot.slane %v7998, 1
        %v8095 = vsel %vm2100, %v8093, %v8094
        %v8096 = vrot.slane %v7999, 1
        %v8097 = vsel %vm2100, %v8094, %v8096
        %v8098 = vrot.slane %v8000, 1
        %v8099 = vrot.slane %v8001, 1
        %v8100 = vsel %vm2100, %v8098, %v8099
        %v8101 = vrot.slane %v8002, 1
        %v8102 = vsel %vm2100, %v8099, %v8101
        %v8103 = vrot.slane %v8003, 1
        %v8104 = vrot.slane %v8004, 1
        %v8105 = vsel %vm2100, %v8103, %v8104
        %v8106 = vrot.slane %v8005, 1
        %v8107 = vsel %vm2100, %v8104, %v8106
        %v8108 = vrot.slane %v8006, 1
        %v8109 = vrot.slane %v8007, 1
        %v8110 = vsel %vm2100, %v8108, %v8109
        %v8111 = vrot.slane %v8008, 1
        %v8112 = vsel %vm2100, %v8109, %v8111
        %v8113 = vrot.slane %v8009, 1
        %v8114 = vrot.slane %v8010, 1
        %v8115 = vsel %vm2100, %v8113, %v8114
        %v8116 = vrot.slane %v8011, 1
        %v8117 = vsel %vm2100, %v8114, %v8116
        %v8118 = vrot.slane %v8012, 1
        %v8119 = vrot.slane %v8013, 1
        %v8120 = vsel %vm2100, %v8118, %v8119
        %v8121 = vrot.slane %v8014, 1
        %v8122 = vsel %vm2100, %v8119, %v8121
        %v8123 = vrot.slane %v8015, 1
        %v8124 = vrot.slane %v8016, 1
        %v8125 = vsel %vm2100, %v8123, %v8124
        %v8126 = vrot.slane %v8017, 1
        %v8127 = vsel %vm2100, %v8124, %v8126
        %v8128 = vrot.slane %v8018, 1
        %v8129 = vrot.slane %v8019, 1
        %v8130 = vsel %vm2100, %v8128, %v8129
        %v8131 = vrot.slane %v8020, 1
        %v8132 = vsel %vm2100, %v8129, %v8131
        %v8133 = vrot.slane %v8021, 1
        %v8134 = vrot.slane %v8022, 1
        %v8135 = vsel %vm2100, %v8133, %v8134
        %v8136 = vrot.slane %v8023, 1
        %v8137 = vsel %vm2100, %v8134, %v8136
        %v8138 = vrot.slane %v8024, 1
        %v8139 = vrot.slane %v8025, 1
        %v8140 = vsel %vm2100, %v8138, %v8139
        %v8141 = vrot.slane %v8026, 1
        %v8142 = vsel %vm2100, %v8139, %v8141
        %v8143 = vrot.slane %v8027, 1
        %v8144 = vrot.slane %v8028, 1
        %v8145 = vsel %vm2100, %v8143, %v8144
        %v8146 = vrot.slane %v8029, 1
        %v8147 = vsel %vm2100, %v8144, %v8146
        %v8148 = vrot.slane %v8030, 1
        %v8149 = vrot.slane %v8031, 1
        %v8150 = vsel %vm2100, %v8148, %v8149
        %v8151 = vrot.slane %v8032, 1
        %v8152 = vsel %vm2100, %v8149, %v8151
        %v8153 = vrot.slane %v8033, 1
        %v8154 = vrot.slane %v8034, 1
        %v8155 = vsel %vm2100, %v8153, %v8154
        %v8156 = vrot.slane %v8035, 1
        %v8157 = vsel %vm2100, %v8154, %v8156
        %v8158 = vrot.slane %v8036, 1
        %v8159 = vrot.slane %v8037, 1
        %v8160 = vsel %vm2100, %v8158, %v8159
        %v8161 = vrot.slane %v8038, 1
        %v8162 = vsel %vm2100, %v8159, %v8161
        %v8163 = vrot.slane %v8039, 1
        %v8164 = vrot.slane %v8040, 1
        %v8165 = vsel %vm2100, %v8163, %v8164
        %v8166 = vrot.slane %v8041, 1
        %v8167 = vsel %vm2100, %v8164, %v8166
        %v8168 = vrot.slane %v8042, 1
        %v8169 = vrot.slane %v8043, 1
        %v8170 = vsel %vm2100, %v8168, %v8169
        %v8171 = vrot.slane %v8044, 1
        %v8172 = vsel %vm2100, %v8169, %v8171
        %v8205 = vadd.f32 %v7383, %v8095
        %v8206 = vadd.f32 %v7384, %v8097
        %v8207 = vadd.f32 %v7385, %v8100
        %v8208 = vadd.f32 %v7386, %v8102
        %v8209 = vadd.f32 %v7387, %v8105
        %v8210 = vadd.f32 %v7388, %v8107
        %v8211 = vadd.f32 %v7389, %v8110
        %v8212 = vadd.f32 %v7390, %v8112
        %v8213 = vadd.f32 %v7391, %v8115
        %v8214 = vadd.f32 %v7392, %v8117
        %v8215 = vadd.f32 %v7393, %v8120
        %v8216 = vadd.f32 %v7394, %v8122
        %v8217 = vadd.f32 %v7395, %v8125
        %v8218 = vadd.f32 %v7396, %v8127
        %v8219 = vadd.f32 %v7397, %v8130
        %v8220 = vadd.f32 %v7398, %v8132
        %v8221 = vadd.f32 %v7399, %v8135
        %v8222 = vadd.f32 %v7400, %v8137
        %v8223 = vadd.f32 %v7401, %v8140
        %v8224 = vadd.f32 %v7402, %v8142
        %v8225 = vadd.f32 %v7403, %v8145
        %v8226 = vadd.f32 %v7404, %v8147
        %v8227 = vadd.f32 %v7405, %v8150
        %v8228 = vadd.f32 %v7406, %v8152
        %v8229 = vadd.f32 %v7407, %v8155
        %v8230 = vadd.f32 %v7408, %v8157
        %v8231 = vadd.f32 %v7409, %v8160
        %v8232 = vadd.f32 %v7410, %v8162
        %v8233 = vadd.f32 %v7411, %v8165
        %v8234 = vadd.f32 %v7412, %v8167
        %v8235 = vadd.f32 %v7413, %v8170
        %v8236 = vadd.f32 %v7414, %v8172
        %s8237 = scalar_lea.vmem [#allocation10], 128
        %v8238 = vld [vmem:[%s8237] sm:$0xf]
        %v8239 = vld [vmem:[%s8237 + $0x4] sm:$0xf]
        %v8240 = vld [vmem:[%s8237 + $0x8] sm:$0xf]
        %v8241 = vld [vmem:[%s8237 + $0xc] sm:$0xf]
        %v8242 = vld [vmem:[%s8237 + $0x10] sm:$0xf]
        %v8243 = vld [vmem:[%s8237 + $0x14] sm:$0xf]
        %v8244 = vld [vmem:[%s8237 + $0x18] sm:$0xf]
        %v8245 = vld [vmem:[%s8237 + $0x1c] sm:$0xf]
        %v8246 = vld [vmem:[%s8237 + $0x20] sm:$0xf]
        %v8247 = vld [vmem:[%s8237 + $0x24] sm:$0xf]
        %v8248 = vld [vmem:[%s8237 + $0x28] sm:$0xf]
        %v8249 = vld [vmem:[%s8237 + $0x2c] sm:$0xf]
        %v8250 = vld [vmem:[%s8237 + $0x30] sm:$0xf]
        %v8251 = vld [vmem:[%s8237 + $0x34] sm:$0xf]
        %v8252 = vld [vmem:[%s8237 + $0x38] sm:$0xf]
        %v8253 = vld [vmem:[%s8237 + $0x3c] sm:$0xf]
        %s8254 = scalar_lea.vmem [#allocation10], 320
        %v8255 = vld [vmem:[%s8254] sm:$0xf]
        %v8256 = vld [vmem:[%s8254 + $0x4] sm:$0xf]
        %v8257 = vld [vmem:[%s8254 + $0x8] sm:$0xf]
        %v8258 = vld [vmem:[%s8254 + $0xc] sm:$0xf]
        %v8259 = vld [vmem:[%s8254 + $0x10] sm:$0xf]
        %v8260 = vld [vmem:[%s8254 + $0x14] sm:$0xf]
        %v8261 = vld [vmem:[%s8254 + $0x18] sm:$0xf]
        %v8262 = vld [vmem:[%s8254 + $0x1c] sm:$0xf]
        %v8263 = vld [vmem:[%s8254 + $0x20] sm:$0xf]
        %v8264 = vld [vmem:[%s8254 + $0x24] sm:$0xf]
        %v8265 = vld [vmem:[%s8254 + $0x28] sm:$0xf]
        %v8266 = vld [vmem:[%s8254 + $0x2c] sm:$0xf]
        %v8267 = vld [vmem:[%s8254 + $0x30] sm:$0xf]
        %v8268 = vld [vmem:[%s8254 + $0x34] sm:$0xf]
        %v8269 = vld [vmem:[%s8254 + $0x38] sm:$0xf]
        %v8270 = vld [vmem:[%s8254 + $0x3c] sm:$0xf]
        %v8287 = vunpack.c.l.b16 %v8255
        %v8288 = vunpack.c.l.b16 %v8256
        %v8289 = vunpack.c.l.b16 %v8257
        %v8290 = vunpack.c.l.b16 %v8258
        %v8291 = vunpack.c.l.b16 %v8259
        %v8292 = vunpack.c.l.b16 %v8260
        %v8293 = vunpack.c.l.b16 %v8261
        %v8294 = vunpack.c.l.b16 %v8262
        %v8295 = vunpack.c.l.b16 %v8263
        %v8296 = vunpack.c.l.b16 %v8264
        %v8297 = vunpack.c.l.b16 %v8265
        %v8298 = vunpack.c.l.b16 %v8266
        %v8299 = vunpack.c.l.b16 %v8267
        %v8300 = vunpack.c.l.b16 %v8268
        %v8301 = vunpack.c.l.b16 %v8269
        %v8302 = vunpack.c.l.b16 %v8270
        %v8303 = vpack.c.b16 %v8288, %v8287
        %v8304 = vpack.c.b16 %v8290, %v8289
        %v8305 = vpack.c.b16 %v8292, %v8291
        %v8306 = vpack.c.b16 %v8294, %v8293
        %v8307 = vpack.c.b16 %v8296, %v8295
        %v8308 = vpack.c.b16 %v8298, %v8297
        %v8309 = vpack.c.b16 %v8300, %v8299
        %v8310 = vpack.c.b16 %v8302, %v8301
        %8319 = vmatpush.bf16.msra.mxu0 %v8310
        %8320 = vmatpush.bf16.msra.mxu0 %v8309
        %8321 = vmatpush.bf16.msra.mxu0 %v8308
        %8322 = vmatpush.bf16.msra.mxu0 %v8307
        %8323 = vmatpush.bf16.msra.mxu0 %v8306
        %8324 = vmatpush.bf16.msra.mxu0 %v8305
        %8325 = vmatpush.bf16.msra.mxu0 %v8304
        %8326 = vmatpush.bf16.msra.mxu0 %v8303
        %8327 = vmatmul.bf16.gmra.mxu0 %v6737
        %v8328 = vpop.f32.mrf.mxu0
        %v8329 = vadd.f32 0.0, %v8328
        %v8330 = vpop.f32.mrf.mxu0
        %v8331 = vadd.f32 0.0, %v8330
        %8332 = vmatmul.bf16.gmra.mxu0 %v6738
        %v8333 = vpop.f32.mrf.mxu0
        %v8334 = vadd.f32 0.0, %v8333
        %v8335 = vpop.f32.mrf.mxu0
        %v8336 = vadd.f32 0.0, %v8335
        %8337 = vmatmul.bf16.gmra.mxu0 %v6739
        %v8338 = vpop.f32.mrf.mxu0
        %v8339 = vadd.f32 0.0, %v8338
        %v8340 = vpop.f32.mrf.mxu0
        %v8341 = vadd.f32 0.0, %v8340
        %8342 = vmatmul.bf16.gmra.mxu0 %v6740
        %v8343 = vpop.f32.mrf.mxu0
        %v8344 = vadd.f32 0.0, %v8343
        %v8345 = vpop.f32.mrf.mxu0
        %v8346 = vadd.f32 0.0, %v8345
        %8347 = vmatmul.bf16.gmra.mxu0 %v6741
        %v8348 = vpop.f32.mrf.mxu0
        %v8349 = vadd.f32 0.0, %v8348
        %v8350 = vpop.f32.mrf.mxu0
        %v8351 = vadd.f32 0.0, %v8350
        %8352 = vmatmul.bf16.gmra.mxu0 %v6742
        %v8353 = vpop.f32.mrf.mxu0
        %v8354 = vadd.f32 0.0, %v8353
        %v8355 = vpop.f32.mrf.mxu0
        %v8356 = vadd.f32 0.0, %v8355
        %8357 = vmatmul.bf16.gmra.mxu0 %v6743
        %v8358 = vpop.f32.mrf.mxu0
        %v8359 = vadd.f32 0.0, %v8358
        %v8360 = vpop.f32.mrf.mxu0
        %v8361 = vadd.f32 0.0, %v8360
        %8362 = vmatmul.bf16.gmra.mxu0 %v6744
        %v8363 = vpop.f32.mrf.mxu0
        %v8364 = vadd.f32 0.0, %v8363
        %v8365 = vpop.f32.mrf.mxu0
        %v8366 = vadd.f32 0.0, %v8365
        %8367 = vmatmul.bf16.gmra.mxu0 %v6745
        %v8368 = vpop.f32.mrf.mxu0
        %v8369 = vadd.f32 0.0, %v8368
        %v8370 = vpop.f32.mrf.mxu0
        %v8371 = vadd.f32 0.0, %v8370
        %8372 = vmatmul.bf16.gmra.mxu0 %v6746
        %v8373 = vpop.f32.mrf.mxu0
        %v8374 = vadd.f32 0.0, %v8373
        %v8375 = vpop.f32.mrf.mxu0
        %v8376 = vadd.f32 0.0, %v8375
        %8377 = vmatmul.bf16.gmra.mxu0 %v6747
        %v8378 = vpop.f32.mrf.mxu0
        %v8379 = vadd.f32 0.0, %v8378
        %v8380 = vpop.f32.mrf.mxu0
        %v8381 = vadd.f32 0.0, %v8380
        %8382 = vmatmul.bf16.gmra.mxu0 %v6748
        %v8383 = vpop.f32.mrf.mxu0
        %v8384 = vadd.f32 0.0, %v8383
        %v8385 = vpop.f32.mrf.mxu0
        %v8386 = vadd.f32 0.0, %v8385
        %8387 = vmatmul.bf16.gmra.mxu0 %v6749
        %v8388 = vpop.f32.mrf.mxu0
        %v8389 = vadd.f32 0.0, %v8388
        %v8390 = vpop.f32.mrf.mxu0
        %v8391 = vadd.f32 0.0, %v8390
        %8392 = vmatmul.bf16.gmra.mxu0 %v6750
        %v8393 = vpop.f32.mrf.mxu0
        %v8394 = vadd.f32 0.0, %v8393
        %v8395 = vpop.f32.mrf.mxu0
        %v8396 = vadd.f32 0.0, %v8395
        %8397 = vmatmul.bf16.gmra.mxu0 %v6751
        %v8398 = vpop.f32.mrf.mxu0
        %v8399 = vadd.f32 0.0, %v8398
        %v8400 = vpop.f32.mrf.mxu0
        %v8401 = vadd.f32 0.0, %v8400
        %8402 = vmatmul.bf16.gmra.mxu0 %v6752
        %v8403 = vpop.f32.mrf.mxu0
        %v8404 = vadd.f32 0.0, %v8403
        %v8405 = vpop.f32.mrf.mxu0
        %v8406 = vadd.f32 0.0, %v8405
        %8407 = vmatmul.bf16.gmra.mxu0 %v6753
        %v8408 = vpop.f32.mrf.mxu0
        %v8409 = vadd.f32 0.0, %v8408
        %v8410 = vpop.f32.mrf.mxu0
        %v8411 = vadd.f32 0.0, %v8410
        %8412 = vmatmul.bf16.gmra.mxu0 %v6754
        %v8413 = vpop.f32.mrf.mxu0
        %v8414 = vadd.f32 0.0, %v8413
        %v8415 = vpop.f32.mrf.mxu0
        %v8416 = vadd.f32 0.0, %v8415
        %8417 = vmatmul.bf16.gmra.mxu0 %v6755
        %v8418 = vpop.f32.mrf.mxu0
        %v8419 = vadd.f32 0.0, %v8418
        %v8420 = vpop.f32.mrf.mxu0
        %v8421 = vadd.f32 0.0, %v8420
        %8422 = vmatmul.bf16.gmra.mxu0 %v6756
        %v8423 = vpop.f32.mrf.mxu0
        %v8424 = vadd.f32 0.0, %v8423
        %v8425 = vpop.f32.mrf.mxu0
        %v8426 = vadd.f32 0.0, %v8425
        %8427 = vmatmul.bf16.gmra.mxu0 %v6757
        %v8428 = vpop.f32.mrf.mxu0
        %v8429 = vadd.f32 0.0, %v8428
        %v8430 = vpop.f32.mrf.mxu0
        %v8431 = vadd.f32 0.0, %v8430
        %8432 = vmatmul.bf16.gmra.mxu0 %v6758
        %v8433 = vpop.f32.mrf.mxu0
        %v8434 = vadd.f32 0.0, %v8433
        %v8435 = vpop.f32.mrf.mxu0
        %v8436 = vadd.f32 0.0, %v8435
        %8437 = vmatmul.bf16.gmra.mxu0 %v6759
        %v8438 = vpop.f32.mrf.mxu0
        %v8439 = vadd.f32 0.0, %v8438
        %v8440 = vpop.f32.mrf.mxu0
        %v8441 = vadd.f32 0.0, %v8440
        %8442 = vmatmul.bf16.gmra.mxu0 %v6760
        %v8443 = vpop.f32.mrf.mxu0
        %v8444 = vadd.f32 0.0, %v8443
        %v8445 = vpop.f32.mrf.mxu0
        %v8446 = vadd.f32 0.0, %v8445
        %8447 = vdwg.mxu0
        %v8464 = vunpack.c.l.b16 %v8238
        %v8465 = vunpack.c.l.b16 %v8239
        %v8466 = vunpack.c.l.b16 %v8240
        %v8467 = vunpack.c.l.b16 %v8241
        %v8468 = vunpack.c.l.b16 %v8242
        %v8469 = vunpack.c.l.b16 %v8243
        %v8470 = vunpack.c.l.b16 %v8244
        %v8471 = vunpack.c.l.b16 %v8245
        %v8472 = vunpack.c.l.b16 %v8246
        %v8473 = vunpack.c.l.b16 %v8247
        %v8474 = vunpack.c.l.b16 %v8248
        %v8475 = vunpack.c.l.b16 %v8249
        %v8476 = vunpack.c.l.b16 %v8250
        %v8477 = vunpack.c.l.b16 %v8251
        %v8478 = vunpack.c.l.b16 %v8252
        %v8479 = vunpack.c.l.b16 %v8253
        %v8480 = vpack.c.b16 %v8465, %v8464
        %v8481 = vpack.c.b16 %v8467, %v8466
        %v8482 = vpack.c.b16 %v8469, %v8468
        %v8483 = vpack.c.b16 %v8471, %v8470
        %v8484 = vpack.c.b16 %v8473, %v8472
        %v8485 = vpack.c.b16 %v8475, %v8474
        %v8486 = vpack.c.b16 %v8477, %v8476
        %v8487 = vpack.c.b16 %v8479, %v8478
        %8496 = vmatpush.bf16.msra.mxu0 %v8487
        %8497 = vmatpush.bf16.msra.mxu0 %v8486
        %8498 = vmatpush.bf16.msra.mxu0 %v8485
        %8499 = vmatpush.bf16.msra.mxu0 %v8484
        %8500 = vmatpush.bf16.msra.mxu0 %v8483
        %8501 = vmatpush.bf16.msra.mxu0 %v8482
        %8502 = vmatpush.bf16.msra.mxu0 %v8481
        %8503 = vmatpush.bf16.msra.mxu0 %v8480
        %8504 = vmatmul.bf16.gmra.mxu0 %v6952
        %v8505 = vpop.f32.mrf.mxu0
        %v8506 = vadd.f32 %v8329, %v8505
        %v8507 = vpop.f32.mrf.mxu0
        %v8508 = vadd.f32 %v8331, %v8507
        %8509 = vmatmul.bf16.gmra.mxu0 %v6953
        %v8510 = vpop.f32.mrf.mxu0
        %v8511 = vadd.f32 %v8334, %v8510
        %v8512 = vpop.f32.mrf.mxu0
        %v8513 = vadd.f32 %v8336, %v8512
        %8514 = vmatmul.bf16.gmra.mxu0 %v6954
        %v8515 = vpop.f32.mrf.mxu0
        %v8516 = vadd.f32 %v8339, %v8515
        %v8517 = vpop.f32.mrf.mxu0
        %v8518 = vadd.f32 %v8341, %v8517
        %8519 = vmatmul.bf16.gmra.mxu0 %v6955
        %v8520 = vpop.f32.mrf.mxu0
        %v8521 = vadd.f32 %v8344, %v8520
        %v8522 = vpop.f32.mrf.mxu0
        %v8523 = vadd.f32 %v8346, %v8522
        %8524 = vmatmul.bf16.gmra.mxu0 %v6956
        %v8525 = vpop.f32.mrf.mxu0
        %v8526 = vadd.f32 %v8349, %v8525
        %v8527 = vpop.f32.mrf.mxu0
        %v8528 = vadd.f32 %v8351, %v8527
        %8529 = vmatmul.bf16.gmra.mxu0 %v6957
        %v8530 = vpop.f32.mrf.mxu0
        %v8531 = vadd.f32 %v8354, %v8530
        %v8532 = vpop.f32.mrf.mxu0
        %v8533 = vadd.f32 %v8356, %v8532
        %8534 = vmatmul.bf16.gmra.mxu0 %v6958
        %v8535 = vpop.f32.mrf.mxu0
        %v8536 = vadd.f32 %v8359, %v8535
        %v8537 = vpop.f32.mrf.mxu0
        %v8538 = vadd.f32 %v8361, %v8537
        %8539 = vmatmul.bf16.gmra.mxu0 %v6959
        %v8540 = vpop.f32.mrf.mxu0
        %v8541 = vadd.f32 %v8364, %v8540
        %v8542 = vpop.f32.mrf.mxu0
        %v8543 = vadd.f32 %v8366, %v8542
        %8544 = vmatmul.bf16.gmra.mxu0 %v6960
        %v8545 = vpop.f32.mrf.mxu0
        %v8546 = vadd.f32 %v8369, %v8545
        %v8547 = vpop.f32.mrf.mxu0
        %v8548 = vadd.f32 %v8371, %v8547
        %8549 = vmatmul.bf16.gmra.mxu0 %v6961
        %v8550 = vpop.f32.mrf.mxu0
        %v8551 = vadd.f32 %v8374, %v8550
        %v8552 = vpop.f32.mrf.mxu0
        %v8553 = vadd.f32 %v8376, %v8552
        %8554 = vmatmul.bf16.gmra.mxu0 %v6962
        %v8555 = vpop.f32.mrf.mxu0
        %v8556 = vadd.f32 %v8379, %v8555
        %v8557 = vpop.f32.mrf.mxu0
        %v8558 = vadd.f32 %v8381, %v8557
        %8559 = vmatmul.bf16.gmra.mxu0 %v6963
        %v8560 = vpop.f32.mrf.mxu0
        %v8561 = vadd.f32 %v8384, %v8560
        %v8562 = vpop.f32.mrf.mxu0
        %v8563 = vadd.f32 %v8386, %v8562
        %8564 = vmatmul.bf16.gmra.mxu0 %v6964
        %v8565 = vpop.f32.mrf.mxu0
        %v8566 = vadd.f32 %v8389, %v8565
        %v8567 = vpop.f32.mrf.mxu0
        %v8568 = vadd.f32 %v8391, %v8567
        %8569 = vmatmul.bf16.gmra.mxu0 %v6965
        %v8570 = vpop.f32.mrf.mxu0
        %v8571 = vadd.f32 %v8394, %v8570
        %v8572 = vpop.f32.mrf.mxu0
        %v8573 = vadd.f32 %v8396, %v8572
        %8574 = vmatmul.bf16.gmra.mxu0 %v6966
        %v8575 = vpop.f32.mrf.mxu0
        %v8576 = vadd.f32 %v8399, %v8575
        %v8577 = vpop.f32.mrf.mxu0
        %v8578 = vadd.f32 %v8401, %v8577
        %8579 = vmatmul.bf16.gmra.mxu0 %v6967
        %v8580 = vpop.f32.mrf.mxu0
        %v8581 = vadd.f32 %v8404, %v8580
        %v8582 = vpop.f32.mrf.mxu0
        %v8583 = vadd.f32 %v8406, %v8582
        %8584 = vmatmul.bf16.gmra.mxu0 %v6968
        %v8585 = vpop.f32.mrf.mxu0
        %v8586 = vadd.f32 %v8409, %v8585
        %v8587 = vpop.f32.mrf.mxu0
        %v8588 = vadd.f32 %v8411, %v8587
        %8589 = vmatmul.bf16.gmra.mxu0 %v6969
        %v8590 = vpop.f32.mrf.mxu0
        %v8591 = vadd.f32 %v8414, %v8590
        %v8592 = vpop.f32.mrf.mxu0
        %v8593 = vadd.f32 %v8416, %v8592
        %8594 = vmatmul.bf16.gmra.mxu0 %v6970
        %v8595 = vpop.f32.mrf.mxu0
        %v8596 = vadd.f32 %v8419, %v8595
        %v8597 = vpop.f32.mrf.mxu0
        %v8598 = vadd.f32 %v8421, %v8597
        %8599 = vmatmul.bf16.gmra.mxu0 %v6971
        %v8600 = vpop.f32.mrf.mxu0
        %v8601 = vadd.f32 %v8424, %v8600
        %v8602 = vpop.f32.mrf.mxu0
        %v8603 = vadd.f32 %v8426, %v8602
        %8604 = vmatmul.bf16.gmra.mxu0 %v6972
        %v8605 = vpop.f32.mrf.mxu0
        %v8606 = vadd.f32 %v8429, %v8605
        %v8607 = vpop.f32.mrf.mxu0
        %v8608 = vadd.f32 %v8431, %v8607
        %8609 = vmatmul.bf16.gmra.mxu0 %v6973
        %v8610 = vpop.f32.mrf.mxu0
        %v8611 = vadd.f32 %v8434, %v8610
        %v8612 = vpop.f32.mrf.mxu0
        %v8613 = vadd.f32 %v8436, %v8612
        %8614 = vmatmul.bf16.gmra.mxu0 %v6974
        %v8615 = vpop.f32.mrf.mxu0
        %v8616 = vadd.f32 %v8439, %v8615
        %v8617 = vpop.f32.mrf.mxu0
        %v8618 = vadd.f32 %v8441, %v8617
        %8619 = vmatmul.bf16.gmra.mxu0 %v6975
        %v8620 = vpop.f32.mrf.mxu0
        %v8621 = vadd.f32 %v8444, %v8620
        %v8622 = vpop.f32.mrf.mxu0
        %v8623 = vadd.f32 %v8446, %v8622
        %8624 = vdwg.mxu0
        %s8625 = scalar_lea.vmem [#allocation10], 512
        %v8626 = vld [vmem:[%s8625] sm:$0xf]
        %v8627 = vld [vmem:[%s8625 + $0x4] sm:$0xf]
        %v8628 = vld [vmem:[%s8625 + $0x8] sm:$0xf]
        %v8629 = vld [vmem:[%s8625 + $0xc] sm:$0xf]
        %v8630 = vld [vmem:[%s8625 + $0x10] sm:$0xf]
        %v8631 = vld [vmem:[%s8625 + $0x14] sm:$0xf]
        %v8632 = vld [vmem:[%s8625 + $0x18] sm:$0xf]
        %v8633 = vld [vmem:[%s8625 + $0x1c] sm:$0xf]
        %v8634 = vld [vmem:[%s8625 + $0x20] sm:$0xf]
        %v8635 = vld [vmem:[%s8625 + $0x24] sm:$0xf]
        %v8636 = vld [vmem:[%s8625 + $0x28] sm:$0xf]
        %v8637 = vld [vmem:[%s8625 + $0x2c] sm:$0xf]
        %v8638 = vld [vmem:[%s8625 + $0x30] sm:$0xf]
        %v8639 = vld [vmem:[%s8625 + $0x34] sm:$0xf]
        %v8640 = vld [vmem:[%s8625 + $0x38] sm:$0xf]
        %v8641 = vld [vmem:[%s8625 + $0x3c] sm:$0xf]
        %v8658 = vunpack.c.l.b16 %v8626
        %v8659 = vunpack.c.l.b16 %v8627
        %v8660 = vunpack.c.l.b16 %v8628
        %v8661 = vunpack.c.l.b16 %v8629
        %v8662 = vunpack.c.l.b16 %v8630
        %v8663 = vunpack.c.l.b16 %v8631
        %v8664 = vunpack.c.l.b16 %v8632
        %v8665 = vunpack.c.l.b16 %v8633
        %v8666 = vunpack.c.l.b16 %v8634
        %v8667 = vunpack.c.l.b16 %v8635
        %v8668 = vunpack.c.l.b16 %v8636
        %v8669 = vunpack.c.l.b16 %v8637
        %v8670 = vunpack.c.l.b16 %v8638
        %v8671 = vunpack.c.l.b16 %v8639
        %v8672 = vunpack.c.l.b16 %v8640
        %v8673 = vunpack.c.l.b16 %v8641
        %v8674 = vpack.c.b16 %v8659, %v8658
        %v8675 = vpack.c.b16 %v8661, %v8660
        %v8676 = vpack.c.b16 %v8663, %v8662
        %v8677 = vpack.c.b16 %v8665, %v8664
        %v8678 = vpack.c.b16 %v8667, %v8666
        %v8679 = vpack.c.b16 %v8669, %v8668
        %v8680 = vpack.c.b16 %v8671, %v8670
        %v8681 = vpack.c.b16 %v8673, %v8672
        %8690 = vmatpush.bf16.msra.mxu0 %v8681
        %8691 = vmatpush.bf16.msra.mxu0 %v8680
        %8692 = vmatpush.bf16.msra.mxu0 %v8679
        %8693 = vmatpush.bf16.msra.mxu0 %v8678
        %8694 = vmatpush.bf16.msra.mxu0 %v8677
        %8695 = vmatpush.bf16.msra.mxu0 %v8676
        %8696 = vmatpush.bf16.msra.mxu0 %v8675
        %8697 = vmatpush.bf16.msra.mxu0 %v8674
        %8698 = vmatmul.bf16.gmra.mxu0 %v6955
        %v8699 = vpop.f32.mrf.mxu0
        %v8700 = vadd.f32 0.0, %v8699
        %v8701 = vpop.f32.mrf.mxu0
        %v8702 = vadd.f32 0.0, %v8701
        %8703 = vmatmul.bf16.gmra.mxu0 %v6956
        %v8704 = vpop.f32.mrf.mxu0
        %v8705 = vadd.f32 0.0, %v8704
        %v8706 = vpop.f32.mrf.mxu0
        %v8707 = vadd.f32 0.0, %v8706
        %8708 = vmatmul.bf16.gmra.mxu0 %v6957
        %v8709 = vpop.f32.mrf.mxu0
        %v8710 = vadd.f32 0.0, %v8709
        %v8711 = vpop.f32.mrf.mxu0
        %v8712 = vadd.f32 0.0, %v8711
        %8713 = vmatmul.bf16.gmra.mxu0 %v6958
        %v8714 = vpop.f32.mrf.mxu0
        %v8715 = vadd.f32 0.0, %v8714
        %v8716 = vpop.f32.mrf.mxu0
        %v8717 = vadd.f32 0.0, %v8716
        %8718 = vmatmul.bf16.gmra.mxu0 %v6959
        %v8719 = vpop.f32.mrf.mxu0
        %v8720 = vadd.f32 0.0, %v8719
        %v8721 = vpop.f32.mrf.mxu0
        %v8722 = vadd.f32 0.0, %v8721
        %8723 = vmatmul.bf16.gmra.mxu0 %v6960
        %v8724 = vpop.f32.mrf.mxu0
        %v8725 = vadd.f32 0.0, %v8724
        %v8726 = vpop.f32.mrf.mxu0
        %v8727 = vadd.f32 0.0, %v8726
        %8728 = vmatmul.bf16.gmra.mxu0 %v6961
        %v8729 = vpop.f32.mrf.mxu0
        %v8730 = vadd.f32 0.0, %v8729
        %v8731 = vpop.f32.mrf.mxu0
        %v8732 = vadd.f32 0.0, %v8731
        %8733 = vmatmul.bf16.gmra.mxu0 %v6962
        %v8734 = vpop.f32.mrf.mxu0
        %v8735 = vadd.f32 0.0, %v8734
        %v8736 = vpop.f32.mrf.mxu0
        %v8737 = vadd.f32 0.0, %v8736
        %8738 = vmatmul.bf16.gmra.mxu0 %v6963
        %v8739 = vpop.f32.mrf.mxu0
        %v8740 = vadd.f32 0.0, %v8739
        %v8741 = vpop.f32.mrf.mxu0
        %v8742 = vadd.f32 0.0, %v8741
        %8743 = vmatmul.bf16.gmra.mxu0 %v6964
        %v8744 = vpop.f32.mrf.mxu0
        %v8745 = vadd.f32 0.0, %v8744
        %v8746 = vpop.f32.mrf.mxu0
        %v8747 = vadd.f32 0.0, %v8746
        %8748 = vmatmul.bf16.gmra.mxu0 %v6965
        %v8749 = vpop.f32.mrf.mxu0
        %v8750 = vadd.f32 0.0, %v8749
        %v8751 = vpop.f32.mrf.mxu0
        %v8752 = vadd.f32 0.0, %v8751
        %8753 = vmatmul.bf16.gmra.mxu0 %v6966
        %v8754 = vpop.f32.mrf.mxu0
        %v8755 = vadd.f32 0.0, %v8754
        %v8756 = vpop.f32.mrf.mxu0
        %v8757 = vadd.f32 0.0, %v8756
        %8758 = vmatmul.bf16.gmra.mxu0 %v6967
        %v8759 = vpop.f32.mrf.mxu0
        %v8760 = vadd.f32 0.0, %v8759
        %v8761 = vpop.f32.mrf.mxu0
        %v8762 = vadd.f32 0.0, %v8761
        %8763 = vmatmul.bf16.gmra.mxu0 %v6968
        %v8764 = vpop.f32.mrf.mxu0
        %v8765 = vadd.f32 0.0, %v8764
        %v8766 = vpop.f32.mrf.mxu0
        %v8767 = vadd.f32 0.0, %v8766
        %8768 = vmatmul.bf16.gmra.mxu0 %v6969
        %v8769 = vpop.f32.mrf.mxu0
        %v8770 = vadd.f32 0.0, %v8769
        %v8771 = vpop.f32.mrf.mxu0
        %v8772 = vadd.f32 0.0, %v8771
        %8773 = vmatmul.bf16.gmra.mxu0 %v6970
        %v8774 = vpop.f32.mrf.mxu0
        %v8775 = vadd.f32 0.0, %v8774
        %v8776 = vpop.f32.mrf.mxu0
        %v8777 = vadd.f32 0.0, %v8776
        %8778 = vmatmul.bf16.gmra.mxu0 %v6971
        %v8779 = vpop.f32.mrf.mxu0
        %v8780 = vadd.f32 0.0, %v8779
        %v8781 = vpop.f32.mrf.mxu0
        %v8782 = vadd.f32 0.0, %v8781
        %8783 = vmatmul.bf16.gmra.mxu0 %v6972
        %v8784 = vpop.f32.mrf.mxu0
        %v8785 = vadd.f32 0.0, %v8784
        %v8786 = vpop.f32.mrf.mxu0
        %v8787 = vadd.f32 0.0, %v8786
        %8788 = vmatmul.bf16.gmra.mxu0 %v6973
        %v8789 = vpop.f32.mrf.mxu0
        %v8790 = vadd.f32 0.0, %v8789
        %v8791 = vpop.f32.mrf.mxu0
        %v8792 = vadd.f32 0.0, %v8791
        %8793 = vmatmul.bf16.gmra.mxu0 %v6974
        %v8794 = vpop.f32.mrf.mxu0
        %v8795 = vadd.f32 0.0, %v8794
        %v8796 = vpop.f32.mrf.mxu0
        %v8797 = vadd.f32 0.0, %v8796
        %8798 = vmatmul.bf16.gmra.mxu0 %v6975
        %v8799 = vpop.f32.mrf.mxu0
        %v8800 = vadd.f32 0.0, %v8799
        %v8801 = vpop.f32.mrf.mxu0
        %v8802 = vadd.f32 0.0, %v8801
        %8803 = vmatmul.bf16.gmra.mxu0 %v7184
        %v8804 = vpop.f32.mrf.mxu0
        %v8805 = vadd.f32 0.0, %v8804
        %v8806 = vpop.f32.mrf.mxu0
        %v8807 = vadd.f32 0.0, %v8806
        %8808 = vmatmul.bf16.gmra.mxu0 %v7185
        %v8809 = vpop.f32.mrf.mxu0
        %v8810 = vadd.f32 0.0, %v8809
        %v8811 = vpop.f32.mrf.mxu0
        %v8812 = vadd.f32 0.0, %v8811
        %8813 = vmatmul.bf16.gmra.mxu0 %v7186
        %v8814 = vpop.f32.mrf.mxu0
        %v8815 = vadd.f32 0.0, %v8814
        %v8816 = vpop.f32.mrf.mxu0
        %v8817 = vadd.f32 0.0, %v8816
        %8818 = vdwg.mxu0
        %v8819 = vadd.f32 %v8506, %v8700
        %v8820 = vadd.f32 %v8508, %v8702
        %v8821 = vadd.f32 %v8511, %v8705
        %v8822 = vadd.f32 %v8513, %v8707
        %v8823 = vadd.f32 %v8516, %v8710
        %v8824 = vadd.f32 %v8518, %v8712
        %v8825 = vadd.f32 %v8521, %v8715
        %v8826 = vadd.f32 %v8523, %v8717
        %v8827 = vadd.f32 %v8526, %v8720
        %v8828 = vadd.f32 %v8528, %v8722
        %v8829 = vadd.f32 %v8531, %v8725
        %v8830 = vadd.f32 %v8533, %v8727
        %v8831 = vadd.f32 %v8536, %v8730
        %v8832 = vadd.f32 %v8538, %v8732
        %v8833 = vadd.f32 %v8541, %v8735
        %v8834 = vadd.f32 %v8543, %v8737
        %v8835 = vadd.f32 %v8546, %v8740
        %v8836 = vadd.f32 %v8548, %v8742
        %v8837 = vadd.f32 %v8551, %v8745
        %v8838 = vadd.f32 %v8553, %v8747
        %v8839 = vadd.f32 %v8556, %v8750
        %v8840 = vadd.f32 %v8558, %v8752
        %v8841 = vadd.f32 %v8561, %v8755
        %v8842 = vadd.f32 %v8563, %v8757
        %v8843 = vadd.f32 %v8566, %v8760
        %v8844 = vadd.f32 %v8568, %v8762
        %v8845 = vadd.f32 %v8571, %v8765
        %v8846 = vadd.f32 %v8573, %v8767
        %v8847 = vadd.f32 %v8576, %v8770
        %v8848 = vadd.f32 %v8578, %v8772
        %v8849 = vadd.f32 %v8581, %v8775
        %v8850 = vadd.f32 %v8583, %v8777
        %v8851 = vadd.f32 %v8586, %v8780
        %v8852 = vadd.f32 %v8588, %v8782
        %v8853 = vadd.f32 %v8591, %v8785
        %v8854 = vadd.f32 %v8593, %v8787
        %v8855 = vadd.f32 %v8596, %v8790
        %v8856 = vadd.f32 %v8598, %v8792
        %v8857 = vadd.f32 %v8601, %v8795
        %v8858 = vadd.f32 %v8603, %v8797
        %v8859 = vadd.f32 %v8606, %v8800
        %v8860 = vadd.f32 %v8608, %v8802
        %v8861 = vadd.f32 %v8611, %v8805
        %v8862 = vadd.f32 %v8613, %v8807
        %v8863 = vadd.f32 %v8616, %v8810
        %v8864 = vadd.f32 %v8618, %v8812
        %v8865 = vadd.f32 %v8621, %v8815
        %v8866 = vadd.f32 %v8623, %v8817
        %v8915 = vrot.slane %v8819, 2
        %v8916 = vrot.slane %v8820, 2
        %v8917 = vsel %vm2539, %v8915, %v8916
        %v8918 = vrot.slane %v8821, 2
        %v8919 = vsel %vm2539, %v8916, %v8918
        %v8920 = vrot.slane %v8822, 2
        %v8921 = vrot.slane %v8823, 2
        %v8922 = vsel %vm2539, %v8920, %v8921
        %v8923 = vrot.slane %v8824, 2
        %v8924 = vsel %vm2539, %v8921, %v8923
        %v8925 = vrot.slane %v8825, 2
        %v8926 = vrot.slane %v8826, 2
        %v8927 = vsel %vm2539, %v8925, %v8926
        %v8928 = vrot.slane %v8827, 2
        %v8929 = vsel %vm2539, %v8926, %v8928
        %v8930 = vrot.slane %v8828, 2
        %v8931 = vrot.slane %v8829, 2
        %v8932 = vsel %vm2539, %v8930, %v8931
        %v8933 = vrot.slane %v8830, 2
        %v8934 = vsel %vm2539, %v8931, %v8933
        %v8935 = vrot.slane %v8831, 2
        %v8936 = vrot.slane %v8832, 2
        %v8937 = vsel %vm2539, %v8935, %v8936
        %v8938 = vrot.slane %v8833, 2
        %v8939 = vsel %vm2539, %v8936, %v8938
        %v8940 = vrot.slane %v8834, 2
        %v8941 = vrot.slane %v8835, 2
        %v8942 = vsel %vm2539, %v8940, %v8941
        %v8943 = vrot.slane %v8836, 2
        %v8944 = vsel %vm2539, %v8941, %v8943
        %v8945 = vrot.slane %v8837, 2
        %v8946 = vrot.slane %v8838, 2
        %v8947 = vsel %vm2539, %v8945, %v8946
        %v8948 = vrot.slane %v8839, 2
        %v8949 = vsel %vm2539, %v8946, %v8948
        %v8950 = vrot.slane %v8840, 2
        %v8951 = vrot.slane %v8841, 2
        %v8952 = vsel %vm2539, %v8950, %v8951
        %v8953 = vrot.slane %v8842, 2
        %v8954 = vsel %vm2539, %v8951, %v8953
        %v8955 = vrot.slane %v8843, 2
        %v8956 = vrot.slane %v8844, 2
        %v8957 = vsel %vm2539, %v8955, %v8956
        %v8958 = vrot.slane %v8845, 2
        %v8959 = vsel %vm2539, %v8956, %v8958
        %v8960 = vrot.slane %v8846, 2
        %v8961 = vrot.slane %v8847, 2
        %v8962 = vsel %vm2539, %v8960, %v8961
        %v8963 = vrot.slane %v8848, 2
        %v8964 = vsel %vm2539, %v8961, %v8963
        %v8965 = vrot.slane %v8849, 2
        %v8966 = vrot.slane %v8850, 2
        %v8967 = vsel %vm2539, %v8965, %v8966
        %v8968 = vrot.slane %v8851, 2
        %v8969 = vsel %vm2539, %v8966, %v8968
        %v8970 = vrot.slane %v8852, 2
        %v8971 = vrot.slane %v8853, 2
        %v8972 = vsel %vm2539, %v8970, %v8971
        %v8973 = vrot.slane %v8854, 2
        %v8974 = vsel %vm2539, %v8971, %v8973
        %v8975 = vrot.slane %v8855, 2
        %v8976 = vrot.slane %v8856, 2
        %v8977 = vsel %vm2539, %v8975, %v8976
        %v8978 = vrot.slane %v8857, 2
        %v8979 = vsel %vm2539, %v8976, %v8978
        %v8980 = vrot.slane %v8858, 2
        %v8981 = vrot.slane %v8859, 2
        %v8982 = vsel %vm2539, %v8980, %v8981
        %v8983 = vrot.slane %v8860, 2
        %v8984 = vsel %vm2539, %v8981, %v8983
        %v8985 = vrot.slane %v8861, 2
        %v8986 = vrot.slane %v8862, 2
        %v8987 = vsel %vm2539, %v8985, %v8986
        %v8988 = vrot.slane %v8863, 2
        %v8989 = vsel %vm2539, %v8986, %v8988
        %v8990 = vrot.slane %v8864, 2
        %v8991 = vrot.slane %v8865, 2
        %v8992 = vsel %vm2539, %v8990, %v8991
        %v8993 = vrot.slane %v8866, 2
        %v8994 = vsel %vm2539, %v8991, %v8993
        %v9027 = vadd.f32 %v8205, %v8917
        %v9028 = vadd.f32 %v8206, %v8919
        %v9029 = vadd.f32 %v8207, %v8922
        %v9030 = vadd.f32 %v8208, %v8924
        %v9031 = vadd.f32 %v8209, %v8927
        %v9032 = vadd.f32 %v8210, %v8929
        %v9033 = vadd.f32 %v8211, %v8932
        %v9034 = vadd.f32 %v8212, %v8934
        %v9035 = vadd.f32 %v8213, %v8937
        %v9036 = vadd.f32 %v8214, %v8939
        %v9037 = vadd.f32 %v8215, %v8942
        %v9038 = vadd.f32 %v8216, %v8944
        %v9039 = vadd.f32 %v8217, %v8947
        %v9040 = vadd.f32 %v8218, %v8949
        %v9041 = vadd.f32 %v8219, %v8952
        %v9042 = vadd.f32 %v8220, %v8954
        %v9043 = vadd.f32 %v8221, %v8957
        %v9044 = vadd.f32 %v8222, %v8959
        %v9045 = vadd.f32 %v8223, %v8962
        %v9046 = vadd.f32 %v8224, %v8964
        %v9047 = vadd.f32 %v8225, %v8967
        %v9048 = vadd.f32 %v8226, %v8969
        %v9049 = vadd.f32 %v8227, %v8972
        %v9050 = vadd.f32 %v8228, %v8974
        %v9051 = vadd.f32 %v8229, %v8977
        %v9052 = vadd.f32 %v8230, %v8979
        %v9053 = vadd.f32 %v8231, %v8982
        %v9054 = vadd.f32 %v8232, %v8984
        %v9055 = vadd.f32 %v8233, %v8987
        %v9056 = vadd.f32 %v8234, %v8989
        %v9057 = vadd.f32 %v8235, %v8992
        %v9058 = vadd.f32 %v8236, %v8994
        %v9059 = vld [vmem:[%s10] sm:$0x1]
        %v9061 = vperm.slane %v9059, 0
        %v9063 = vadd.f32 %v9027, %v9061
        %v9064 = vadd.f32 %v9028, %v9061
        %v9065 = vadd.f32 %v9029, %v9061
        %v9066 = vadd.f32 %v9030, %v9061
        %v9067 = vadd.f32 %v9031, %v9061
        %v9068 = vadd.f32 %v9032, %v9061
        %v9069 = vadd.f32 %v9033, %v9061
        %v9070 = vadd.f32 %v9034, %v9061
        %v9071 = vadd.f32 %v9035, %v9061
        %v9072 = vadd.f32 %v9036, %v9061
        %v9073 = vadd.f32 %v9037, %v9061
        %v9074 = vadd.f32 %v9038, %v9061
        %v9075 = vadd.f32 %v9039, %v9061
        %v9076 = vadd.f32 %v9040, %v9061
        %v9077 = vadd.f32 %v9041, %v9061
        %v9078 = vadd.f32 %v9042, %v9061
        %v9079 = vadd.f32 %v9043, %v9061
        %v9080 = vadd.f32 %v9044, %v9061
        %v9081 = vadd.f32 %v9045, %v9061
        %v9082 = vadd.f32 %v9046, %v9061
        %v9083 = vadd.f32 %v9047, %v9061
        %v9084 = vadd.f32 %v9048, %v9061
        %v9085 = vadd.f32 %v9049, %v9061
        %v9086 = vadd.f32 %v9050, %v9061
        %v9087 = vadd.f32 %v9051, %v9061
        %v9088 = vadd.f32 %v9052, %v9061
        %v9089 = vadd.f32 %v9053, %v9061
        %v9090 = vadd.f32 %v9054, %v9061
        %v9091 = vadd.f32 %v9055, %v9061
        %v9092 = vadd.f32 %v9056, %v9061
        %v9093 = vadd.f32 %v9057, %v9061
        %v9094 = vadd.f32 %v9058, %v9061
        %v9095 = vtanh.pop %v9063
        %v9096 = vtanh.pop %v9064
        %v9097 = vtanh.pop %v9065
        %v9098 = vtanh.pop %v9066
        %v9099 = vtanh.pop %v9067
        %v9100 = vtanh.pop %v9068
        %v9101 = vtanh.pop %v9069
        %v9102 = vtanh.pop %v9070
        %v9103 = vtanh.pop %v9071
        %v9104 = vtanh.pop %v9072
        %v9105 = vtanh.pop %v9073
        %v9106 = vtanh.pop %v9074
        %v9107 = vtanh.pop %v9075
        %v9108 = vtanh.pop %v9076
        %v9109 = vtanh.pop %v9077
        %v9110 = vtanh.pop %v9078
        %v9111 = vtanh.pop %v9079
        %v9112 = vtanh.pop %v9080
        %v9113 = vtanh.pop %v9081
        %v9114 = vtanh.pop %v9082
        %v9115 = vtanh.pop %v9083
        %v9116 = vtanh.pop %v9084
        %v9117 = vtanh.pop %v9085
        %v9118 = vtanh.pop %v9086
        %v9119 = vtanh.pop %v9087
        %v9120 = vtanh.pop %v9088
        %v9121 = vtanh.pop %v9089
        %v9122 = vtanh.pop %v9090
        %v9123 = vtanh.pop %v9091
        %v9124 = vtanh.pop %v9092
        %v9125 = vtanh.pop %v9093
        %v9126 = vtanh.pop %v9094
        %9127 = vst [vmem:[%s510] sm:$0xff] %v9095
        %9128 = vst [vmem:[%s510 + $0x8] sm:$0xff] %v9096
        %9129 = vst [vmem:[%s510 + $0x10] sm:$0xff] %v9097
        %9130 = vst [vmem:[%s510 + $0x18] sm:$0xff] %v9098
        %9131 = vst [vmem:[%s510 + $0x20] sm:$0xff] %v9099
        %9132 = vst [vmem:[%s510 + $0x28] sm:$0xff] %v9100
        %9133 = vst [vmem:[%s510 + $0x30] sm:$0xff] %v9101
        %9134 = vst [vmem:[%s510 + $0x38] sm:$0xff] %v9102
        %9135 = vst [vmem:[%s510 + $0x40] sm:$0xff] %v9103
        %9136 = vst [vmem:[%s510 + $0x48] sm:$0xff] %v9104
        %9137 = vst [vmem:[%s510 + $0x50] sm:$0xff] %v9105
        %9138 = vst [vmem:[%s510 + $0x58] sm:$0xff] %v9106
        %9139 = vst [vmem:[%s510 + $0x60] sm:$0xff] %v9107
        %9140 = vst [vmem:[%s510 + $0x68] sm:$0xff] %v9108
        %9141 = vst [vmem:[%s510 + $0x70] sm:$0xff] %v9109
        %9142 = vst [vmem:[%s510 + $0x78] sm:$0xff] %v9110
        %9143 = vst [vmem:[%s510 + $0x80] sm:$0xff] %v9111
        %9144 = vst [vmem:[%s510 + $0x88] sm:$0xff] %v9112
        %9145 = vst [vmem:[%s510 + $0x90] sm:$0xff] %v9113
        %9146 = vst [vmem:[%s510 + $0x98] sm:$0xff] %v9114
        %9147 = vst [vmem:[%s510 + $0xa0] sm:$0xff] %v9115
        %9148 = vst [vmem:[%s510 + $0xa8] sm:$0xff] %v9116
        %9149 = vst [vmem:[%s510 + $0xb0] sm:$0xff] %v9117
        %9150 = vst [vmem:[%s510 + $0xb8] sm:$0xff] %v9118
        %9151 = vst [vmem:[%s510 + $0xc0] sm:$0xff] %v9119
        %9152 = vst [vmem:[%s510 + $0xc8] sm:$0xff] %v9120
        %9153 = vst [vmem:[%s510 + $0xd0] sm:$0xff] %v9121
        %9154 = vst [vmem:[%s510 + $0xd8] sm:$0xff] %v9122
        %9155 = vst [vmem:[%s510 + $0xe0] sm:$0xff] %v9123
        %9156 = vst [vmem:[%s510 + $0xe8] sm:$0xff] %v9124
        %9157 = vst [vmem:[%s510 + $0xf0] sm:$0xff] %v9125
        %9158 = vst [vmem:[%s510 + $0xf8] sm:$0xff] %v9126
        %p9159 = scmp.lt.s32.totalorder %s27, 1
        %s9160 = scalar_select %p9159, %s27, 1
        %s9161 = smul.addr %s9160, 32
        %s9162 = smul.addr %s9161, 8
        %s9163 = scalar_lea.vmem %s12, %s9162
        // Predicated region
        $region93: #{forward.1} parent=67 // pred_check
          %p9164 = pneg %p302
        $region94: #{forward.1} parent=67 // pred_check_branch
          %9166 = sbr.rel (%p9164) target = $region96
        $region95: #{forward.1} parent=67 // pred_region
          _
        $region96: #{forward.1} parent=67 // pred_fallthru
          _
      $region68: #{forward.1} parent=5 // pred_fallthru
        _
      %p9167 = scmp.le.s32.totalorder 2, %s22
      // Predicated region
      $region97: #{forward.1} parent=5 // pred_check
        %p9168 = pneg %p9167
      $region98: #{forward.1} parent=5 // pred_check_branch
        %9170 = sbr.rel (%p9168) target = $region100
      $region99: #{forward.1} parent=5 // pred_region
        %s9171 = ssub.s32 %s22, 2
        // Predicated region
        $region101: #{forward.1} parent=99 // pred_check
          %p9172 = pneg %p308
        $region102: #{forward.1} parent=99 // pred_check_branch
          %9174 = sbr.rel (%p9172) target = $region104
        $region103: #{forward.1} parent=99 // pred_region
          %p9175 = scmp.lt.s32.totalorder %s28, 1
          %s9176 = scalar_select %p9175, %s28, 1
          %s9177 = smul.addr %s9176, 32
          %s9178 = smul.addr %s9177, 8
          %s9179 = scalar_lea.vmem %s12, %s9178
        $region104: #{forward.1} parent=99 // pred_fallthru
          _
      $region100: #{forward.1} parent=5 // pred_fallthru
        _
    $region6: #{forward.1} parent=1 // loop_footer
      %s26 = sadd.s32 1, %s22
    $region7: #{forward.1} parent=1 // loop_footer_branch
      %21 = sbr.rel target = $region3
    $region8: #{forward.1} parent=1 // loop_exit
      _
    %9180 = vsyncpa [#allocation3], 1
    %s9181 = scalar_lea.sflag [#allocation3], 1
    %9182 = vsyncpa %s9181, 1
    %9183 = vsyncpa [#allocation5], 1
    %9184 = vsyncpa [#allocation8], 1
    %9185 = vsyncpa [#allocation11], 1

</llo_original>
